<compile_context>
chip_gen: v5e
topology: v5e:2x2
jax: 0.10.0
libtpu: 0.0.40
codegen_flags: <defaults>
</compile_context>

<pallas_src>
import functools
import math

import jax
import jax.numpy as jnp
from jax.experimental import pallas as pl
from jax.experimental.pallas import tpu as pltpu


# ----------------------------------------------------------------------------
# small helpers (bf16 MXU operands, f32 accumulation; f32 norm math)
# ----------------------------------------------------------------------------
def _mm(a, b):
    return jnp.dot(a.astype(jnp.bfloat16), b.astype(jnp.bfloat16),
                   preferred_element_type=jnp.float32)


def _bmm(eq, a, b):
    return jnp.einsum(eq, a.astype(jnp.bfloat16), b.astype(jnp.bfloat16),
                      preferred_element_type=jnp.float32)


def _layer_norm(y, g, b, eps=1e-5):
    mean = jnp.mean(y, axis=-1, keepdims=True)
    var = jnp.mean((y - mean) * (y - mean), axis=-1, keepdims=True)
    return (y - mean) * jax.lax.rsqrt(var + eps) * g + b


# ----------------------------------------------------------------------------
# fused encoder kernel
# ----------------------------------------------------------------------------
def encoder_kernel(x_ref, lens_ref, rel_ref,
                   wq_ref, wk_ref, wv_ref, wo_ref, bo_ref,
                   ln1g_ref, ln1b_ref,
                   w1_ref, b1_ref, w2_ref, b2_ref,
                   ln2g_ref, ln2b_ref,
                   relk_ref, relv_ref,
                   wout_ref, bout_ref,
                   o_ref,
                   *, batch, nodes, num_heads, head_dim, num_layers,
                   num_relations):
    B, N, nh, Dh, R = batch, nodes, num_heads, head_dim, num_relations
    H = nh * Dh
    Z = B * nh
    inv_sqrt_d = 1.0 / math.sqrt(Dh)

    # additive key-padding bias built in-kernel from per-graph lengths
    lens = lens_ref[...]                                       # [B, 1] int32
    col = jax.lax.broadcasted_iota(jnp.int32, (B, N), 1)       # [B, N]
    neg_bias = jnp.where(col < lens, 0.0, -1e9).astype(jnp.float32)
    neg_bias = neg_bias[:, None, None, :]                      # [B, 1, 1, N]

    rel_ids = rel_ref[...]                                     # [B, N, N] int32
    # one select mask per relation id (R small, static; reused by all layers)
    sels = [(rel_ids == r)[:, None, :, :] for r in range(R)]   # each [B,1,N,N]

    def split_heads(t):        # [B*N, H] -> [B*nh, N, Dh]
        t = jnp.swapaxes(t.reshape(B, N, H), 1, 2)             # [B, H, N]
        t = t.reshape(Z, Dh, N)                                # tile-aligned split
        return jnp.swapaxes(t, 1, 2)                           # [Z, N, Dh]

    def merge_heads(t):        # [B*nh, N, Dh] -> [B*N, H]
        t = jnp.swapaxes(t, 1, 2).reshape(B, H, N)             # [B, H, N]
        return jnp.swapaxes(t, 1, 2).reshape(B * N, H)         # [B*N, H]

    x = x_ref[...]                                             # [B*N, H] f32

    for l in range(num_layers):
        # ---- relation-aware multi-head self-attention ------------------------
        qh = split_heads(_mm(x, wq_ref[l]))                    # [Z, N, Dh]
        kh = split_heads(_mm(x, wk_ref[l]))
        vh = split_heads(_mm(x, wv_ref[l]))

        scores = _bmm('zqd,zkd->zqk', qh, kh).reshape(B, nh, N, N)

        # relation bias:  (Q @ rel_k_emb^T)[..., rel_ids]
        qr = _bmm('nd,rd->nr', qh.reshape(Z * N, Dh), relk_ref[l])
        qr = qr.reshape(B, nh, N, R)                           # [B,nh,N,R]
        rel_score = jnp.zeros((B, nh, N, N), jnp.float32)
        for r in range(R):
            rel_score = rel_score + jnp.where(sels[r], qr[..., r:r + 1], 0.0)

        scores = (scores + rel_score) * inv_sqrt_d + neg_bias

        # masked softmax over keys (f32)
        m = jnp.max(scores, axis=-1, keepdims=True)
        p = jnp.exp(scores - m)
        attn = p * pl.reciprocal(jnp.sum(p, axis=-1, keepdims=True),
                                 approx=True)                  # [B,nh,N,N]

        # attn @ V
        head_out = _bmm('zqk,zkd->zqd', attn.reshape(Z, N, N), vh)  # [Z,N,Dh]

        # relation values: attention mass per relation id, then [*,R]@[R,Dh]
        masses = [jnp.sum(jnp.where(sels[r], attn, 0.0), axis=-1, keepdims=True)
                  for r in range(R)]                           # each [B,nh,N,1]
        am = jnp.concatenate(masses, axis=-1).reshape(Z * N, R)
        head_out = head_out + _bmm('nr,rd->nd', am,
                                   relv_ref[l]).reshape(Z, N, Dh)

        # ---- output projection + residual + LayerNorm -------------------------
        attn_out = _mm(merge_heads(head_out), wo_ref[l]) + bo_ref[l]
        x = _layer_norm(x + attn_out, ln1g_ref[l], ln1b_ref[l])

        # ---- position-wise FFN + residual + LayerNorm --------------------------
        h1 = jnp.maximum(_mm(x, w1_ref[l]) + b1_ref[l], 0.0)
        h2 = _mm(h1, w2_ref[l]) + b2_ref[l]
        x = _layer_norm(x + h2, ln2g_ref[l], ln2b_ref[l])

    # ---- output head: linear + tanh --------------------------------------------
    o_ref[...] = jnp.tanh(_mm(x, wout_ref[...]) + bout_ref[...])


# ----------------------------------------------------------------------------
# wrapper
# ----------------------------------------------------------------------------
def text2sql_encoder(x, rel_ids, lengths, params, out_params,
                     *, num_heads, head_dim):
    B, N, H = x.shape
    assert H == num_heads * head_dim
    assert N % 8 == 0 and head_dim % 8 == 0, "tile-aligned head reshapes"
    L = params["wq"].shape[0]
    R = params["rel_k"].shape[1]
    O = out_params["w"].shape[1]

    kern = functools.partial(
        encoder_kernel, batch=B, nodes=N, num_heads=num_heads,
        head_dim=head_dim, num_layers=L, num_relations=R)

    args = (
        x.reshape(B * N, H).astype(jnp.float32),
        lengths.reshape(B, 1).astype(jnp.int32),
        rel_ids.astype(jnp.int32),
        params["wq"], params["wk"], params["wv"], params["wo"], params["bo"],
        params["ln1_g"], params["ln1_b"],
        params["w1"], params["b1"], params["w2"], params["b2"],
        params["ln2_g"], params["ln2_b"],
        params["rel_k"], params["rel_v"],
        out_params["w"], out_params["b"],
    )
    vmem = pl.BlockSpec(memory_space=pltpu.MemorySpace.VMEM)

    out = pl.pallas_call(
        kern,
        out_shape=jax.ShapeDtypeStruct((B * N, O), jnp.float32),
        in_specs=[vmem] * len(args),
        out_specs=vmem,
    )(*args)
    return out.reshape(B, N, O)


# ----------------------------------------------------------------------------
# deterministic parameter init (layer weights stacked on a leading L axis)
# ----------------------------------------------------------------------------
def init_params(key, *, hidden, ffn, num_layers, num_relations, head_dim,
                out_dim):
    L = num_layers
    s = 1.0 / math.sqrt(hidden)
    ks = jax.random.split(key, 9)

    def rnd(k, shape, scale):
        return jax.random.normal(k, shape, jnp.float32) * scale

    params = dict(
        wq=rnd(ks[0], (L, hidden, hidden), s),
        wk=rnd(ks[1], (L, hidden, hidden), s),
        wv=rnd(ks[2], (L, hidden, hidden), s),
        wo=rnd(ks[3], (L, hidden, hidden), s),
        bo=jnp.zeros((L, 1, hidden), jnp.float32),
        ln1_g=jnp.ones((L, 1, hidden), jnp.float32),
        ln1_b=jnp.zeros((L, 1, hidden), jnp.float32),
        w1=rnd(ks[4], (L, hidden, ffn), s),
        b1=jnp.zeros((L, 1, ffn), jnp.float32),
        w2=rnd(ks[5], (L, ffn, hidden), 1.0 / math.sqrt(ffn)),
        b2=jnp.zeros((L, 1, hidden), jnp.float32),
        ln2_g=jnp.ones((L, 1, hidden), jnp.float32),
        ln2_b=jnp.zeros((L, 1, hidden), jnp.float32),
        rel_k=rnd(ks[6], (L, num_relations, head_dim), 0.1),
        rel_v=rnd(ks[7], (L, num_relations, head_dim), 0.1),
    )
    out_params = dict(
        w=rnd(ks[8], (hidden, out_dim), 1.0 / math.sqrt(hidden)),
        b=jnp.zeros((1, out_dim), jnp.float32),
    )
    return params, out_params


if __name__ == "__main__":
    B, N, H = 2, 16, 32          # batch, graph nodes, hidden
    NUM_HEADS, DH = 4, 8         # heads, per-head dim (H == NUM_HEADS * DH)
    FFN = 4 * H
    NUM_LAYERS = 2
    NUM_RELATIONS = 11
    OUT_DIM = 32

    key = jax.random.PRNGKey(0)
    key, kx, kr = jax.random.split(key, 3)

    x = jax.random.normal(kx, (B, N, H), jnp.float32)
    rel_ids = jax.random.randint(kr, (B, N, N), 0, NUM_RELATIONS)
    lengths = jnp.array([N, N - 3], jnp.int32)   # pad tail nodes masked out

    params, out_params = init_params(
        key, hidden=H, ffn=FFN, num_layers=NUM_LAYERS,
        num_relations=NUM_RELATIONS, head_dim=DH, out_dim=OUT_DIM)

    out = text2sql_encoder(x, rel_ids, lengths, params, out_params,
                           num_heads=NUM_HEADS, head_dim=DH)
    out = jax.block_until_ready(out)

    assert out.shape == (B, N, OUT_DIM)
    assert bool(jnp.all(jnp.isfinite(out)))
    print("KERNEL_OK")
</pallas_src>

<mosaic_0001>
module attributes {stable_mosaic.version = 11 : i64} {
  func.func @encoder_kernel(%arg0: memref<32x32xf32, #tpu.memory_space<vmem>>, %arg1: memref<2x1xi32, #tpu.memory_space<vmem>>, %arg2: memref<2x16x16xi32, #tpu.memory_space<vmem>>, %arg3: memref<2x32x32xf32, #tpu.memory_space<vmem>>, %arg4: memref<2x32x32xf32, #tpu.memory_space<vmem>>, %arg5: memref<2x32x32xf32, #tpu.memory_space<vmem>>, %arg6: memref<2x32x32xf32, #tpu.memory_space<vmem>>, %arg7: memref<2x1x32xf32, #tpu.memory_space<vmem>>, %arg8: memref<2x1x32xf32, #tpu.memory_space<vmem>>, %arg9: memref<2x1x32xf32, #tpu.memory_space<vmem>>, %arg10: memref<2x32x128xf32, #tpu.memory_space<vmem>>, %arg11: memref<2x1x128xf32, #tpu.memory_space<vmem>>, %arg12: memref<2x128x32xf32, #tpu.memory_space<vmem>>, %arg13: memref<2x1x32xf32, #tpu.memory_space<vmem>>, %arg14: memref<2x1x32xf32, #tpu.memory_space<vmem>>, %arg15: memref<2x1x32xf32, #tpu.memory_space<vmem>>, %arg16: memref<2x11x8xf32, #tpu.memory_space<vmem>>, %arg17: memref<2x11x8xf32, #tpu.memory_space<vmem>>, %arg18: memref<32x32xf32, #tpu.memory_space<vmem>>, %arg19: memref<1x32xf32, #tpu.memory_space<vmem>>, %arg20: memref<32x32xf32, #tpu.memory_space<vmem>>) attributes {dimension_semantics = [], scalar_prefetch = 0 : i64, scratch_operands = 0 : i64, tpu.core_type = #tpu.core_type<tc>} {
    %c0 = arith.constant 0 : index
    %c0_0 = arith.constant 0 : index
    %0 = vector.load %arg1[%c0, %c0_0] : memref<2x1xi32, #tpu.memory_space<vmem>>, vector<2x1xi32>
    %1 = tpu.iota {dimensions = array<i32: 1>} : vector<2x16xi32>
    %2 = vector.broadcast %0 : vector<2x1xi32> to vector<2x16xi32>
    %3 = arith.cmpi slt, %1, %2 : vector<2x16xi32>
    %cst = arith.constant 0.000000e+00 : f32
    %cst_1 = arith.constant -1.000000e+09 : f32
    %4 = vector.broadcast %cst : f32 to vector<2x16xf32>
    %5 = vector.broadcast %cst_1 : f32 to vector<2x16xf32>
    %6 = arith.select %3, %4, %5 : vector<2x16xi1>, vector<2x16xf32>
    %7 = vector.shape_cast %6 : vector<2x16xf32> to vector<2x1x1x16xf32>
    %c0_2 = arith.constant 0 : index
    %c0_3 = arith.constant 0 : index
    %c0_4 = arith.constant 0 : index
    %8 = vector.load %arg2[%c0_2, %c0_3, %c0_4] : memref<2x16x16xi32, #tpu.memory_space<vmem>>, vector<2x16x16xi32>
    %c0_i32 = arith.constant 0 : i32
    %9 = vector.broadcast %c0_i32 : i32 to vector<2x16x16xi32>
    %10 = arith.cmpi eq, %8, %9 : vector<2x16x16xi32>
    %11 = vector.shape_cast %10 : vector<2x16x16xi1> to vector<2x1x16x16xi1>
    %c1_i32 = arith.constant 1 : i32
    %12 = vector.broadcast %c1_i32 : i32 to vector<2x16x16xi32>
    %13 = arith.cmpi eq, %8, %12 : vector<2x16x16xi32>
    %14 = vector.shape_cast %13 : vector<2x16x16xi1> to vector<2x1x16x16xi1>
    %c2_i32 = arith.constant 2 : i32
    %15 = vector.broadcast %c2_i32 : i32 to vector<2x16x16xi32>
    %16 = arith.cmpi eq, %8, %15 : vector<2x16x16xi32>
    %17 = vector.shape_cast %16 : vector<2x16x16xi1> to vector<2x1x16x16xi1>
    %c3_i32 = arith.constant 3 : i32
    %18 = vector.broadcast %c3_i32 : i32 to vector<2x16x16xi32>
    %19 = arith.cmpi eq, %8, %18 : vector<2x16x16xi32>
    %20 = vector.shape_cast %19 : vector<2x16x16xi1> to vector<2x1x16x16xi1>
    %c4_i32 = arith.constant 4 : i32
    %21 = vector.broadcast %c4_i32 : i32 to vector<2x16x16xi32>
    %22 = arith.cmpi eq, %8, %21 : vector<2x16x16xi32>
    %23 = vector.shape_cast %22 : vector<2x16x16xi1> to vector<2x1x16x16xi1>
    %c5_i32 = arith.constant 5 : i32
    %24 = vector.broadcast %c5_i32 : i32 to vector<2x16x16xi32>
    %25 = arith.cmpi eq, %8, %24 : vector<2x16x16xi32>
    %26 = vector.shape_cast %25 : vector<2x16x16xi1> to vector<2x1x16x16xi1>
    %c6_i32 = arith.constant 6 : i32
    %27 = vector.broadcast %c6_i32 : i32 to vector<2x16x16xi32>
    %28 = arith.cmpi eq, %8, %27 : vector<2x16x16xi32>
    %29 = vector.shape_cast %28 : vector<2x16x16xi1> to vector<2x1x16x16xi1>
    %c7_i32 = arith.constant 7 : i32
    %30 = vector.broadcast %c7_i32 : i32 to vector<2x16x16xi32>
    %31 = arith.cmpi eq, %8, %30 : vector<2x16x16xi32>
    %32 = vector.shape_cast %31 : vector<2x16x16xi1> to vector<2x1x16x16xi1>
    %c8_i32 = arith.constant 8 : i32
    %33 = vector.broadcast %c8_i32 : i32 to vector<2x16x16xi32>
    %34 = arith.cmpi eq, %8, %33 : vector<2x16x16xi32>
    %35 = vector.shape_cast %34 : vector<2x16x16xi1> to vector<2x1x16x16xi1>
    %c9_i32 = arith.constant 9 : i32
    %36 = vector.broadcast %c9_i32 : i32 to vector<2x16x16xi32>
    %37 = arith.cmpi eq, %8, %36 : vector<2x16x16xi32>
    %38 = vector.shape_cast %37 : vector<2x16x16xi1> to vector<2x1x16x16xi1>
    %c10_i32 = arith.constant 10 : i32
    %39 = vector.broadcast %c10_i32 : i32 to vector<2x16x16xi32>
    %40 = arith.cmpi eq, %8, %39 : vector<2x16x16xi32>
    %41 = vector.shape_cast %40 : vector<2x16x16xi1> to vector<2x1x16x16xi1>
    %c0_5 = arith.constant 0 : index
    %c0_6 = arith.constant 0 : index
    %42 = vector.load %arg0[%c0_5, %c0_6] : memref<32x32xf32, #tpu.memory_space<vmem>>, vector<32x32xf32>
    %c0_7 = arith.constant 0 : index
    %c0_8 = arith.constant 0 : index
    %c0_9 = arith.constant 0 : index
    %43 = vector.load %arg3[%c0_7, %c0_8, %c0_9] : memref<2x32x32xf32, #tpu.memory_space<vmem>>, vector<1x32x32xf32>
    %44 = vector.shape_cast %43 : vector<1x32x32xf32> to vector<32x32xf32>
    %45 = arith.truncf %42 : vector<32x32xf32> to vector<32x32xbf16>
    %46 = arith.truncf %44 : vector<32x32xf32> to vector<32x32xbf16>
    %cst_10 = arith.constant dense<0.000000e+00> : vector<32x32xf32>
    %47 = tpu.matmul %45, %46, %cst_10 {dimension_numbers = #tpu.dot_dimension_numbers<[1], [0], [0], [1], [0, 0, 1, 1], [], []>} : vector<32x32xbf16>, vector<32x32xbf16>, vector<32x32xf32> -> vector<32x32xf32>
    %48 = vector.shape_cast %47 : vector<32x32xf32> to vector<2x16x32xf32>
    %49 = tpu.transpose %48, [0, 2, 1] : vector<2x16x32xf32> -> vector<2x32x16xf32>
    %50 = vector.shape_cast %49 : vector<2x32x16xf32> to vector<8x8x16xf32>
    %51 = tpu.transpose %50, [0, 2, 1] : vector<8x8x16xf32> -> vector<8x16x8xf32>
    %c0_11 = arith.constant 0 : index
    %c0_12 = arith.constant 0 : index
    %c0_13 = arith.constant 0 : index
    %52 = vector.load %arg4[%c0_11, %c0_12, %c0_13] : memref<2x32x32xf32, #tpu.memory_space<vmem>>, vector<1x32x32xf32>
    %53 = vector.shape_cast %52 : vector<1x32x32xf32> to vector<32x32xf32>
    %54 = arith.truncf %42 : vector<32x32xf32> to vector<32x32xbf16>
    %55 = arith.truncf %53 : vector<32x32xf32> to vector<32x32xbf16>
    %cst_14 = arith.constant dense<0.000000e+00> : vector<32x32xf32>
    %56 = tpu.matmul %54, %55, %cst_14 {dimension_numbers = #tpu.dot_dimension_numbers<[1], [0], [0], [1], [0, 0, 1, 1], [], []>} : vector<32x32xbf16>, vector<32x32xbf16>, vector<32x32xf32> -> vector<32x32xf32>
    %57 = vector.shape_cast %56 : vector<32x32xf32> to vector<2x16x32xf32>
    %58 = tpu.transpose %57, [0, 2, 1] : vector<2x16x32xf32> -> vector<2x32x16xf32>
    %59 = vector.shape_cast %58 : vector<2x32x16xf32> to vector<8x8x16xf32>
    %60 = tpu.transpose %59, [0, 2, 1] : vector<8x8x16xf32> -> vector<8x16x8xf32>
    %c0_15 = arith.constant 0 : index
    %c0_16 = arith.constant 0 : index
    %c0_17 = arith.constant 0 : index
    %61 = vector.load %arg5[%c0_15, %c0_16, %c0_17] : memref<2x32x32xf32, #tpu.memory_space<vmem>>, vector<1x32x32xf32>
    %62 = vector.shape_cast %61 : vector<1x32x32xf32> to vector<32x32xf32>
    %63 = arith.truncf %42 : vector<32x32xf32> to vector<32x32xbf16>
    %64 = arith.truncf %62 : vector<32x32xf32> to vector<32x32xbf16>
    %cst_18 = arith.constant dense<0.000000e+00> : vector<32x32xf32>
    %65 = tpu.matmul %63, %64, %cst_18 {dimension_numbers = #tpu.dot_dimension_numbers<[1], [0], [0], [1], [0, 0, 1, 1], [], []>} : vector<32x32xbf16>, vector<32x32xbf16>, vector<32x32xf32> -> vector<32x32xf32>
    %66 = vector.shape_cast %65 : vector<32x32xf32> to vector<2x16x32xf32>
    %67 = tpu.transpose %66, [0, 2, 1] : vector<2x16x32xf32> -> vector<2x32x16xf32>
    %68 = vector.shape_cast %67 : vector<2x32x16xf32> to vector<8x8x16xf32>
    %69 = tpu.transpose %68, [0, 2, 1] : vector<8x8x16xf32> -> vector<8x16x8xf32>
    %70 = arith.truncf %51 : vector<8x16x8xf32> to vector<8x16x8xbf16>
    %71 = arith.truncf %60 : vector<8x16x8xf32> to vector<8x16x8xbf16>
    "tpu.trace_start"() <{level = 10 : i32, message = "zqd,zkd->zqk"}> : () -> ()
    %cst_19 = arith.constant dense<0.000000e+00> : vector<8x16x16xf32>
    %72 = tpu.matmul %70, %71, %cst_19 {dimension_numbers = #tpu.dot_dimension_numbers<[2], [2], [1], [1], [0, 0, 0, 1, 1, 1], [0], [0]>} : vector<8x16x8xbf16>, vector<8x16x8xbf16>, vector<8x16x16xf32> -> vector<8x16x16xf32>
    "tpu.trace_stop"() : () -> ()
    %73 = vector.shape_cast %72 : vector<8x16x16xf32> to vector<2x4x16x16xf32>
    %74 = vector.shape_cast %51 : vector<8x16x8xf32> to vector<128x8xf32>
    %c0_20 = arith.constant 0 : index
    %c0_21 = arith.constant 0 : index
    %c0_22 = arith.constant 0 : index
    %75 = vector.load %arg16[%c0_20, %c0_21, %c0_22] : memref<2x11x8xf32, #tpu.memory_space<vmem>>, vector<1x11x8xf32>
    %76 = vector.shape_cast %75 : vector<1x11x8xf32> to vector<11x8xf32>
    %77 = arith.truncf %74 : vector<128x8xf32> to vector<128x8xbf16>
    %78 = arith.truncf %76 : vector<11x8xf32> to vector<11x8xbf16>
    "tpu.trace_start"() <{level = 10 : i32, message = "nd,rd->nr"}> : () -> ()
    %cst_23 = arith.constant dense<0.000000e+00> : vector<128x11xf32>
    %79 = tpu.matmul %77, %78, %cst_23 {dimension_numbers = #tpu.dot_dimension_numbers<[1], [1], [0], [0], [0, 0, 1, 0], [], []>} : vector<128x8xbf16>, vector<11x8xbf16>, vector<128x11xf32> -> vector<128x11xf32>
    "tpu.trace_stop"() : () -> ()
    %80 = vector.shape_cast %79 : vector<128x11xf32> to vector<2x4x16x11xf32>
    %cst_24 = arith.constant 0.000000e+00 : f32
    %81 = vector.broadcast %cst_24 : f32 to vector<2x4x16x16xf32>
    %82 = vector.extract_strided_slice %80 {offsets = [0, 0, 0, 0], sizes = [2, 4, 16, 1], strides = [1, 1, 1, 1]} : vector<2x4x16x11xf32> to vector<2x4x16x1xf32>
    %cst_25 = arith.constant 0.000000e+00 : f32
    %83 = vector.shape_cast %11 : vector<2x1x16x16xi1> to vector<2x1x16x16xi1>
    %84 = vector.broadcast %83 : vector<2x1x16x16xi1> to vector<2x4x16x16xi1>
    %85 = vector.shape_cast %82 : vector<2x4x16x1xf32> to vector<2x4x16x1xf32>
    %86 = vector.broadcast %85 : vector<2x4x16x1xf32> to vector<2x4x16x16xf32>
    %87 = vector.broadcast %cst_25 : f32 to vector<2x4x16x16xf32>
    %88 = arith.select %84, %86, %87 : vector<2x4x16x16xi1>, vector<2x4x16x16xf32>
    %89 = arith.addf %81, %88 : vector<2x4x16x16xf32>
    %90 = vector.extract_strided_slice %80 {offsets = [0, 0, 0, 1], sizes = [2, 4, 16, 1], strides = [1, 1, 1, 1]} : vector<2x4x16x11xf32> to vector<2x4x16x1xf32>
    %cst_26 = arith.constant 0.000000e+00 : f32
    %91 = vector.shape_cast %14 : vector<2x1x16x16xi1> to vector<2x1x16x16xi1>
    %92 = vector.broadcast %91 : vector<2x1x16x16xi1> to vector<2x4x16x16xi1>
    %93 = vector.shape_cast %90 : vector<2x4x16x1xf32> to vector<2x4x16x1xf32>
    %94 = vector.broadcast %93 : vector<2x4x16x1xf32> to vector<2x4x16x16xf32>
    %95 = vector.broadcast %cst_26 : f32 to vector<2x4x16x16xf32>
    %96 = arith.select %92, %94, %95 : vector<2x4x16x16xi1>, vector<2x4x16x16xf32>
    %97 = arith.addf %89, %96 : vector<2x4x16x16xf32>
    %98 = vector.extract_strided_slice %80 {offsets = [0, 0, 0, 2], sizes = [2, 4, 16, 1], strides = [1, 1, 1, 1]} : vector<2x4x16x11xf32> to vector<2x4x16x1xf32>
    %cst_27 = arith.constant 0.000000e+00 : f32
    %99 = vector.shape_cast %17 : vector<2x1x16x16xi1> to vector<2x1x16x16xi1>
    %100 = vector.broadcast %99 : vector<2x1x16x16xi1> to vector<2x4x16x16xi1>
    %101 = vector.shape_cast %98 : vector<2x4x16x1xf32> to vector<2x4x16x1xf32>
    %102 = vector.broadcast %101 : vector<2x4x16x1xf32> to vector<2x4x16x16xf32>
    %103 = vector.broadcast %cst_27 : f32 to vector<2x4x16x16xf32>
    %104 = arith.select %100, %102, %103 : vector<2x4x16x16xi1>, vector<2x4x16x16xf32>
    %105 = arith.addf %97, %104 : vector<2x4x16x16xf32>
    %106 = vector.extract_strided_slice %80 {offsets = [0, 0, 0, 3], sizes = [2, 4, 16, 1], strides = [1, 1, 1, 1]} : vector<2x4x16x11xf32> to vector<2x4x16x1xf32>
    %cst_28 = arith.constant 0.000000e+00 : f32
    %107 = vector.shape_cast %20 : vector<2x1x16x16xi1> to vector<2x1x16x16xi1>
    %108 = vector.broadcast %107 : vector<2x1x16x16xi1> to vector<2x4x16x16xi1>
    %109 = vector.shape_cast %106 : vector<2x4x16x1xf32> to vector<2x4x16x1xf32>
    %110 = vector.broadcast %109 : vector<2x4x16x1xf32> to vector<2x4x16x16xf32>
    %111 = vector.broadcast %cst_28 : f32 to vector<2x4x16x16xf32>
    %112 = arith.select %108, %110, %111 : vector<2x4x16x16xi1>, vector<2x4x16x16xf32>
    %113 = arith.addf %105, %112 : vector<2x4x16x16xf32>
    %114 = vector.extract_strided_slice %80 {offsets = [0, 0, 0, 4], sizes = [2, 4, 16, 1], strides = [1, 1, 1, 1]} : vector<2x4x16x11xf32> to vector<2x4x16x1xf32>
    %cst_29 = arith.constant 0.000000e+00 : f32
    %115 = vector.shape_cast %23 : vector<2x1x16x16xi1> to vector<2x1x16x16xi1>
    %116 = vector.broadcast %115 : vector<2x1x16x16xi1> to vector<2x4x16x16xi1>
    %117 = vector.shape_cast %114 : vector<2x4x16x1xf32> to vector<2x4x16x1xf32>
    %118 = vector.broadcast %117 : vector<2x4x16x1xf32> to vector<2x4x16x16xf32>
    %119 = vector.broadcast %cst_29 : f32 to vector<2x4x16x16xf32>
    %120 = arith.select %116, %118, %119 : vector<2x4x16x16xi1>, vector<2x4x16x16xf32>
    %121 = arith.addf %113, %120 : vector<2x4x16x16xf32>
    %122 = vector.extract_strided_slice %80 {offsets = [0, 0, 0, 5], sizes = [2, 4, 16, 1], strides = [1, 1, 1, 1]} : vector<2x4x16x11xf32> to vector<2x4x16x1xf32>
    %cst_30 = arith.constant 0.000000e+00 : f32
    %123 = vector.shape_cast %26 : vector<2x1x16x16xi1> to vector<2x1x16x16xi1>
    %124 = vector.broadcast %123 : vector<2x1x16x16xi1> to vector<2x4x16x16xi1>
    %125 = vector.shape_cast %122 : vector<2x4x16x1xf32> to vector<2x4x16x1xf32>
    %126 = vector.broadcast %125 : vector<2x4x16x1xf32> to vector<2x4x16x16xf32>
    %127 = vector.broadcast %cst_30 : f32 to vector<2x4x16x16xf32>
    %128 = arith.select %124, %126, %127 : vector<2x4x16x16xi1>, vector<2x4x16x16xf32>
    %129 = arith.addf %121, %128 : vector<2x4x16x16xf32>
    %130 = vector.extract_strided_slice %80 {offsets = [0, 0, 0, 6], sizes = [2, 4, 16, 1], strides = [1, 1, 1, 1]} : vector<2x4x16x11xf32> to vector<2x4x16x1xf32>
    %cst_31 = arith.constant 0.000000e+00 : f32
    %131 = vector.shape_cast %29 : vector<2x1x16x16xi1> to vector<2x1x16x16xi1>
    %132 = vector.broadcast %131 : vector<2x1x16x16xi1> to vector<2x4x16x16xi1>
    %133 = vector.shape_cast %130 : vector<2x4x16x1xf32> to vector<2x4x16x1xf32>
    %134 = vector.broadcast %133 : vector<2x4x16x1xf32> to vector<2x4x16x16xf32>
    %135 = vector.broadcast %cst_31 : f32 to vector<2x4x16x16xf32>
    %136 = arith.select %132, %134, %135 : vector<2x4x16x16xi1>, vector<2x4x16x16xf32>
    %137 = arith.addf %129, %136 : vector<2x4x16x16xf32>
    %138 = vector.extract_strided_slice %80 {offsets = [0, 0, 0, 7], sizes = [2, 4, 16, 1], strides = [1, 1, 1, 1]} : vector<2x4x16x11xf32> to vector<2x4x16x1xf32>
    %cst_32 = arith.constant 0.000000e+00 : f32
    %139 = vector.shape_cast %32 : vector<2x1x16x16xi1> to vector<2x1x16x16xi1>
    %140 = vector.broadcast %139 : vector<2x1x16x16xi1> to vector<2x4x16x16xi1>
    %141 = vector.shape_cast %138 : vector<2x4x16x1xf32> to vector<2x4x16x1xf32>
    %142 = vector.broadcast %141 : vector<2x4x16x1xf32> to vector<2x4x16x16xf32>
    %143 = vector.broadcast %cst_32 : f32 to vector<2x4x16x16xf32>
    %144 = arith.select %140, %142, %143 : vector<2x4x16x16xi1>, vector<2x4x16x16xf32>
    %145 = arith.addf %137, %144 : vector<2x4x16x16xf32>
    %146 = vector.extract_strided_slice %80 {offsets = [0, 0, 0, 8], sizes = [2, 4, 16, 1], strides = [1, 1, 1, 1]} : vector<2x4x16x11xf32> to vector<2x4x16x1xf32>
    %cst_33 = arith.constant 0.000000e+00 : f32
    %147 = vector.shape_cast %35 : vector<2x1x16x16xi1> to vector<2x1x16x16xi1>
    %148 = vector.broadcast %147 : vector<2x1x16x16xi1> to vector<2x4x16x16xi1>
    %149 = vector.shape_cast %146 : vector<2x4x16x1xf32> to vector<2x4x16x1xf32>
    %150 = vector.broadcast %149 : vector<2x4x16x1xf32> to vector<2x4x16x16xf32>
    %151 = vector.broadcast %cst_33 : f32 to vector<2x4x16x16xf32>
    %152 = arith.select %148, %150, %151 : vector<2x4x16x16xi1>, vector<2x4x16x16xf32>
    %153 = arith.addf %145, %152 : vector<2x4x16x16xf32>
    %154 = vector.extract_strided_slice %80 {offsets = [0, 0, 0, 9], sizes = [2, 4, 16, 1], strides = [1, 1, 1, 1]} : vector<2x4x16x11xf32> to vector<2x4x16x1xf32>
    %cst_34 = arith.constant 0.000000e+00 : f32
    %155 = vector.shape_cast %38 : vector<2x1x16x16xi1> to vector<2x1x16x16xi1>
    %156 = vector.broadcast %155 : vector<2x1x16x16xi1> to vector<2x4x16x16xi1>
    %157 = vector.shape_cast %154 : vector<2x4x16x1xf32> to vector<2x4x16x1xf32>
    %158 = vector.broadcast %157 : vector<2x4x16x1xf32> to vector<2x4x16x16xf32>
    %159 = vector.broadcast %cst_34 : f32 to vector<2x4x16x16xf32>
    %160 = arith.select %156, %158, %159 : vector<2x4x16x16xi1>, vector<2x4x16x16xf32>
    %161 = arith.addf %153, %160 : vector<2x4x16x16xf32>
    %162 = vector.extract_strided_slice %80 {offsets = [0, 0, 0, 10], sizes = [2, 4, 16, 1], strides = [1, 1, 1, 1]} : vector<2x4x16x11xf32> to vector<2x4x16x1xf32>
    %cst_35 = arith.constant 0.000000e+00 : f32
    %163 = vector.shape_cast %41 : vector<2x1x16x16xi1> to vector<2x1x16x16xi1>
    %164 = vector.broadcast %163 : vector<2x1x16x16xi1> to vector<2x4x16x16xi1>
    %165 = vector.shape_cast %162 : vector<2x4x16x1xf32> to vector<2x4x16x1xf32>
    %166 = vector.broadcast %165 : vector<2x4x16x1xf32> to vector<2x4x16x16xf32>
    %167 = vector.broadcast %cst_35 : f32 to vector<2x4x16x16xf32>
    %168 = arith.select %164, %166, %167 : vector<2x4x16x16xi1>, vector<2x4x16x16xf32>
    %169 = arith.addf %161, %168 : vector<2x4x16x16xf32>
    %170 = arith.addf %73, %169 : vector<2x4x16x16xf32>
    %cst_36 = arith.constant 0.353553385 : f32
    %171 = vector.broadcast %cst_36 : f32 to vector<2x4x16x16xf32>
    %172 = arith.mulf %170, %171 : vector<2x4x16x16xf32>
    %173 = vector.broadcast %7 : vector<2x1x1x16xf32> to vector<2x4x16x16xf32>
    %174 = arith.addf %172, %173 : vector<2x4x16x16xf32>
    %cst_37 = arith.constant dense<0xFF800000> : vector<2x4x16xf32>
    %175 = vector.multi_reduction <maximumf>, %174, %cst_37 [3] : vector<2x4x16x16xf32> to vector<2x4x16xf32>
    %176 = vector.shape_cast %175 : vector<2x4x16xf32> to vector<2x4x16x1xf32>
    %177 = vector.broadcast %176 : vector<2x4x16x1xf32> to vector<2x4x16x16xf32>
    %178 = arith.subf %174, %177 : vector<2x4x16x16xf32>
    %179 = math.exp %178 : vector<2x4x16x16xf32>
    %cst_38 = arith.constant dense<0.000000e+00> : vector<2x4x16xf32>
    %180 = vector.multi_reduction <add>, %179, %cst_38 [3] : vector<2x4x16x16xf32> to vector<2x4x16xf32>
    %181 = vector.shape_cast %180 : vector<2x4x16xf32> to vector<2x4x16x1xf32>
    %182 = tpu.reciprocal %181 {approx = true} : vector<2x4x16x1xf32> -> vector<2x4x16x1xf32>
    %183 = vector.broadcast %182 : vector<2x4x16x1xf32> to vector<2x4x16x16xf32>
    %184 = arith.mulf %179, %183 : vector<2x4x16x16xf32>
    %185 = vector.shape_cast %184 : vector<2x4x16x16xf32> to vector<8x16x16xf32>
    %186 = arith.truncf %185 : vector<8x16x16xf32> to vector<8x16x16xbf16>
    %187 = arith.truncf %69 : vector<8x16x8xf32> to vector<8x16x8xbf16>
    "tpu.trace_start"() <{level = 10 : i32, message = "zqk,zkd->zqd"}> : () -> ()
    %cst_39 = arith.constant dense<0.000000e+00> : vector<8x16x8xf32>
    %188 = tpu.matmul %186, %187, %cst_39 {dimension_numbers = #tpu.dot_dimension_numbers<[2], [1], [1], [2], [0, 0, 0, 1, 1, 2], [0], [0]>} : vector<8x16x16xbf16>, vector<8x16x8xbf16>, vector<8x16x8xf32> -> vector<8x16x8xf32>
    %cst_40 = arith.constant 0.000000e+00 : f32
    "tpu.trace_stop"() : () -> ()
    %189 = vector.shape_cast %11 : vector<2x1x16x16xi1> to vector<2x1x16x16xi1>
    %190 = vector.broadcast %189 : vector<2x1x16x16xi1> to vector<2x4x16x16xi1>
    %191 = vector.broadcast %cst_40 : f32 to vector<2x4x16x16xf32>
    %192 = arith.select %190, %184, %191 : vector<2x4x16x16xi1>, vector<2x4x16x16xf32>
    %cst_41 = arith.constant dense<0.000000e+00> : vector<2x4x16xf32>
    %193 = vector.multi_reduction <add>, %192, %cst_41 [3] : vector<2x4x16x16xf32> to vector<2x4x16xf32>
    %194 = vector.shape_cast %193 : vector<2x4x16xf32> to vector<2x4x16x1xf32>
    %cst_42 = arith.constant 0.000000e+00 : f32
    %195 = vector.shape_cast %14 : vector<2x1x16x16xi1> to vector<2x1x16x16xi1>
    %196 = vector.broadcast %195 : vector<2x1x16x16xi1> to vector<2x4x16x16xi1>
    %197 = vector.broadcast %cst_42 : f32 to vector<2x4x16x16xf32>
    %198 = arith.select %196, %184, %197 : vector<2x4x16x16xi1>, vector<2x4x16x16xf32>
    %cst_43 = arith.constant dense<0.000000e+00> : vector<2x4x16xf32>
    %199 = vector.multi_reduction <add>, %198, %cst_43 [3] : vector<2x4x16x16xf32> to vector<2x4x16xf32>
    %200 = vector.shape_cast %199 : vector<2x4x16xf32> to vector<2x4x16x1xf32>
    %cst_44 = arith.constant 0.000000e+00 : f32
    %201 = vector.shape_cast %17 : vector<2x1x16x16xi1> to vector<2x1x16x16xi1>
    %202 = vector.broadcast %201 : vector<2x1x16x16xi1> to vector<2x4x16x16xi1>
    %203 = vector.broadcast %cst_44 : f32 to vector<2x4x16x16xf32>
    %204 = arith.select %202, %184, %203 : vector<2x4x16x16xi1>, vector<2x4x16x16xf32>
    %cst_45 = arith.constant dense<0.000000e+00> : vector<2x4x16xf32>
    %205 = vector.multi_reduction <add>, %204, %cst_45 [3] : vector<2x4x16x16xf32> to vector<2x4x16xf32>
    %206 = vector.shape_cast %205 : vector<2x4x16xf32> to vector<2x4x16x1xf32>
    %cst_46 = arith.constant 0.000000e+00 : f32
    %207 = vector.shape_cast %20 : vector<2x1x16x16xi1> to vector<2x1x16x16xi1>
    %208 = vector.broadcast %207 : vector<2x1x16x16xi1> to vector<2x4x16x16xi1>
    %209 = vector.broadcast %cst_46 : f32 to vector<2x4x16x16xf32>
    %210 = arith.select %208, %184, %209 : vector<2x4x16x16xi1>, vector<2x4x16x16xf32>
    %cst_47 = arith.constant dense<0.000000e+00> : vector<2x4x16xf32>
    %211 = vector.multi_reduction <add>, %210, %cst_47 [3] : vector<2x4x16x16xf32> to vector<2x4x16xf32>
    %212 = vector.shape_cast %211 : vector<2x4x16xf32> to vector<2x4x16x1xf32>
    %cst_48 = arith.constant 0.000000e+00 : f32
    %213 = vector.shape_cast %23 : vector<2x1x16x16xi1> to vector<2x1x16x16xi1>
    %214 = vector.broadcast %213 : vector<2x1x16x16xi1> to vector<2x4x16x16xi1>
    %215 = vector.broadcast %cst_48 : f32 to vector<2x4x16x16xf32>
    %216 = arith.select %214, %184, %215 : vector<2x4x16x16xi1>, vector<2x4x16x16xf32>
    %cst_49 = arith.constant dense<0.000000e+00> : vector<2x4x16xf32>
    %217 = vector.multi_reduction <add>, %216, %cst_49 [3] : vector<2x4x16x16xf32> to vector<2x4x16xf32>
    %218 = vector.shape_cast %217 : vector<2x4x16xf32> to vector<2x4x16x1xf32>
    %cst_50 = arith.constant 0.000000e+00 : f32
    %219 = vector.shape_cast %26 : vector<2x1x16x16xi1> to vector<2x1x16x16xi1>
    %220 = vector.broadcast %219 : vector<2x1x16x16xi1> to vector<2x4x16x16xi1>
    %221 = vector.broadcast %cst_50 : f32 to vector<2x4x16x16xf32>
    %222 = arith.select %220, %184, %221 : vector<2x4x16x16xi1>, vector<2x4x16x16xf32>
    %cst_51 = arith.constant dense<0.000000e+00> : vector<2x4x16xf32>
    %223 = vector.multi_reduction <add>, %222, %cst_51 [3] : vector<2x4x16x16xf32> to vector<2x4x16xf32>
    %224 = vector.shape_cast %223 : vector<2x4x16xf32> to vector<2x4x16x1xf32>
    %cst_52 = arith.constant 0.000000e+00 : f32
    %225 = vector.shape_cast %29 : vector<2x1x16x16xi1> to vector<2x1x16x16xi1>
    %226 = vector.broadcast %225 : vector<2x1x16x16xi1> to vector<2x4x16x16xi1>
    %227 = vector.broadcast %cst_52 : f32 to vector<2x4x16x16xf32>
    %228 = arith.select %226, %184, %227 : vector<2x4x16x16xi1>, vector<2x4x16x16xf32>
    %cst_53 = arith.constant dense<0.000000e+00> : vector<2x4x16xf32>
    %229 = vector.multi_reduction <add>, %228, %cst_53 [3] : vector<2x4x16x16xf32> to vector<2x4x16xf32>
    %230 = vector.shape_cast %229 : vector<2x4x16xf32> to vector<2x4x16x1xf32>
    %cst_54 = arith.constant 0.000000e+00 : f32
    %231 = vector.shape_cast %32 : vector<2x1x16x16xi1> to vector<2x1x16x16xi1>
    %232 = vector.broadcast %231 : vector<2x1x16x16xi1> to vector<2x4x16x16xi1>
    %233 = vector.broadcast %cst_54 : f32 to vector<2x4x16x16xf32>
    %234 = arith.select %232, %184, %233 : vector<2x4x16x16xi1>, vector<2x4x16x16xf32>
    %cst_55 = arith.constant dense<0.000000e+00> : vector<2x4x16xf32>
    %235 = vector.multi_reduction <add>, %234, %cst_55 [3] : vector<2x4x16x16xf32> to vector<2x4x16xf32>
    %236 = vector.shape_cast %235 : vector<2x4x16xf32> to vector<2x4x16x1xf32>
    %cst_56 = arith.constant 0.000000e+00 : f32
    %237 = vector.shape_cast %35 : vector<2x1x16x16xi1> to vector<2x1x16x16xi1>
    %238 = vector.broadcast %237 : vector<2x1x16x16xi1> to vector<2x4x16x16xi1>
    %239 = vector.broadcast %cst_56 : f32 to vector<2x4x16x16xf32>
    %240 = arith.select %238, %184, %239 : vector<2x4x16x16xi1>, vector<2x4x16x16xf32>
    %cst_57 = arith.constant dense<0.000000e+00> : vector<2x4x16xf32>
    %241 = vector.multi_reduction <add>, %240, %cst_57 [3] : vector<2x4x16x16xf32> to vector<2x4x16xf32>
    %242 = vector.shape_cast %241 : vector<2x4x16xf32> to vector<2x4x16x1xf32>
    %cst_58 = arith.constant 0.000000e+00 : f32
    %243 = vector.shape_cast %38 : vector<2x1x16x16xi1> to vector<2x1x16x16xi1>
    %244 = vector.broadcast %243 : vector<2x1x16x16xi1> to vector<2x4x16x16xi1>
    %245 = vector.broadcast %cst_58 : f32 to vector<2x4x16x16xf32>
    %246 = arith.select %244, %184, %245 : vector<2x4x16x16xi1>, vector<2x4x16x16xf32>
    %cst_59 = arith.constant dense<0.000000e+00> : vector<2x4x16xf32>
    %247 = vector.multi_reduction <add>, %246, %cst_59 [3] : vector<2x4x16x16xf32> to vector<2x4x16xf32>
    %248 = vector.shape_cast %247 : vector<2x4x16xf32> to vector<2x4x16x1xf32>
    %cst_60 = arith.constant 0.000000e+00 : f32
    %249 = vector.shape_cast %41 : vector<2x1x16x16xi1> to vector<2x1x16x16xi1>
    %250 = vector.broadcast %249 : vector<2x1x16x16xi1> to vector<2x4x16x16xi1>
    %251 = vector.broadcast %cst_60 : f32 to vector<2x4x16x16xf32>
    %252 = arith.select %250, %184, %251 : vector<2x4x16x16xi1>, vector<2x4x16x16xf32>
    %cst_61 = arith.constant dense<0.000000e+00> : vector<2x4x16xf32>
    %253 = vector.multi_reduction <add>, %252, %cst_61 [3] : vector<2x4x16x16xf32> to vector<2x4x16xf32>
    %254 = vector.shape_cast %253 : vector<2x4x16xf32> to vector<2x4x16x1xf32>
    %255 = tpu.concatenate %194, %200, %206, %212, %218, %224, %230, %236, %242, %248, %254 in 3 : vector<2x4x16x1xf32>, vector<2x4x16x1xf32>, vector<2x4x16x1xf32>, vector<2x4x16x1xf32>, vector<2x4x16x1xf32>, vector<2x4x16x1xf32>, vector<2x4x16x1xf32>, vector<2x4x16x1xf32>, vector<2x4x16x1xf32>, vector<2x4x16x1xf32>, vector<2x4x16x1xf32> -> vector<2x4x16x11xf32>
    %256 = vector.shape_cast %255 : vector<2x4x16x11xf32> to vector<128x11xf32>
    %c0_62 = arith.constant 0 : index
    %c0_63 = arith.constant 0 : index
    %c0_64 = arith.constant 0 : index
    %257 = vector.load %arg17[%c0_62, %c0_63, %c0_64] : memref<2x11x8xf32, #tpu.memory_space<vmem>>, vector<1x11x8xf32>
    %258 = vector.shape_cast %257 : vector<1x11x8xf32> to vector<11x8xf32>
    %259 = arith.truncf %256 : vector<128x11xf32> to vector<128x11xbf16>
    %260 = arith.truncf %258 : vector<11x8xf32> to vector<11x8xbf16>
    "tpu.trace_start"() <{level = 10 : i32, message = "nr,rd->nd"}> : () -> ()
    %cst_65 = arith.constant dense<0.000000e+00> : vector<128x8xf32>
    %261 = tpu.matmul %259, %260, %cst_65 {dimension_numbers = #tpu.dot_dimension_numbers<[1], [0], [0], [1], [0, 0, 1, 1], [], []>} : vector<128x11xbf16>, vector<11x8xbf16>, vector<128x8xf32> -> vector<128x8xf32>
    "tpu.trace_stop"() : () -> ()
    %262 = vector.shape_cast %261 : vector<128x8xf32> to vector<8x16x8xf32>
    %263 = arith.addf %188, %262 : vector<8x16x8xf32>
    %264 = tpu.transpose %263, [0, 2, 1] : vector<8x16x8xf32> -> vector<8x8x16xf32>
    %265 = vector.shape_cast %264 : vector<8x8x16xf32> to vector<2x32x16xf32>
    %266 = tpu.transpose %265, [0, 2, 1] : vector<2x32x16xf32> -> vector<2x16x32xf32>
    %267 = vector.shape_cast %266 : vector<2x16x32xf32> to vector<32x32xf32>
    %c0_66 = arith.constant 0 : index
    %c0_67 = arith.constant 0 : index
    %c0_68 = arith.constant 0 : index
    %268 = vector.load %arg6[%c0_66, %c0_67, %c0_68] : memref<2x32x32xf32, #tpu.memory_space<vmem>>, vector<1x32x32xf32>
    %269 = vector.shape_cast %268 : vector<1x32x32xf32> to vector<32x32xf32>
    %270 = arith.truncf %267 : vector<32x32xf32> to vector<32x32xbf16>
    %271 = arith.truncf %269 : vector<32x32xf32> to vector<32x32xbf16>
    %cst_69 = arith.constant dense<0.000000e+00> : vector<32x32xf32>
    %272 = tpu.matmul %270, %271, %cst_69 {dimension_numbers = #tpu.dot_dimension_numbers<[1], [0], [0], [1], [0, 0, 1, 1], [], []>} : vector<32x32xbf16>, vector<32x32xbf16>, vector<32x32xf32> -> vector<32x32xf32>
    %c0_70 = arith.constant 0 : index
    %c0_71 = arith.constant 0 : index
    %c0_72 = arith.constant 0 : index
    %273 = vector.load %arg7[%c0_70, %c0_71, %c0_72] : memref<2x1x32xf32, #tpu.memory_space<vmem>>, vector<1x1x32xf32>
    %274 = vector.shape_cast %273 : vector<1x1x32xf32> to vector<1x32xf32>
    %275 = vector.broadcast %274 : vector<1x32xf32> to vector<32x32xf32>
    %276 = arith.addf %272, %275 : vector<32x32xf32>
    %277 = arith.addf %42, %276 : vector<32x32xf32>
    %c0_73 = arith.constant 0 : index
    %c0_74 = arith.constant 0 : index
    %c0_75 = arith.constant 0 : index
    %278 = vector.load %arg8[%c0_73, %c0_74, %c0_75] : memref<2x1x32xf32, #tpu.memory_space<vmem>>, vector<1x1x32xf32>
    %279 = vector.shape_cast %278 : vector<1x1x32xf32> to vector<1x32xf32>
    %c0_76 = arith.constant 0 : index
    %c0_77 = arith.constant 0 : index
    %c0_78 = arith.constant 0 : index
    %280 = vector.load %arg9[%c0_76, %c0_77, %c0_78] : memref<2x1x32xf32, #tpu.memory_space<vmem>>, vector<1x1x32xf32>
    %281 = vector.shape_cast %280 : vector<1x1x32xf32> to vector<1x32xf32>
    %cst_79 = arith.constant dense<0.000000e+00> : vector<32xf32>
    %282 = vector.multi_reduction <add>, %277, %cst_79 [1] : vector<32x32xf32> to vector<32xf32>
    %283 = vector.shape_cast %282 : vector<32xf32> to vector<32x1xf32>
    %cst_80 = arith.constant 3.200000e+01 : f32
    %284 = vector.broadcast %cst_80 : f32 to vector<32x1xf32>
    %285 = arith.divf %283, %284 : vector<32x1xf32>
    %286 = vector.broadcast %285 : vector<32x1xf32> to vector<32x32xf32>
    %287 = arith.subf %277, %286 : vector<32x32xf32>
    %288 = vector.broadcast %285 : vector<32x1xf32> to vector<32x32xf32>
    %289 = arith.subf %277, %288 : vector<32x32xf32>
    %290 = arith.mulf %287, %289 : vector<32x32xf32>
    %cst_81 = arith.constant dense<0.000000e+00> : vector<32xf32>
    %291 = vector.multi_reduction <add>, %290, %cst_81 [1] : vector<32x32xf32> to vector<32xf32>
    %292 = vector.shape_cast %291 : vector<32xf32> to vector<32x1xf32>
    %cst_82 = arith.constant 3.200000e+01 : f32
    %293 = vector.broadcast %cst_82 : f32 to vector<32x1xf32>
    %294 = arith.divf %292, %293 : vector<32x1xf32>
    %295 = vector.broadcast %285 : vector<32x1xf32> to vector<32x32xf32>
    %296 = arith.subf %277, %295 : vector<32x32xf32>
    %cst_83 = arith.constant 9.99999974E-6 : f32
    %297 = vector.broadcast %cst_83 : f32 to vector<32x1xf32>
    %298 = arith.addf %294, %297 : vector<32x1xf32>
    %299 = math.rsqrt %298 : vector<32x1xf32>
    %300 = vector.broadcast %299 : vector<32x1xf32> to vector<32x32xf32>
    %301 = arith.mulf %296, %300 : vector<32x32xf32>
    %302 = vector.broadcast %279 : vector<1x32xf32> to vector<32x32xf32>
    %303 = arith.mulf %301, %302 : vector<32x32xf32>
    %304 = vector.broadcast %281 : vector<1x32xf32> to vector<32x32xf32>
    %305 = arith.addf %303, %304 : vector<32x32xf32>
    %c0_84 = arith.constant 0 : index
    %c0_85 = arith.constant 0 : index
    %c0_86 = arith.constant 0 : index
    %306 = vector.load %arg10[%c0_84, %c0_85, %c0_86] : memref<2x32x128xf32, #tpu.memory_space<vmem>>, vector<1x32x128xf32>
    %307 = vector.shape_cast %306 : vector<1x32x128xf32> to vector<32x128xf32>
    %308 = arith.truncf %305 : vector<32x32xf32> to vector<32x32xbf16>
    %309 = arith.truncf %307 : vector<32x128xf32> to vector<32x128xbf16>
    %cst_87 = arith.constant dense<0.000000e+00> : vector<32x128xf32>
    %310 = tpu.matmul %308, %309, %cst_87 {dimension_numbers = #tpu.dot_dimension_numbers<[1], [0], [0], [1], [0, 0, 1, 1], [], []>} : vector<32x32xbf16>, vector<32x128xbf16>, vector<32x128xf32> -> vector<32x128xf32>
    %c0_88 = arith.constant 0 : index
    %c0_89 = arith.constant 0 : index
    %c0_90 = arith.constant 0 : index
    %311 = vector.load %arg11[%c0_88, %c0_89, %c0_90] : memref<2x1x128xf32, #tpu.memory_space<vmem>>, vector<1x1x128xf32>
    %312 = vector.shape_cast %311 : vector<1x1x128xf32> to vector<1x128xf32>
    %313 = vector.broadcast %312 : vector<1x128xf32> to vector<32x128xf32>
    %314 = arith.addf %310, %313 : vector<32x128xf32>
    %cst_91 = arith.constant 0.000000e+00 : f32
    %315 = vector.broadcast %cst_91 : f32 to vector<32x128xf32>
    %316 = arith.maximumf %314, %315 : vector<32x128xf32>
    %c0_92 = arith.constant 0 : index
    %c0_93 = arith.constant 0 : index
    %c0_94 = arith.constant 0 : index
    %317 = vector.load %arg12[%c0_92, %c0_93, %c0_94] : memref<2x128x32xf32, #tpu.memory_space<vmem>>, vector<1x128x32xf32>
    %318 = vector.shape_cast %317 : vector<1x128x32xf32> to vector<128x32xf32>
    %319 = arith.truncf %316 : vector<32x128xf32> to vector<32x128xbf16>
    %320 = arith.truncf %318 : vector<128x32xf32> to vector<128x32xbf16>
    %cst_95 = arith.constant dense<0.000000e+00> : vector<32x32xf32>
    %321 = tpu.matmul %319, %320, %cst_95 {dimension_numbers = #tpu.dot_dimension_numbers<[1], [0], [0], [1], [0, 0, 1, 1], [], []>} : vector<32x128xbf16>, vector<128x32xbf16>, vector<32x32xf32> -> vector<32x32xf32>
    %c0_96 = arith.constant 0 : index
    %c0_97 = arith.constant 0 : index
    %c0_98 = arith.constant 0 : index
    %322 = vector.load %arg13[%c0_96, %c0_97, %c0_98] : memref<2x1x32xf32, #tpu.memory_space<vmem>>, vector<1x1x32xf32>
    %323 = vector.shape_cast %322 : vector<1x1x32xf32> to vector<1x32xf32>
    %324 = vector.broadcast %323 : vector<1x32xf32> to vector<32x32xf32>
    %325 = arith.addf %321, %324 : vector<32x32xf32>
    %326 = arith.addf %305, %325 : vector<32x32xf32>
    %c0_99 = arith.constant 0 : index
    %c0_100 = arith.constant 0 : index
    %c0_101 = arith.constant 0 : index
    %327 = vector.load %arg14[%c0_99, %c0_100, %c0_101] : memref<2x1x32xf32, #tpu.memory_space<vmem>>, vector<1x1x32xf32>
    %328 = vector.shape_cast %327 : vector<1x1x32xf32> to vector<1x32xf32>
    %c0_102 = arith.constant 0 : index
    %c0_103 = arith.constant 0 : index
    %c0_104 = arith.constant 0 : index
    %329 = vector.load %arg15[%c0_102, %c0_103, %c0_104] : memref<2x1x32xf32, #tpu.memory_space<vmem>>, vector<1x1x32xf32>
    %330 = vector.shape_cast %329 : vector<1x1x32xf32> to vector<1x32xf32>
    %cst_105 = arith.constant dense<0.000000e+00> : vector<32xf32>
    %331 = vector.multi_reduction <add>, %326, %cst_105 [1] : vector<32x32xf32> to vector<32xf32>
    %332 = vector.shape_cast %331 : vector<32xf32> to vector<32x1xf32>
    %cst_106 = arith.constant 3.200000e+01 : f32
    %333 = vector.broadcast %cst_106 : f32 to vector<32x1xf32>
    %334 = arith.divf %332, %333 : vector<32x1xf32>
    %335 = vector.broadcast %334 : vector<32x1xf32> to vector<32x32xf32>
    %336 = arith.subf %326, %335 : vector<32x32xf32>
    %337 = vector.broadcast %334 : vector<32x1xf32> to vector<32x32xf32>
    %338 = arith.subf %326, %337 : vector<32x32xf32>
    %339 = arith.mulf %336, %338 : vector<32x32xf32>
    %cst_107 = arith.constant dense<0.000000e+00> : vector<32xf32>
    %340 = vector.multi_reduction <add>, %339, %cst_107 [1] : vector<32x32xf32> to vector<32xf32>
    %341 = vector.shape_cast %340 : vector<32xf32> to vector<32x1xf32>
    %cst_108 = arith.constant 3.200000e+01 : f32
    %342 = vector.broadcast %cst_108 : f32 to vector<32x1xf32>
    %343 = arith.divf %341, %342 : vector<32x1xf32>
    %344 = vector.broadcast %334 : vector<32x1xf32> to vector<32x32xf32>
    %345 = arith.subf %326, %344 : vector<32x32xf32>
    %cst_109 = arith.constant 9.99999974E-6 : f32
    %346 = vector.broadcast %cst_109 : f32 to vector<32x1xf32>
    %347 = arith.addf %343, %346 : vector<32x1xf32>
    %348 = math.rsqrt %347 : vector<32x1xf32>
    %349 = vector.broadcast %348 : vector<32x1xf32> to vector<32x32xf32>
    %350 = arith.mulf %345, %349 : vector<32x32xf32>
    %351 = vector.broadcast %328 : vector<1x32xf32> to vector<32x32xf32>
    %352 = arith.mulf %350, %351 : vector<32x32xf32>
    %353 = vector.broadcast %330 : vector<1x32xf32> to vector<32x32xf32>
    %354 = arith.addf %352, %353 : vector<32x32xf32>
    %c1 = arith.constant 1 : index
    %c0_110 = arith.constant 0 : index
    %c0_111 = arith.constant 0 : index
    %355 = vector.load %arg3[%c1, %c0_110, %c0_111] : memref<2x32x32xf32, #tpu.memory_space<vmem>>, vector<1x32x32xf32>
    %356 = vector.shape_cast %355 : vector<1x32x32xf32> to vector<32x32xf32>
    %357 = arith.truncf %354 : vector<32x32xf32> to vector<32x32xbf16>
    %358 = arith.truncf %356 : vector<32x32xf32> to vector<32x32xbf16>
    %cst_112 = arith.constant dense<0.000000e+00> : vector<32x32xf32>
    %359 = tpu.matmul %357, %358, %cst_112 {dimension_numbers = #tpu.dot_dimension_numbers<[1], [0], [0], [1], [0, 0, 1, 1], [], []>} : vector<32x32xbf16>, vector<32x32xbf16>, vector<32x32xf32> -> vector<32x32xf32>
    %360 = vector.shape_cast %359 : vector<32x32xf32> to vector<2x16x32xf32>
    %361 = tpu.transpose %360, [0, 2, 1] : vector<2x16x32xf32> -> vector<2x32x16xf32>
    %362 = vector.shape_cast %361 : vector<2x32x16xf32> to vector<8x8x16xf32>
    %363 = tpu.transpose %362, [0, 2, 1] : vector<8x8x16xf32> -> vector<8x16x8xf32>
    %c1_113 = arith.constant 1 : index
    %c0_114 = arith.constant 0 : index
    %c0_115 = arith.constant 0 : index
    %364 = vector.load %arg4[%c1_113, %c0_114, %c0_115] : memref<2x32x32xf32, #tpu.memory_space<vmem>>, vector<1x32x32xf32>
    %365 = vector.shape_cast %364 : vector<1x32x32xf32> to vector<32x32xf32>
    %366 = arith.truncf %354 : vector<32x32xf32> to vector<32x32xbf16>
    %367 = arith.truncf %365 : vector<32x32xf32> to vector<32x32xbf16>
    %cst_116 = arith.constant dense<0.000000e+00> : vector<32x32xf32>
    %368 = tpu.matmul %366, %367, %cst_116 {dimension_numbers = #tpu.dot_dimension_numbers<[1], [0], [0], [1], [0, 0, 1, 1], [], []>} : vector<32x32xbf16>, vector<32x32xbf16>, vector<32x32xf32> -> vector<32x32xf32>
    %369 = vector.shape_cast %368 : vector<32x32xf32> to vector<2x16x32xf32>
    %370 = tpu.transpose %369, [0, 2, 1] : vector<2x16x32xf32> -> vector<2x32x16xf32>
    %371 = vector.shape_cast %370 : vector<2x32x16xf32> to vector<8x8x16xf32>
    %372 = tpu.transpose %371, [0, 2, 1] : vector<8x8x16xf32> -> vector<8x16x8xf32>
    %c1_117 = arith.constant 1 : index
    %c0_118 = arith.constant 0 : index
    %c0_119 = arith.constant 0 : index
    %373 = vector.load %arg5[%c1_117, %c0_118, %c0_119] : memref<2x32x32xf32, #tpu.memory_space<vmem>>, vector<1x32x32xf32>
    %374 = vector.shape_cast %373 : vector<1x32x32xf32> to vector<32x32xf32>
    %375 = arith.truncf %354 : vector<32x32xf32> to vector<32x32xbf16>
    %376 = arith.truncf %374 : vector<32x32xf32> to vector<32x32xbf16>
    %cst_120 = arith.constant dense<0.000000e+00> : vector<32x32xf32>
    %377 = tpu.matmul %375, %376, %cst_120 {dimension_numbers = #tpu.dot_dimension_numbers<[1], [0], [0], [1], [0, 0, 1, 1], [], []>} : vector<32x32xbf16>, vector<32x32xbf16>, vector<32x32xf32> -> vector<32x32xf32>
    %378 = vector.shape_cast %377 : vector<32x32xf32> to vector<2x16x32xf32>
    %379 = tpu.transpose %378, [0, 2, 1] : vector<2x16x32xf32> -> vector<2x32x16xf32>
    %380 = vector.shape_cast %379 : vector<2x32x16xf32> to vector<8x8x16xf32>
    %381 = tpu.transpose %380, [0, 2, 1] : vector<8x8x16xf32> -> vector<8x16x8xf32>
    %382 = arith.truncf %363 : vector<8x16x8xf32> to vector<8x16x8xbf16>
    %383 = arith.truncf %372 : vector<8x16x8xf32> to vector<8x16x8xbf16>
    "tpu.trace_start"() <{level = 10 : i32, message = "zqd,zkd->zqk"}> : () -> ()
    %cst_121 = arith.constant dense<0.000000e+00> : vector<8x16x16xf32>
    %384 = tpu.matmul %382, %383, %cst_121 {dimension_numbers = #tpu.dot_dimension_numbers<[2], [2], [1], [1], [0, 0, 0, 1, 1, 1], [0], [0]>} : vector<8x16x8xbf16>, vector<8x16x8xbf16>, vector<8x16x16xf32> -> vector<8x16x16xf32>
    "tpu.trace_stop"() : () -> ()
    %385 = vector.shape_cast %384 : vector<8x16x16xf32> to vector<2x4x16x16xf32>
    %386 = vector.shape_cast %363 : vector<8x16x8xf32> to vector<128x8xf32>
    %c1_122 = arith.constant 1 : index
    %c0_123 = arith.constant 0 : index
    %c0_124 = arith.constant 0 : index
    %387 = vector.load %arg16[%c1_122, %c0_123, %c0_124] : memref<2x11x8xf32, #tpu.memory_space<vmem>>, vector<1x11x8xf32>
    %388 = vector.shape_cast %387 : vector<1x11x8xf32> to vector<11x8xf32>
    %389 = arith.truncf %386 : vector<128x8xf32> to vector<128x8xbf16>
    %390 = arith.truncf %388 : vector<11x8xf32> to vector<11x8xbf16>
    "tpu.trace_start"() <{level = 10 : i32, message = "nd,rd->nr"}> : () -> ()
    %cst_125 = arith.constant dense<0.000000e+00> : vector<128x11xf32>
    %391 = tpu.matmul %389, %390, %cst_125 {dimension_numbers = #tpu.dot_dimension_numbers<[1], [1], [0], [0], [0, 0, 1, 0], [], []>} : vector<128x8xbf16>, vector<11x8xbf16>, vector<128x11xf32> -> vector<128x11xf32>
    "tpu.trace_stop"() : () -> ()
    %392 = vector.shape_cast %391 : vector<128x11xf32> to vector<2x4x16x11xf32>
    %cst_126 = arith.constant 0.000000e+00 : f32
    %393 = vector.broadcast %cst_126 : f32 to vector<2x4x16x16xf32>
    %394 = vector.extract_strided_slice %392 {offsets = [0, 0, 0, 0], sizes = [2, 4, 16, 1], strides = [1, 1, 1, 1]} : vector<2x4x16x11xf32> to vector<2x4x16x1xf32>
    %cst_127 = arith.constant 0.000000e+00 : f32
    %395 = vector.shape_cast %11 : vector<2x1x16x16xi1> to vector<2x1x16x16xi1>
    %396 = vector.broadcast %395 : vector<2x1x16x16xi1> to vector<2x4x16x16xi1>
    %397 = vector.shape_cast %394 : vector<2x4x16x1xf32> to vector<2x4x16x1xf32>
    %398 = vector.broadcast %397 : vector<2x4x16x1xf32> to vector<2x4x16x16xf32>
    %399 = vector.broadcast %cst_127 : f32 to vector<2x4x16x16xf32>
    %400 = arith.select %396, %398, %399 : vector<2x4x16x16xi1>, vector<2x4x16x16xf32>
    %401 = arith.addf %393, %400 : vector<2x4x16x16xf32>
    %402 = vector.extract_strided_slice %392 {offsets = [0, 0, 0, 1], sizes = [2, 4, 16, 1], strides = [1, 1, 1, 1]} : vector<2x4x16x11xf32> to vector<2x4x16x1xf32>
    %cst_128 = arith.constant 0.000000e+00 : f32
    %403 = vector.shape_cast %14 : vector<2x1x16x16xi1> to vector<2x1x16x16xi1>
    %404 = vector.broadcast %403 : vector<2x1x16x16xi1> to vector<2x4x16x16xi1>
    %405 = vector.shape_cast %402 : vector<2x4x16x1xf32> to vector<2x4x16x1xf32>
    %406 = vector.broadcast %405 : vector<2x4x16x1xf32> to vector<2x4x16x16xf32>
    %407 = vector.broadcast %cst_128 : f32 to vector<2x4x16x16xf32>
    %408 = arith.select %404, %406, %407 : vector<2x4x16x16xi1>, vector<2x4x16x16xf32>
    %409 = arith.addf %401, %408 : vector<2x4x16x16xf32>
    %410 = vector.extract_strided_slice %392 {offsets = [0, 0, 0, 2], sizes = [2, 4, 16, 1], strides = [1, 1, 1, 1]} : vector<2x4x16x11xf32> to vector<2x4x16x1xf32>
    %cst_129 = arith.constant 0.000000e+00 : f32
    %411 = vector.shape_cast %17 : vector<2x1x16x16xi1> to vector<2x1x16x16xi1>
    %412 = vector.broadcast %411 : vector<2x1x16x16xi1> to vector<2x4x16x16xi1>
    %413 = vector.shape_cast %410 : vector<2x4x16x1xf32> to vector<2x4x16x1xf32>
    %414 = vector.broadcast %413 : vector<2x4x16x1xf32> to vector<2x4x16x16xf32>
    %415 = vector.broadcast %cst_129 : f32 to vector<2x4x16x16xf32>
    %416 = arith.select %412, %414, %415 : vector<2x4x16x16xi1>, vector<2x4x16x16xf32>
    %417 = arith.addf %409, %416 : vector<2x4x16x16xf32>
    %418 = vector.extract_strided_slice %392 {offsets = [0, 0, 0, 3], sizes = [2, 4, 16, 1], strides = [1, 1, 1, 1]} : vector<2x4x16x11xf32> to vector<2x4x16x1xf32>
    %cst_130 = arith.constant 0.000000e+00 : f32
    %419 = vector.shape_cast %20 : vector<2x1x16x16xi1> to vector<2x1x16x16xi1>
    %420 = vector.broadcast %419 : vector<2x1x16x16xi1> to vector<2x4x16x16xi1>
    %421 = vector.shape_cast %418 : vector<2x4x16x1xf32> to vector<2x4x16x1xf32>
    %422 = vector.broadcast %421 : vector<2x4x16x1xf32> to vector<2x4x16x16xf32>
    %423 = vector.broadcast %cst_130 : f32 to vector<2x4x16x16xf32>
    %424 = arith.select %420, %422, %423 : vector<2x4x16x16xi1>, vector<2x4x16x16xf32>
    %425 = arith.addf %417, %424 : vector<2x4x16x16xf32>
    %426 = vector.extract_strided_slice %392 {offsets = [0, 0, 0, 4], sizes = [2, 4, 16, 1], strides = [1, 1, 1, 1]} : vector<2x4x16x11xf32> to vector<2x4x16x1xf32>
    %cst_131 = arith.constant 0.000000e+00 : f32
    %427 = vector.shape_cast %23 : vector<2x1x16x16xi1> to vector<2x1x16x16xi1>
    %428 = vector.broadcast %427 : vector<2x1x16x16xi1> to vector<2x4x16x16xi1>
    %429 = vector.shape_cast %426 : vector<2x4x16x1xf32> to vector<2x4x16x1xf32>
    %430 = vector.broadcast %429 : vector<2x4x16x1xf32> to vector<2x4x16x16xf32>
    %431 = vector.broadcast %cst_131 : f32 to vector<2x4x16x16xf32>
    %432 = arith.select %428, %430, %431 : vector<2x4x16x16xi1>, vector<2x4x16x16xf32>
    %433 = arith.addf %425, %432 : vector<2x4x16x16xf32>
    %434 = vector.extract_strided_slice %392 {offsets = [0, 0, 0, 5], sizes = [2, 4, 16, 1], strides = [1, 1, 1, 1]} : vector<2x4x16x11xf32> to vector<2x4x16x1xf32>
    %cst_132 = arith.constant 0.000000e+00 : f32
    %435 = vector.shape_cast %26 : vector<2x1x16x16xi1> to vector<2x1x16x16xi1>
    %436 = vector.broadcast %435 : vector<2x1x16x16xi1> to vector<2x4x16x16xi1>
    %437 = vector.shape_cast %434 : vector<2x4x16x1xf32> to vector<2x4x16x1xf32>
    %438 = vector.broadcast %437 : vector<2x4x16x1xf32> to vector<2x4x16x16xf32>
    %439 = vector.broadcast %cst_132 : f32 to vector<2x4x16x16xf32>
    %440 = arith.select %436, %438, %439 : vector<2x4x16x16xi1>, vector<2x4x16x16xf32>
    %441 = arith.addf %433, %440 : vector<2x4x16x16xf32>
    %442 = vector.extract_strided_slice %392 {offsets = [0, 0, 0, 6], sizes = [2, 4, 16, 1], strides = [1, 1, 1, 1]} : vector<2x4x16x11xf32> to vector<2x4x16x1xf32>
    %cst_133 = arith.constant 0.000000e+00 : f32
    %443 = vector.shape_cast %29 : vector<2x1x16x16xi1> to vector<2x1x16x16xi1>
    %444 = vector.broadcast %443 : vector<2x1x16x16xi1> to vector<2x4x16x16xi1>
    %445 = vector.shape_cast %442 : vector<2x4x16x1xf32> to vector<2x4x16x1xf32>
    %446 = vector.broadcast %445 : vector<2x4x16x1xf32> to vector<2x4x16x16xf32>
    %447 = vector.broadcast %cst_133 : f32 to vector<2x4x16x16xf32>
    %448 = arith.select %444, %446, %447 : vector<2x4x16x16xi1>, vector<2x4x16x16xf32>
    %449 = arith.addf %441, %448 : vector<2x4x16x16xf32>
    %450 = vector.extract_strided_slice %392 {offsets = [0, 0, 0, 7], sizes = [2, 4, 16, 1], strides = [1, 1, 1, 1]} : vector<2x4x16x11xf32> to vector<2x4x16x1xf32>
    %cst_134 = arith.constant 0.000000e+00 : f32
    %451 = vector.shape_cast %32 : vector<2x1x16x16xi1> to vector<2x1x16x16xi1>
    %452 = vector.broadcast %451 : vector<2x1x16x16xi1> to vector<2x4x16x16xi1>
    %453 = vector.shape_cast %450 : vector<2x4x16x1xf32> to vector<2x4x16x1xf32>
    %454 = vector.broadcast %453 : vector<2x4x16x1xf32> to vector<2x4x16x16xf32>
    %455 = vector.broadcast %cst_134 : f32 to vector<2x4x16x16xf32>
    %456 = arith.select %452, %454, %455 : vector<2x4x16x16xi1>, vector<2x4x16x16xf32>
    %457 = arith.addf %449, %456 : vector<2x4x16x16xf32>
    %458 = vector.extract_strided_slice %392 {offsets = [0, 0, 0, 8], sizes = [2, 4, 16, 1], strides = [1, 1, 1, 1]} : vector<2x4x16x11xf32> to vector<2x4x16x1xf32>
    %cst_135 = arith.constant 0.000000e+00 : f32
    %459 = vector.shape_cast %35 : vector<2x1x16x16xi1> to vector<2x1x16x16xi1>
    %460 = vector.broadcast %459 : vector<2x1x16x16xi1> to vector<2x4x16x16xi1>
    %461 = vector.shape_cast %458 : vector<2x4x16x1xf32> to vector<2x4x16x1xf32>
    %462 = vector.broadcast %461 : vector<2x4x16x1xf32> to vector<2x4x16x16xf32>
    %463 = vector.broadcast %cst_135 : f32 to vector<2x4x16x16xf32>
    %464 = arith.select %460, %462, %463 : vector<2x4x16x16xi1>, vector<2x4x16x16xf32>
    %465 = arith.addf %457, %464 : vector<2x4x16x16xf32>
    %466 = vector.extract_strided_slice %392 {offsets = [0, 0, 0, 9], sizes = [2, 4, 16, 1], strides = [1, 1, 1, 1]} : vector<2x4x16x11xf32> to vector<2x4x16x1xf32>
    %cst_136 = arith.constant 0.000000e+00 : f32
    %467 = vector.shape_cast %38 : vector<2x1x16x16xi1> to vector<2x1x16x16xi1>
    %468 = vector.broadcast %467 : vector<2x1x16x16xi1> to vector<2x4x16x16xi1>
    %469 = vector.shape_cast %466 : vector<2x4x16x1xf32> to vector<2x4x16x1xf32>
    %470 = vector.broadcast %469 : vector<2x4x16x1xf32> to vector<2x4x16x16xf32>
    %471 = vector.broadcast %cst_136 : f32 to vector<2x4x16x16xf32>
    %472 = arith.select %468, %470, %471 : vector<2x4x16x16xi1>, vector<2x4x16x16xf32>
    %473 = arith.addf %465, %472 : vector<2x4x16x16xf32>
    %474 = vector.extract_strided_slice %392 {offsets = [0, 0, 0, 10], sizes = [2, 4, 16, 1], strides = [1, 1, 1, 1]} : vector<2x4x16x11xf32> to vector<2x4x16x1xf32>
    %cst_137 = arith.constant 0.000000e+00 : f32
    %475 = vector.shape_cast %41 : vector<2x1x16x16xi1> to vector<2x1x16x16xi1>
    %476 = vector.broadcast %475 : vector<2x1x16x16xi1> to vector<2x4x16x16xi1>
    %477 = vector.shape_cast %474 : vector<2x4x16x1xf32> to vector<2x4x16x1xf32>
    %478 = vector.broadcast %477 : vector<2x4x16x1xf32> to vector<2x4x16x16xf32>
    %479 = vector.broadcast %cst_137 : f32 to vector<2x4x16x16xf32>
    %480 = arith.select %476, %478, %479 : vector<2x4x16x16xi1>, vector<2x4x16x16xf32>
    %481 = arith.addf %473, %480 : vector<2x4x16x16xf32>
    %482 = arith.addf %385, %481 : vector<2x4x16x16xf32>
    %cst_138 = arith.constant 0.353553385 : f32
    %483 = vector.broadcast %cst_138 : f32 to vector<2x4x16x16xf32>
    %484 = arith.mulf %482, %483 : vector<2x4x16x16xf32>
    %485 = vector.broadcast %7 : vector<2x1x1x16xf32> to vector<2x4x16x16xf32>
    %486 = arith.addf %484, %485 : vector<2x4x16x16xf32>
    %cst_139 = arith.constant dense<0xFF800000> : vector<2x4x16xf32>
    %487 = vector.multi_reduction <maximumf>, %486, %cst_139 [3] : vector<2x4x16x16xf32> to vector<2x4x16xf32>
    %488 = vector.shape_cast %487 : vector<2x4x16xf32> to vector<2x4x16x1xf32>
    %489 = vector.broadcast %488 : vector<2x4x16x1xf32> to vector<2x4x16x16xf32>
    %490 = arith.subf %486, %489 : vector<2x4x16x16xf32>
    %491 = math.exp %490 : vector<2x4x16x16xf32>
    %cst_140 = arith.constant dense<0.000000e+00> : vector<2x4x16xf32>
    %492 = vector.multi_reduction <add>, %491, %cst_140 [3] : vector<2x4x16x16xf32> to vector<2x4x16xf32>
    %493 = vector.shape_cast %492 : vector<2x4x16xf32> to vector<2x4x16x1xf32>
    %494 = tpu.reciprocal %493 {approx = true} : vector<2x4x16x1xf32> -> vector<2x4x16x1xf32>
    %495 = vector.broadcast %494 : vector<2x4x16x1xf32> to vector<2x4x16x16xf32>
    %496 = arith.mulf %491, %495 : vector<2x4x16x16xf32>
    %497 = vector.shape_cast %496 : vector<2x4x16x16xf32> to vector<8x16x16xf32>
    %498 = arith.truncf %497 : vector<8x16x16xf32> to vector<8x16x16xbf16>
    %499 = arith.truncf %381 : vector<8x16x8xf32> to vector<8x16x8xbf16>
    "tpu.trace_start"() <{level = 10 : i32, message = "zqk,zkd->zqd"}> : () -> ()
    %cst_141 = arith.constant dense<0.000000e+00> : vector<8x16x8xf32>
    %500 = tpu.matmul %498, %499, %cst_141 {dimension_numbers = #tpu.dot_dimension_numbers<[2], [1], [1], [2], [0, 0, 0, 1, 1, 2], [0], [0]>} : vector<8x16x16xbf16>, vector<8x16x8xbf16>, vector<8x16x8xf32> -> vector<8x16x8xf32>
    %cst_142 = arith.constant 0.000000e+00 : f32
    "tpu.trace_stop"() : () -> ()
    %501 = vector.shape_cast %11 : vector<2x1x16x16xi1> to vector<2x1x16x16xi1>
    %502 = vector.broadcast %501 : vector<2x1x16x16xi1> to vector<2x4x16x16xi1>
    %503 = vector.broadcast %cst_142 : f32 to vector<2x4x16x16xf32>
    %504 = arith.select %502, %496, %503 : vector<2x4x16x16xi1>, vector<2x4x16x16xf32>
    %cst_143 = arith.constant dense<0.000000e+00> : vector<2x4x16xf32>
    %505 = vector.multi_reduction <add>, %504, %cst_143 [3] : vector<2x4x16x16xf32> to vector<2x4x16xf32>
    %506 = vector.shape_cast %505 : vector<2x4x16xf32> to vector<2x4x16x1xf32>
    %cst_144 = arith.constant 0.000000e+00 : f32
    %507 = vector.shape_cast %14 : vector<2x1x16x16xi1> to vector<2x1x16x16xi1>
    %508 = vector.broadcast %507 : vector<2x1x16x16xi1> to vector<2x4x16x16xi1>
    %509 = vector.broadcast %cst_144 : f32 to vector<2x4x16x16xf32>
    %510 = arith.select %508, %496, %509 : vector<2x4x16x16xi1>, vector<2x4x16x16xf32>
    %cst_145 = arith.constant dense<0.000000e+00> : vector<2x4x16xf32>
    %511 = vector.multi_reduction <add>, %510, %cst_145 [3] : vector<2x4x16x16xf32> to vector<2x4x16xf32>
    %512 = vector.shape_cast %511 : vector<2x4x16xf32> to vector<2x4x16x1xf32>
    %cst_146 = arith.constant 0.000000e+00 : f32
    %513 = vector.shape_cast %17 : vector<2x1x16x16xi1> to vector<2x1x16x16xi1>
    %514 = vector.broadcast %513 : vector<2x1x16x16xi1> to vector<2x4x16x16xi1>
    %515 = vector.broadcast %cst_146 : f32 to vector<2x4x16x16xf32>
    %516 = arith.select %514, %496, %515 : vector<2x4x16x16xi1>, vector<2x4x16x16xf32>
    %cst_147 = arith.constant dense<0.000000e+00> : vector<2x4x16xf32>
    %517 = vector.multi_reduction <add>, %516, %cst_147 [3] : vector<2x4x16x16xf32> to vector<2x4x16xf32>
    %518 = vector.shape_cast %517 : vector<2x4x16xf32> to vector<2x4x16x1xf32>
    %cst_148 = arith.constant 0.000000e+00 : f32
    %519 = vector.shape_cast %20 : vector<2x1x16x16xi1> to vector<2x1x16x16xi1>
    %520 = vector.broadcast %519 : vector<2x1x16x16xi1> to vector<2x4x16x16xi1>
    %521 = vector.broadcast %cst_148 : f32 to vector<2x4x16x16xf32>
    %522 = arith.select %520, %496, %521 : vector<2x4x16x16xi1>, vector<2x4x16x16xf32>
    %cst_149 = arith.constant dense<0.000000e+00> : vector<2x4x16xf32>
    %523 = vector.multi_reduction <add>, %522, %cst_149 [3] : vector<2x4x16x16xf32> to vector<2x4x16xf32>
    %524 = vector.shape_cast %523 : vector<2x4x16xf32> to vector<2x4x16x1xf32>
    %cst_150 = arith.constant 0.000000e+00 : f32
    %525 = vector.shape_cast %23 : vector<2x1x16x16xi1> to vector<2x1x16x16xi1>
    %526 = vector.broadcast %525 : vector<2x1x16x16xi1> to vector<2x4x16x16xi1>
    %527 = vector.broadcast %cst_150 : f32 to vector<2x4x16x16xf32>
    %528 = arith.select %526, %496, %527 : vector<2x4x16x16xi1>, vector<2x4x16x16xf32>
    %cst_151 = arith.constant dense<0.000000e+00> : vector<2x4x16xf32>
    %529 = vector.multi_reduction <add>, %528, %cst_151 [3] : vector<2x4x16x16xf32> to vector<2x4x16xf32>
    %530 = vector.shape_cast %529 : vector<2x4x16xf32> to vector<2x4x16x1xf32>
    %cst_152 = arith.constant 0.000000e+00 : f32
    %531 = vector.shape_cast %26 : vector<2x1x16x16xi1> to vector<2x1x16x16xi1>
    %532 = vector.broadcast %531 : vector<2x1x16x16xi1> to vector<2x4x16x16xi1>
    %533 = vector.broadcast %cst_152 : f32 to vector<2x4x16x16xf32>
    %534 = arith.select %532, %496, %533 : vector<2x4x16x16xi1>, vector<2x4x16x16xf32>
    %cst_153 = arith.constant dense<0.000000e+00> : vector<2x4x16xf32>
    %535 = vector.multi_reduction <add>, %534, %cst_153 [3] : vector<2x4x16x16xf32> to vector<2x4x16xf32>
    %536 = vector.shape_cast %535 : vector<2x4x16xf32> to vector<2x4x16x1xf32>
    %cst_154 = arith.constant 0.000000e+00 : f32
    %537 = vector.shape_cast %29 : vector<2x1x16x16xi1> to vector<2x1x16x16xi1>
    %538 = vector.broadcast %537 : vector<2x1x16x16xi1> to vector<2x4x16x16xi1>
    %539 = vector.broadcast %cst_154 : f32 to vector<2x4x16x16xf32>
    %540 = arith.select %538, %496, %539 : vector<2x4x16x16xi1>, vector<2x4x16x16xf32>
    %cst_155 = arith.constant dense<0.000000e+00> : vector<2x4x16xf32>
    %541 = vector.multi_reduction <add>, %540, %cst_155 [3] : vector<2x4x16x16xf32> to vector<2x4x16xf32>
    %542 = vector.shape_cast %541 : vector<2x4x16xf32> to vector<2x4x16x1xf32>
    %cst_156 = arith.constant 0.000000e+00 : f32
    %543 = vector.shape_cast %32 : vector<2x1x16x16xi1> to vector<2x1x16x16xi1>
    %544 = vector.broadcast %543 : vector<2x1x16x16xi1> to vector<2x4x16x16xi1>
    %545 = vector.broadcast %cst_156 : f32 to vector<2x4x16x16xf32>
    %546 = arith.select %544, %496, %545 : vector<2x4x16x16xi1>, vector<2x4x16x16xf32>
    %cst_157 = arith.constant dense<0.000000e+00> : vector<2x4x16xf32>
    %547 = vector.multi_reduction <add>, %546, %cst_157 [3] : vector<2x4x16x16xf32> to vector<2x4x16xf32>
    %548 = vector.shape_cast %547 : vector<2x4x16xf32> to vector<2x4x16x1xf32>
    %cst_158 = arith.constant 0.000000e+00 : f32
    %549 = vector.shape_cast %35 : vector<2x1x16x16xi1> to vector<2x1x16x16xi1>
    %550 = vector.broadcast %549 : vector<2x1x16x16xi1> to vector<2x4x16x16xi1>
    %551 = vector.broadcast %cst_158 : f32 to vector<2x4x16x16xf32>
    %552 = arith.select %550, %496, %551 : vector<2x4x16x16xi1>, vector<2x4x16x16xf32>
    %cst_159 = arith.constant dense<0.000000e+00> : vector<2x4x16xf32>
    %553 = vector.multi_reduction <add>, %552, %cst_159 [3] : vector<2x4x16x16xf32> to vector<2x4x16xf32>
    %554 = vector.shape_cast %553 : vector<2x4x16xf32> to vector<2x4x16x1xf32>
    %cst_160 = arith.constant 0.000000e+00 : f32
    %555 = vector.shape_cast %38 : vector<2x1x16x16xi1> to vector<2x1x16x16xi1>
    %556 = vector.broadcast %555 : vector<2x1x16x16xi1> to vector<2x4x16x16xi1>
    %557 = vector.broadcast %cst_160 : f32 to vector<2x4x16x16xf32>
    %558 = arith.select %556, %496, %557 : vector<2x4x16x16xi1>, vector<2x4x16x16xf32>
    %cst_161 = arith.constant dense<0.000000e+00> : vector<2x4x16xf32>
    %559 = vector.multi_reduction <add>, %558, %cst_161 [3] : vector<2x4x16x16xf32> to vector<2x4x16xf32>
    %560 = vector.shape_cast %559 : vector<2x4x16xf32> to vector<2x4x16x1xf32>
    %cst_162 = arith.constant 0.000000e+00 : f32
    %561 = vector.shape_cast %41 : vector<2x1x16x16xi1> to vector<2x1x16x16xi1>
    %562 = vector.broadcast %561 : vector<2x1x16x16xi1> to vector<2x4x16x16xi1>
    %563 = vector.broadcast %cst_162 : f32 to vector<2x4x16x16xf32>
    %564 = arith.select %562, %496, %563 : vector<2x4x16x16xi1>, vector<2x4x16x16xf32>
    %cst_163 = arith.constant dense<0.000000e+00> : vector<2x4x16xf32>
    %565 = vector.multi_reduction <add>, %564, %cst_163 [3] : vector<2x4x16x16xf32> to vector<2x4x16xf32>
    %566 = vector.shape_cast %565 : vector<2x4x16xf32> to vector<2x4x16x1xf32>
    %567 = tpu.concatenate %506, %512, %518, %524, %530, %536, %542, %548, %554, %560, %566 in 3 : vector<2x4x16x1xf32>, vector<2x4x16x1xf32>, vector<2x4x16x1xf32>, vector<2x4x16x1xf32>, vector<2x4x16x1xf32>, vector<2x4x16x1xf32>, vector<2x4x16x1xf32>, vector<2x4x16x1xf32>, vector<2x4x16x1xf32>, vector<2x4x16x1xf32>, vector<2x4x16x1xf32> -> vector<2x4x16x11xf32>
    %568 = vector.shape_cast %567 : vector<2x4x16x11xf32> to vector<128x11xf32>
    %c1_164 = arith.constant 1 : index
    %c0_165 = arith.constant 0 : index
    %c0_166 = arith.constant 0 : index
    %569 = vector.load %arg17[%c1_164, %c0_165, %c0_166] : memref<2x11x8xf32, #tpu.memory_space<vmem>>, vector<1x11x8xf32>
    %570 = vector.shape_cast %569 : vector<1x11x8xf32> to vector<11x8xf32>
    %571 = arith.truncf %568 : vector<128x11xf32> to vector<128x11xbf16>
    %572 = arith.truncf %570 : vector<11x8xf32> to vector<11x8xbf16>
    "tpu.trace_start"() <{level = 10 : i32, message = "nr,rd->nd"}> : () -> ()
    %cst_167 = arith.constant dense<0.000000e+00> : vector<128x8xf32>
    %573 = tpu.matmul %571, %572, %cst_167 {dimension_numbers = #tpu.dot_dimension_numbers<[1], [0], [0], [1], [0, 0, 1, 1], [], []>} : vector<128x11xbf16>, vector<11x8xbf16>, vector<128x8xf32> -> vector<128x8xf32>
    "tpu.trace_stop"() : () -> ()
    %574 = vector.shape_cast %573 : vector<128x8xf32> to vector<8x16x8xf32>
    %575 = arith.addf %500, %574 : vector<8x16x8xf32>
    %576 = tpu.transpose %575, [0, 2, 1] : vector<8x16x8xf32> -> vector<8x8x16xf32>
    %577 = vector.shape_cast %576 : vector<8x8x16xf32> to vector<2x32x16xf32>
    %578 = tpu.transpose %577, [0, 2, 1] : vector<2x32x16xf32> -> vector<2x16x32xf32>
    %579 = vector.shape_cast %578 : vector<2x16x32xf32> to vector<32x32xf32>
    %c1_168 = arith.constant 1 : index
    %c0_169 = arith.constant 0 : index
    %c0_170 = arith.constant 0 : index
    %580 = vector.load %arg6[%c1_168, %c0_169, %c0_170] : memref<2x32x32xf32, #tpu.memory_space<vmem>>, vector<1x32x32xf32>
    %581 = vector.shape_cast %580 : vector<1x32x32xf32> to vector<32x32xf32>
    %582 = arith.truncf %579 : vector<32x32xf32> to vector<32x32xbf16>
    %583 = arith.truncf %581 : vector<32x32xf32> to vector<32x32xbf16>
    %cst_171 = arith.constant dense<0.000000e+00> : vector<32x32xf32>
    %584 = tpu.matmul %582, %583, %cst_171 {dimension_numbers = #tpu.dot_dimension_numbers<[1], [0], [0], [1], [0, 0, 1, 1], [], []>} : vector<32x32xbf16>, vector<32x32xbf16>, vector<32x32xf32> -> vector<32x32xf32>
    %c1_172 = arith.constant 1 : index
    %c0_173 = arith.constant 0 : index
    %c0_174 = arith.constant 0 : index
    %585 = vector.load %arg7[%c1_172, %c0_173, %c0_174] : memref<2x1x32xf32, #tpu.memory_space<vmem>>, vector<1x1x32xf32>
    %586 = vector.shape_cast %585 : vector<1x1x32xf32> to vector<1x32xf32>
    %587 = vector.broadcast %586 : vector<1x32xf32> to vector<32x32xf32>
    %588 = arith.addf %584, %587 : vector<32x32xf32>
    %589 = arith.addf %354, %588 : vector<32x32xf32>
    %c1_175 = arith.constant 1 : index
    %c0_176 = arith.constant 0 : index
    %c0_177 = arith.constant 0 : index
    %590 = vector.load %arg8[%c1_175, %c0_176, %c0_177] : memref<2x1x32xf32, #tpu.memory_space<vmem>>, vector<1x1x32xf32>
    %591 = vector.shape_cast %590 : vector<1x1x32xf32> to vector<1x32xf32>
    %c1_178 = arith.constant 1 : index
    %c0_179 = arith.constant 0 : index
    %c0_180 = arith.constant 0 : index
    %592 = vector.load %arg9[%c1_178, %c0_179, %c0_180] : memref<2x1x32xf32, #tpu.memory_space<vmem>>, vector<1x1x32xf32>
    %593 = vector.shape_cast %592 : vector<1x1x32xf32> to vector<1x32xf32>
    %cst_181 = arith.constant dense<0.000000e+00> : vector<32xf32>
    %594 = vector.multi_reduction <add>, %589, %cst_181 [1] : vector<32x32xf32> to vector<32xf32>
    %595 = vector.shape_cast %594 : vector<32xf32> to vector<32x1xf32>
    %cst_182 = arith.constant 3.200000e+01 : f32
    %596 = vector.broadcast %cst_182 : f32 to vector<32x1xf32>
    %597 = arith.divf %595, %596 : vector<32x1xf32>
    %598 = vector.broadcast %597 : vector<32x1xf32> to vector<32x32xf32>
    %599 = arith.subf %589, %598 : vector<32x32xf32>
    %600 = vector.broadcast %597 : vector<32x1xf32> to vector<32x32xf32>
    %601 = arith.subf %589, %600 : vector<32x32xf32>
    %602 = arith.mulf %599, %601 : vector<32x32xf32>
    %cst_183 = arith.constant dense<0.000000e+00> : vector<32xf32>
    %603 = vector.multi_reduction <add>, %602, %cst_183 [1] : vector<32x32xf32> to vector<32xf32>
    %604 = vector.shape_cast %603 : vector<32xf32> to vector<32x1xf32>
    %cst_184 = arith.constant 3.200000e+01 : f32
    %605 = vector.broadcast %cst_184 : f32 to vector<32x1xf32>
    %606 = arith.divf %604, %605 : vector<32x1xf32>
    %607 = vector.broadcast %597 : vector<32x1xf32> to vector<32x32xf32>
    %608 = arith.subf %589, %607 : vector<32x32xf32>
    %cst_185 = arith.constant 9.99999974E-6 : f32
    %609 = vector.broadcast %cst_185 : f32 to vector<32x1xf32>
    %610 = arith.addf %606, %609 : vector<32x1xf32>
    %611 = math.rsqrt %610 : vector<32x1xf32>
    %612 = vector.broadcast %611 : vector<32x1xf32> to vector<32x32xf32>
    %613 = arith.mulf %608, %612 : vector<32x32xf32>
    %614 = vector.broadcast %591 : vector<1x32xf32> to vector<32x32xf32>
    %615 = arith.mulf %613, %614 : vector<32x32xf32>
    %616 = vector.broadcast %593 : vector<1x32xf32> to vector<32x32xf32>
    %617 = arith.addf %615, %616 : vector<32x32xf32>
    %c1_186 = arith.constant 1 : index
    %c0_187 = arith.constant 0 : index
    %c0_188 = arith.constant 0 : index
    %618 = vector.load %arg10[%c1_186, %c0_187, %c0_188] : memref<2x32x128xf32, #tpu.memory_space<vmem>>, vector<1x32x128xf32>
    %619 = vector.shape_cast %618 : vector<1x32x128xf32> to vector<32x128xf32>
    %620 = arith.truncf %617 : vector<32x32xf32> to vector<32x32xbf16>
    %621 = arith.truncf %619 : vector<32x128xf32> to vector<32x128xbf16>
    %cst_189 = arith.constant dense<0.000000e+00> : vector<32x128xf32>
    %622 = tpu.matmul %620, %621, %cst_189 {dimension_numbers = #tpu.dot_dimension_numbers<[1], [0], [0], [1], [0, 0, 1, 1], [], []>} : vector<32x32xbf16>, vector<32x128xbf16>, vector<32x128xf32> -> vector<32x128xf32>
    %c1_190 = arith.constant 1 : index
    %c0_191 = arith.constant 0 : index
    %c0_192 = arith.constant 0 : index
    %623 = vector.load %arg11[%c1_190, %c0_191, %c0_192] : memref<2x1x128xf32, #tpu.memory_space<vmem>>, vector<1x1x128xf32>
    %624 = vector.shape_cast %623 : vector<1x1x128xf32> to vector<1x128xf32>
    %625 = vector.broadcast %624 : vector<1x128xf32> to vector<32x128xf32>
    %626 = arith.addf %622, %625 : vector<32x128xf32>
    %cst_193 = arith.constant 0.000000e+00 : f32
    %627 = vector.broadcast %cst_193 : f32 to vector<32x128xf32>
    %628 = arith.maximumf %626, %627 : vector<32x128xf32>
    %c1_194 = arith.constant 1 : index
    %c0_195 = arith.constant 0 : index
    %c0_196 = arith.constant 0 : index
    %629 = vector.load %arg12[%c1_194, %c0_195, %c0_196] : memref<2x128x32xf32, #tpu.memory_space<vmem>>, vector<1x128x32xf32>
    %630 = vector.shape_cast %629 : vector<1x128x32xf32> to vector<128x32xf32>
    %631 = arith.truncf %628 : vector<32x128xf32> to vector<32x128xbf16>
    %632 = arith.truncf %630 : vector<128x32xf32> to vector<128x32xbf16>
    %cst_197 = arith.constant dense<0.000000e+00> : vector<32x32xf32>
    %633 = tpu.matmul %631, %632, %cst_197 {dimension_numbers = #tpu.dot_dimension_numbers<[1], [0], [0], [1], [0, 0, 1, 1], [], []>} : vector<32x128xbf16>, vector<128x32xbf16>, vector<32x32xf32> -> vector<32x32xf32>
    %c1_198 = arith.constant 1 : index
    %c0_199 = arith.constant 0 : index
    %c0_200 = arith.constant 0 : index
    %634 = vector.load %arg13[%c1_198, %c0_199, %c0_200] : memref<2x1x32xf32, #tpu.memory_space<vmem>>, vector<1x1x32xf32>
    %635 = vector.shape_cast %634 : vector<1x1x32xf32> to vector<1x32xf32>
    %636 = vector.broadcast %635 : vector<1x32xf32> to vector<32x32xf32>
    %637 = arith.addf %633, %636 : vector<32x32xf32>
    %638 = arith.addf %617, %637 : vector<32x32xf32>
    %c1_201 = arith.constant 1 : index
    %c0_202 = arith.constant 0 : index
    %c0_203 = arith.constant 0 : index
    %639 = vector.load %arg14[%c1_201, %c0_202, %c0_203] : memref<2x1x32xf32, #tpu.memory_space<vmem>>, vector<1x1x32xf32>
    %640 = vector.shape_cast %639 : vector<1x1x32xf32> to vector<1x32xf32>
    %c1_204 = arith.constant 1 : index
    %c0_205 = arith.constant 0 : index
    %c0_206 = arith.constant 0 : index
    %641 = vector.load %arg15[%c1_204, %c0_205, %c0_206] : memref<2x1x32xf32, #tpu.memory_space<vmem>>, vector<1x1x32xf32>
    %642 = vector.shape_cast %641 : vector<1x1x32xf32> to vector<1x32xf32>
    %cst_207 = arith.constant dense<0.000000e+00> : vector<32xf32>
    %643 = vector.multi_reduction <add>, %638, %cst_207 [1] : vector<32x32xf32> to vector<32xf32>
    %644 = vector.shape_cast %643 : vector<32xf32> to vector<32x1xf32>
    %cst_208 = arith.constant 3.200000e+01 : f32
    %645 = vector.broadcast %cst_208 : f32 to vector<32x1xf32>
    %646 = arith.divf %644, %645 : vector<32x1xf32>
    %647 = vector.broadcast %646 : vector<32x1xf32> to vector<32x32xf32>
    %648 = arith.subf %638, %647 : vector<32x32xf32>
    %649 = vector.broadcast %646 : vector<32x1xf32> to vector<32x32xf32>
    %650 = arith.subf %638, %649 : vector<32x32xf32>
    %651 = arith.mulf %648, %650 : vector<32x32xf32>
    %cst_209 = arith.constant dense<0.000000e+00> : vector<32xf32>
    %652 = vector.multi_reduction <add>, %651, %cst_209 [1] : vector<32x32xf32> to vector<32xf32>
    %653 = vector.shape_cast %652 : vector<32xf32> to vector<32x1xf32>
    %cst_210 = arith.constant 3.200000e+01 : f32
    %654 = vector.broadcast %cst_210 : f32 to vector<32x1xf32>
    %655 = arith.divf %653, %654 : vector<32x1xf32>
    %656 = vector.broadcast %646 : vector<32x1xf32> to vector<32x32xf32>
    %657 = arith.subf %638, %656 : vector<32x32xf32>
    %cst_211 = arith.constant 9.99999974E-6 : f32
    %658 = vector.broadcast %cst_211 : f32 to vector<32x1xf32>
    %659 = arith.addf %655, %658 : vector<32x1xf32>
    %660 = math.rsqrt %659 : vector<32x1xf32>
    %661 = vector.broadcast %660 : vector<32x1xf32> to vector<32x32xf32>
    %662 = arith.mulf %657, %661 : vector<32x32xf32>
    %663 = vector.broadcast %640 : vector<1x32xf32> to vector<32x32xf32>
    %664 = arith.mulf %662, %663 : vector<32x32xf32>
    %665 = vector.broadcast %642 : vector<1x32xf32> to vector<32x32xf32>
    %666 = arith.addf %664, %665 : vector<32x32xf32>
    %c0_212 = arith.constant 0 : index
    %c0_213 = arith.constant 0 : index
    %667 = vector.load %arg18[%c0_212, %c0_213] : memref<32x32xf32, #tpu.memory_space<vmem>>, vector<32x32xf32>
    %668 = arith.truncf %666 : vector<32x32xf32> to vector<32x32xbf16>
    %669 = arith.truncf %667 : vector<32x32xf32> to vector<32x32xbf16>
    %cst_214 = arith.constant dense<0.000000e+00> : vector<32x32xf32>
    %670 = tpu.matmul %668, %669, %cst_214 {dimension_numbers = #tpu.dot_dimension_numbers<[1], [0], [0], [1], [0, 0, 1, 1], [], []>} : vector<32x32xbf16>, vector<32x32xbf16>, vector<32x32xf32> -> vector<32x32xf32>
    %c0_215 = arith.constant 0 : index
    %c0_216 = arith.constant 0 : index
    %671 = vector.load %arg19[%c0_215, %c0_216] : memref<1x32xf32, #tpu.memory_space<vmem>>, vector<1x32xf32>
    %672 = vector.broadcast %671 : vector<1x32xf32> to vector<32x32xf32>
    %673 = arith.addf %670, %672 : vector<32x32xf32>
    %674 = math.tanh %673 : vector<32x32xf32>
    %c0_217 = arith.constant 0 : index
    %c0_218 = arith.constant 0 : index
    %675 = vector.load %arg20[%c0_217, %c0_218] : memref<32x32xf32, #tpu.memory_space<vmem>>, vector<32x32xf32>
    tpu.vector_store %arg20[%c0_217, %c0_218], %674 {strides = array<i32>} : memref<32x32xf32, #tpu.memory_space<vmem>>, vector<32x32xf32>,
    return
  }
}

</mosaic_0001>

<llo_original>
// kernel: tpu_custom_call.1
$region0: #{tpu_custom_call.1}
  #allocation0 [shape = 'u32[]', space=smem, size = 0x4, offset = 0x4, fixed_abs, tag = 'smem constant byte address 0x4 - core index']
  #allocation1 [shape = 'u32[72,128]{1,0:T(1,128)}', space=vmem, size = 0x9000, scoped, tag = 'internal scratch']
  %s0 = inlined_call_operand.hbm [shape: f32[32,32], index: 0, kind: input, shape index: {}]
  %s1 = inlined_call_operand.vmem [shape: s32[2,1], index: 1, kind: input, shape index: {}]
  %s2 = inlined_call_operand.hbm [shape: s32[2,16,16], index: 2, kind: input, shape index: {}]
  %s3 = inlined_call_operand.vmem [shape: f32[2,32,32], index: 3, kind: input, shape index: {}]
  %s4 = inlined_call_operand.vmem [shape: f32[2,32,32], index: 4, kind: input, shape index: {}]
  %s5 = inlined_call_operand.vmem [shape: f32[2,32,32], index: 5, kind: input, shape index: {}]
  %s6 = inlined_call_operand.vmem [shape: f32[2,32,32], index: 6, kind: input, shape index: {}]
  %s7 = inlined_call_operand.vmem [shape: f32[2,1,32], index: 7, kind: input, shape index: {}]
  %s8 = inlined_call_operand.vmem [shape: f32[2,1,32], index: 8, kind: input, shape index: {}]
  %s9 = inlined_call_operand.vmem [shape: f32[2,1,32], index: 9, kind: input, shape index: {}]
  %s10 = inlined_call_operand.vmem [shape: f32[2,32,128], index: 10, kind: input, shape index: {}]
  %s11 = inlined_call_operand.vmem [shape: f32[2,1,128], index: 11, kind: input, shape index: {}]
  %s12 = inlined_call_operand.vmem [shape: f32[2,128,32], index: 12, kind: input, shape index: {}]
  %s13 = inlined_call_operand.vmem [shape: f32[2,1,32], index: 13, kind: input, shape index: {}]
  %s14 = inlined_call_operand.vmem [shape: f32[2,1,32], index: 14, kind: input, shape index: {}]
  %s15 = inlined_call_operand.vmem [shape: f32[2,1,32], index: 15, kind: input, shape index: {}]
  %s16 = inlined_call_operand.vmem [shape: f32[2,11,8], index: 16, kind: input, shape index: {}]
  %s17 = inlined_call_operand.vmem [shape: f32[2,11,8], index: 17, kind: input, shape index: {}]
  %s18 = inlined_call_operand.hbm [shape: f32[32,32], index: 18, kind: input, shape index: {}]
  %s19 = inlined_call_operand.vmem [shape: f32[1,32], index: 19, kind: input, shape index: {}]
  %s20 = inlined_call_operand.hbm [shape: f32[32,32], index: 20, kind: output, shape index: {}]
  %s21 = sld [smem:[#allocation0]]
  $region102: #{tpu_custom_call.1} parent=0
    _
  %s23 = ssub.s32 1, %s21
  %s24 = scalar_select 0, %s23, %s21
  $region1: #{tpu_custom_call.1} parent=0
    #allocation2 [shape = 'u8[16384]{0}', space=vmem, size = 0x4000, scoped, tag = 'input window, operand 0, single buffered']
    #allocation3 [shape = 's32[1]{0}', space=sflag, size = 0x4, scoped, tag = 'scoped memory for tpu_custom_call.1']
    #allocation4 [shape = 's32[1]{0}', space=sflag, size = 0x4, scoped, tag = 'scoped memory for tpu_custom_call.1']
    #allocation5 [shape = 'u8[16384]{0}', space=vmem, size = 0x4000, scoped, tag = 'input window, operand 2, single buffered']
    #allocation6 [shape = 's32[1]{0}', space=sflag, size = 0x4, scoped, tag = 'scoped memory for tpu_custom_call.1']
    #allocation7 [shape = 'u8[16384]{0}', space=vmem, size = 0x4000, scoped, tag = 'input window, operand 18, single buffered']
    #allocation8 [shape = 'u8[16384]{0}', space=vmem, size = 0x4000, scoped, tag = 'output window, operand 0, single buffered']
    %25 = vsyncpa [#allocation3], 0
    %26 = vsyncpa [#allocation6], 0
    %27 = vsyncpa [#allocation4], 0
    // Predicated region
    $region2: #{tpu_custom_call.1} parent=1 // pred_check
      _
    $region3: #{tpu_custom_call.1} parent=1 // pred_check_branch
      %29 = sbr.rel (0) target = $region5
    $region4: #{tpu_custom_call.1} parent=1 // pred_region
      %31 = vsyncadd [#allocation3], 0
      %s32 = sshll.u32 %s0, 4
      %s33 = int_to_ptr.hbm [resolvable:$true] %s32
      %s34 = sshll.u32 [#allocation2], 4
      %s35 = int_to_ptr.vmem [resolvable:$true] %s34
      %40 = dma.hbm_to_vmem [thread:$0]  %s33, 512, %s35, [#allocation3], 128, 128, 8
    $region5: #{tpu_custom_call.1} parent=1 // pred_fallthru
      _
    // Predicated region
    $region6: #{tpu_custom_call.1} parent=1 // pred_check
      _
    $region7: #{tpu_custom_call.1} parent=1 // pred_check_branch
      %42 = sbr.rel (0) target = $region9
    $region8: #{tpu_custom_call.1} parent=1 // pred_region
      _
    $region9: #{tpu_custom_call.1} parent=1 // pred_fallthru
      _
    // Predicated region
    $region10: #{tpu_custom_call.1} parent=1 // pred_check
      _
    $region11: #{tpu_custom_call.1} parent=1 // pred_check_branch
      %44 = sbr.rel (0) target = $region13
    $region12: #{tpu_custom_call.1} parent=1 // pred_region
      %46 = vsyncadd [#allocation6], 0
      %s47 = sshll.u32 %s2, 4
      %s48 = int_to_ptr.hbm [resolvable:$true] %s47
      %s49 = sshll.u32 [#allocation5], 4
      %s50 = int_to_ptr.vmem [resolvable:$true] %s49
      %55 = dma.hbm_to_vmem [thread:$0]  %s48, 512, %s50, [#allocation6], 128, 128, 8
    $region13: #{tpu_custom_call.1} parent=1 // pred_fallthru
      _
    // Predicated region
    $region14: #{tpu_custom_call.1} parent=1 // pred_check
      _
    $region15: #{tpu_custom_call.1} parent=1 // pred_check_branch
      %57 = sbr.rel (0) target = $region17
    $region16: #{tpu_custom_call.1} parent=1 // pred_region
      _
    $region17: #{tpu_custom_call.1} parent=1 // pred_fallthru
      _
    // Predicated region
    $region18: #{tpu_custom_call.1} parent=1 // pred_check
      _
    $region19: #{tpu_custom_call.1} parent=1 // pred_check_branch
      %59 = sbr.rel (0) target = $region21
    $region20: #{tpu_custom_call.1} parent=1 // pred_region
      _
    $region21: #{tpu_custom_call.1} parent=1 // pred_fallthru
      _
    // Predicated region
    $region22: #{tpu_custom_call.1} parent=1 // pred_check
      _
    $region23: #{tpu_custom_call.1} parent=1 // pred_check_branch
      %61 = sbr.rel (0) target = $region25
    $region24: #{tpu_custom_call.1} parent=1 // pred_region
      _
    $region25: #{tpu_custom_call.1} parent=1 // pred_fallthru
      _
    // Predicated region
    $region26: #{tpu_custom_call.1} parent=1 // pred_check
      _
    $region27: #{tpu_custom_call.1} parent=1 // pred_check_branch
      %63 = sbr.rel (0) target = $region29
    $region28: #{tpu_custom_call.1} parent=1 // pred_region
      _
    $region29: #{tpu_custom_call.1} parent=1 // pred_fallthru
      _
    // Predicated region
    $region30: #{tpu_custom_call.1} parent=1 // pred_check
      _
    $region31: #{tpu_custom_call.1} parent=1 // pred_check_branch
      %65 = sbr.rel (0) target = $region33
    $region32: #{tpu_custom_call.1} parent=1 // pred_region
      _
    $region33: #{tpu_custom_call.1} parent=1 // pred_fallthru
      _
    // Predicated region
    $region34: #{tpu_custom_call.1} parent=1 // pred_check
      _
    $region35: #{tpu_custom_call.1} parent=1 // pred_check_branch
      %67 = sbr.rel (0) target = $region37
    $region36: #{tpu_custom_call.1} parent=1 // pred_region
      _
    $region37: #{tpu_custom_call.1} parent=1 // pred_fallthru
      _
    // Predicated region
    $region38: #{tpu_custom_call.1} parent=1 // pred_check
      _
    $region39: #{tpu_custom_call.1} parent=1 // pred_check_branch
      %69 = sbr.rel (0) target = $region41
    $region40: #{tpu_custom_call.1} parent=1 // pred_region
      _
    $region41: #{tpu_custom_call.1} parent=1 // pred_fallthru
      _
    // Predicated region
    $region42: #{tpu_custom_call.1} parent=1 // pred_check
      _
    $region43: #{tpu_custom_call.1} parent=1 // pred_check_branch
      %71 = sbr.rel (0) target = $region45
    $region44: #{tpu_custom_call.1} parent=1 // pred_region
      _
    $region45: #{tpu_custom_call.1} parent=1 // pred_fallthru
      _
    // Predicated region
    $region46: #{tpu_custom_call.1} parent=1 // pred_check
      _
    $region47: #{tpu_custom_call.1} parent=1 // pred_check_branch
      %73 = sbr.rel (0) target = $region49
    $region48: #{tpu_custom_call.1} parent=1 // pred_region
      _
    $region49: #{tpu_custom_call.1} parent=1 // pred_fallthru
      _
    // Predicated region
    $region50: #{tpu_custom_call.1} parent=1 // pred_check
      _
    $region51: #{tpu_custom_call.1} parent=1 // pred_check_branch
      %75 = sbr.rel (0) target = $region53
    $region52: #{tpu_custom_call.1} parent=1 // pred_region
      _
    $region53: #{tpu_custom_call.1} parent=1 // pred_fallthru
      _
    // Predicated region
    $region54: #{tpu_custom_call.1} parent=1 // pred_check
      _
    $region55: #{tpu_custom_call.1} parent=1 // pred_check_branch
      %77 = sbr.rel (0) target = $region57
    $region56: #{tpu_custom_call.1} parent=1 // pred_region
      _
    $region57: #{tpu_custom_call.1} parent=1 // pred_fallthru
      _
    // Predicated region
    $region58: #{tpu_custom_call.1} parent=1 // pred_check
      _
    $region59: #{tpu_custom_call.1} parent=1 // pred_check_branch
      %79 = sbr.rel (0) target = $region61
    $region60: #{tpu_custom_call.1} parent=1 // pred_region
      _
    $region61: #{tpu_custom_call.1} parent=1 // pred_fallthru
      _
    // Predicated region
    $region62: #{tpu_custom_call.1} parent=1 // pred_check
      _
    $region63: #{tpu_custom_call.1} parent=1 // pred_check_branch
      %81 = sbr.rel (0) target = $region65
    $region64: #{tpu_custom_call.1} parent=1 // pred_region
      _
    $region65: #{tpu_custom_call.1} parent=1 // pred_fallthru
      _
    // Predicated region
    $region66: #{tpu_custom_call.1} parent=1 // pred_check
      _
    $region67: #{tpu_custom_call.1} parent=1 // pred_check_branch
      %83 = sbr.rel (0) target = $region69
    $region68: #{tpu_custom_call.1} parent=1 // pred_region
      _
    $region69: #{tpu_custom_call.1} parent=1 // pred_fallthru
      _
    // Predicated region
    $region70: #{tpu_custom_call.1} parent=1 // pred_check
      _
    $region71: #{tpu_custom_call.1} parent=1 // pred_check_branch
      %85 = sbr.rel (0) target = $region73
    $region72: #{tpu_custom_call.1} parent=1 // pred_region
      _
    $region73: #{tpu_custom_call.1} parent=1 // pred_fallthru
      _
    // Predicated region
    $region74: #{tpu_custom_call.1} parent=1 // pred_check
      _
    $region75: #{tpu_custom_call.1} parent=1 // pred_check_branch
      %87 = sbr.rel (0) target = $region77
    $region76: #{tpu_custom_call.1} parent=1 // pred_region
      %89 = vsyncadd [#allocation6], 0
      %s90 = sshll.u32 %s18, 4
      %s91 = int_to_ptr.hbm [resolvable:$true] %s90
      %s92 = sshll.u32 [#allocation7], 4
      %s93 = int_to_ptr.vmem [resolvable:$true] %s92
      %98 = dma.hbm_to_vmem [thread:$0]  %s91, 512, %s93, [#allocation6], 128, 128, 8
    $region77: #{tpu_custom_call.1} parent=1 // pred_fallthru
      _
    // Predicated region
    $region78: #{tpu_custom_call.1} parent=1 // pred_check
      _
    $region79: #{tpu_custom_call.1} parent=1 // pred_check_branch
      %100 = sbr.rel (0) target = $region81
    $region80: #{tpu_custom_call.1} parent=1 // pred_region
      _
    $region81: #{tpu_custom_call.1} parent=1 // pred_fallthru
      _
    // Predicated region
    $region82: #{tpu_custom_call.1} parent=1 // pred_check
      _
    $region83: #{tpu_custom_call.1} parent=1 // pred_check_branch
      %102 = sbr.rel (0) target = $region85
    $region84: #{tpu_custom_call.1} parent=1 // pred_region
      %104 = dma.done [#allocation3], 512
    $region85: #{tpu_custom_call.1} parent=1 // pred_fallthru
      _
    // Predicated region
    $region86: #{tpu_custom_call.1} parent=1 // pred_check
      _
    $region87: #{tpu_custom_call.1} parent=1 // pred_check_branch
      %106 = sbr.rel (0) target = $region89
    $region88: #{tpu_custom_call.1} parent=1 // pred_region
      %108 = dma.done [#allocation6], 512
    $region89: #{tpu_custom_call.1} parent=1 // pred_fallthru
      _
    // Predicated region
    $region90: #{tpu_custom_call.1} parent=1 // pred_check
      _
    $region91: #{tpu_custom_call.1} parent=1 // pred_check_branch
      %110 = sbr.rel (0) target = $region93
    $region92: #{tpu_custom_call.1} parent=1 // pred_region
      %112 = dma.done [#allocation6], 512
    $region93: #{tpu_custom_call.1} parent=1 // pred_fallthru
      _
    %v114 = vld [vmem:[%s1] sm:$0x3]
    %v115 = vlaneseq
    %v116 = vand.u32 %v115, 127
    %117 = vset.pattern.permute.xlu0 0
    %118 = vperm.xlu0 %117, %v114
    %v119 = vpop.permute.xlu0 %118
    %vm120 = vcmp.lt.s32.totalorder %v116, %v119
    %v121 = vsel %vm120, 0.0, -1e+09
    %v123 = vrot.slane %v121, 1
    %v124 = vld [vmem:[#allocation5] sm:$0xff]
    %v125 = vld [vmem:[#allocation5 + $0x8] sm:$0xff]
    %v126 = vld [vmem:[#allocation5 + $0x10] sm:$0xff]
    %v127 = vld [vmem:[#allocation5 + $0x18] sm:$0xff]
    %vm128 = vcmp.eq.s32.totalorder %v124, 0
    %vm129 = vcmp.eq.s32.totalorder %v125, 0
    %vm130 = vcmp.eq.s32.totalorder %v126, 0
    %vm131 = vcmp.eq.s32.totalorder %v127, 0
    %vm132 = vcmp.eq.s32.totalorder %v124, 1
    %vm133 = vcmp.eq.s32.totalorder %v125, 1
    %vm134 = vcmp.eq.s32.totalorder %v126, 1
    %vm135 = vcmp.eq.s32.totalorder %v127, 1
    %vm136 = vcmp.eq.s32.totalorder %v124, 2
    %vm137 = vcmp.eq.s32.totalorder %v125, 2
    %vm138 = vcmp.eq.s32.totalorder %v126, 2
    %vm139 = vcmp.eq.s32.totalorder %v127, 2
    %vm140 = vcmp.eq.s32.totalorder %v124, 3
    %vm141 = vcmp.eq.s32.totalorder %v125, 3
    %vm142 = vcmp.eq.s32.totalorder %v126, 3
    %vm143 = vcmp.eq.s32.totalorder %v127, 3
    %vm144 = vcmp.eq.s32.totalorder %v124, 4
    %vm145 = vcmp.eq.s32.totalorder %v125, 4
    %vm146 = vcmp.eq.s32.totalorder %v126, 4
    %vm147 = vcmp.eq.s32.totalorder %v127, 4
    %vm148 = vcmp.eq.s32.totalorder %v124, 5
    %vm149 = vcmp.eq.s32.totalorder %v125, 5
    %vm150 = vcmp.eq.s32.totalorder %v126, 5
    %vm151 = vcmp.eq.s32.totalorder %v127, 5
    %vm152 = vcmp.eq.s32.totalorder %v124, 6
    %vm153 = vcmp.eq.s32.totalorder %v125, 6
    %vm154 = vcmp.eq.s32.totalorder %v126, 6
    %vm155 = vcmp.eq.s32.totalorder %v127, 6
    %vm156 = vcmp.eq.s32.totalorder %v124, 7
    %vm157 = vcmp.eq.s32.totalorder %v125, 7
    %vm158 = vcmp.eq.s32.totalorder %v126, 7
    %vm159 = vcmp.eq.s32.totalorder %v127, 7
    %vm160 = vcmp.eq.s32.totalorder %v124, 8
    %vm161 = vcmp.eq.s32.totalorder %v125, 8
    %vm162 = vcmp.eq.s32.totalorder %v126, 8
    %vm163 = vcmp.eq.s32.totalorder %v127, 8
    %vm164 = vcmp.eq.s32.totalorder %v124, 9
    %vm165 = vcmp.eq.s32.totalorder %v125, 9
    %vm166 = vcmp.eq.s32.totalorder %v126, 9
    %vm167 = vcmp.eq.s32.totalorder %v127, 9
    %vm168 = vcmp.eq.s32.totalorder %v124, 10
    %vm169 = vcmp.eq.s32.totalorder %v125, 10
    %vm170 = vcmp.eq.s32.totalorder %v126, 10
    %vm171 = vcmp.eq.s32.totalorder %v127, 10
    %v172 = vld [vmem:[#allocation2] sm:$0xff]
    %v173 = vld [vmem:[#allocation2 + $0x8] sm:$0xff]
    %v174 = vld [vmem:[#allocation2 + $0x10] sm:$0xff]
    %v175 = vld [vmem:[#allocation2 + $0x18] sm:$0xff]
    %v176 = vld [vmem:[%s3] sm:$0xff]
    %v177 = vld [vmem:[%s3 + $0x8] sm:$0xff]
    %v178 = vld [vmem:[%s3 + $0x10] sm:$0xff]
    %v179 = vld [vmem:[%s3 + $0x18] sm:$0xff]
    %v180 = vpack.c.bf16 %v173, %v172
    %v181 = vpack.c.bf16 %v175, %v174
    %v182 = vpack.c.bf16 %v177, %v176
    %v183 = vpack.c.bf16 %v179, %v178
    %vm184 = vcmask 261120
    %v186 = vsel %vm184, %v180, 0
    %v189 = vsel %vm184, %v181, 0
    %191 = vmatpush.bf16.msra.mxu0 0
    %192 = vmatpush.bf16.msra.mxu0 0
    %193 = vmatpush.bf16.msra.mxu0 0
    %194 = vmatpush.bf16.msra.mxu0 0
    %195 = vmatpush.bf16.msra.mxu0 0
    %196 = vmatpush.bf16.msra.mxu0 0
    %197 = vmatpush.bf16.msra.mxu0 %v183
    %198 = vmatpush.bf16.msra.mxu0 %v182
    %199 = vmatmul.bf16.gmra.mxu0 %v186
    %v200 = vpop.f32.mrf.mxu0
    %v201 = vadd.f32 0.0, %v200
    %v202 = vpop.f32.mrf.mxu0
    %v203 = vadd.f32 0.0, %v202
    %204 = vmatmul.bf16.gmra.mxu0 %v189
    %v205 = vpop.f32.mrf.mxu0
    %v206 = vadd.f32 0.0, %v205
    %v207 = vpop.f32.mrf.mxu0
    %v208 = vadd.f32 0.0, %v207
    %209 = vdwg.mxu0
    %210 = vxpose.xlu0.b32.start [1/16] %v201, 128
    %211 = vxpose.xlu0.b32.cont [2/16] %v203, 128
    %212 = vxpose.xlu0.b32.cont [3/16] 0.0, 128
    %213 = vxpose.xlu0.b32.cont [4/16] 0.0, 128
    %214 = vxpose.xlu0.b32.cont [5/16] 0.0, 128
    %215 = vxpose.xlu0.b32.cont [6/16] 0.0, 128
    %216 = vxpose.xlu0.b32.cont [7/16] 0.0, 128
    %217 = vxpose.xlu0.b32.cont [8/16] 0.0, 128
    %218 = vxpose.xlu0.b32.cont [9/16] 0.0, 128
    %219 = vxpose.xlu0.b32.cont [10/16] 0.0, 128
    %220 = vxpose.xlu0.b32.cont [11/16] 0.0, 128
    %221 = vxpose.xlu0.b32.cont [12/16] 0.0, 128
    %222 = vxpose.xlu0.b32.cont [13/16] 0.0, 128
    %223 = vxpose.xlu0.b32.cont [14/16] 0.0, 128
    %224 = vxpose.xlu0.b32.cont [15/16] 0.0, 128
    %225 = vxpose.xlu0.b32.end [16/16] 0.0, 128
    %v226 = vpop.trf.xlu0
    %v227 = vpop.trf.xlu0
    %v228 = vpop.trf.xlu0
    %v229 = vpop.trf.xlu0
    %v230 = vpop.trf.xlu0
    %v231 = vpop.trf.xlu0
    %v232 = vpop.trf.xlu0
    %v233 = vpop.trf.xlu0
    %v234 = vpop.trf.xlu0
    %v235 = vpop.trf.xlu0
    %v236 = vpop.trf.xlu0
    %v237 = vpop.trf.xlu0
    %v238 = vpop.trf.xlu0
    %v239 = vpop.trf.xlu0
    %v240 = vpop.trf.xlu0
    %v241 = vpop.trf.xlu0
    %242 = vxpose.xlu0.b32.start [1/16] %v206, 128
    %243 = vxpose.xlu0.b32.cont [2/16] %v208, 128
    %244 = vxpose.xlu0.b32.cont [3/16] 0.0, 128
    %245 = vxpose.xlu0.b32.cont [4/16] 0.0, 128
    %246 = vxpose.xlu0.b32.cont [5/16] 0.0, 128
    %247 = vxpose.xlu0.b32.cont [6/16] 0.0, 128
    %248 = vxpose.xlu0.b32.cont [7/16] 0.0, 128
    %249 = vxpose.xlu0.b32.cont [8/16] 0.0, 128
    %250 = vxpose.xlu0.b32.cont [9/16] 0.0, 128
    %251 = vxpose.xlu0.b32.cont [10/16] 0.0, 128
    %252 = vxpose.xlu0.b32.cont [11/16] 0.0, 128
    %253 = vxpose.xlu0.b32.cont [12/16] 0.0, 128
    %254 = vxpose.xlu0.b32.cont [13/16] 0.0, 128
    %255 = vxpose.xlu0.b32.cont [14/16] 0.0, 128
    %256 = vxpose.xlu0.b32.cont [15/16] 0.0, 128
    %257 = vxpose.xlu0.b32.end [16/16] 0.0, 128
    %v258 = vpop.trf.xlu0
    %v259 = vpop.trf.xlu0
    %v260 = vpop.trf.xlu0
    %v261 = vpop.trf.xlu0
    %v262 = vpop.trf.xlu0
    %v263 = vpop.trf.xlu0
    %v264 = vpop.trf.xlu0
    %v265 = vpop.trf.xlu0
    %v266 = vpop.trf.xlu0
    %v267 = vpop.trf.xlu0
    %v268 = vpop.trf.xlu0
    %v269 = vpop.trf.xlu0
    %v270 = vpop.trf.xlu0
    %v271 = vpop.trf.xlu0
    %v272 = vpop.trf.xlu0
    %v273 = vpop.trf.xlu0
    %274 = vxpose.xlu0.b32.start [1/16] %v226, 128
    %275 = vxpose.xlu0.b32.cont [2/16] 0.0, 128
    %276 = vxpose.xlu0.b32.cont [3/16] 0.0, 128
    %277 = vxpose.xlu0.b32.cont [4/16] 0.0, 128
    %278 = vxpose.xlu0.b32.cont [5/16] 0.0, 128
    %279 = vxpose.xlu0.b32.cont [6/16] 0.0, 128
    %280 = vxpose.xlu0.b32.cont [7/16] 0.0, 128
    %281 = vxpose.xlu0.b32.cont [8/16] 0.0, 128
    %282 = vxpose.xlu0.b32.cont [9/16] 0.0, 128
    %283 = vxpose.xlu0.b32.cont [10/16] 0.0, 128
    %284 = vxpose.xlu0.b32.cont [11/16] 0.0, 128
    %285 = vxpose.xlu0.b32.cont [12/16] 0.0, 128
    %286 = vxpose.xlu0.b32.cont [13/16] 0.0, 128
    %287 = vxpose.xlu0.b32.cont [14/16] 0.0, 128
    %288 = vxpose.xlu0.b32.cont [15/16] 0.0, 128
    %289 = vxpose.xlu0.b32.end [16/16] 0.0, 128
    %v290 = vpop.trf.xlu0
    %v291 = vpop.trf.xlu0
    %v292 = vpop.trf.xlu0
    %v293 = vpop.trf.xlu0
    %v294 = vpop.trf.xlu0
    %v295 = vpop.trf.xlu0
    %v296 = vpop.trf.xlu0
    %v297 = vpop.trf.xlu0
    %v298 = vpop.trf.xlu0
    %v299 = vpop.trf.xlu0
    %v300 = vpop.trf.xlu0
    %v301 = vpop.trf.xlu0
    %v302 = vpop.trf.xlu0
    %v303 = vpop.trf.xlu0
    %v304 = vpop.trf.xlu0
    %v305 = vpop.trf.xlu0
    %306 = vxpose.xlu0.b32.start [1/16] %v227, 128
    %307 = vxpose.xlu0.b32.cont [2/16] 0.0, 128
    %308 = vxpose.xlu0.b32.cont [3/16] 0.0, 128
    %309 = vxpose.xlu0.b32.cont [4/16] 0.0, 128
    %310 = vxpose.xlu0.b32.cont [5/16] 0.0, 128
    %311 = vxpose.xlu0.b32.cont [6/16] 0.0, 128
    %312 = vxpose.xlu0.b32.cont [7/16] 0.0, 128
    %313 = vxpose.xlu0.b32.cont [8/16] 0.0, 128
    %314 = vxpose.xlu0.b32.cont [9/16] 0.0, 128
    %315 = vxpose.xlu0.b32.cont [10/16] 0.0, 128
    %316 = vxpose.xlu0.b32.cont [11/16] 0.0, 128
    %317 = vxpose.xlu0.b32.cont [12/16] 0.0, 128
    %318 = vxpose.xlu0.b32.cont [13/16] 0.0, 128
    %319 = vxpose.xlu0.b32.cont [14/16] 0.0, 128
    %320 = vxpose.xlu0.b32.cont [15/16] 0.0, 128
    %321 = vxpose.xlu0.b32.end [16/16] 0.0, 128
    %v322 = vpop.trf.xlu0
    %v323 = vpop.trf.xlu0
    %v324 = vpop.trf.xlu0
    %v325 = vpop.trf.xlu0
    %v326 = vpop.trf.xlu0
    %v327 = vpop.trf.xlu0
    %v328 = vpop.trf.xlu0
    %v329 = vpop.trf.xlu0
    %v330 = vpop.trf.xlu0
    %v331 = vpop.trf.xlu0
    %v332 = vpop.trf.xlu0
    %v333 = vpop.trf.xlu0
    %v334 = vpop.trf.xlu0
    %v335 = vpop.trf.xlu0
    %v336 = vpop.trf.xlu0
    %v337 = vpop.trf.xlu0
    %338 = vxpose.xlu0.b32.start [1/16] %v228, 128
    %339 = vxpose.xlu0.b32.cont [2/16] 0.0, 128
    %340 = vxpose.xlu0.b32.cont [3/16] 0.0, 128
    %341 = vxpose.xlu0.b32.cont [4/16] 0.0, 128
    %342 = vxpose.xlu0.b32.cont [5/16] 0.0, 128
    %343 = vxpose.xlu0.b32.cont [6/16] 0.0, 128
    %344 = vxpose.xlu0.b32.cont [7/16] 0.0, 128
    %345 = vxpose.xlu0.b32.cont [8/16] 0.0, 128
    %346 = vxpose.xlu0.b32.cont [9/16] 0.0, 128
    %347 = vxpose.xlu0.b32.cont [10/16] 0.0, 128
    %348 = vxpose.xlu0.b32.cont [11/16] 0.0, 128
    %349 = vxpose.xlu0.b32.cont [12/16] 0.0, 128
    %350 = vxpose.xlu0.b32.cont [13/16] 0.0, 128
    %351 = vxpose.xlu0.b32.cont [14/16] 0.0, 128
    %352 = vxpose.xlu0.b32.cont [15/16] 0.0, 128
    %353 = vxpose.xlu0.b32.end [16/16] 0.0, 128
    %v354 = vpop.trf.xlu0
    %v355 = vpop.trf.xlu0
    %v356 = vpop.trf.xlu0
    %v357 = vpop.trf.xlu0
    %v358 = vpop.trf.xlu0
    %v359 = vpop.trf.xlu0
    %v360 = vpop.trf.xlu0
    %v361 = vpop.trf.xlu0
    %v362 = vpop.trf.xlu0
    %v363 = vpop.trf.xlu0
    %v364 = vpop.trf.xlu0
    %v365 = vpop.trf.xlu0
    %v366 = vpop.trf.xlu0
    %v367 = vpop.trf.xlu0
    %v368 = vpop.trf.xlu0
    %v369 = vpop.trf.xlu0
    %370 = vxpose.xlu0.b32.start [1/16] %v229, 128
    %371 = vxpose.xlu0.b32.cont [2/16] 0.0, 128
    %372 = vxpose.xlu0.b32.cont [3/16] 0.0, 128
    %373 = vxpose.xlu0.b32.cont [4/16] 0.0, 128
    %374 = vxpose.xlu0.b32.cont [5/16] 0.0, 128
    %375 = vxpose.xlu0.b32.cont [6/16] 0.0, 128
    %376 = vxpose.xlu0.b32.cont [7/16] 0.0, 128
    %377 = vxpose.xlu0.b32.cont [8/16] 0.0, 128
    %378 = vxpose.xlu0.b32.cont [9/16] 0.0, 128
    %379 = vxpose.xlu0.b32.cont [10/16] 0.0, 128
    %380 = vxpose.xlu0.b32.cont [11/16] 0.0, 128
    %381 = vxpose.xlu0.b32.cont [12/16] 0.0, 128
    %382 = vxpose.xlu0.b32.cont [13/16] 0.0, 128
    %383 = vxpose.xlu0.b32.cont [14/16] 0.0, 128
    %384 = vxpose.xlu0.b32.cont [15/16] 0.0, 128
    %385 = vxpose.xlu0.b32.end [16/16] 0.0, 128
    %v386 = vpop.trf.xlu0
    %v387 = vpop.trf.xlu0
    %v388 = vpop.trf.xlu0
    %v389 = vpop.trf.xlu0
    %v390 = vpop.trf.xlu0
    %v391 = vpop.trf.xlu0
    %v392 = vpop.trf.xlu0
    %v393 = vpop.trf.xlu0
    %v394 = vpop.trf.xlu0
    %v395 = vpop.trf.xlu0
    %v396 = vpop.trf.xlu0
    %v397 = vpop.trf.xlu0
    %v398 = vpop.trf.xlu0
    %v399 = vpop.trf.xlu0
    %v400 = vpop.trf.xlu0
    %v401 = vpop.trf.xlu0
    %402 = vxpose.xlu0.b32.start [1/16] %v258, 128
    %403 = vxpose.xlu0.b32.cont [2/16] 0.0, 128
    %404 = vxpose.xlu0.b32.cont [3/16] 0.0, 128
    %405 = vxpose.xlu0.b32.cont [4/16] 0.0, 128
    %406 = vxpose.xlu0.b32.cont [5/16] 0.0, 128
    %407 = vxpose.xlu0.b32.cont [6/16] 0.0, 128
    %408 = vxpose.xlu0.b32.cont [7/16] 0.0, 128
    %409 = vxpose.xlu0.b32.cont [8/16] 0.0, 128
    %410 = vxpose.xlu0.b32.cont [9/16] 0.0, 128
    %411 = vxpose.xlu0.b32.cont [10/16] 0.0, 128
    %412 = vxpose.xlu0.b32.cont [11/16] 0.0, 128
    %413 = vxpose.xlu0.b32.cont [12/16] 0.0, 128
    %414 = vxpose.xlu0.b32.cont [13/16] 0.0, 128
    %415 = vxpose.xlu0.b32.cont [14/16] 0.0, 128
    %416 = vxpose.xlu0.b32.cont [15/16] 0.0, 128
    %417 = vxpose.xlu0.b32.end [16/16] 0.0, 128
    %v418 = vpop.trf.xlu0
    %v419 = vpop.trf.xlu0
    %v420 = vpop.trf.xlu0
    %v421 = vpop.trf.xlu0
    %v422 = vpop.trf.xlu0
    %v423 = vpop.trf.xlu0
    %v424 = vpop.trf.xlu0
    %v425 = vpop.trf.xlu0
    %v426 = vpop.trf.xlu0
    %v427 = vpop.trf.xlu0
    %v428 = vpop.trf.xlu0
    %v429 = vpop.trf.xlu0
    %v430 = vpop.trf.xlu0
    %v431 = vpop.trf.xlu0
    %v432 = vpop.trf.xlu0
    %v433 = vpop.trf.xlu0
    %434 = vxpose.xlu0.b32.start [1/16] %v259, 128
    %435 = vxpose.xlu0.b32.cont [2/16] 0.0, 128
    %436 = vxpose.xlu0.b32.cont [3/16] 0.0, 128
    %437 = vxpose.xlu0.b32.cont [4/16] 0.0, 128
    %438 = vxpose.xlu0.b32.cont [5/16] 0.0, 128
    %439 = vxpose.xlu0.b32.cont [6/16] 0.0, 128
    %440 = vxpose.xlu0.b32.cont [7/16] 0.0, 128
    %441 = vxpose.xlu0.b32.cont [8/16] 0.0, 128
    %442 = vxpose.xlu0.b32.cont [9/16] 0.0, 128
    %443 = vxpose.xlu0.b32.cont [10/16] 0.0, 128
    %444 = vxpose.xlu0.b32.cont [11/16] 0.0, 128
    %445 = vxpose.xlu0.b32.cont [12/16] 0.0, 128
    %446 = vxpose.xlu0.b32.cont [13/16] 0.0, 128
    %447 = vxpose.xlu0.b32.cont [14/16] 0.0, 128
    %448 = vxpose.xlu0.b32.cont [15/16] 0.0, 128
    %449 = vxpose.xlu0.b32.end [16/16] 0.0, 128
    %v450 = vpop.trf.xlu0
    %v451 = vpop.trf.xlu0
    %v452 = vpop.trf.xlu0
    %v453 = vpop.trf.xlu0
    %v454 = vpop.trf.xlu0
    %v455 = vpop.trf.xlu0
    %v456 = vpop.trf.xlu0
    %v457 = vpop.trf.xlu0
    %v458 = vpop.trf.xlu0
    %v459 = vpop.trf.xlu0
    %v460 = vpop.trf.xlu0
    %v461 = vpop.trf.xlu0
    %v462 = vpop.trf.xlu0
    %v463 = vpop.trf.xlu0
    %v464 = vpop.trf.xlu0
    %v465 = vpop.trf.xlu0
    %466 = vxpose.xlu0.b32.start [1/16] %v260, 128
    %467 = vxpose.xlu0.b32.cont [2/16] 0.0, 128
    %468 = vxpose.xlu0.b32.cont [3/16] 0.0, 128
    %469 = vxpose.xlu0.b32.cont [4/16] 0.0, 128
    %470 = vxpose.xlu0.b32.cont [5/16] 0.0, 128
    %471 = vxpose.xlu0.b32.cont [6/16] 0.0, 128
    %472 = vxpose.xlu0.b32.cont [7/16] 0.0, 128
    %473 = vxpose.xlu0.b32.cont [8/16] 0.0, 128
    %474 = vxpose.xlu0.b32.cont [9/16] 0.0, 128
    %475 = vxpose.xlu0.b32.cont [10/16] 0.0, 128
    %476 = vxpose.xlu0.b32.cont [11/16] 0.0, 128
    %477 = vxpose.xlu0.b32.cont [12/16] 0.0, 128
    %478 = vxpose.xlu0.b32.cont [13/16] 0.0, 128
    %479 = vxpose.xlu0.b32.cont [14/16] 0.0, 128
    %480 = vxpose.xlu0.b32.cont [15/16] 0.0, 128
    %481 = vxpose.xlu0.b32.end [16/16] 0.0, 128
    %v482 = vpop.trf.xlu0
    %v483 = vpop.trf.xlu0
    %v484 = vpop.trf.xlu0
    %v485 = vpop.trf.xlu0
    %v486 = vpop.trf.xlu0
    %v487 = vpop.trf.xlu0
    %v488 = vpop.trf.xlu0
    %v489 = vpop.trf.xlu0
    %v490 = vpop.trf.xlu0
    %v491 = vpop.trf.xlu0
    %v492 = vpop.trf.xlu0
    %v493 = vpop.trf.xlu0
    %v494 = vpop.trf.xlu0
    %v495 = vpop.trf.xlu0
    %v496 = vpop.trf.xlu0
    %v497 = vpop.trf.xlu0
    %498 = vxpose.xlu0.b32.start [1/16] %v261, 128
    %499 = vxpose.xlu0.b32.cont [2/16] 0.0, 128
    %500 = vxpose.xlu0.b32.cont [3/16] 0.0, 128
    %501 = vxpose.xlu0.b32.cont [4/16] 0.0, 128
    %502 = vxpose.xlu0.b32.cont [5/16] 0.0, 128
    %503 = vxpose.xlu0.b32.cont [6/16] 0.0, 128
    %504 = vxpose.xlu0.b32.cont [7/16] 0.0, 128
    %505 = vxpose.xlu0.b32.cont [8/16] 0.0, 128
    %506 = vxpose.xlu0.b32.cont [9/16] 0.0, 128
    %507 = vxpose.xlu0.b32.cont [10/16] 0.0, 128
    %508 = vxpose.xlu0.b32.cont [11/16] 0.0, 128
    %509 = vxpose.xlu0.b32.cont [12/16] 0.0, 128
    %510 = vxpose.xlu0.b32.cont [13/16] 0.0, 128
    %511 = vxpose.xlu0.b32.cont [14/16] 0.0, 128
    %512 = vxpose.xlu0.b32.cont [15/16] 0.0, 128
    %513 = vxpose.xlu0.b32.end [16/16] 0.0, 128
    %v514 = vpop.trf.xlu0
    %v515 = vpop.trf.xlu0
    %v516 = vpop.trf.xlu0
    %v517 = vpop.trf.xlu0
    %v518 = vpop.trf.xlu0
    %v519 = vpop.trf.xlu0
    %v520 = vpop.trf.xlu0
    %v521 = vpop.trf.xlu0
    %v522 = vpop.trf.xlu0
    %v523 = vpop.trf.xlu0
    %v524 = vpop.trf.xlu0
    %v525 = vpop.trf.xlu0
    %v526 = vpop.trf.xlu0
    %v527 = vpop.trf.xlu0
    %v528 = vpop.trf.xlu0
    %v529 = vpop.trf.xlu0
    %v530 = vld [vmem:[%s4] sm:$0xff]
    %v531 = vld [vmem:[%s4 + $0x8] sm:$0xff]
    %v532 = vld [vmem:[%s4 + $0x10] sm:$0xff]
    %v533 = vld [vmem:[%s4 + $0x18] sm:$0xff]
    %v534 = vpack.c.bf16 %v531, %v530
    %v535 = vpack.c.bf16 %v533, %v532
    %536 = vmatpush.bf16.msra.mxu0 0
    %537 = vmatpush.bf16.msra.mxu0 0
    %538 = vmatpush.bf16.msra.mxu0 0
    %539 = vmatpush.bf16.msra.mxu0 0
    %540 = vmatpush.bf16.msra.mxu0 0
    %541 = vmatpush.bf16.msra.mxu0 0
    %542 = vmatpush.bf16.msra.mxu0 %v535
    %543 = vmatpush.bf16.msra.mxu0 %v534
    %544 = vmatmul.bf16.gmra.mxu0 %v186
    %v545 = vpop.f32.mrf.mxu0
    %v546 = vadd.f32 0.0, %v545
    %v547 = vpop.f32.mrf.mxu0
    %v548 = vadd.f32 0.0, %v547
    %549 = vmatmul.bf16.gmra.mxu0 %v189
    %v550 = vpop.f32.mrf.mxu0
    %v551 = vadd.f32 0.0, %v550
    %v552 = vpop.f32.mrf.mxu0
    %v553 = vadd.f32 0.0, %v552
    %554 = vdwg.mxu0
    %555 = vxpose.xlu0.b32.start [1/16] %v546, 128
    %556 = vxpose.xlu0.b32.cont [2/16] %v548, 128
    %557 = vxpose.xlu0.b32.cont [3/16] 0.0, 128
    %558 = vxpose.xlu0.b32.cont [4/16] 0.0, 128
    %559 = vxpose.xlu0.b32.cont [5/16] 0.0, 128
    %560 = vxpose.xlu0.b32.cont [6/16] 0.0, 128
    %561 = vxpose.xlu0.b32.cont [7/16] 0.0, 128
    %562 = vxpose.xlu0.b32.cont [8/16] 0.0, 128
    %563 = vxpose.xlu0.b32.cont [9/16] 0.0, 128
    %564 = vxpose.xlu0.b32.cont [10/16] 0.0, 128
    %565 = vxpose.xlu0.b32.cont [11/16] 0.0, 128
    %566 = vxpose.xlu0.b32.cont [12/16] 0.0, 128
    %567 = vxpose.xlu0.b32.cont [13/16] 0.0, 128
    %568 = vxpose.xlu0.b32.cont [14/16] 0.0, 128
    %569 = vxpose.xlu0.b32.cont [15/16] 0.0, 128
    %570 = vxpose.xlu0.b32.end [16/16] 0.0, 128
    %v571 = vpop.trf.xlu0
    %v572 = vpop.trf.xlu0
    %v573 = vpop.trf.xlu0
    %v574 = vpop.trf.xlu0
    %v575 = vpop.trf.xlu0
    %v576 = vpop.trf.xlu0
    %v577 = vpop.trf.xlu0
    %v578 = vpop.trf.xlu0
    %v579 = vpop.trf.xlu0
    %v580 = vpop.trf.xlu0
    %v581 = vpop.trf.xlu0
    %v582 = vpop.trf.xlu0
    %v583 = vpop.trf.xlu0
    %v584 = vpop.trf.xlu0
    %v585 = vpop.trf.xlu0
    %v586 = vpop.trf.xlu0
    %587 = vxpose.xlu0.b32.start [1/16] %v551, 128
    %588 = vxpose.xlu0.b32.cont [2/16] %v553, 128
    %589 = vxpose.xlu0.b32.cont [3/16] 0.0, 128
    %590 = vxpose.xlu0.b32.cont [4/16] 0.0, 128
    %591 = vxpose.xlu0.b32.cont [5/16] 0.0, 128
    %592 = vxpose.xlu0.b32.cont [6/16] 0.0, 128
    %593 = vxpose.xlu0.b32.cont [7/16] 0.0, 128
    %594 = vxpose.xlu0.b32.cont [8/16] 0.0, 128
    %595 = vxpose.xlu0.b32.cont [9/16] 0.0, 128
    %596 = vxpose.xlu0.b32.cont [10/16] 0.0, 128
    %597 = vxpose.xlu0.b32.cont [11/16] 0.0, 128
    %598 = vxpose.xlu0.b32.cont [12/16] 0.0, 128
    %599 = vxpose.xlu0.b32.cont [13/16] 0.0, 128
    %600 = vxpose.xlu0.b32.cont [14/16] 0.0, 128
    %601 = vxpose.xlu0.b32.cont [15/16] 0.0, 128
    %602 = vxpose.xlu0.b32.end [16/16] 0.0, 128
    %v603 = vpop.trf.xlu0
    %v604 = vpop.trf.xlu0
    %v605 = vpop.trf.xlu0
    %v606 = vpop.trf.xlu0
    %v607 = vpop.trf.xlu0
    %v608 = vpop.trf.xlu0
    %v609 = vpop.trf.xlu0
    %v610 = vpop.trf.xlu0
    %v611 = vpop.trf.xlu0
    %v612 = vpop.trf.xlu0
    %v613 = vpop.trf.xlu0
    %v614 = vpop.trf.xlu0
    %v615 = vpop.trf.xlu0
    %v616 = vpop.trf.xlu0
    %v617 = vpop.trf.xlu0
    %v618 = vpop.trf.xlu0
    %619 = vxpose.xlu0.b32.start [1/16] %v571, 128
    %620 = vxpose.xlu0.b32.cont [2/16] 0.0, 128
    %621 = vxpose.xlu0.b32.cont [3/16] 0.0, 128
    %622 = vxpose.xlu0.b32.cont [4/16] 0.0, 128
    %623 = vxpose.xlu0.b32.cont [5/16] 0.0, 128
    %624 = vxpose.xlu0.b32.cont [6/16] 0.0, 128
    %625 = vxpose.xlu0.b32.cont [7/16] 0.0, 128
    %626 = vxpose.xlu0.b32.cont [8/16] 0.0, 128
    %627 = vxpose.xlu0.b32.cont [9/16] 0.0, 128
    %628 = vxpose.xlu0.b32.cont [10/16] 0.0, 128
    %629 = vxpose.xlu0.b32.cont [11/16] 0.0, 128
    %630 = vxpose.xlu0.b32.cont [12/16] 0.0, 128
    %631 = vxpose.xlu0.b32.cont [13/16] 0.0, 128
    %632 = vxpose.xlu0.b32.cont [14/16] 0.0, 128
    %633 = vxpose.xlu0.b32.cont [15/16] 0.0, 128
    %634 = vxpose.xlu0.b32.end [16/16] 0.0, 128
    %v635 = vpop.trf.xlu0
    %v636 = vpop.trf.xlu0
    %v637 = vpop.trf.xlu0
    %v638 = vpop.trf.xlu0
    %v639 = vpop.trf.xlu0
    %v640 = vpop.trf.xlu0
    %v641 = vpop.trf.xlu0
    %v642 = vpop.trf.xlu0
    %v643 = vpop.trf.xlu0
    %v644 = vpop.trf.xlu0
    %v645 = vpop.trf.xlu0
    %v646 = vpop.trf.xlu0
    %v647 = vpop.trf.xlu0
    %v648 = vpop.trf.xlu0
    %v649 = vpop.trf.xlu0
    %v650 = vpop.trf.xlu0
    %651 = vxpose.xlu0.b32.start [1/16] %v572, 128
    %652 = vxpose.xlu0.b32.cont [2/16] 0.0, 128
    %653 = vxpose.xlu0.b32.cont [3/16] 0.0, 128
    %654 = vxpose.xlu0.b32.cont [4/16] 0.0, 128
    %655 = vxpose.xlu0.b32.cont [5/16] 0.0, 128
    %656 = vxpose.xlu0.b32.cont [6/16] 0.0, 128
    %657 = vxpose.xlu0.b32.cont [7/16] 0.0, 128
    %658 = vxpose.xlu0.b32.cont [8/16] 0.0, 128
    %659 = vxpose.xlu0.b32.cont [9/16] 0.0, 128
    %660 = vxpose.xlu0.b32.cont [10/16] 0.0, 128
    %661 = vxpose.xlu0.b32.cont [11/16] 0.0, 128
    %662 = vxpose.xlu0.b32.cont [12/16] 0.0, 128
    %663 = vxpose.xlu0.b32.cont [13/16] 0.0, 128
    %664 = vxpose.xlu0.b32.cont [14/16] 0.0, 128
    %665 = vxpose.xlu0.b32.cont [15/16] 0.0, 128
    %666 = vxpose.xlu0.b32.end [16/16] 0.0, 128
    %v667 = vpop.trf.xlu0
    %v668 = vpop.trf.xlu0
    %v669 = vpop.trf.xlu0
    %v670 = vpop.trf.xlu0
    %v671 = vpop.trf.xlu0
    %v672 = vpop.trf.xlu0
    %v673 = vpop.trf.xlu0
    %v674 = vpop.trf.xlu0
    %v675 = vpop.trf.xlu0
    %v676 = vpop.trf.xlu0
    %v677 = vpop.trf.xlu0
    %v678 = vpop.trf.xlu0
    %v679 = vpop.trf.xlu0
    %v680 = vpop.trf.xlu0
    %v681 = vpop.trf.xlu0
    %v682 = vpop.trf.xlu0
    %683 = vxpose.xlu0.b32.start [1/16] %v573, 128
    %684 = vxpose.xlu0.b32.cont [2/16] 0.0, 128
    %685 = vxpose.xlu0.b32.cont [3/16] 0.0, 128
    %686 = vxpose.xlu0.b32.cont [4/16] 0.0, 128
    %687 = vxpose.xlu0.b32.cont [5/16] 0.0, 128
    %688 = vxpose.xlu0.b32.cont [6/16] 0.0, 128
    %689 = vxpose.xlu0.b32.cont [7/16] 0.0, 128
    %690 = vxpose.xlu0.b32.cont [8/16] 0.0, 128
    %691 = vxpose.xlu0.b32.cont [9/16] 0.0, 128
    %692 = vxpose.xlu0.b32.cont [10/16] 0.0, 128
    %693 = vxpose.xlu0.b32.cont [11/16] 0.0, 128
    %694 = vxpose.xlu0.b32.cont [12/16] 0.0, 128
    %695 = vxpose.xlu0.b32.cont [13/16] 0.0, 128
    %696 = vxpose.xlu0.b32.cont [14/16] 0.0, 128
    %697 = vxpose.xlu0.b32.cont [15/16] 0.0, 128
    %698 = vxpose.xlu0.b32.end [16/16] 0.0, 128
    %v699 = vpop.trf.xlu0
    %v700 = vpop.trf.xlu0
    %v701 = vpop.trf.xlu0
    %v702 = vpop.trf.xlu0
    %v703 = vpop.trf.xlu0
    %v704 = vpop.trf.xlu0
    %v705 = vpop.trf.xlu0
    %v706 = vpop.trf.xlu0
    %v707 = vpop.trf.xlu0
    %v708 = vpop.trf.xlu0
    %v709 = vpop.trf.xlu0
    %v710 = vpop.trf.xlu0
    %v711 = vpop.trf.xlu0
    %v712 = vpop.trf.xlu0
    %v713 = vpop.trf.xlu0
    %v714 = vpop.trf.xlu0
    %715 = vxpose.xlu0.b32.start [1/16] %v574, 128
    %716 = vxpose.xlu0.b32.cont [2/16] 0.0, 128
    %717 = vxpose.xlu0.b32.cont [3/16] 0.0, 128
    %718 = vxpose.xlu0.b32.cont [4/16] 0.0, 128
    %719 = vxpose.xlu0.b32.cont [5/16] 0.0, 128
    %720 = vxpose.xlu0.b32.cont [6/16] 0.0, 128
    %721 = vxpose.xlu0.b32.cont [7/16] 0.0, 128
    %722 = vxpose.xlu0.b32.cont [8/16] 0.0, 128
    %723 = vxpose.xlu0.b32.cont [9/16] 0.0, 128
    %724 = vxpose.xlu0.b32.cont [10/16] 0.0, 128
    %725 = vxpose.xlu0.b32.cont [11/16] 0.0, 128
    %726 = vxpose.xlu0.b32.cont [12/16] 0.0, 128
    %727 = vxpose.xlu0.b32.cont [13/16] 0.0, 128
    %728 = vxpose.xlu0.b32.cont [14/16] 0.0, 128
    %729 = vxpose.xlu0.b32.cont [15/16] 0.0, 128
    %730 = vxpose.xlu0.b32.end [16/16] 0.0, 128
    %v731 = vpop.trf.xlu0
    %v732 = vpop.trf.xlu0
    %v733 = vpop.trf.xlu0
    %v734 = vpop.trf.xlu0
    %v735 = vpop.trf.xlu0
    %v736 = vpop.trf.xlu0
    %v737 = vpop.trf.xlu0
    %v738 = vpop.trf.xlu0
    %v739 = vpop.trf.xlu0
    %v740 = vpop.trf.xlu0
    %v741 = vpop.trf.xlu0
    %v742 = vpop.trf.xlu0
    %v743 = vpop.trf.xlu0
    %v744 = vpop.trf.xlu0
    %v745 = vpop.trf.xlu0
    %v746 = vpop.trf.xlu0
    %747 = vxpose.xlu0.b32.start [1/16] %v603, 128
    %748 = vxpose.xlu0.b32.cont [2/16] 0.0, 128
    %749 = vxpose.xlu0.b32.cont [3/16] 0.0, 128
    %750 = vxpose.xlu0.b32.cont [4/16] 0.0, 128
    %751 = vxpose.xlu0.b32.cont [5/16] 0.0, 128
    %752 = vxpose.xlu0.b32.cont [6/16] 0.0, 128
    %753 = vxpose.xlu0.b32.cont [7/16] 0.0, 128
    %754 = vxpose.xlu0.b32.cont [8/16] 0.0, 128
    %755 = vxpose.xlu0.b32.cont [9/16] 0.0, 128
    %756 = vxpose.xlu0.b32.cont [10/16] 0.0, 128
    %757 = vxpose.xlu0.b32.cont [11/16] 0.0, 128
    %758 = vxpose.xlu0.b32.cont [12/16] 0.0, 128
    %759 = vxpose.xlu0.b32.cont [13/16] 0.0, 128
    %760 = vxpose.xlu0.b32.cont [14/16] 0.0, 128
    %761 = vxpose.xlu0.b32.cont [15/16] 0.0, 128
    %762 = vxpose.xlu0.b32.end [16/16] 0.0, 128
    %v763 = vpop.trf.xlu0
    %v764 = vpop.trf.xlu0
    %v765 = vpop.trf.xlu0
    %v766 = vpop.trf.xlu0
    %v767 = vpop.trf.xlu0
    %v768 = vpop.trf.xlu0
    %v769 = vpop.trf.xlu0
    %v770 = vpop.trf.xlu0
    %v771 = vpop.trf.xlu0
    %v772 = vpop.trf.xlu0
    %v773 = vpop.trf.xlu0
    %v774 = vpop.trf.xlu0
    %v775 = vpop.trf.xlu0
    %v776 = vpop.trf.xlu0
    %v777 = vpop.trf.xlu0
    %v778 = vpop.trf.xlu0
    %779 = vxpose.xlu0.b32.start [1/16] %v604, 128
    %780 = vxpose.xlu0.b32.cont [2/16] 0.0, 128
    %781 = vxpose.xlu0.b32.cont [3/16] 0.0, 128
    %782 = vxpose.xlu0.b32.cont [4/16] 0.0, 128
    %783 = vxpose.xlu0.b32.cont [5/16] 0.0, 128
    %784 = vxpose.xlu0.b32.cont [6/16] 0.0, 128
    %785 = vxpose.xlu0.b32.cont [7/16] 0.0, 128
    %786 = vxpose.xlu0.b32.cont [8/16] 0.0, 128
    %787 = vxpose.xlu0.b32.cont [9/16] 0.0, 128
    %788 = vxpose.xlu0.b32.cont [10/16] 0.0, 128
    %789 = vxpose.xlu0.b32.cont [11/16] 0.0, 128
    %790 = vxpose.xlu0.b32.cont [12/16] 0.0, 128
    %791 = vxpose.xlu0.b32.cont [13/16] 0.0, 128
    %792 = vxpose.xlu0.b32.cont [14/16] 0.0, 128
    %793 = vxpose.xlu0.b32.cont [15/16] 0.0, 128
    %794 = vxpose.xlu0.b32.end [16/16] 0.0, 128
    %v795 = vpop.trf.xlu0
    %v796 = vpop.trf.xlu0
    %v797 = vpop.trf.xlu0
    %v798 = vpop.trf.xlu0
    %v799 = vpop.trf.xlu0
    %v800 = vpop.trf.xlu0
    %v801 = vpop.trf.xlu0
    %v802 = vpop.trf.xlu0
    %v803 = vpop.trf.xlu0
    %v804 = vpop.trf.xlu0
    %v805 = vpop.trf.xlu0
    %v806 = vpop.trf.xlu0
    %v807 = vpop.trf.xlu0
    %v808 = vpop.trf.xlu0
    %v809 = vpop.trf.xlu0
    %v810 = vpop.trf.xlu0
    %811 = vxpose.xlu0.b32.start [1/16] %v605, 128
    %812 = vxpose.xlu0.b32.cont [2/16] 0.0, 128
    %813 = vxpose.xlu0.b32.cont [3/16] 0.0, 128
    %814 = vxpose.xlu0.b32.cont [4/16] 0.0, 128
    %815 = vxpose.xlu0.b32.cont [5/16] 0.0, 128
    %816 = vxpose.xlu0.b32.cont [6/16] 0.0, 128
    %817 = vxpose.xlu0.b32.cont [7/16] 0.0, 128
    %818 = vxpose.xlu0.b32.cont [8/16] 0.0, 128
    %819 = vxpose.xlu0.b32.cont [9/16] 0.0, 128
    %820 = vxpose.xlu0.b32.cont [10/16] 0.0, 128
    %821 = vxpose.xlu0.b32.cont [11/16] 0.0, 128
    %822 = vxpose.xlu0.b32.cont [12/16] 0.0, 128
    %823 = vxpose.xlu0.b32.cont [13/16] 0.0, 128
    %824 = vxpose.xlu0.b32.cont [14/16] 0.0, 128
    %825 = vxpose.xlu0.b32.cont [15/16] 0.0, 128
    %826 = vxpose.xlu0.b32.end [16/16] 0.0, 128
    %v827 = vpop.trf.xlu0
    %v828 = vpop.trf.xlu0
    %v829 = vpop.trf.xlu0
    %v830 = vpop.trf.xlu0
    %v831 = vpop.trf.xlu0
    %v832 = vpop.trf.xlu0
    %v833 = vpop.trf.xlu0
    %v834 = vpop.trf.xlu0
    %v835 = vpop.trf.xlu0
    %v836 = vpop.trf.xlu0
    %v837 = vpop.trf.xlu0
    %v838 = vpop.trf.xlu0
    %v839 = vpop.trf.xlu0
    %v840 = vpop.trf.xlu0
    %v841 = vpop.trf.xlu0
    %v842 = vpop.trf.xlu0
    %843 = vxpose.xlu0.b32.start [1/16] %v606, 128
    %844 = vxpose.xlu0.b32.cont [2/16] 0.0, 128
    %845 = vxpose.xlu0.b32.cont [3/16] 0.0, 128
    %846 = vxpose.xlu0.b32.cont [4/16] 0.0, 128
    %847 = vxpose.xlu0.b32.cont [5/16] 0.0, 128
    %848 = vxpose.xlu0.b32.cont [6/16] 0.0, 128
    %849 = vxpose.xlu0.b32.cont [7/16] 0.0, 128
    %850 = vxpose.xlu0.b32.cont [8/16] 0.0, 128
    %851 = vxpose.xlu0.b32.cont [9/16] 0.0, 128
    %852 = vxpose.xlu0.b32.cont [10/16] 0.0, 128
    %853 = vxpose.xlu0.b32.cont [11/16] 0.0, 128
    %854 = vxpose.xlu0.b32.cont [12/16] 0.0, 128
    %855 = vxpose.xlu0.b32.cont [13/16] 0.0, 128
    %856 = vxpose.xlu0.b32.cont [14/16] 0.0, 128
    %857 = vxpose.xlu0.b32.cont [15/16] 0.0, 128
    %858 = vxpose.xlu0.b32.end [16/16] 0.0, 128
    %v859 = vpop.trf.xlu0
    %v860 = vpop.trf.xlu0
    %v861 = vpop.trf.xlu0
    %v862 = vpop.trf.xlu0
    %v863 = vpop.trf.xlu0
    %v864 = vpop.trf.xlu0
    %v865 = vpop.trf.xlu0
    %v866 = vpop.trf.xlu0
    %v867 = vpop.trf.xlu0
    %v868 = vpop.trf.xlu0
    %v869 = vpop.trf.xlu0
    %v870 = vpop.trf.xlu0
    %v871 = vpop.trf.xlu0
    %v872 = vpop.trf.xlu0
    %v873 = vpop.trf.xlu0
    %v874 = vpop.trf.xlu0
    %v875 = vld [vmem:[%s5] sm:$0xff]
    %v876 = vld [vmem:[%s5 + $0x8] sm:$0xff]
    %v877 = vld [vmem:[%s5 + $0x10] sm:$0xff]
    %v878 = vld [vmem:[%s5 + $0x18] sm:$0xff]
    %v879 = vpack.c.bf16 %v876, %v875
    %v880 = vpack.c.bf16 %v878, %v877
    %881 = vmatpush.bf16.msra.mxu0 0
    %882 = vmatpush.bf16.msra.mxu0 0
    %883 = vmatpush.bf16.msra.mxu0 0
    %884 = vmatpush.bf16.msra.mxu0 0
    %885 = vmatpush.bf16.msra.mxu0 0
    %886 = vmatpush.bf16.msra.mxu0 0
    %887 = vmatpush.bf16.msra.mxu0 %v880
    %888 = vmatpush.bf16.msra.mxu0 %v879
    %889 = vmatmul.bf16.gmra.mxu0 %v186
    %v890 = vpop.f32.mrf.mxu0
    %v891 = vadd.f32 0.0, %v890
    %v892 = vpop.f32.mrf.mxu0
    %v893 = vadd.f32 0.0, %v892
    %894 = vmatmul.bf16.gmra.mxu0 %v189
    %v895 = vpop.f32.mrf.mxu0
    %v896 = vadd.f32 0.0, %v895
    %v897 = vpop.f32.mrf.mxu0
    %v898 = vadd.f32 0.0, %v897
    %899 = vdwg.mxu0
    %900 = vxpose.xlu0.b32.start [1/16] %v891, 128
    %901 = vxpose.xlu0.b32.cont [2/16] %v893, 128
    %902 = vxpose.xlu0.b32.cont [3/16] 0.0, 128
    %903 = vxpose.xlu0.b32.cont [4/16] 0.0, 128
    %904 = vxpose.xlu0.b32.cont [5/16] 0.0, 128
    %905 = vxpose.xlu0.b32.cont [6/16] 0.0, 128
    %906 = vxpose.xlu0.b32.cont [7/16] 0.0, 128
    %907 = vxpose.xlu0.b32.cont [8/16] 0.0, 128
    %908 = vxpose.xlu0.b32.cont [9/16] 0.0, 128
    %909 = vxpose.xlu0.b32.cont [10/16] 0.0, 128
    %910 = vxpose.xlu0.b32.cont [11/16] 0.0, 128
    %911 = vxpose.xlu0.b32.cont [12/16] 0.0, 128
    %912 = vxpose.xlu0.b32.cont [13/16] 0.0, 128
    %913 = vxpose.xlu0.b32.cont [14/16] 0.0, 128
    %914 = vxpose.xlu0.b32.cont [15/16] 0.0, 128
    %915 = vxpose.xlu0.b32.end [16/16] 0.0, 128
    %v916 = vpop.trf.xlu0
    %v917 = vpop.trf.xlu0
    %v918 = vpop.trf.xlu0
    %v919 = vpop.trf.xlu0
    %v920 = vpop.trf.xlu0
    %v921 = vpop.trf.xlu0
    %v922 = vpop.trf.xlu0
    %v923 = vpop.trf.xlu0
    %v924 = vpop.trf.xlu0
    %v925 = vpop.trf.xlu0
    %v926 = vpop.trf.xlu0
    %v927 = vpop.trf.xlu0
    %v928 = vpop.trf.xlu0
    %v929 = vpop.trf.xlu0
    %v930 = vpop.trf.xlu0
    %v931 = vpop.trf.xlu0
    %932 = vxpose.xlu0.b32.start [1/16] %v896, 128
    %933 = vxpose.xlu0.b32.cont [2/16] %v898, 128
    %934 = vxpose.xlu0.b32.cont [3/16] 0.0, 128
    %935 = vxpose.xlu0.b32.cont [4/16] 0.0, 128
    %936 = vxpose.xlu0.b32.cont [5/16] 0.0, 128
    %937 = vxpose.xlu0.b32.cont [6/16] 0.0, 128
    %938 = vxpose.xlu0.b32.cont [7/16] 0.0, 128
    %939 = vxpose.xlu0.b32.cont [8/16] 0.0, 128
    %940 = vxpose.xlu0.b32.cont [9/16] 0.0, 128
    %941 = vxpose.xlu0.b32.cont [10/16] 0.0, 128
    %942 = vxpose.xlu0.b32.cont [11/16] 0.0, 128
    %943 = vxpose.xlu0.b32.cont [12/16] 0.0, 128
    %944 = vxpose.xlu0.b32.cont [13/16] 0.0, 128
    %945 = vxpose.xlu0.b32.cont [14/16] 0.0, 128
    %946 = vxpose.xlu0.b32.cont [15/16] 0.0, 128
    %947 = vxpose.xlu0.b32.end [16/16] 0.0, 128
    %v948 = vpop.trf.xlu0
    %v949 = vpop.trf.xlu0
    %v950 = vpop.trf.xlu0
    %v951 = vpop.trf.xlu0
    %v952 = vpop.trf.xlu0
    %v953 = vpop.trf.xlu0
    %v954 = vpop.trf.xlu0
    %v955 = vpop.trf.xlu0
    %v956 = vpop.trf.xlu0
    %v957 = vpop.trf.xlu0
    %v958 = vpop.trf.xlu0
    %v959 = vpop.trf.xlu0
    %v960 = vpop.trf.xlu0
    %v961 = vpop.trf.xlu0
    %v962 = vpop.trf.xlu0
    %v963 = vpop.trf.xlu0
    %964 = vxpose.xlu0.b32.start [1/16] %v916, 128
    %965 = vxpose.xlu0.b32.cont [2/16] 0.0, 128
    %966 = vxpose.xlu0.b32.cont [3/16] 0.0, 128
    %967 = vxpose.xlu0.b32.cont [4/16] 0.0, 128
    %968 = vxpose.xlu0.b32.cont [5/16] 0.0, 128
    %969 = vxpose.xlu0.b32.cont [6/16] 0.0, 128
    %970 = vxpose.xlu0.b32.cont [7/16] 0.0, 128
    %971 = vxpose.xlu0.b32.cont [8/16] 0.0, 128
    %972 = vxpose.xlu0.b32.cont [9/16] 0.0, 128
    %973 = vxpose.xlu0.b32.cont [10/16] 0.0, 128
    %974 = vxpose.xlu0.b32.cont [11/16] 0.0, 128
    %975 = vxpose.xlu0.b32.cont [12/16] 0.0, 128
    %976 = vxpose.xlu0.b32.cont [13/16] 0.0, 128
    %977 = vxpose.xlu0.b32.cont [14/16] 0.0, 128
    %978 = vxpose.xlu0.b32.cont [15/16] 0.0, 128
    %979 = vxpose.xlu0.b32.end [16/16] 0.0, 128
    %v980 = vpop.trf.xlu0
    %v981 = vpop.trf.xlu0
    %v982 = vpop.trf.xlu0
    %v983 = vpop.trf.xlu0
    %v984 = vpop.trf.xlu0
    %v985 = vpop.trf.xlu0
    %v986 = vpop.trf.xlu0
    %v987 = vpop.trf.xlu0
    %v988 = vpop.trf.xlu0
    %v989 = vpop.trf.xlu0
    %v990 = vpop.trf.xlu0
    %v991 = vpop.trf.xlu0
    %v992 = vpop.trf.xlu0
    %v993 = vpop.trf.xlu0
    %v994 = vpop.trf.xlu0
    %v995 = vpop.trf.xlu0
    %996 = vxpose.xlu0.b32.start [1/16] %v917, 128
    %997 = vxpose.xlu0.b32.cont [2/16] 0.0, 128
    %998 = vxpose.xlu0.b32.cont [3/16] 0.0, 128
    %999 = vxpose.xlu0.b32.cont [4/16] 0.0, 128
    %1000 = vxpose.xlu0.b32.cont [5/16] 0.0, 128
    %1001 = vxpose.xlu0.b32.cont [6/16] 0.0, 128
    %1002 = vxpose.xlu0.b32.cont [7/16] 0.0, 128
    %1003 = vxpose.xlu0.b32.cont [8/16] 0.0, 128
    %1004 = vxpose.xlu0.b32.cont [9/16] 0.0, 128
    %1005 = vxpose.xlu0.b32.cont [10/16] 0.0, 128
    %1006 = vxpose.xlu0.b32.cont [11/16] 0.0, 128
    %1007 = vxpose.xlu0.b32.cont [12/16] 0.0, 128
    %1008 = vxpose.xlu0.b32.cont [13/16] 0.0, 128
    %1009 = vxpose.xlu0.b32.cont [14/16] 0.0, 128
    %1010 = vxpose.xlu0.b32.cont [15/16] 0.0, 128
    %1011 = vxpose.xlu0.b32.end [16/16] 0.0, 128
    %v1012 = vpop.trf.xlu0
    %v1013 = vpop.trf.xlu0
    %v1014 = vpop.trf.xlu0
    %v1015 = vpop.trf.xlu0
    %v1016 = vpop.trf.xlu0
    %v1017 = vpop.trf.xlu0
    %v1018 = vpop.trf.xlu0
    %v1019 = vpop.trf.xlu0
    %v1020 = vpop.trf.xlu0
    %v1021 = vpop.trf.xlu0
    %v1022 = vpop.trf.xlu0
    %v1023 = vpop.trf.xlu0
    %v1024 = vpop.trf.xlu0
    %v1025 = vpop.trf.xlu0
    %v1026 = vpop.trf.xlu0
    %v1027 = vpop.trf.xlu0
    %1028 = vxpose.xlu0.b32.start [1/16] %v918, 128
    %1029 = vxpose.xlu0.b32.cont [2/16] 0.0, 128
    %1030 = vxpose.xlu0.b32.cont [3/16] 0.0, 128
    %1031 = vxpose.xlu0.b32.cont [4/16] 0.0, 128
    %1032 = vxpose.xlu0.b32.cont [5/16] 0.0, 128
    %1033 = vxpose.xlu0.b32.cont [6/16] 0.0, 128
    %1034 = vxpose.xlu0.b32.cont [7/16] 0.0, 128
    %1035 = vxpose.xlu0.b32.cont [8/16] 0.0, 128
    %1036 = vxpose.xlu0.b32.cont [9/16] 0.0, 128
    %1037 = vxpose.xlu0.b32.cont [10/16] 0.0, 128
    %1038 = vxpose.xlu0.b32.cont [11/16] 0.0, 128
    %1039 = vxpose.xlu0.b32.cont [12/16] 0.0, 128
    %1040 = vxpose.xlu0.b32.cont [13/16] 0.0, 128
    %1041 = vxpose.xlu0.b32.cont [14/16] 0.0, 128
    %1042 = vxpose.xlu0.b32.cont [15/16] 0.0, 128
    %1043 = vxpose.xlu0.b32.end [16/16] 0.0, 128
    %v1044 = vpop.trf.xlu0
    %v1045 = vpop.trf.xlu0
    %v1046 = vpop.trf.xlu0
    %v1047 = vpop.trf.xlu0
    %v1048 = vpop.trf.xlu0
    %v1049 = vpop.trf.xlu0
    %v1050 = vpop.trf.xlu0
    %v1051 = vpop.trf.xlu0
    %v1052 = vpop.trf.xlu0
    %v1053 = vpop.trf.xlu0
    %v1054 = vpop.trf.xlu0
    %v1055 = vpop.trf.xlu0
    %v1056 = vpop.trf.xlu0
    %v1057 = vpop.trf.xlu0
    %v1058 = vpop.trf.xlu0
    %v1059 = vpop.trf.xlu0
    %1060 = vxpose.xlu0.b32.start [1/16] %v919, 128
    %1061 = vxpose.xlu0.b32.cont [2/16] 0.0, 128
    %1062 = vxpose.xlu0.b32.cont [3/16] 0.0, 128
    %1063 = vxpose.xlu0.b32.cont [4/16] 0.0, 128
    %1064 = vxpose.xlu0.b32.cont [5/16] 0.0, 128
    %1065 = vxpose.xlu0.b32.cont [6/16] 0.0, 128
    %1066 = vxpose.xlu0.b32.cont [7/16] 0.0, 128
    %1067 = vxpose.xlu0.b32.cont [8/16] 0.0, 128
    %1068 = vxpose.xlu0.b32.cont [9/16] 0.0, 128
    %1069 = vxpose.xlu0.b32.cont [10/16] 0.0, 128
    %1070 = vxpose.xlu0.b32.cont [11/16] 0.0, 128
    %1071 = vxpose.xlu0.b32.cont [12/16] 0.0, 128
    %1072 = vxpose.xlu0.b32.cont [13/16] 0.0, 128
    %1073 = vxpose.xlu0.b32.cont [14/16] 0.0, 128
    %1074 = vxpose.xlu0.b32.cont [15/16] 0.0, 128
    %1075 = vxpose.xlu0.b32.end [16/16] 0.0, 128
    %v1076 = vpop.trf.xlu0
    %v1077 = vpop.trf.xlu0
    %v1078 = vpop.trf.xlu0
    %v1079 = vpop.trf.xlu0
    %v1080 = vpop.trf.xlu0
    %v1081 = vpop.trf.xlu0
    %v1082 = vpop.trf.xlu0
    %v1083 = vpop.trf.xlu0
    %v1084 = vpop.trf.xlu0
    %v1085 = vpop.trf.xlu0
    %v1086 = vpop.trf.xlu0
    %v1087 = vpop.trf.xlu0
    %v1088 = vpop.trf.xlu0
    %v1089 = vpop.trf.xlu0
    %v1090 = vpop.trf.xlu0
    %v1091 = vpop.trf.xlu0
    %1092 = vxpose.xlu0.b32.start [1/16] %v948, 128
    %1093 = vxpose.xlu0.b32.cont [2/16] 0.0, 128
    %1094 = vxpose.xlu0.b32.cont [3/16] 0.0, 128
    %1095 = vxpose.xlu0.b32.cont [4/16] 0.0, 128
    %1096 = vxpose.xlu0.b32.cont [5/16] 0.0, 128
    %1097 = vxpose.xlu0.b32.cont [6/16] 0.0, 128
    %1098 = vxpose.xlu0.b32.cont [7/16] 0.0, 128
    %1099 = vxpose.xlu0.b32.cont [8/16] 0.0, 128
    %1100 = vxpose.xlu0.b32.cont [9/16] 0.0, 128
    %1101 = vxpose.xlu0.b32.cont [10/16] 0.0, 128
    %1102 = vxpose.xlu0.b32.cont [11/16] 0.0, 128
    %1103 = vxpose.xlu0.b32.cont [12/16] 0.0, 128
    %1104 = vxpose.xlu0.b32.cont [13/16] 0.0, 128
    %1105 = vxpose.xlu0.b32.cont [14/16] 0.0, 128
    %1106 = vxpose.xlu0.b32.cont [15/16] 0.0, 128
    %1107 = vxpose.xlu0.b32.end [16/16] 0.0, 128
    %v1108 = vpop.trf.xlu0
    %v1109 = vpop.trf.xlu0
    %v1110 = vpop.trf.xlu0
    %v1111 = vpop.trf.xlu0
    %v1112 = vpop.trf.xlu0
    %v1113 = vpop.trf.xlu0
    %v1114 = vpop.trf.xlu0
    %v1115 = vpop.trf.xlu0
    %v1116 = vpop.trf.xlu0
    %v1117 = vpop.trf.xlu0
    %v1118 = vpop.trf.xlu0
    %v1119 = vpop.trf.xlu0
    %v1120 = vpop.trf.xlu0
    %v1121 = vpop.trf.xlu0
    %v1122 = vpop.trf.xlu0
    %v1123 = vpop.trf.xlu0
    %1124 = vxpose.xlu0.b32.start [1/16] %v949, 128
    %1125 = vxpose.xlu0.b32.cont [2/16] 0.0, 128
    %1126 = vxpose.xlu0.b32.cont [3/16] 0.0, 128
    %1127 = vxpose.xlu0.b32.cont [4/16] 0.0, 128
    %1128 = vxpose.xlu0.b32.cont [5/16] 0.0, 128
    %1129 = vxpose.xlu0.b32.cont [6/16] 0.0, 128
    %1130 = vxpose.xlu0.b32.cont [7/16] 0.0, 128
    %1131 = vxpose.xlu0.b32.cont [8/16] 0.0, 128
    %1132 = vxpose.xlu0.b32.cont [9/16] 0.0, 128
    %1133 = vxpose.xlu0.b32.cont [10/16] 0.0, 128
    %1134 = vxpose.xlu0.b32.cont [11/16] 0.0, 128
    %1135 = vxpose.xlu0.b32.cont [12/16] 0.0, 128
    %1136 = vxpose.xlu0.b32.cont [13/16] 0.0, 128
    %1137 = vxpose.xlu0.b32.cont [14/16] 0.0, 128
    %1138 = vxpose.xlu0.b32.cont [15/16] 0.0, 128
    %1139 = vxpose.xlu0.b32.end [16/16] 0.0, 128
    %v1140 = vpop.trf.xlu0
    %v1141 = vpop.trf.xlu0
    %v1142 = vpop.trf.xlu0
    %v1143 = vpop.trf.xlu0
    %v1144 = vpop.trf.xlu0
    %v1145 = vpop.trf.xlu0
    %v1146 = vpop.trf.xlu0
    %v1147 = vpop.trf.xlu0
    %v1148 = vpop.trf.xlu0
    %v1149 = vpop.trf.xlu0
    %v1150 = vpop.trf.xlu0
    %v1151 = vpop.trf.xlu0
    %v1152 = vpop.trf.xlu0
    %v1153 = vpop.trf.xlu0
    %v1154 = vpop.trf.xlu0
    %v1155 = vpop.trf.xlu0
    %1156 = vxpose.xlu0.b32.start [1/16] %v950, 128
    %1157 = vxpose.xlu0.b32.cont [2/16] 0.0, 128
    %1158 = vxpose.xlu0.b32.cont [3/16] 0.0, 128
    %1159 = vxpose.xlu0.b32.cont [4/16] 0.0, 128
    %1160 = vxpose.xlu0.b32.cont [5/16] 0.0, 128
    %1161 = vxpose.xlu0.b32.cont [6/16] 0.0, 128
    %1162 = vxpose.xlu0.b32.cont [7/16] 0.0, 128
    %1163 = vxpose.xlu0.b32.cont [8/16] 0.0, 128
    %1164 = vxpose.xlu0.b32.cont [9/16] 0.0, 128
    %1165 = vxpose.xlu0.b32.cont [10/16] 0.0, 128
    %1166 = vxpose.xlu0.b32.cont [11/16] 0.0, 128
    %1167 = vxpose.xlu0.b32.cont [12/16] 0.0, 128
    %1168 = vxpose.xlu0.b32.cont [13/16] 0.0, 128
    %1169 = vxpose.xlu0.b32.cont [14/16] 0.0, 128
    %1170 = vxpose.xlu0.b32.cont [15/16] 0.0, 128
    %1171 = vxpose.xlu0.b32.end [16/16] 0.0, 128
    %v1172 = vpop.trf.xlu0
    %v1173 = vpop.trf.xlu0
    %v1174 = vpop.trf.xlu0
    %v1175 = vpop.trf.xlu0
    %v1176 = vpop.trf.xlu0
    %v1177 = vpop.trf.xlu0
    %v1178 = vpop.trf.xlu0
    %v1179 = vpop.trf.xlu0
    %v1180 = vpop.trf.xlu0
    %v1181 = vpop.trf.xlu0
    %v1182 = vpop.trf.xlu0
    %v1183 = vpop.trf.xlu0
    %v1184 = vpop.trf.xlu0
    %v1185 = vpop.trf.xlu0
    %v1186 = vpop.trf.xlu0
    %v1187 = vpop.trf.xlu0
    %1188 = vxpose.xlu0.b32.start [1/16] %v951, 128
    %1189 = vxpose.xlu0.b32.cont [2/16] 0.0, 128
    %1190 = vxpose.xlu0.b32.cont [3/16] 0.0, 128
    %1191 = vxpose.xlu0.b32.cont [4/16] 0.0, 128
    %1192 = vxpose.xlu0.b32.cont [5/16] 0.0, 128
    %1193 = vxpose.xlu0.b32.cont [6/16] 0.0, 128
    %1194 = vxpose.xlu0.b32.cont [7/16] 0.0, 128
    %1195 = vxpose.xlu0.b32.cont [8/16] 0.0, 128
    %1196 = vxpose.xlu0.b32.cont [9/16] 0.0, 128
    %1197 = vxpose.xlu0.b32.cont [10/16] 0.0, 128
    %1198 = vxpose.xlu0.b32.cont [11/16] 0.0, 128
    %1199 = vxpose.xlu0.b32.cont [12/16] 0.0, 128
    %1200 = vxpose.xlu0.b32.cont [13/16] 0.0, 128
    %1201 = vxpose.xlu0.b32.cont [14/16] 0.0, 128
    %1202 = vxpose.xlu0.b32.cont [15/16] 0.0, 128
    %1203 = vxpose.xlu0.b32.end [16/16] 0.0, 128
    %v1204 = vpop.trf.xlu0
    %v1205 = vpop.trf.xlu0
    %v1206 = vpop.trf.xlu0
    %v1207 = vpop.trf.xlu0
    %v1208 = vpop.trf.xlu0
    %v1209 = vpop.trf.xlu0
    %v1210 = vpop.trf.xlu0
    %v1211 = vpop.trf.xlu0
    %v1212 = vpop.trf.xlu0
    %v1213 = vpop.trf.xlu0
    %v1214 = vpop.trf.xlu0
    %v1215 = vpop.trf.xlu0
    %v1216 = vpop.trf.xlu0
    %v1217 = vpop.trf.xlu0
    %v1218 = vpop.trf.xlu0
    %v1219 = vpop.trf.xlu0
    %v1220 = vpack.c.bf16 %v290, %v290
    %v1221 = vpack.c.bf16 %v291, %v291
    %v1222 = vpack.c.bf16 %v322, %v322
    %v1223 = vpack.c.bf16 %v323, %v323
    %v1224 = vpack.c.bf16 %v354, %v354
    %v1225 = vpack.c.bf16 %v355, %v355
    %v1226 = vpack.c.bf16 %v386, %v386
    %v1227 = vpack.c.bf16 %v387, %v387
    %v1228 = vpack.c.bf16 %v418, %v418
    %v1229 = vpack.c.bf16 %v419, %v419
    %v1230 = vpack.c.bf16 %v450, %v450
    %v1231 = vpack.c.bf16 %v451, %v451
    %v1232 = vpack.c.bf16 %v482, %v482
    %v1233 = vpack.c.bf16 %v483, %v483
    %v1234 = vpack.c.bf16 %v514, %v514
    %v1235 = vpack.c.bf16 %v515, %v515
    %v1236 = vpack.c.bf16 %v635, %v635
    %v1237 = vpack.c.bf16 %v636, %v636
    %v1238 = vpack.c.bf16 %v667, %v667
    %v1239 = vpack.c.bf16 %v668, %v668
    %v1240 = vpack.c.bf16 %v699, %v699
    %v1241 = vpack.c.bf16 %v700, %v700
    %v1242 = vpack.c.bf16 %v731, %v731
    %v1243 = vpack.c.bf16 %v732, %v732
    %v1244 = vpack.c.bf16 %v763, %v763
    %v1245 = vpack.c.bf16 %v764, %v764
    %v1246 = vpack.c.bf16 %v795, %v795
    %v1247 = vpack.c.bf16 %v796, %v796
    %v1248 = vpack.c.bf16 %v827, %v827
    %v1249 = vpack.c.bf16 %v828, %v828
    %v1250 = vpack.c.bf16 %v859, %v859
    %v1251 = vpack.c.bf16 %v860, %v860
    %v1254 = vunpack.c.l.b16 %v1220
    %v1255 = vunpack.c.l.b16 %v1221
    %v1256 = vpack.c.b16 %v1255, %v1254
    %v1259 = vunpack.c.l.b16 %v1236
    %v1260 = vunpack.c.l.b16 %v1237
    %v1261 = vpack.c.b16 %v1260, %v1259
    %vm1262 = vcmask 64512
    %v1264 = vsel %vm1262, %v1256, 0
    %v1267 = vsel %vm1262, %v1261, 0
    %1269 = vmatpush.bf16.xpose.msra.mxu0 0
    %1270 = vmatpush.bf16.xpose.msra.mxu0 0
    %1271 = vmatpush.bf16.xpose.msra.mxu0 0
    %1272 = vmatpush.bf16.xpose.msra.mxu0 0
    %1273 = vmatpush.bf16.xpose.msra.mxu0 0
    %1274 = vmatpush.bf16.xpose.msra.mxu0 0
    %1275 = vmatpush.bf16.xpose.msra.mxu0 0
    %1276 = vmatpush.bf16.xpose.msra.mxu0 %v1267
    %1277 = vmatmul.bf16.gmra.mxu0 %v1264
    %v1278 = vpop.f32.mrf.mxu0
    %v1279 = vadd.f32 0.0, %v1278
    %v1280 = vpop.f32.mrf.mxu0
    %v1281 = vadd.f32 0.0, %v1280
    %1282 = vdwg.mxu0
    %v1285 = vunpack.c.l.b16 %v1222
    %v1286 = vunpack.c.l.b16 %v1223
    %v1287 = vpack.c.b16 %v1286, %v1285
    %v1290 = vunpack.c.l.b16 %v1238
    %v1291 = vunpack.c.l.b16 %v1239
    %v1292 = vpack.c.b16 %v1291, %v1290
    %v1294 = vsel %vm1262, %v1287, 0
    %v1297 = vsel %vm1262, %v1292, 0
    %1299 = vmatpush.bf16.xpose.msra.mxu0 0
    %1300 = vmatpush.bf16.xpose.msra.mxu0 0
    %1301 = vmatpush.bf16.xpose.msra.mxu0 0
    %1302 = vmatpush.bf16.xpose.msra.mxu0 0
    %1303 = vmatpush.bf16.xpose.msra.mxu0 0
    %1304 = vmatpush.bf16.xpose.msra.mxu0 0
    %1305 = vmatpush.bf16.xpose.msra.mxu0 0
    %1306 = vmatpush.bf16.xpose.msra.mxu0 %v1297
    %1307 = vmatmul.bf16.gmra.mxu0 %v1294
    %v1308 = vpop.f32.mrf.mxu0
    %v1309 = vadd.f32 0.0, %v1308
    %v1310 = vpop.f32.mrf.mxu0
    %v1311 = vadd.f32 0.0, %v1310
    %1312 = vdwg.mxu0
    %v1315 = vunpack.c.l.b16 %v1224
    %v1316 = vunpack.c.l.b16 %v1225
    %v1317 = vpack.c.b16 %v1316, %v1315
    %v1320 = vunpack.c.l.b16 %v1240
    %v1321 = vunpack.c.l.b16 %v1241
    %v1322 = vpack.c.b16 %v1321, %v1320
    %v1324 = vsel %vm1262, %v1317, 0
    %v1327 = vsel %vm1262, %v1322, 0
    %1329 = vmatpush.bf16.xpose.msra.mxu0 0
    %1330 = vmatpush.bf16.xpose.msra.mxu0 0
    %1331 = vmatpush.bf16.xpose.msra.mxu0 0
    %1332 = vmatpush.bf16.xpose.msra.mxu0 0
    %1333 = vmatpush.bf16.xpose.msra.mxu0 0
    %1334 = vmatpush.bf16.xpose.msra.mxu0 0
    %1335 = vmatpush.bf16.xpose.msra.mxu0 0
    %1336 = vmatpush.bf16.xpose.msra.mxu0 %v1327
    %1337 = vmatmul.bf16.gmra.mxu0 %v1324
    %v1338 = vpop.f32.mrf.mxu0
    %v1339 = vadd.f32 0.0, %v1338
    %v1340 = vpop.f32.mrf.mxu0
    %v1341 = vadd.f32 0.0, %v1340
    %1342 = vdwg.mxu0
    %v1345 = vunpack.c.l.b16 %v1226
    %v1346 = vunpack.c.l.b16 %v1227
    %v1347 = vpack.c.b16 %v1346, %v1345
    %v1350 = vunpack.c.l.b16 %v1242
    %v1351 = vunpack.c.l.b16 %v1243
    %v1352 = vpack.c.b16 %v1351, %v1350
    %v1354 = vsel %vm1262, %v1347, 0
    %v1357 = vsel %vm1262, %v1352, 0
    %1359 = vmatpush.bf16.xpose.msra.mxu0 0
    %1360 = vmatpush.bf16.xpose.msra.mxu0 0
    %1361 = vmatpush.bf16.xpose.msra.mxu0 0
    %1362 = vmatpush.bf16.xpose.msra.mxu0 0
    %1363 = vmatpush.bf16.xpose.msra.mxu0 0
    %1364 = vmatpush.bf16.xpose.msra.mxu0 0
    %1365 = vmatpush.bf16.xpose.msra.mxu0 0
    %1366 = vmatpush.bf16.xpose.msra.mxu0 %v1357
    %1367 = vmatmul.bf16.gmra.mxu0 %v1354
    %v1368 = vpop.f32.mrf.mxu0
    %v1369 = vadd.f32 0.0, %v1368
    %v1370 = vpop.f32.mrf.mxu0
    %v1371 = vadd.f32 0.0, %v1370
    %1372 = vdwg.mxu0
    %v1375 = vunpack.c.l.b16 %v1228
    %v1376 = vunpack.c.l.b16 %v1229
    %v1377 = vpack.c.b16 %v1376, %v1375
    %v1380 = vunpack.c.l.b16 %v1244
    %v1381 = vunpack.c.l.b16 %v1245
    %v1382 = vpack.c.b16 %v1381, %v1380
    %v1384 = vsel %vm1262, %v1377, 0
    %v1387 = vsel %vm1262, %v1382, 0
    %1389 = vmatpush.bf16.xpose.msra.mxu0 0
    %1390 = vmatpush.bf16.xpose.msra.mxu0 0
    %1391 = vmatpush.bf16.xpose.msra.mxu0 0
    %1392 = vmatpush.bf16.xpose.msra.mxu0 0
    %1393 = vmatpush.bf16.xpose.msra.mxu0 0
    %1394 = vmatpush.bf16.xpose.msra.mxu0 0
    %1395 = vmatpush.bf16.xpose.msra.mxu0 0
    %1396 = vmatpush.bf16.xpose.msra.mxu0 %v1387
    %1397 = vmatmul.bf16.gmra.mxu0 %v1384
    %v1398 = vpop.f32.mrf.mxu0
    %v1399 = vadd.f32 0.0, %v1398
    %v1400 = vpop.f32.mrf.mxu0
    %v1401 = vadd.f32 0.0, %v1400
    %1402 = vdwg.mxu0
    %v1405 = vunpack.c.l.b16 %v1230
    %v1406 = vunpack.c.l.b16 %v1231
    %v1407 = vpack.c.b16 %v1406, %v1405
    %v1410 = vunpack.c.l.b16 %v1246
    %v1411 = vunpack.c.l.b16 %v1247
    %v1412 = vpack.c.b16 %v1411, %v1410
    %v1414 = vsel %vm1262, %v1407, 0
    %v1417 = vsel %vm1262, %v1412, 0
    %1419 = vmatpush.bf16.xpose.msra.mxu0 0
    %1420 = vmatpush.bf16.xpose.msra.mxu0 0
    %1421 = vmatpush.bf16.xpose.msra.mxu0 0
    %1422 = vmatpush.bf16.xpose.msra.mxu0 0
    %1423 = vmatpush.bf16.xpose.msra.mxu0 0
    %1424 = vmatpush.bf16.xpose.msra.mxu0 0
    %1425 = vmatpush.bf16.xpose.msra.mxu0 0
    %1426 = vmatpush.bf16.xpose.msra.mxu0 %v1417
    %1427 = vmatmul.bf16.gmra.mxu0 %v1414
    %v1428 = vpop.f32.mrf.mxu0
    %v1429 = vadd.f32 0.0, %v1428
    %v1430 = vpop.f32.mrf.mxu0
    %v1431 = vadd.f32 0.0, %v1430
    %1432 = vdwg.mxu0
    %v1435 = vunpack.c.l.b16 %v1232
    %v1436 = vunpack.c.l.b16 %v1233
    %v1437 = vpack.c.b16 %v1436, %v1435
    %v1440 = vunpack.c.l.b16 %v1248
    %v1441 = vunpack.c.l.b16 %v1249
    %v1442 = vpack.c.b16 %v1441, %v1440
    %v1444 = vsel %vm1262, %v1437, 0
    %v1447 = vsel %vm1262, %v1442, 0
    %1449 = vmatpush.bf16.xpose.msra.mxu0 0
    %1450 = vmatpush.bf16.xpose.msra.mxu0 0
    %1451 = vmatpush.bf16.xpose.msra.mxu0 0
    %1452 = vmatpush.bf16.xpose.msra.mxu0 0
    %1453 = vmatpush.bf16.xpose.msra.mxu0 0
    %1454 = vmatpush.bf16.xpose.msra.mxu0 0
    %1455 = vmatpush.bf16.xpose.msra.mxu0 0
    %1456 = vmatpush.bf16.xpose.msra.mxu0 %v1447
    %1457 = vmatmul.bf16.gmra.mxu0 %v1444
    %v1458 = vpop.f32.mrf.mxu0
    %v1459 = vadd.f32 0.0, %v1458
    %v1460 = vpop.f32.mrf.mxu0
    %v1461 = vadd.f32 0.0, %v1460
    %1462 = vdwg.mxu0
    %v1465 = vunpack.c.l.b16 %v1234
    %v1466 = vunpack.c.l.b16 %v1235
    %v1467 = vpack.c.b16 %v1466, %v1465
    %v1470 = vunpack.c.l.b16 %v1250
    %v1471 = vunpack.c.l.b16 %v1251
    %v1472 = vpack.c.b16 %v1471, %v1470
    %v1474 = vsel %vm1262, %v1467, 0
    %v1477 = vsel %vm1262, %v1472, 0
    %1479 = vmatpush.bf16.xpose.msra.mxu0 0
    %1480 = vmatpush.bf16.xpose.msra.mxu0 0
    %1481 = vmatpush.bf16.xpose.msra.mxu0 0
    %1482 = vmatpush.bf16.xpose.msra.mxu0 0
    %1483 = vmatpush.bf16.xpose.msra.mxu0 0
    %1484 = vmatpush.bf16.xpose.msra.mxu0 0
    %1485 = vmatpush.bf16.xpose.msra.mxu0 0
    %1486 = vmatpush.bf16.xpose.msra.mxu0 %v1477
    %1487 = vmatmul.bf16.gmra.mxu0 %v1474
    %v1488 = vpop.f32.mrf.mxu0
    %v1489 = vadd.f32 0.0, %v1488
    %v1490 = vpop.f32.mrf.mxu0
    %v1491 = vadd.f32 0.0, %v1490
    %1492 = vdwg.mxu0
    %v1493 = vld [vmem:[%s16] sm:$0xff]
    %v1494 = vld [vmem:[%s16 + $0x8] sm:$0x7]
    %v1495 = vpack.c.bf16 %v291, %v290
    %v1496 = vpack.c.bf16 %v323, %v322
    %v1497 = vpack.c.bf16 %v355, %v354
    %v1498 = vpack.c.bf16 %v387, %v386
    %v1499 = vpack.c.bf16 %v419, %v418
    %v1500 = vpack.c.bf16 %v451, %v450
    %v1501 = vpack.c.bf16 %v483, %v482
    %v1502 = vpack.c.bf16 %v515, %v514
    %v1503 = vpack.c.bf16 %v1494, %v1493
    %v1505 = vsel %vm1262, %v1495, 0
    %v1508 = vsel %vm1262, %v1496, 0
    %v1511 = vsel %vm1262, %v1497, 0
    %v1514 = vsel %vm1262, %v1498, 0
    %v1517 = vsel %vm1262, %v1499, 0
    %v1520 = vsel %vm1262, %v1500, 0
    %v1523 = vsel %vm1262, %v1501, 0
    %v1526 = vsel %vm1262, %v1502, 0
    %v1529 = vsel %vm1262, %v1503, 0
    %1531 = vmatpush.bf16.xpose.msra.mxu0 0
    %1532 = vmatpush.bf16.xpose.msra.mxu0 0
    %1533 = vmatpush.bf16.xpose.msra.mxu0 0
    %1534 = vmatpush.bf16.xpose.msra.mxu0 0
    %1535 = vmatpush.bf16.xpose.msra.mxu0 0
    %1536 = vmatpush.bf16.xpose.msra.mxu0 0
    %1537 = vmatpush.bf16.xpose.msra.mxu0 0
    %1538 = vmatpush.bf16.xpose.msra.mxu0 %v1529
    %1539 = vmatmul.bf16.gmra.mxu0 %v1505
    %v1540 = vpop.f32.mrf.mxu0
    %v1541 = vadd.f32 0.0, %v1540
    %v1542 = vpop.f32.mrf.mxu0
    %v1543 = vadd.f32 0.0, %v1542
    %1544 = vmatmul.bf16.gmra.mxu0 %v1508
    %v1545 = vpop.f32.mrf.mxu0
    %v1546 = vadd.f32 0.0, %v1545
    %v1547 = vpop.f32.mrf.mxu0
    %v1548 = vadd.f32 0.0, %v1547
    %1549 = vmatmul.bf16.gmra.mxu0 %v1511
    %v1550 = vpop.f32.mrf.mxu0
    %v1551 = vadd.f32 0.0, %v1550
    %v1552 = vpop.f32.mrf.mxu0
    %v1553 = vadd.f32 0.0, %v1552
    %1554 = vmatmul.bf16.gmra.mxu0 %v1514
    %v1555 = vpop.f32.mrf.mxu0
    %v1556 = vadd.f32 0.0, %v1555
    %v1557 = vpop.f32.mrf.mxu0
    %v1558 = vadd.f32 0.0, %v1557
    %1559 = vmatmul.bf16.gmra.mxu0 %v1517
    %v1560 = vpop.f32.mrf.mxu0
    %v1561 = vadd.f32 0.0, %v1560
    %v1562 = vpop.f32.mrf.mxu0
    %v1563 = vadd.f32 0.0, %v1562
    %1564 = vmatmul.bf16.gmra.mxu0 %v1520
    %v1565 = vpop.f32.mrf.mxu0
    %v1566 = vadd.f32 0.0, %v1565
    %v1567 = vpop.f32.mrf.mxu0
    %v1568 = vadd.f32 0.0, %v1567
    %1569 = vmatmul.bf16.gmra.mxu0 %v1523
    %v1570 = vpop.f32.mrf.mxu0
    %v1571 = vadd.f32 0.0, %v1570
    %v1572 = vpop.f32.mrf.mxu0
    %v1573 = vadd.f32 0.0, %v1572
    %1574 = vmatmul.bf16.gmra.mxu0 %v1526
    %v1575 = vpop.f32.mrf.mxu0
    %v1576 = vadd.f32 0.0, %v1575
    %v1577 = vpop.f32.mrf.mxu0
    %v1578 = vadd.f32 0.0, %v1577
    %1579 = vdwg.mxu0
    %v1580 = vsel %vm128, 1, 0
    %v1581 = vsel %vm129, 1, 0
    %v1582 = vsel %vm130, 1, 0
    %v1583 = vsel %vm131, 1, 0
    %vm1584 = vcmp.eq.s32.totalorder %v1580, 1
    %vm1585 = vcmp.eq.s32.totalorder %v1581, 1
    %vm1586 = vcmp.eq.s32.totalorder %v1582, 1
    %vm1587 = vcmp.eq.s32.totalorder %v1583, 1
    %1589 = vset.pattern.permute.xlu0 0
    %1590 = vperm.xlu0 %1589, %v1541
    %v1591 = vpop.permute.xlu0 %1590
    %1594 = vset.pattern.permute.xlu0 0
    %1595 = vperm.xlu0 %1594, %v1543
    %v1596 = vpop.permute.xlu0 %1595
    %1599 = vset.pattern.permute.xlu0 0
    %1600 = vperm.xlu0 %1599, %v1546
    %v1601 = vpop.permute.xlu0 %1600
    %1604 = vset.pattern.permute.xlu0 0
    %1605 = vperm.xlu0 %1604, %v1548
    %v1606 = vpop.permute.xlu0 %1605
    %1609 = vset.pattern.permute.xlu0 0
    %1610 = vperm.xlu0 %1609, %v1551
    %v1611 = vpop.permute.xlu0 %1610
    %1614 = vset.pattern.permute.xlu0 0
    %1615 = vperm.xlu0 %1614, %v1553
    %v1616 = vpop.permute.xlu0 %1615
    %1619 = vset.pattern.permute.xlu0 0
    %1620 = vperm.xlu0 %1619, %v1556
    %v1621 = vpop.permute.xlu0 %1620
    %1624 = vset.pattern.permute.xlu0 0
    %1625 = vperm.xlu0 %1624, %v1558
    %v1626 = vpop.permute.xlu0 %1625
    %1629 = vset.pattern.permute.xlu0 0
    %1630 = vperm.xlu0 %1629, %v1561
    %v1631 = vpop.permute.xlu0 %1630
    %1634 = vset.pattern.permute.xlu0 0
    %1635 = vperm.xlu0 %1634, %v1563
    %v1636 = vpop.permute.xlu0 %1635
    %1639 = vset.pattern.permute.xlu0 0
    %1640 = vperm.xlu0 %1639, %v1566
    %v1641 = vpop.permute.xlu0 %1640
    %1644 = vset.pattern.permute.xlu0 0
    %1645 = vperm.xlu0 %1644, %v1568
    %v1646 = vpop.permute.xlu0 %1645
    %1649 = vset.pattern.permute.xlu0 0
    %1650 = vperm.xlu0 %1649, %v1571
    %v1651 = vpop.permute.xlu0 %1650
    %1654 = vset.pattern.permute.xlu0 0
    %1655 = vperm.xlu0 %1654, %v1573
    %v1656 = vpop.permute.xlu0 %1655
    %1659 = vset.pattern.permute.xlu0 0
    %1660 = vperm.xlu0 %1659, %v1576
    %v1661 = vpop.permute.xlu0 %1660
    %1664 = vset.pattern.permute.xlu0 0
    %1665 = vperm.xlu0 %1664, %v1578
    %v1666 = vpop.permute.xlu0 %1665
    %v1668 = vsel %vm1584, %v1591, 0.0
    %v1669 = vsel %vm1585, %v1596, 0.0
    %v1670 = vsel %vm1584, %v1601, 0.0
    %v1671 = vsel %vm1585, %v1606, 0.0
    %v1672 = vsel %vm1584, %v1611, 0.0
    %v1673 = vsel %vm1585, %v1616, 0.0
    %v1674 = vsel %vm1584, %v1621, 0.0
    %v1675 = vsel %vm1585, %v1626, 0.0
    %v1676 = vsel %vm1586, %v1631, 0.0
    %v1677 = vsel %vm1587, %v1636, 0.0
    %v1678 = vsel %vm1586, %v1641, 0.0
    %v1679 = vsel %vm1587, %v1646, 0.0
    %v1680 = vsel %vm1586, %v1651, 0.0
    %v1681 = vsel %vm1587, %v1656, 0.0
    %v1682 = vsel %vm1586, %v1661, 0.0
    %v1683 = vsel %vm1587, %v1666, 0.0
    %v1684 = vadd.f32 %v1668, 0.0
    %v1685 = vadd.f32 %v1669, 0.0
    %v1686 = vadd.f32 %v1670, 0.0
    %v1687 = vadd.f32 %v1671, 0.0
    %v1688 = vadd.f32 %v1672, 0.0
    %v1689 = vadd.f32 %v1673, 0.0
    %v1690 = vadd.f32 %v1674, 0.0
    %v1691 = vadd.f32 %v1675, 0.0
    %v1692 = vadd.f32 %v1676, 0.0
    %v1693 = vadd.f32 %v1677, 0.0
    %v1694 = vadd.f32 %v1678, 0.0
    %v1695 = vadd.f32 %v1679, 0.0
    %v1696 = vadd.f32 %v1680, 0.0
    %v1697 = vadd.f32 %v1681, 0.0
    %v1698 = vadd.f32 %v1682, 0.0
    %v1699 = vadd.f32 %v1683, 0.0
    %v1700 = vsel %vm132, 1, 0
    %v1701 = vsel %vm133, 1, 0
    %v1702 = vsel %vm134, 1, 0
    %v1703 = vsel %vm135, 1, 0
    %vm1704 = vcmp.eq.s32.totalorder %v1700, 1
    %vm1705 = vcmp.eq.s32.totalorder %v1701, 1
    %vm1706 = vcmp.eq.s32.totalorder %v1702, 1
    %vm1707 = vcmp.eq.s32.totalorder %v1703, 1
    %1708 = vset.pattern.permute.xlu0 1
    %1709 = vperm.xlu0 %1708, %v1541
    %v1710 = vpop.permute.xlu0 %1709
    %1712 = vset.pattern.permute.xlu0 1
    %1713 = vperm.xlu0 %1712, %v1543
    %v1714 = vpop.permute.xlu0 %1713
    %1716 = vset.pattern.permute.xlu0 1
    %1717 = vperm.xlu0 %1716, %v1546
    %v1718 = vpop.permute.xlu0 %1717
    %1720 = vset.pattern.permute.xlu0 1
    %1721 = vperm.xlu0 %1720, %v1548
    %v1722 = vpop.permute.xlu0 %1721
    %1724 = vset.pattern.permute.xlu0 1
    %1725 = vperm.xlu0 %1724, %v1551
    %v1726 = vpop.permute.xlu0 %1725
    %1728 = vset.pattern.permute.xlu0 1
    %1729 = vperm.xlu0 %1728, %v1553
    %v1730 = vpop.permute.xlu0 %1729
    %1732 = vset.pattern.permute.xlu0 1
    %1733 = vperm.xlu0 %1732, %v1556
    %v1734 = vpop.permute.xlu0 %1733
    %1736 = vset.pattern.permute.xlu0 1
    %1737 = vperm.xlu0 %1736, %v1558
    %v1738 = vpop.permute.xlu0 %1737
    %1740 = vset.pattern.permute.xlu0 1
    %1741 = vperm.xlu0 %1740, %v1561
    %v1742 = vpop.permute.xlu0 %1741
    %1744 = vset.pattern.permute.xlu0 1
    %1745 = vperm.xlu0 %1744, %v1563
    %v1746 = vpop.permute.xlu0 %1745
    %1748 = vset.pattern.permute.xlu0 1
    %1749 = vperm.xlu0 %1748, %v1566
    %v1750 = vpop.permute.xlu0 %1749
    %1752 = vset.pattern.permute.xlu0 1
    %1753 = vperm.xlu0 %1752, %v1568
    %v1754 = vpop.permute.xlu0 %1753
    %1756 = vset.pattern.permute.xlu0 1
    %1757 = vperm.xlu0 %1756, %v1571
    %v1758 = vpop.permute.xlu0 %1757
    %1760 = vset.pattern.permute.xlu0 1
    %1761 = vperm.xlu0 %1760, %v1573
    %v1762 = vpop.permute.xlu0 %1761
    %1764 = vset.pattern.permute.xlu0 1
    %1765 = vperm.xlu0 %1764, %v1576
    %v1766 = vpop.permute.xlu0 %1765
    %1768 = vset.pattern.permute.xlu0 1
    %1769 = vperm.xlu0 %1768, %v1578
    %v1770 = vpop.permute.xlu0 %1769
    %v1772 = vsel %vm1704, %v1710, 0.0
    %v1773 = vsel %vm1705, %v1714, 0.0
    %v1774 = vsel %vm1704, %v1718, 0.0
    %v1775 = vsel %vm1705, %v1722, 0.0
    %v1776 = vsel %vm1704, %v1726, 0.0
    %v1777 = vsel %vm1705, %v1730, 0.0
    %v1778 = vsel %vm1704, %v1734, 0.0
    %v1779 = vsel %vm1705, %v1738, 0.0
    %v1780 = vsel %vm1706, %v1742, 0.0
    %v1781 = vsel %vm1707, %v1746, 0.0
    %v1782 = vsel %vm1706, %v1750, 0.0
    %v1783 = vsel %vm1707, %v1754, 0.0
    %v1784 = vsel %vm1706, %v1758, 0.0
    %v1785 = vsel %vm1707, %v1762, 0.0
    %v1786 = vsel %vm1706, %v1766, 0.0
    %v1787 = vsel %vm1707, %v1770, 0.0
    %v1788 = vadd.f32 %v1684, %v1772
    %v1789 = vadd.f32 %v1685, %v1773
    %v1790 = vadd.f32 %v1686, %v1774
    %v1791 = vadd.f32 %v1687, %v1775
    %v1792 = vadd.f32 %v1688, %v1776
    %v1793 = vadd.f32 %v1689, %v1777
    %v1794 = vadd.f32 %v1690, %v1778
    %v1795 = vadd.f32 %v1691, %v1779
    %v1796 = vadd.f32 %v1692, %v1780
    %v1797 = vadd.f32 %v1693, %v1781
    %v1798 = vadd.f32 %v1694, %v1782
    %v1799 = vadd.f32 %v1695, %v1783
    %v1800 = vadd.f32 %v1696, %v1784
    %v1801 = vadd.f32 %v1697, %v1785
    %v1802 = vadd.f32 %v1698, %v1786
    %v1803 = vadd.f32 %v1699, %v1787
    %v1804 = vsel %vm136, 1, 0
    %v1805 = vsel %vm137, 1, 0
    %v1806 = vsel %vm138, 1, 0
    %v1807 = vsel %vm139, 1, 0
    %vm1808 = vcmp.eq.s32.totalorder %v1804, 1
    %vm1809 = vcmp.eq.s32.totalorder %v1805, 1
    %vm1810 = vcmp.eq.s32.totalorder %v1806, 1
    %vm1811 = vcmp.eq.s32.totalorder %v1807, 1
    %1812 = vset.pattern.permute.xlu0 2
    %1813 = vperm.xlu0 %1812, %v1541
    %v1814 = vpop.permute.xlu0 %1813
    %1816 = vset.pattern.permute.xlu0 2
    %1817 = vperm.xlu0 %1816, %v1543
    %v1818 = vpop.permute.xlu0 %1817
    %1820 = vset.pattern.permute.xlu0 2
    %1821 = vperm.xlu0 %1820, %v1546
    %v1822 = vpop.permute.xlu0 %1821
    %1824 = vset.pattern.permute.xlu0 2
    %1825 = vperm.xlu0 %1824, %v1548
    %v1826 = vpop.permute.xlu0 %1825
    %1828 = vset.pattern.permute.xlu0 2
    %1829 = vperm.xlu0 %1828, %v1551
    %v1830 = vpop.permute.xlu0 %1829
    %1832 = vset.pattern.permute.xlu0 2
    %1833 = vperm.xlu0 %1832, %v1553
    %v1834 = vpop.permute.xlu0 %1833
    %1836 = vset.pattern.permute.xlu0 2
    %1837 = vperm.xlu0 %1836, %v1556
    %v1838 = vpop.permute.xlu0 %1837
    %1840 = vset.pattern.permute.xlu0 2
    %1841 = vperm.xlu0 %1840, %v1558
    %v1842 = vpop.permute.xlu0 %1841
    %1844 = vset.pattern.permute.xlu0 2
    %1845 = vperm.xlu0 %1844, %v1561
    %v1846 = vpop.permute.xlu0 %1845
    %1848 = vset.pattern.permute.xlu0 2
    %1849 = vperm.xlu0 %1848, %v1563
    %v1850 = vpop.permute.xlu0 %1849
    %1852 = vset.pattern.permute.xlu0 2
    %1853 = vperm.xlu0 %1852, %v1566
    %v1854 = vpop.permute.xlu0 %1853
    %1856 = vset.pattern.permute.xlu0 2
    %1857 = vperm.xlu0 %1856, %v1568
    %v1858 = vpop.permute.xlu0 %1857
    %1860 = vset.pattern.permute.xlu0 2
    %1861 = vperm.xlu0 %1860, %v1571
    %v1862 = vpop.permute.xlu0 %1861
    %1864 = vset.pattern.permute.xlu0 2
    %1865 = vperm.xlu0 %1864, %v1573
    %v1866 = vpop.permute.xlu0 %1865
    %1868 = vset.pattern.permute.xlu0 2
    %1869 = vperm.xlu0 %1868, %v1576
    %v1870 = vpop.permute.xlu0 %1869
    %1872 = vset.pattern.permute.xlu0 2
    %1873 = vperm.xlu0 %1872, %v1578
    %v1874 = vpop.permute.xlu0 %1873
    %v1876 = vsel %vm1808, %v1814, 0.0
    %v1877 = vsel %vm1809, %v1818, 0.0
    %v1878 = vsel %vm1808, %v1822, 0.0
    %v1879 = vsel %vm1809, %v1826, 0.0
    %v1880 = vsel %vm1808, %v1830, 0.0
    %v1881 = vsel %vm1809, %v1834, 0.0
    %v1882 = vsel %vm1808, %v1838, 0.0
    %v1883 = vsel %vm1809, %v1842, 0.0
    %v1884 = vsel %vm1810, %v1846, 0.0
    %v1885 = vsel %vm1811, %v1850, 0.0
    %v1886 = vsel %vm1810, %v1854, 0.0
    %v1887 = vsel %vm1811, %v1858, 0.0
    %v1888 = vsel %vm1810, %v1862, 0.0
    %v1889 = vsel %vm1811, %v1866, 0.0
    %v1890 = vsel %vm1810, %v1870, 0.0
    %v1891 = vsel %vm1811, %v1874, 0.0
    %v1892 = vadd.f32 %v1788, %v1876
    %v1893 = vadd.f32 %v1789, %v1877
    %v1894 = vadd.f32 %v1790, %v1878
    %v1895 = vadd.f32 %v1791, %v1879
    %v1896 = vadd.f32 %v1792, %v1880
    %v1897 = vadd.f32 %v1793, %v1881
    %v1898 = vadd.f32 %v1794, %v1882
    %v1899 = vadd.f32 %v1795, %v1883
    %v1900 = vadd.f32 %v1796, %v1884
    %v1901 = vadd.f32 %v1797, %v1885
    %v1902 = vadd.f32 %v1798, %v1886
    %v1903 = vadd.f32 %v1799, %v1887
    %v1904 = vadd.f32 %v1800, %v1888
    %v1905 = vadd.f32 %v1801, %v1889
    %v1906 = vadd.f32 %v1802, %v1890
    %v1907 = vadd.f32 %v1803, %v1891
    %v1908 = vsel %vm140, 1, 0
    %v1909 = vsel %vm141, 1, 0
    %v1910 = vsel %vm142, 1, 0
    %v1911 = vsel %vm143, 1, 0
    %vm1912 = vcmp.eq.s32.totalorder %v1908, 1
    %vm1913 = vcmp.eq.s32.totalorder %v1909, 1
    %vm1914 = vcmp.eq.s32.totalorder %v1910, 1
    %vm1915 = vcmp.eq.s32.totalorder %v1911, 1
    %1916 = vset.pattern.permute.xlu0 3
    %1917 = vperm.xlu0 %1916, %v1541
    %v1918 = vpop.permute.xlu0 %1917
    %1920 = vset.pattern.permute.xlu0 3
    %1921 = vperm.xlu0 %1920, %v1543
    %v1922 = vpop.permute.xlu0 %1921
    %1924 = vset.pattern.permute.xlu0 3
    %1925 = vperm.xlu0 %1924, %v1546
    %v1926 = vpop.permute.xlu0 %1925
    %1928 = vset.pattern.permute.xlu0 3
    %1929 = vperm.xlu0 %1928, %v1548
    %v1930 = vpop.permute.xlu0 %1929
    %1932 = vset.pattern.permute.xlu0 3
    %1933 = vperm.xlu0 %1932, %v1551
    %v1934 = vpop.permute.xlu0 %1933
    %1936 = vset.pattern.permute.xlu0 3
    %1937 = vperm.xlu0 %1936, %v1553
    %v1938 = vpop.permute.xlu0 %1937
    %1940 = vset.pattern.permute.xlu0 3
    %1941 = vperm.xlu0 %1940, %v1556
    %v1942 = vpop.permute.xlu0 %1941
    %1944 = vset.pattern.permute.xlu0 3
    %1945 = vperm.xlu0 %1944, %v1558
    %v1946 = vpop.permute.xlu0 %1945
    %1948 = vset.pattern.permute.xlu0 3
    %1949 = vperm.xlu0 %1948, %v1561
    %v1950 = vpop.permute.xlu0 %1949
    %1952 = vset.pattern.permute.xlu0 3
    %1953 = vperm.xlu0 %1952, %v1563
    %v1954 = vpop.permute.xlu0 %1953
    %1956 = vset.pattern.permute.xlu0 3
    %1957 = vperm.xlu0 %1956, %v1566
    %v1958 = vpop.permute.xlu0 %1957
    %1960 = vset.pattern.permute.xlu0 3
    %1961 = vperm.xlu0 %1960, %v1568
    %v1962 = vpop.permute.xlu0 %1961
    %1964 = vset.pattern.permute.xlu0 3
    %1965 = vperm.xlu0 %1964, %v1571
    %v1966 = vpop.permute.xlu0 %1965
    %1968 = vset.pattern.permute.xlu0 3
    %1969 = vperm.xlu0 %1968, %v1573
    %v1970 = vpop.permute.xlu0 %1969
    %1972 = vset.pattern.permute.xlu0 3
    %1973 = vperm.xlu0 %1972, %v1576
    %v1974 = vpop.permute.xlu0 %1973
    %1976 = vset.pattern.permute.xlu0 3
    %1977 = vperm.xlu0 %1976, %v1578
    %v1978 = vpop.permute.xlu0 %1977
    %v1980 = vsel %vm1912, %v1918, 0.0
    %v1981 = vsel %vm1913, %v1922, 0.0
    %v1982 = vsel %vm1912, %v1926, 0.0
    %v1983 = vsel %vm1913, %v1930, 0.0
    %v1984 = vsel %vm1912, %v1934, 0.0
    %v1985 = vsel %vm1913, %v1938, 0.0
    %v1986 = vsel %vm1912, %v1942, 0.0
    %v1987 = vsel %vm1913, %v1946, 0.0
    %v1988 = vsel %vm1914, %v1950, 0.0
    %v1989 = vsel %vm1915, %v1954, 0.0
    %v1990 = vsel %vm1914, %v1958, 0.0
    %v1991 = vsel %vm1915, %v1962, 0.0
    %v1992 = vsel %vm1914, %v1966, 0.0
    %v1993 = vsel %vm1915, %v1970, 0.0
    %v1994 = vsel %vm1914, %v1974, 0.0
    %v1995 = vsel %vm1915, %v1978, 0.0
    %v1996 = vadd.f32 %v1892, %v1980
    %v1997 = vadd.f32 %v1893, %v1981
    %v1998 = vadd.f32 %v1894, %v1982
    %v1999 = vadd.f32 %v1895, %v1983
    %v2000 = vadd.f32 %v1896, %v1984
    %v2001 = vadd.f32 %v1897, %v1985
    %v2002 = vadd.f32 %v1898, %v1986
    %v2003 = vadd.f32 %v1899, %v1987
    %v2004 = vadd.f32 %v1900, %v1988
    %v2005 = vadd.f32 %v1901, %v1989
    %v2006 = vadd.f32 %v1902, %v1990
    %v2007 = vadd.f32 %v1903, %v1991
    %v2008 = vadd.f32 %v1904, %v1992
    %v2009 = vadd.f32 %v1905, %v1993
    %v2010 = vadd.f32 %v1906, %v1994
    %v2011 = vadd.f32 %v1907, %v1995
    %v2012 = vsel %vm144, 1, 0
    %v2013 = vsel %vm145, 1, 0
    %v2014 = vsel %vm146, 1, 0
    %v2015 = vsel %vm147, 1, 0
    %vm2016 = vcmp.eq.s32.totalorder %v2012, 1
    %vm2017 = vcmp.eq.s32.totalorder %v2013, 1
    %vm2018 = vcmp.eq.s32.totalorder %v2014, 1
    %vm2019 = vcmp.eq.s32.totalorder %v2015, 1
    %2020 = vset.pattern.permute.xlu0 4
    %2021 = vperm.xlu0 %2020, %v1541
    %v2022 = vpop.permute.xlu0 %2021
    %2024 = vset.pattern.permute.xlu0 4
    %2025 = vperm.xlu0 %2024, %v1543
    %v2026 = vpop.permute.xlu0 %2025
    %2028 = vset.pattern.permute.xlu0 4
    %2029 = vperm.xlu0 %2028, %v1546
    %v2030 = vpop.permute.xlu0 %2029
    %2032 = vset.pattern.permute.xlu0 4
    %2033 = vperm.xlu0 %2032, %v1548
    %v2034 = vpop.permute.xlu0 %2033
    %2036 = vset.pattern.permute.xlu0 4
    %2037 = vperm.xlu0 %2036, %v1551
    %v2038 = vpop.permute.xlu0 %2037
    %2040 = vset.pattern.permute.xlu0 4
    %2041 = vperm.xlu0 %2040, %v1553
    %v2042 = vpop.permute.xlu0 %2041
    %2044 = vset.pattern.permute.xlu0 4
    %2045 = vperm.xlu0 %2044, %v1556
    %v2046 = vpop.permute.xlu0 %2045
    %2048 = vset.pattern.permute.xlu0 4
    %2049 = vperm.xlu0 %2048, %v1558
    %v2050 = vpop.permute.xlu0 %2049
    %2052 = vset.pattern.permute.xlu0 4
    %2053 = vperm.xlu0 %2052, %v1561
    %v2054 = vpop.permute.xlu0 %2053
    %2056 = vset.pattern.permute.xlu0 4
    %2057 = vperm.xlu0 %2056, %v1563
    %v2058 = vpop.permute.xlu0 %2057
    %2060 = vset.pattern.permute.xlu0 4
    %2061 = vperm.xlu0 %2060, %v1566
    %v2062 = vpop.permute.xlu0 %2061
    %2064 = vset.pattern.permute.xlu0 4
    %2065 = vperm.xlu0 %2064, %v1568
    %v2066 = vpop.permute.xlu0 %2065
    %2068 = vset.pattern.permute.xlu0 4
    %2069 = vperm.xlu0 %2068, %v1571
    %v2070 = vpop.permute.xlu0 %2069
    %2072 = vset.pattern.permute.xlu0 4
    %2073 = vperm.xlu0 %2072, %v1573
    %v2074 = vpop.permute.xlu0 %2073
    %2076 = vset.pattern.permute.xlu0 4
    %2077 = vperm.xlu0 %2076, %v1576
    %v2078 = vpop.permute.xlu0 %2077
    %2080 = vset.pattern.permute.xlu0 4
    %2081 = vperm.xlu0 %2080, %v1578
    %v2082 = vpop.permute.xlu0 %2081
    %v2084 = vsel %vm2016, %v2022, 0.0
    %v2085 = vsel %vm2017, %v2026, 0.0
    %v2086 = vsel %vm2016, %v2030, 0.0
    %v2087 = vsel %vm2017, %v2034, 0.0
    %v2088 = vsel %vm2016, %v2038, 0.0
    %v2089 = vsel %vm2017, %v2042, 0.0
    %v2090 = vsel %vm2016, %v2046, 0.0
    %v2091 = vsel %vm2017, %v2050, 0.0
    %v2092 = vsel %vm2018, %v2054, 0.0
    %v2093 = vsel %vm2019, %v2058, 0.0
    %v2094 = vsel %vm2018, %v2062, 0.0
    %v2095 = vsel %vm2019, %v2066, 0.0
    %v2096 = vsel %vm2018, %v2070, 0.0
    %v2097 = vsel %vm2019, %v2074, 0.0
    %v2098 = vsel %vm2018, %v2078, 0.0
    %v2099 = vsel %vm2019, %v2082, 0.0
    %v2100 = vadd.f32 %v1996, %v2084
    %v2101 = vadd.f32 %v1997, %v2085
    %v2102 = vadd.f32 %v1998, %v2086
    %v2103 = vadd.f32 %v1999, %v2087
    %v2104 = vadd.f32 %v2000, %v2088
    %v2105 = vadd.f32 %v2001, %v2089
    %v2106 = vadd.f32 %v2002, %v2090
    %v2107 = vadd.f32 %v2003, %v2091
    %v2108 = vadd.f32 %v2004, %v2092
    %v2109 = vadd.f32 %v2005, %v2093
    %v2110 = vadd.f32 %v2006, %v2094
    %v2111 = vadd.f32 %v2007, %v2095
    %v2112 = vadd.f32 %v2008, %v2096
    %v2113 = vadd.f32 %v2009, %v2097
    %v2114 = vadd.f32 %v2010, %v2098
    %v2115 = vadd.f32 %v2011, %v2099
    %v2116 = vsel %vm148, 1, 0
    %v2117 = vsel %vm149, 1, 0
    %v2118 = vsel %vm150, 1, 0
    %v2119 = vsel %vm151, 1, 0
    %vm2120 = vcmp.eq.s32.totalorder %v2116, 1
    %vm2121 = vcmp.eq.s32.totalorder %v2117, 1
    %vm2122 = vcmp.eq.s32.totalorder %v2118, 1
    %vm2123 = vcmp.eq.s32.totalorder %v2119, 1
    %2124 = vset.pattern.permute.xlu0 5
    %2125 = vperm.xlu0 %2124, %v1541
    %v2126 = vpop.permute.xlu0 %2125
    %2128 = vset.pattern.permute.xlu0 5
    %2129 = vperm.xlu0 %2128, %v1543
    %v2130 = vpop.permute.xlu0 %2129
    %2132 = vset.pattern.permute.xlu0 5
    %2133 = vperm.xlu0 %2132, %v1546
    %v2134 = vpop.permute.xlu0 %2133
    %2136 = vset.pattern.permute.xlu0 5
    %2137 = vperm.xlu0 %2136, %v1548
    %v2138 = vpop.permute.xlu0 %2137
    %2140 = vset.pattern.permute.xlu0 5
    %2141 = vperm.xlu0 %2140, %v1551
    %v2142 = vpop.permute.xlu0 %2141
    %2144 = vset.pattern.permute.xlu0 5
    %2145 = vperm.xlu0 %2144, %v1553
    %v2146 = vpop.permute.xlu0 %2145
    %2148 = vset.pattern.permute.xlu0 5
    %2149 = vperm.xlu0 %2148, %v1556
    %v2150 = vpop.permute.xlu0 %2149
    %2152 = vset.pattern.permute.xlu0 5
    %2153 = vperm.xlu0 %2152, %v1558
    %v2154 = vpop.permute.xlu0 %2153
    %2156 = vset.pattern.permute.xlu0 5
    %2157 = vperm.xlu0 %2156, %v1561
    %v2158 = vpop.permute.xlu0 %2157
    %2160 = vset.pattern.permute.xlu0 5
    %2161 = vperm.xlu0 %2160, %v1563
    %v2162 = vpop.permute.xlu0 %2161
    %2164 = vset.pattern.permute.xlu0 5
    %2165 = vperm.xlu0 %2164, %v1566
    %v2166 = vpop.permute.xlu0 %2165
    %2168 = vset.pattern.permute.xlu0 5
    %2169 = vperm.xlu0 %2168, %v1568
    %v2170 = vpop.permute.xlu0 %2169
    %2172 = vset.pattern.permute.xlu0 5
    %2173 = vperm.xlu0 %2172, %v1571
    %v2174 = vpop.permute.xlu0 %2173
    %2176 = vset.pattern.permute.xlu0 5
    %2177 = vperm.xlu0 %2176, %v1573
    %v2178 = vpop.permute.xlu0 %2177
    %2180 = vset.pattern.permute.xlu0 5
    %2181 = vperm.xlu0 %2180, %v1576
    %v2182 = vpop.permute.xlu0 %2181
    %2184 = vset.pattern.permute.xlu0 5
    %2185 = vperm.xlu0 %2184, %v1578
    %v2186 = vpop.permute.xlu0 %2185
    %v2188 = vsel %vm2120, %v2126, 0.0
    %v2189 = vsel %vm2121, %v2130, 0.0
    %v2190 = vsel %vm2120, %v2134, 0.0
    %v2191 = vsel %vm2121, %v2138, 0.0
    %v2192 = vsel %vm2120, %v2142, 0.0
    %v2193 = vsel %vm2121, %v2146, 0.0
    %v2194 = vsel %vm2120, %v2150, 0.0
    %v2195 = vsel %vm2121, %v2154, 0.0
    %v2196 = vsel %vm2122, %v2158, 0.0
    %v2197 = vsel %vm2123, %v2162, 0.0
    %v2198 = vsel %vm2122, %v2166, 0.0
    %v2199 = vsel %vm2123, %v2170, 0.0
    %v2200 = vsel %vm2122, %v2174, 0.0
    %v2201 = vsel %vm2123, %v2178, 0.0
    %v2202 = vsel %vm2122, %v2182, 0.0
    %v2203 = vsel %vm2123, %v2186, 0.0
    %v2204 = vadd.f32 %v2100, %v2188
    %v2205 = vadd.f32 %v2101, %v2189
    %v2206 = vadd.f32 %v2102, %v2190
    %v2207 = vadd.f32 %v2103, %v2191
    %v2208 = vadd.f32 %v2104, %v2192
    %v2209 = vadd.f32 %v2105, %v2193
    %v2210 = vadd.f32 %v2106, %v2194
    %v2211 = vadd.f32 %v2107, %v2195
    %v2212 = vadd.f32 %v2108, %v2196
    %v2213 = vadd.f32 %v2109, %v2197
    %v2214 = vadd.f32 %v2110, %v2198
    %v2215 = vadd.f32 %v2111, %v2199
    %v2216 = vadd.f32 %v2112, %v2200
    %v2217 = vadd.f32 %v2113, %v2201
    %v2218 = vadd.f32 %v2114, %v2202
    %v2219 = vadd.f32 %v2115, %v2203
    %v2220 = vsel %vm152, 1, 0
    %v2221 = vsel %vm153, 1, 0
    %v2222 = vsel %vm154, 1, 0
    %v2223 = vsel %vm155, 1, 0
    %vm2224 = vcmp.eq.s32.totalorder %v2220, 1
    %vm2225 = vcmp.eq.s32.totalorder %v2221, 1
    %vm2226 = vcmp.eq.s32.totalorder %v2222, 1
    %vm2227 = vcmp.eq.s32.totalorder %v2223, 1
    %2228 = vset.pattern.permute.xlu0 6
    %2229 = vperm.xlu0 %2228, %v1541
    %v2230 = vpop.permute.xlu0 %2229
    %2232 = vset.pattern.permute.xlu0 6
    %2233 = vperm.xlu0 %2232, %v1543
    %v2234 = vpop.permute.xlu0 %2233
    %2236 = vset.pattern.permute.xlu0 6
    %2237 = vperm.xlu0 %2236, %v1546
    %v2238 = vpop.permute.xlu0 %2237
    %2240 = vset.pattern.permute.xlu0 6
    %2241 = vperm.xlu0 %2240, %v1548
    %v2242 = vpop.permute.xlu0 %2241
    %2244 = vset.pattern.permute.xlu0 6
    %2245 = vperm.xlu0 %2244, %v1551
    %v2246 = vpop.permute.xlu0 %2245
    %2248 = vset.pattern.permute.xlu0 6
    %2249 = vperm.xlu0 %2248, %v1553
    %v2250 = vpop.permute.xlu0 %2249
    %2252 = vset.pattern.permute.xlu0 6
    %2253 = vperm.xlu0 %2252, %v1556
    %v2254 = vpop.permute.xlu0 %2253
    %2256 = vset.pattern.permute.xlu0 6
    %2257 = vperm.xlu0 %2256, %v1558
    %v2258 = vpop.permute.xlu0 %2257
    %2260 = vset.pattern.permute.xlu0 6
    %2261 = vperm.xlu0 %2260, %v1561
    %v2262 = vpop.permute.xlu0 %2261
    %2264 = vset.pattern.permute.xlu0 6
    %2265 = vperm.xlu0 %2264, %v1563
    %v2266 = vpop.permute.xlu0 %2265
    %2268 = vset.pattern.permute.xlu0 6
    %2269 = vperm.xlu0 %2268, %v1566
    %v2270 = vpop.permute.xlu0 %2269
    %2272 = vset.pattern.permute.xlu0 6
    %2273 = vperm.xlu0 %2272, %v1568
    %v2274 = vpop.permute.xlu0 %2273
    %2276 = vset.pattern.permute.xlu0 6
    %2277 = vperm.xlu0 %2276, %v1571
    %v2278 = vpop.permute.xlu0 %2277
    %2280 = vset.pattern.permute.xlu0 6
    %2281 = vperm.xlu0 %2280, %v1573
    %v2282 = vpop.permute.xlu0 %2281
    %2284 = vset.pattern.permute.xlu0 6
    %2285 = vperm.xlu0 %2284, %v1576
    %v2286 = vpop.permute.xlu0 %2285
    %2288 = vset.pattern.permute.xlu0 6
    %2289 = vperm.xlu0 %2288, %v1578
    %v2290 = vpop.permute.xlu0 %2289
    %v2292 = vsel %vm2224, %v2230, 0.0
    %v2293 = vsel %vm2225, %v2234, 0.0
    %v2294 = vsel %vm2224, %v2238, 0.0
    %v2295 = vsel %vm2225, %v2242, 0.0
    %v2296 = vsel %vm2224, %v2246, 0.0
    %v2297 = vsel %vm2225, %v2250, 0.0
    %v2298 = vsel %vm2224, %v2254, 0.0
    %v2299 = vsel %vm2225, %v2258, 0.0
    %v2300 = vsel %vm2226, %v2262, 0.0
    %v2301 = vsel %vm2227, %v2266, 0.0
    %v2302 = vsel %vm2226, %v2270, 0.0
    %v2303 = vsel %vm2227, %v2274, 0.0
    %v2304 = vsel %vm2226, %v2278, 0.0
    %v2305 = vsel %vm2227, %v2282, 0.0
    %v2306 = vsel %vm2226, %v2286, 0.0
    %v2307 = vsel %vm2227, %v2290, 0.0
    %v2308 = vadd.f32 %v2204, %v2292
    %v2309 = vadd.f32 %v2205, %v2293
    %v2310 = vadd.f32 %v2206, %v2294
    %v2311 = vadd.f32 %v2207, %v2295
    %v2312 = vadd.f32 %v2208, %v2296
    %v2313 = vadd.f32 %v2209, %v2297
    %v2314 = vadd.f32 %v2210, %v2298
    %v2315 = vadd.f32 %v2211, %v2299
    %v2316 = vadd.f32 %v2212, %v2300
    %v2317 = vadd.f32 %v2213, %v2301
    %v2318 = vadd.f32 %v2214, %v2302
    %v2319 = vadd.f32 %v2215, %v2303
    %v2320 = vadd.f32 %v2216, %v2304
    %v2321 = vadd.f32 %v2217, %v2305
    %v2322 = vadd.f32 %v2218, %v2306
    %v2323 = vadd.f32 %v2219, %v2307
    %v2324 = vsel %vm156, 1, 0
    %v2325 = vsel %vm157, 1, 0
    %v2326 = vsel %vm158, 1, 0
    %v2327 = vsel %vm159, 1, 0
    %vm2328 = vcmp.eq.s32.totalorder %v2324, 1
    %vm2329 = vcmp.eq.s32.totalorder %v2325, 1
    %vm2330 = vcmp.eq.s32.totalorder %v2326, 1
    %vm2331 = vcmp.eq.s32.totalorder %v2327, 1
    %2332 = vset.pattern.permute.xlu0 7
    %2333 = vperm.xlu0 %2332, %v1541
    %v2334 = vpop.permute.xlu0 %2333
    %2336 = vset.pattern.permute.xlu0 7
    %2337 = vperm.xlu0 %2336, %v1543
    %v2338 = vpop.permute.xlu0 %2337
    %2340 = vset.pattern.permute.xlu0 7
    %2341 = vperm.xlu0 %2340, %v1546
    %v2342 = vpop.permute.xlu0 %2341
    %2344 = vset.pattern.permute.xlu0 7
    %2345 = vperm.xlu0 %2344, %v1548
    %v2346 = vpop.permute.xlu0 %2345
    %2348 = vset.pattern.permute.xlu0 7
    %2349 = vperm.xlu0 %2348, %v1551
    %v2350 = vpop.permute.xlu0 %2349
    %2352 = vset.pattern.permute.xlu0 7
    %2353 = vperm.xlu0 %2352, %v1553
    %v2354 = vpop.permute.xlu0 %2353
    %2356 = vset.pattern.permute.xlu0 7
    %2357 = vperm.xlu0 %2356, %v1556
    %v2358 = vpop.permute.xlu0 %2357
    %2360 = vset.pattern.permute.xlu0 7
    %2361 = vperm.xlu0 %2360, %v1558
    %v2362 = vpop.permute.xlu0 %2361
    %2364 = vset.pattern.permute.xlu0 7
    %2365 = vperm.xlu0 %2364, %v1561
    %v2366 = vpop.permute.xlu0 %2365
    %2368 = vset.pattern.permute.xlu0 7
    %2369 = vperm.xlu0 %2368, %v1563
    %v2370 = vpop.permute.xlu0 %2369
    %2372 = vset.pattern.permute.xlu0 7
    %2373 = vperm.xlu0 %2372, %v1566
    %v2374 = vpop.permute.xlu0 %2373
    %2376 = vset.pattern.permute.xlu0 7
    %2377 = vperm.xlu0 %2376, %v1568
    %v2378 = vpop.permute.xlu0 %2377
    %2380 = vset.pattern.permute.xlu0 7
    %2381 = vperm.xlu0 %2380, %v1571
    %v2382 = vpop.permute.xlu0 %2381
    %2384 = vset.pattern.permute.xlu0 7
    %2385 = vperm.xlu0 %2384, %v1573
    %v2386 = vpop.permute.xlu0 %2385
    %2388 = vset.pattern.permute.xlu0 7
    %2389 = vperm.xlu0 %2388, %v1576
    %v2390 = vpop.permute.xlu0 %2389
    %2392 = vset.pattern.permute.xlu0 7
    %2393 = vperm.xlu0 %2392, %v1578
    %v2394 = vpop.permute.xlu0 %2393
    %v2396 = vsel %vm2328, %v2334, 0.0
    %v2397 = vsel %vm2329, %v2338, 0.0
    %v2398 = vsel %vm2328, %v2342, 0.0
    %v2399 = vsel %vm2329, %v2346, 0.0
    %v2400 = vsel %vm2328, %v2350, 0.0
    %v2401 = vsel %vm2329, %v2354, 0.0
    %v2402 = vsel %vm2328, %v2358, 0.0
    %v2403 = vsel %vm2329, %v2362, 0.0
    %v2404 = vsel %vm2330, %v2366, 0.0
    %v2405 = vsel %vm2331, %v2370, 0.0
    %v2406 = vsel %vm2330, %v2374, 0.0
    %v2407 = vsel %vm2331, %v2378, 0.0
    %v2408 = vsel %vm2330, %v2382, 0.0
    %v2409 = vsel %vm2331, %v2386, 0.0
    %v2410 = vsel %vm2330, %v2390, 0.0
    %v2411 = vsel %vm2331, %v2394, 0.0
    %v2412 = vadd.f32 %v2308, %v2396
    %v2413 = vadd.f32 %v2309, %v2397
    %v2414 = vadd.f32 %v2310, %v2398
    %v2415 = vadd.f32 %v2311, %v2399
    %v2416 = vadd.f32 %v2312, %v2400
    %v2417 = vadd.f32 %v2313, %v2401
    %v2418 = vadd.f32 %v2314, %v2402
    %v2419 = vadd.f32 %v2315, %v2403
    %v2420 = vadd.f32 %v2316, %v2404
    %v2421 = vadd.f32 %v2317, %v2405
    %v2422 = vadd.f32 %v2318, %v2406
    %v2423 = vadd.f32 %v2319, %v2407
    %v2424 = vadd.f32 %v2320, %v2408
    %v2425 = vadd.f32 %v2321, %v2409
    %v2426 = vadd.f32 %v2322, %v2410
    %v2427 = vadd.f32 %v2323, %v2411
    %v2428 = vsel %vm160, 1, 0
    %v2429 = vsel %vm161, 1, 0
    %v2430 = vsel %vm162, 1, 0
    %v2431 = vsel %vm163, 1, 0
    %vm2432 = vcmp.eq.s32.totalorder %v2428, 1
    %vm2433 = vcmp.eq.s32.totalorder %v2429, 1
    %vm2434 = vcmp.eq.s32.totalorder %v2430, 1
    %vm2435 = vcmp.eq.s32.totalorder %v2431, 1
    %2436 = vset.pattern.permute.xlu0 8
    %2437 = vperm.xlu0 %2436, %v1541
    %v2438 = vpop.permute.xlu0 %2437
    %2440 = vset.pattern.permute.xlu0 8
    %2441 = vperm.xlu0 %2440, %v1543
    %v2442 = vpop.permute.xlu0 %2441
    %2444 = vset.pattern.permute.xlu0 8
    %2445 = vperm.xlu0 %2444, %v1546
    %v2446 = vpop.permute.xlu0 %2445
    %2448 = vset.pattern.permute.xlu0 8
    %2449 = vperm.xlu0 %2448, %v1548
    %v2450 = vpop.permute.xlu0 %2449
    %2452 = vset.pattern.permute.xlu0 8
    %2453 = vperm.xlu0 %2452, %v1551
    %v2454 = vpop.permute.xlu0 %2453
    %2456 = vset.pattern.permute.xlu0 8
    %2457 = vperm.xlu0 %2456, %v1553
    %v2458 = vpop.permute.xlu0 %2457
    %2460 = vset.pattern.permute.xlu0 8
    %2461 = vperm.xlu0 %2460, %v1556
    %v2462 = vpop.permute.xlu0 %2461
    %2464 = vset.pattern.permute.xlu0 8
    %2465 = vperm.xlu0 %2464, %v1558
    %v2466 = vpop.permute.xlu0 %2465
    %2468 = vset.pattern.permute.xlu0 8
    %2469 = vperm.xlu0 %2468, %v1561
    %v2470 = vpop.permute.xlu0 %2469
    %2472 = vset.pattern.permute.xlu0 8
    %2473 = vperm.xlu0 %2472, %v1563
    %v2474 = vpop.permute.xlu0 %2473
    %2476 = vset.pattern.permute.xlu0 8
    %2477 = vperm.xlu0 %2476, %v1566
    %v2478 = vpop.permute.xlu0 %2477
    %2480 = vset.pattern.permute.xlu0 8
    %2481 = vperm.xlu0 %2480, %v1568
    %v2482 = vpop.permute.xlu0 %2481
    %2484 = vset.pattern.permute.xlu0 8
    %2485 = vperm.xlu0 %2484, %v1571
    %v2486 = vpop.permute.xlu0 %2485
    %2488 = vset.pattern.permute.xlu0 8
    %2489 = vperm.xlu0 %2488, %v1573
    %v2490 = vpop.permute.xlu0 %2489
    %2492 = vset.pattern.permute.xlu0 8
    %2493 = vperm.xlu0 %2492, %v1576
    %v2494 = vpop.permute.xlu0 %2493
    %2496 = vset.pattern.permute.xlu0 8
    %2497 = vperm.xlu0 %2496, %v1578
    %v2498 = vpop.permute.xlu0 %2497
    %v2500 = vsel %vm2432, %v2438, 0.0
    %v2501 = vsel %vm2433, %v2442, 0.0
    %v2502 = vsel %vm2432, %v2446, 0.0
    %v2503 = vsel %vm2433, %v2450, 0.0
    %v2504 = vsel %vm2432, %v2454, 0.0
    %v2505 = vsel %vm2433, %v2458, 0.0
    %v2506 = vsel %vm2432, %v2462, 0.0
    %v2507 = vsel %vm2433, %v2466, 0.0
    %v2508 = vsel %vm2434, %v2470, 0.0
    %v2509 = vsel %vm2435, %v2474, 0.0
    %v2510 = vsel %vm2434, %v2478, 0.0
    %v2511 = vsel %vm2435, %v2482, 0.0
    %v2512 = vsel %vm2434, %v2486, 0.0
    %v2513 = vsel %vm2435, %v2490, 0.0
    %v2514 = vsel %vm2434, %v2494, 0.0
    %v2515 = vsel %vm2435, %v2498, 0.0
    %v2516 = vadd.f32 %v2412, %v2500
    %v2517 = vadd.f32 %v2413, %v2501
    %v2518 = vadd.f32 %v2414, %v2502
    %v2519 = vadd.f32 %v2415, %v2503
    %v2520 = vadd.f32 %v2416, %v2504
    %v2521 = vadd.f32 %v2417, %v2505
    %v2522 = vadd.f32 %v2418, %v2506
    %v2523 = vadd.f32 %v2419, %v2507
    %v2524 = vadd.f32 %v2420, %v2508
    %v2525 = vadd.f32 %v2421, %v2509
    %v2526 = vadd.f32 %v2422, %v2510
    %v2527 = vadd.f32 %v2423, %v2511
    %v2528 = vadd.f32 %v2424, %v2512
    %v2529 = vadd.f32 %v2425, %v2513
    %v2530 = vadd.f32 %v2426, %v2514
    %v2531 = vadd.f32 %v2427, %v2515
    %v2532 = vsel %vm164, 1, 0
    %v2533 = vsel %vm165, 1, 0
    %v2534 = vsel %vm166, 1, 0
    %v2535 = vsel %vm167, 1, 0
    %vm2536 = vcmp.eq.s32.totalorder %v2532, 1
    %vm2537 = vcmp.eq.s32.totalorder %v2533, 1
    %vm2538 = vcmp.eq.s32.totalorder %v2534, 1
    %vm2539 = vcmp.eq.s32.totalorder %v2535, 1
    %2540 = vset.pattern.permute.xlu0 9
    %2541 = vperm.xlu0 %2540, %v1541
    %v2542 = vpop.permute.xlu0 %2541
    %2544 = vset.pattern.permute.xlu0 9
    %2545 = vperm.xlu0 %2544, %v1543
    %v2546 = vpop.permute.xlu0 %2545
    %2548 = vset.pattern.permute.xlu0 9
    %2549 = vperm.xlu0 %2548, %v1546
    %v2550 = vpop.permute.xlu0 %2549
    %2552 = vset.pattern.permute.xlu0 9
    %2553 = vperm.xlu0 %2552, %v1548
    %v2554 = vpop.permute.xlu0 %2553
    %2556 = vset.pattern.permute.xlu0 9
    %2557 = vperm.xlu0 %2556, %v1551
    %v2558 = vpop.permute.xlu0 %2557
    %2560 = vset.pattern.permute.xlu0 9
    %2561 = vperm.xlu0 %2560, %v1553
    %v2562 = vpop.permute.xlu0 %2561
    %2564 = vset.pattern.permute.xlu0 9
    %2565 = vperm.xlu0 %2564, %v1556
    %v2566 = vpop.permute.xlu0 %2565
    %2568 = vset.pattern.permute.xlu0 9
    %2569 = vperm.xlu0 %2568, %v1558
    %v2570 = vpop.permute.xlu0 %2569
    %2572 = vset.pattern.permute.xlu0 9
    %2573 = vperm.xlu0 %2572, %v1561
    %v2574 = vpop.permute.xlu0 %2573
    %2576 = vset.pattern.permute.xlu0 9
    %2577 = vperm.xlu0 %2576, %v1563
    %v2578 = vpop.permute.xlu0 %2577
    %2580 = vset.pattern.permute.xlu0 9
    %2581 = vperm.xlu0 %2580, %v1566
    %v2582 = vpop.permute.xlu0 %2581
    %2584 = vset.pattern.permute.xlu0 9
    %2585 = vperm.xlu0 %2584, %v1568
    %v2586 = vpop.permute.xlu0 %2585
    %2588 = vset.pattern.permute.xlu0 9
    %2589 = vperm.xlu0 %2588, %v1571
    %v2590 = vpop.permute.xlu0 %2589
    %2592 = vset.pattern.permute.xlu0 9
    %2593 = vperm.xlu0 %2592, %v1573
    %v2594 = vpop.permute.xlu0 %2593
    %2596 = vset.pattern.permute.xlu0 9
    %2597 = vperm.xlu0 %2596, %v1576
    %v2598 = vpop.permute.xlu0 %2597
    %2600 = vset.pattern.permute.xlu0 9
    %2601 = vperm.xlu0 %2600, %v1578
    %v2602 = vpop.permute.xlu0 %2601
    %v2604 = vsel %vm2536, %v2542, 0.0
    %v2605 = vsel %vm2537, %v2546, 0.0
    %v2606 = vsel %vm2536, %v2550, 0.0
    %v2607 = vsel %vm2537, %v2554, 0.0
    %v2608 = vsel %vm2536, %v2558, 0.0
    %v2609 = vsel %vm2537, %v2562, 0.0
    %v2610 = vsel %vm2536, %v2566, 0.0
    %v2611 = vsel %vm2537, %v2570, 0.0
    %v2612 = vsel %vm2538, %v2574, 0.0
    %v2613 = vsel %vm2539, %v2578, 0.0
    %v2614 = vsel %vm2538, %v2582, 0.0
    %v2615 = vsel %vm2539, %v2586, 0.0
    %v2616 = vsel %vm2538, %v2590, 0.0
    %v2617 = vsel %vm2539, %v2594, 0.0
    %v2618 = vsel %vm2538, %v2598, 0.0
    %v2619 = vsel %vm2539, %v2602, 0.0
    %v2620 = vadd.f32 %v2516, %v2604
    %v2621 = vadd.f32 %v2517, %v2605
    %v2622 = vadd.f32 %v2518, %v2606
    %v2623 = vadd.f32 %v2519, %v2607
    %v2624 = vadd.f32 %v2520, %v2608
    %v2625 = vadd.f32 %v2521, %v2609
    %v2626 = vadd.f32 %v2522, %v2610
    %v2627 = vadd.f32 %v2523, %v2611
    %v2628 = vadd.f32 %v2524, %v2612
    %v2629 = vadd.f32 %v2525, %v2613
    %v2630 = vadd.f32 %v2526, %v2614
    %v2631 = vadd.f32 %v2527, %v2615
    %v2632 = vadd.f32 %v2528, %v2616
    %v2633 = vadd.f32 %v2529, %v2617
    %v2634 = vadd.f32 %v2530, %v2618
    %v2635 = vadd.f32 %v2531, %v2619
    %v2636 = vsel %vm168, 1, 0
    %v2637 = vsel %vm169, 1, 0
    %v2638 = vsel %vm170, 1, 0
    %v2639 = vsel %vm171, 1, 0
    %vm2640 = vcmp.eq.s32.totalorder %v2636, 1
    %vm2641 = vcmp.eq.s32.totalorder %v2637, 1
    %vm2642 = vcmp.eq.s32.totalorder %v2638, 1
    %vm2643 = vcmp.eq.s32.totalorder %v2639, 1
    %2644 = vset.pattern.permute.xlu0 10
    %2645 = vperm.xlu0 %2644, %v1541
    %v2646 = vpop.permute.xlu0 %2645
    %2648 = vset.pattern.permute.xlu0 10
    %2649 = vperm.xlu0 %2648, %v1543
    %v2650 = vpop.permute.xlu0 %2649
    %2652 = vset.pattern.permute.xlu0 10
    %2653 = vperm.xlu0 %2652, %v1546
    %v2654 = vpop.permute.xlu0 %2653
    %2656 = vset.pattern.permute.xlu0 10
    %2657 = vperm.xlu0 %2656, %v1548
    %v2658 = vpop.permute.xlu0 %2657
    %2660 = vset.pattern.permute.xlu0 10
    %2661 = vperm.xlu0 %2660, %v1551
    %v2662 = vpop.permute.xlu0 %2661
    %2664 = vset.pattern.permute.xlu0 10
    %2665 = vperm.xlu0 %2664, %v1553
    %v2666 = vpop.permute.xlu0 %2665
    %2668 = vset.pattern.permute.xlu0 10
    %2669 = vperm.xlu0 %2668, %v1556
    %v2670 = vpop.permute.xlu0 %2669
    %2672 = vset.pattern.permute.xlu0 10
    %2673 = vperm.xlu0 %2672, %v1558
    %v2674 = vpop.permute.xlu0 %2673
    %2676 = vset.pattern.permute.xlu0 10
    %2677 = vperm.xlu0 %2676, %v1561
    %v2678 = vpop.permute.xlu0 %2677
    %2680 = vset.pattern.permute.xlu0 10
    %2681 = vperm.xlu0 %2680, %v1563
    %v2682 = vpop.permute.xlu0 %2681
    %2684 = vset.pattern.permute.xlu0 10
    %2685 = vperm.xlu0 %2684, %v1566
    %v2686 = vpop.permute.xlu0 %2685
    %2688 = vset.pattern.permute.xlu0 10
    %2689 = vperm.xlu0 %2688, %v1568
    %v2690 = vpop.permute.xlu0 %2689
    %2692 = vset.pattern.permute.xlu0 10
    %2693 = vperm.xlu0 %2692, %v1571
    %v2694 = vpop.permute.xlu0 %2693
    %2696 = vset.pattern.permute.xlu0 10
    %2697 = vperm.xlu0 %2696, %v1573
    %v2698 = vpop.permute.xlu0 %2697
    %2700 = vset.pattern.permute.xlu0 10
    %2701 = vperm.xlu0 %2700, %v1576
    %v2702 = vpop.permute.xlu0 %2701
    %2704 = vset.pattern.permute.xlu0 10
    %2705 = vperm.xlu0 %2704, %v1578
    %v2706 = vpop.permute.xlu0 %2705
    %v2708 = vsel %vm2640, %v2646, 0.0
    %v2709 = vsel %vm2641, %v2650, 0.0
    %v2710 = vsel %vm2640, %v2654, 0.0
    %v2711 = vsel %vm2641, %v2658, 0.0
    %v2712 = vsel %vm2640, %v2662, 0.0
    %v2713 = vsel %vm2641, %v2666, 0.0
    %v2714 = vsel %vm2640, %v2670, 0.0
    %v2715 = vsel %vm2641, %v2674, 0.0
    %v2716 = vsel %vm2642, %v2678, 0.0
    %v2717 = vsel %vm2643, %v2682, 0.0
    %v2718 = vsel %vm2642, %v2686, 0.0
    %v2719 = vsel %vm2643, %v2690, 0.0
    %v2720 = vsel %vm2642, %v2694, 0.0
    %v2721 = vsel %vm2643, %v2698, 0.0
    %v2722 = vsel %vm2642, %v2702, 0.0
    %v2723 = vsel %vm2643, %v2706, 0.0
    %v2724 = vadd.f32 %v2620, %v2708
    %v2725 = vadd.f32 %v2621, %v2709
    %v2726 = vadd.f32 %v2622, %v2710
    %v2727 = vadd.f32 %v2623, %v2711
    %v2728 = vadd.f32 %v2624, %v2712
    %v2729 = vadd.f32 %v2625, %v2713
    %v2730 = vadd.f32 %v2626, %v2714
    %v2731 = vadd.f32 %v2627, %v2715
    %v2732 = vadd.f32 %v2628, %v2716
    %v2733 = vadd.f32 %v2629, %v2717
    %v2734 = vadd.f32 %v2630, %v2718
    %v2735 = vadd.f32 %v2631, %v2719
    %v2736 = vadd.f32 %v2632, %v2720
    %v2737 = vadd.f32 %v2633, %v2721
    %v2738 = vadd.f32 %v2634, %v2722
    %v2739 = vadd.f32 %v2635, %v2723
    %v2740 = vadd.f32 %v1279, %v2724
    %v2741 = vadd.f32 %v1281, %v2725
    %v2742 = vadd.f32 %v1309, %v2726
    %v2743 = vadd.f32 %v1311, %v2727
    %v2744 = vadd.f32 %v1339, %v2728
    %v2745 = vadd.f32 %v1341, %v2729
    %v2746 = vadd.f32 %v1369, %v2730
    %v2747 = vadd.f32 %v1371, %v2731
    %v2748 = vadd.f32 %v1399, %v2732
    %v2749 = vadd.f32 %v1401, %v2733
    %v2750 = vadd.f32 %v1429, %v2734
    %v2751 = vadd.f32 %v1431, %v2735
    %v2752 = vadd.f32 %v1459, %v2736
    %v2753 = vadd.f32 %v1461, %v2737
    %v2754 = vadd.f32 %v1489, %v2738
    %v2755 = vadd.f32 %v1491, %v2739
    %v2756 = vmul.f32 %v2740, 0.35355338
    %v2757 = vmul.f32 %v2741, 0.35355338
    %v2758 = vmul.f32 %v2742, 0.35355338
    %v2759 = vmul.f32 %v2743, 0.35355338
    %v2760 = vmul.f32 %v2744, 0.35355338
    %v2761 = vmul.f32 %v2745, 0.35355338
    %v2762 = vmul.f32 %v2746, 0.35355338
    %v2763 = vmul.f32 %v2747, 0.35355338
    %v2764 = vmul.f32 %v2748, 0.35355338
    %v2765 = vmul.f32 %v2749, 0.35355338
    %v2766 = vmul.f32 %v2750, 0.35355338
    %v2767 = vmul.f32 %v2751, 0.35355338
    %v2768 = vmul.f32 %v2752, 0.35355338
    %v2769 = vmul.f32 %v2753, 0.35355338
    %v2770 = vmul.f32 %v2754, 0.35355338
    %v2771 = vmul.f32 %v2755, 0.35355338
    %v2772 = vperm.slane %v121, 0
    %v2773 = vperm.slane %v123, 0
    %v2776 = vadd.f32 %v2756, %v2772
    %v2777 = vadd.f32 %v2757, %v2772
    %v2778 = vadd.f32 %v2758, %v2772
    %v2779 = vadd.f32 %v2759, %v2772
    %v2780 = vadd.f32 %v2760, %v2772
    %v2781 = vadd.f32 %v2761, %v2772
    %v2782 = vadd.f32 %v2762, %v2772
    %v2783 = vadd.f32 %v2763, %v2772
    %v2784 = vadd.f32 %v2764, %v2773
    %v2785 = vadd.f32 %v2765, %v2773
    %v2786 = vadd.f32 %v2766, %v2773
    %v2787 = vadd.f32 %v2767, %v2773
    %v2788 = vadd.f32 %v2768, %v2773
    %v2789 = vadd.f32 %v2769, %v2773
    %v2790 = vadd.f32 %v2770, %v2773
    %v2791 = vadd.f32 %v2771, %v2773
    %vm2792 = vcmask 130048
    %v2793 = vsel %vm2792, %v2776, -inf
    %2794 = vmax.xlane.f32.xlu0 %v2793
    %v2795 = vpop.xlane.xlu0 %2794
    %v2796 = vsel %vm2792, %v2777, -inf
    %2797 = vmax.xlane.f32.xlu0 %v2796
    %v2798 = vpop.xlane.xlu0 %2797
    %v2799 = vsel %vm2792, %v2778, -inf
    %2800 = vmax.xlane.f32.xlu0 %v2799
    %v2801 = vpop.xlane.xlu0 %2800
    %v2802 = vsel %vm2792, %v2779, -inf
    %2803 = vmax.xlane.f32.xlu0 %v2802
    %v2804 = vpop.xlane.xlu0 %2803
    %v2805 = vsel %vm2792, %v2780, -inf
    %2806 = vmax.xlane.f32.xlu0 %v2805
    %v2807 = vpop.xlane.xlu0 %2806
    %v2808 = vsel %vm2792, %v2781, -inf
    %2809 = vmax.xlane.f32.xlu0 %v2808
    %v2810 = vpop.xlane.xlu0 %2809
    %v2811 = vsel %vm2792, %v2782, -inf
    %2812 = vmax.xlane.f32.xlu0 %v2811
    %v2813 = vpop.xlane.xlu0 %2812
    %v2814 = vsel %vm2792, %v2783, -inf
    %2815 = vmax.xlane.f32.xlu0 %v2814
    %v2816 = vpop.xlane.xlu0 %2815
    %v2817 = vsel %vm2792, %v2784, -inf
    %2818 = vmax.xlane.f32.xlu0 %v2817
    %v2819 = vpop.xlane.xlu0 %2818
    %v2820 = vsel %vm2792, %v2785, -inf
    %2821 = vmax.xlane.f32.xlu0 %v2820
    %v2822 = vpop.xlane.xlu0 %2821
    %v2823 = vsel %vm2792, %v2786, -inf
    %2824 = vmax.xlane.f32.xlu0 %v2823
    %v2825 = vpop.xlane.xlu0 %2824
    %v2826 = vsel %vm2792, %v2787, -inf
    %2827 = vmax.xlane.f32.xlu0 %v2826
    %v2828 = vpop.xlane.xlu0 %2827
    %v2829 = vsel %vm2792, %v2788, -inf
    %2830 = vmax.xlane.f32.xlu0 %v2829
    %v2831 = vpop.xlane.xlu0 %2830
    %v2832 = vsel %vm2792, %v2789, -inf
    %2833 = vmax.xlane.f32.xlu0 %v2832
    %v2834 = vpop.xlane.xlu0 %2833
    %v2835 = vsel %vm2792, %v2790, -inf
    %2836 = vmax.xlane.f32.xlu0 %v2835
    %v2837 = vpop.xlane.xlu0 %2836
    %v2838 = vsel %vm2792, %v2791, -inf
    %2839 = vmax.xlane.f32.xlu0 %v2838
    %v2840 = vpop.xlane.xlu0 %2839
    %v2841 = vsub.f32 %v2776, %v2795
    %v2842 = vsub.f32 %v2777, %v2798
    %v2843 = vsub.f32 %v2778, %v2801
    %v2844 = vsub.f32 %v2779, %v2804
    %v2845 = vsub.f32 %v2780, %v2807
    %v2846 = vsub.f32 %v2781, %v2810
    %v2847 = vsub.f32 %v2782, %v2813
    %v2848 = vsub.f32 %v2783, %v2816
    %v2849 = vsub.f32 %v2784, %v2819
    %v2850 = vsub.f32 %v2785, %v2822
    %v2851 = vsub.f32 %v2786, %v2825
    %v2852 = vsub.f32 %v2787, %v2828
    %v2853 = vsub.f32 %v2788, %v2831
    %v2854 = vsub.f32 %v2789, %v2834
    %v2855 = vsub.f32 %v2790, %v2837
    %v2856 = vsub.f32 %v2791, %v2840
    %v2857 = vmul.f32 %v2841, 1.442695
    %v2858 = vpow.pop %v2857
    %v2859 = vmul.f32 %v2842, 1.442695
    %v2860 = vpow.pop %v2859
    %v2861 = vmul.f32 %v2843, 1.442695
    %v2862 = vpow.pop %v2861
    %v2863 = vmul.f32 %v2844, 1.442695
    %v2864 = vpow.pop %v2863
    %v2865 = vmul.f32 %v2845, 1.442695
    %v2866 = vpow.pop %v2865
    %v2867 = vmul.f32 %v2846, 1.442695
    %v2868 = vpow.pop %v2867
    %v2869 = vmul.f32 %v2847, 1.442695
    %v2870 = vpow.pop %v2869
    %v2871 = vmul.f32 %v2848, 1.442695
    %v2872 = vpow.pop %v2871
    %v2873 = vmul.f32 %v2849, 1.442695
    %v2874 = vpow.pop %v2873
    %v2875 = vmul.f32 %v2850, 1.442695
    %v2876 = vpow.pop %v2875
    %v2877 = vmul.f32 %v2851, 1.442695
    %v2878 = vpow.pop %v2877
    %v2879 = vmul.f32 %v2852, 1.442695
    %v2880 = vpow.pop %v2879
    %v2881 = vmul.f32 %v2853, 1.442695
    %v2882 = vpow.pop %v2881
    %v2883 = vmul.f32 %v2854, 1.442695
    %v2884 = vpow.pop %v2883
    %v2885 = vmul.f32 %v2855, 1.442695
    %v2886 = vpow.pop %v2885
    %v2887 = vmul.f32 %v2856, 1.442695
    %v2888 = vpow.pop %v2887
    %v2889 = vsel %vm2792, %v2858, 0.0
    %2890 = vadd.xlane.f32.xlu0 %v2889
    %v2891 = vpop.xlane.xlu0 %2890
    %v2892 = vsel %vm2792, %v2860, 0.0
    %2893 = vadd.xlane.f32.xlu0 %v2892
    %v2894 = vpop.xlane.xlu0 %2893
    %v2895 = vsel %vm2792, %v2862, 0.0
    %2896 = vadd.xlane.f32.xlu0 %v2895
    %v2897 = vpop.xlane.xlu0 %2896
    %v2898 = vsel %vm2792, %v2864, 0.0
    %2899 = vadd.xlane.f32.xlu0 %v2898
    %v2900 = vpop.xlane.xlu0 %2899
    %v2901 = vsel %vm2792, %v2866, 0.0
    %2902 = vadd.xlane.f32.xlu0 %v2901
    %v2903 = vpop.xlane.xlu0 %2902
    %v2904 = vsel %vm2792, %v2868, 0.0
    %2905 = vadd.xlane.f32.xlu0 %v2904
    %v2906 = vpop.xlane.xlu0 %2905
    %v2907 = vsel %vm2792, %v2870, 0.0
    %2908 = vadd.xlane.f32.xlu0 %v2907
    %v2909 = vpop.xlane.xlu0 %2908
    %v2910 = vsel %vm2792, %v2872, 0.0
    %2911 = vadd.xlane.f32.xlu0 %v2910
    %v2912 = vpop.xlane.xlu0 %2911
    %v2913 = vsel %vm2792, %v2874, 0.0
    %2914 = vadd.xlane.f32.xlu0 %v2913
    %v2915 = vpop.xlane.xlu0 %2914
    %v2916 = vsel %vm2792, %v2876, 0.0
    %2917 = vadd.xlane.f32.xlu0 %v2916
    %v2918 = vpop.xlane.xlu0 %2917
    %v2919 = vsel %vm2792, %v2878, 0.0
    %2920 = vadd.xlane.f32.xlu0 %v2919
    %v2921 = vpop.xlane.xlu0 %2920
    %v2922 = vsel %vm2792, %v2880, 0.0
    %2923 = vadd.xlane.f32.xlu0 %v2922
    %v2924 = vpop.xlane.xlu0 %2923
    %v2925 = vsel %vm2792, %v2882, 0.0
    %2926 = vadd.xlane.f32.xlu0 %v2925
    %v2927 = vpop.xlane.xlu0 %2926
    %v2928 = vsel %vm2792, %v2884, 0.0
    %2929 = vadd.xlane.f32.xlu0 %v2928
    %v2930 = vpop.xlane.xlu0 %2929
    %v2931 = vsel %vm2792, %v2886, 0.0
    %2932 = vadd.xlane.f32.xlu0 %v2931
    %v2933 = vpop.xlane.xlu0 %2932
    %v2934 = vsel %vm2792, %v2888, 0.0
    %2935 = vadd.xlane.f32.xlu0 %v2934
    %v2936 = vpop.xlane.xlu0 %2935
    %v2937 = vrcp.pop %v2891
    %v2938 = vrcp.pop %v2894
    %v2939 = vrcp.pop %v2897
    %v2940 = vrcp.pop %v2900
    %v2941 = vrcp.pop %v2903
    %v2942 = vrcp.pop %v2906
    %v2943 = vrcp.pop %v2909
    %v2944 = vrcp.pop %v2912
    %v2945 = vrcp.pop %v2915
    %v2946 = vrcp.pop %v2918
    %v2947 = vrcp.pop %v2921
    %v2948 = vrcp.pop %v2924
    %v2949 = vrcp.pop %v2927
    %v2950 = vrcp.pop %v2930
    %v2951 = vrcp.pop %v2933
    %v2952 = vrcp.pop %v2936
    %v2953 = vmul.f32 %v2858, %v2937
    %v2954 = vmul.f32 %v2860, %v2938
    %v2955 = vmul.f32 %v2862, %v2939
    %v2956 = vmul.f32 %v2864, %v2940
    %v2957 = vmul.f32 %v2866, %v2941
    %v2958 = vmul.f32 %v2868, %v2942
    %v2959 = vmul.f32 %v2870, %v2943
    %v2960 = vmul.f32 %v2872, %v2944
    %v2961 = vmul.f32 %v2874, %v2945
    %v2962 = vmul.f32 %v2876, %v2946
    %v2963 = vmul.f32 %v2878, %v2947
    %v2964 = vmul.f32 %v2880, %v2948
    %v2965 = vmul.f32 %v2882, %v2949
    %v2966 = vmul.f32 %v2884, %v2950
    %v2967 = vmul.f32 %v2886, %v2951
    %v2968 = vmul.f32 %v2888, %v2952
    %v2969 = vpack.c.bf16 %v2953, %v2953
    %v2970 = vpack.c.bf16 %v2954, %v2954
    %v2971 = vpack.c.bf16 %v2955, %v2955
    %v2972 = vpack.c.bf16 %v2956, %v2956
    %v2973 = vpack.c.bf16 %v2957, %v2957
    %v2974 = vpack.c.bf16 %v2958, %v2958
    %v2975 = vpack.c.bf16 %v2959, %v2959
    %v2976 = vpack.c.bf16 %v2960, %v2960
    %v2977 = vpack.c.bf16 %v2961, %v2961
    %v2978 = vpack.c.bf16 %v2962, %v2962
    %v2979 = vpack.c.bf16 %v2963, %v2963
    %v2980 = vpack.c.bf16 %v2964, %v2964
    %v2981 = vpack.c.bf16 %v2965, %v2965
    %v2982 = vpack.c.bf16 %v2966, %v2966
    %v2983 = vpack.c.bf16 %v2967, %v2967
    %v2984 = vpack.c.bf16 %v2968, %v2968
    %v2985 = vpack.c.bf16 %v980, %v980
    %v2986 = vpack.c.bf16 %v981, %v981
    %v2987 = vpack.c.bf16 %v1012, %v1012
    %v2988 = vpack.c.bf16 %v1013, %v1013
    %v2989 = vpack.c.bf16 %v1044, %v1044
    %v2990 = vpack.c.bf16 %v1045, %v1045
    %v2991 = vpack.c.bf16 %v1076, %v1076
    %v2992 = vpack.c.bf16 %v1077, %v1077
    %v2993 = vpack.c.bf16 %v1108, %v1108
    %v2994 = vpack.c.bf16 %v1109, %v1109
    %v2995 = vpack.c.bf16 %v1140, %v1140
    %v2996 = vpack.c.bf16 %v1141, %v1141
    %v2997 = vpack.c.bf16 %v1172, %v1172
    %v2998 = vpack.c.bf16 %v1173, %v1173
    %v2999 = vpack.c.bf16 %v1204, %v1204
    %v3000 = vpack.c.bf16 %v1205, %v1205
    %v3001 = vsel %vm1584, %v2953, 0.0
    %v3002 = vsel %vm1585, %v2954, 0.0
    %v3003 = vsel %vm1584, %v2955, 0.0
    %v3004 = vsel %vm1585, %v2956, 0.0
    %v3005 = vsel %vm1584, %v2957, 0.0
    %v3006 = vsel %vm1585, %v2958, 0.0
    %v3007 = vsel %vm1584, %v2959, 0.0
    %v3008 = vsel %vm1585, %v2960, 0.0
    %v3009 = vsel %vm1586, %v2961, 0.0
    %v3010 = vsel %vm1587, %v2962, 0.0
    %v3011 = vsel %vm1586, %v2963, 0.0
    %v3012 = vsel %vm1587, %v2964, 0.0
    %v3013 = vsel %vm1586, %v2965, 0.0
    %v3014 = vsel %vm1587, %v2966, 0.0
    %v3015 = vsel %vm1586, %v2967, 0.0
    %v3016 = vsel %vm1587, %v2968, 0.0
    %v3017 = vsel %vm2792, %v3001, 0.0
    %3018 = vadd.xlane.f32.xlu0 %v3017
    %v3019 = vpop.xlane.xlu0 %3018
    %v3020 = vsel %vm2792, %v3002, 0.0
    %3021 = vadd.xlane.f32.xlu0 %v3020
    %v3022 = vpop.xlane.xlu0 %3021
    %v3023 = vsel %vm2792, %v3003, 0.0
    %3024 = vadd.xlane.f32.xlu0 %v3023
    %v3025 = vpop.xlane.xlu0 %3024
    %v3026 = vsel %vm2792, %v3004, 0.0
    %3027 = vadd.xlane.f32.xlu0 %v3026
    %v3028 = vpop.xlane.xlu0 %3027
    %v3029 = vsel %vm2792, %v3005, 0.0
    %3030 = vadd.xlane.f32.xlu0 %v3029
    %v3031 = vpop.xlane.xlu0 %3030
    %v3032 = vsel %vm2792, %v3006, 0.0
    %3033 = vadd.xlane.f32.xlu0 %v3032
    %v3034 = vpop.xlane.xlu0 %3033
    %v3035 = vsel %vm2792, %v3007, 0.0
    %3036 = vadd.xlane.f32.xlu0 %v3035
    %v3037 = vpop.xlane.xlu0 %3036
    %v3038 = vsel %vm2792, %v3008, 0.0
    %3039 = vadd.xlane.f32.xlu0 %v3038
    %v3040 = vpop.xlane.xlu0 %3039
    %v3041 = vsel %vm2792, %v3009, 0.0
    %3042 = vadd.xlane.f32.xlu0 %v3041
    %v3043 = vpop.xlane.xlu0 %3042
    %v3044 = vsel %vm2792, %v3010, 0.0
    %3045 = vadd.xlane.f32.xlu0 %v3044
    %v3046 = vpop.xlane.xlu0 %3045
    %v3047 = vsel %vm2792, %v3011, 0.0
    %3048 = vadd.xlane.f32.xlu0 %v3047
    %v3049 = vpop.xlane.xlu0 %3048
    %v3050 = vsel %vm2792, %v3012, 0.0
    %3051 = vadd.xlane.f32.xlu0 %v3050
    %v3052 = vpop.xlane.xlu0 %3051
    %v3053 = vsel %vm2792, %v3013, 0.0
    %3054 = vadd.xlane.f32.xlu0 %v3053
    %v3055 = vpop.xlane.xlu0 %3054
    %v3056 = vsel %vm2792, %v3014, 0.0
    %3057 = vadd.xlane.f32.xlu0 %v3056
    %v3058 = vpop.xlane.xlu0 %3057
    %v3059 = vsel %vm2792, %v3015, 0.0
    %3060 = vadd.xlane.f32.xlu0 %v3059
    %v3061 = vpop.xlane.xlu0 %3060
    %v3062 = vsel %vm2792, %v3016, 0.0
    %3063 = vadd.xlane.f32.xlu0 %v3062
    %v3064 = vpop.xlane.xlu0 %3063
    %v3065 = vsel %vm1704, %v2953, 0.0
    %v3066 = vsel %vm1705, %v2954, 0.0
    %v3067 = vsel %vm1704, %v2955, 0.0
    %v3068 = vsel %vm1705, %v2956, 0.0
    %v3069 = vsel %vm1704, %v2957, 0.0
    %v3070 = vsel %vm1705, %v2958, 0.0
    %v3071 = vsel %vm1704, %v2959, 0.0
    %v3072 = vsel %vm1705, %v2960, 0.0
    %v3073 = vsel %vm1706, %v2961, 0.0
    %v3074 = vsel %vm1707, %v2962, 0.0
    %v3075 = vsel %vm1706, %v2963, 0.0
    %v3076 = vsel %vm1707, %v2964, 0.0
    %v3077 = vsel %vm1706, %v2965, 0.0
    %v3078 = vsel %vm1707, %v2966, 0.0
    %v3079 = vsel %vm1706, %v2967, 0.0
    %v3080 = vsel %vm1707, %v2968, 0.0
    %v3081 = vsel %vm2792, %v3065, 0.0
    %3082 = vadd.xlane.f32.xlu0 %v3081
    %v3083 = vpop.xlane.xlu0 %3082
    %v3084 = vsel %vm2792, %v3066, 0.0
    %3085 = vadd.xlane.f32.xlu0 %v3084
    %v3086 = vpop.xlane.xlu0 %3085
    %v3087 = vsel %vm2792, %v3067, 0.0
    %3088 = vadd.xlane.f32.xlu0 %v3087
    %v3089 = vpop.xlane.xlu0 %3088
    %v3090 = vsel %vm2792, %v3068, 0.0
    %3091 = vadd.xlane.f32.xlu0 %v3090
    %v3092 = vpop.xlane.xlu0 %3091
    %v3093 = vsel %vm2792, %v3069, 0.0
    %3094 = vadd.xlane.f32.xlu0 %v3093
    %v3095 = vpop.xlane.xlu0 %3094
    %v3096 = vsel %vm2792, %v3070, 0.0
    %3097 = vadd.xlane.f32.xlu0 %v3096
    %v3098 = vpop.xlane.xlu0 %3097
    %v3099 = vsel %vm2792, %v3071, 0.0
    %3100 = vadd.xlane.f32.xlu0 %v3099
    %v3101 = vpop.xlane.xlu0 %3100
    %v3102 = vsel %vm2792, %v3072, 0.0
    %3103 = vadd.xlane.f32.xlu0 %v3102
    %v3104 = vpop.xlane.xlu0 %3103
    %v3105 = vsel %vm2792, %v3073, 0.0
    %3106 = vadd.xlane.f32.xlu0 %v3105
    %v3107 = vpop.xlane.xlu0 %3106
    %v3108 = vsel %vm2792, %v3074, 0.0
    %3109 = vadd.xlane.f32.xlu0 %v3108
    %v3110 = vpop.xlane.xlu0 %3109
    %v3111 = vsel %vm2792, %v3075, 0.0
    %3112 = vadd.xlane.f32.xlu0 %v3111
    %v3113 = vpop.xlane.xlu0 %3112
    %v3114 = vsel %vm2792, %v3076, 0.0
    %3115 = vadd.xlane.f32.xlu0 %v3114
    %v3116 = vpop.xlane.xlu0 %3115
    %v3117 = vsel %vm2792, %v3077, 0.0
    %3118 = vadd.xlane.f32.xlu0 %v3117
    %v3119 = vpop.xlane.xlu0 %3118
    %v3120 = vsel %vm2792, %v3078, 0.0
    %3121 = vadd.xlane.f32.xlu0 %v3120
    %v3122 = vpop.xlane.xlu0 %3121
    %v3123 = vsel %vm2792, %v3079, 0.0
    %3124 = vadd.xlane.f32.xlu0 %v3123
    %v3125 = vpop.xlane.xlu0 %3124
    %v3126 = vsel %vm2792, %v3080, 0.0
    %3127 = vadd.xlane.f32.xlu0 %v3126
    %v3128 = vpop.xlane.xlu0 %3127
    %v3129 = vsel %vm1808, %v2953, 0.0
    %v3130 = vsel %vm1809, %v2954, 0.0
    %v3131 = vsel %vm1808, %v2955, 0.0
    %v3132 = vsel %vm1809, %v2956, 0.0
    %v3133 = vsel %vm1808, %v2957, 0.0
    %v3134 = vsel %vm1809, %v2958, 0.0
    %v3135 = vsel %vm1808, %v2959, 0.0
    %v3136 = vsel %vm1809, %v2960, 0.0
    %v3137 = vsel %vm1810, %v2961, 0.0
    %v3138 = vsel %vm1811, %v2962, 0.0
    %v3139 = vsel %vm1810, %v2963, 0.0
    %v3140 = vsel %vm1811, %v2964, 0.0
    %v3141 = vsel %vm1810, %v2965, 0.0
    %v3142 = vsel %vm1811, %v2966, 0.0
    %v3143 = vsel %vm1810, %v2967, 0.0
    %v3144 = vsel %vm1811, %v2968, 0.0
    %v3145 = vsel %vm2792, %v3129, 0.0
    %3146 = vadd.xlane.f32.xlu0 %v3145
    %v3147 = vpop.xlane.xlu0 %3146
    %v3148 = vsel %vm2792, %v3130, 0.0
    %3149 = vadd.xlane.f32.xlu0 %v3148
    %v3150 = vpop.xlane.xlu0 %3149
    %v3151 = vsel %vm2792, %v3131, 0.0
    %3152 = vadd.xlane.f32.xlu0 %v3151
    %v3153 = vpop.xlane.xlu0 %3152
    %v3154 = vsel %vm2792, %v3132, 0.0
    %3155 = vadd.xlane.f32.xlu0 %v3154
    %v3156 = vpop.xlane.xlu0 %3155
    %v3157 = vsel %vm2792, %v3133, 0.0
    %3158 = vadd.xlane.f32.xlu0 %v3157
    %v3159 = vpop.xlane.xlu0 %3158
    %v3160 = vsel %vm2792, %v3134, 0.0
    %3161 = vadd.xlane.f32.xlu0 %v3160
    %v3162 = vpop.xlane.xlu0 %3161
    %v3163 = vsel %vm2792, %v3135, 0.0
    %3164 = vadd.xlane.f32.xlu0 %v3163
    %v3165 = vpop.xlane.xlu0 %3164
    %v3166 = vsel %vm2792, %v3136, 0.0
    %3167 = vadd.xlane.f32.xlu0 %v3166
    %v3168 = vpop.xlane.xlu0 %3167
    %v3169 = vsel %vm2792, %v3137, 0.0
    %3170 = vadd.xlane.f32.xlu0 %v3169
    %v3171 = vpop.xlane.xlu0 %3170
    %v3172 = vsel %vm2792, %v3138, 0.0
    %3173 = vadd.xlane.f32.xlu0 %v3172
    %v3174 = vpop.xlane.xlu0 %3173
    %v3175 = vsel %vm2792, %v3139, 0.0
    %3176 = vadd.xlane.f32.xlu0 %v3175
    %v3177 = vpop.xlane.xlu0 %3176
    %v3178 = vsel %vm2792, %v3140, 0.0
    %3179 = vadd.xlane.f32.xlu0 %v3178
    %v3180 = vpop.xlane.xlu0 %3179
    %v3181 = vsel %vm2792, %v3141, 0.0
    %3182 = vadd.xlane.f32.xlu0 %v3181
    %v3183 = vpop.xlane.xlu0 %3182
    %v3184 = vsel %vm2792, %v3142, 0.0
    %3185 = vadd.xlane.f32.xlu0 %v3184
    %v3186 = vpop.xlane.xlu0 %3185
    %v3187 = vsel %vm2792, %v3143, 0.0
    %3188 = vadd.xlane.f32.xlu0 %v3187
    %v3189 = vpop.xlane.xlu0 %3188
    %v3190 = vsel %vm2792, %v3144, 0.0
    %3191 = vadd.xlane.f32.xlu0 %v3190
    %v3192 = vpop.xlane.xlu0 %3191
    %v3193 = vsel %vm1912, %v2953, 0.0
    %v3194 = vsel %vm1913, %v2954, 0.0
    %v3195 = vsel %vm1912, %v2955, 0.0
    %v3196 = vsel %vm1913, %v2956, 0.0
    %v3197 = vsel %vm1912, %v2957, 0.0
    %v3198 = vsel %vm1913, %v2958, 0.0
    %v3199 = vsel %vm1912, %v2959, 0.0
    %v3200 = vsel %vm1913, %v2960, 0.0
    %v3201 = vsel %vm1914, %v2961, 0.0
    %v3202 = vsel %vm1915, %v2962, 0.0
    %v3203 = vsel %vm1914, %v2963, 0.0
    %v3204 = vsel %vm1915, %v2964, 0.0
    %v3205 = vsel %vm1914, %v2965, 0.0
    %v3206 = vsel %vm1915, %v2966, 0.0
    %v3207 = vsel %vm1914, %v2967, 0.0
    %v3208 = vsel %vm1915, %v2968, 0.0
    %v3209 = vsel %vm2792, %v3193, 0.0
    %3210 = vadd.xlane.f32.xlu0 %v3209
    %v3211 = vpop.xlane.xlu0 %3210
    %v3212 = vsel %vm2792, %v3194, 0.0
    %3213 = vadd.xlane.f32.xlu0 %v3212
    %v3214 = vpop.xlane.xlu0 %3213
    %v3215 = vsel %vm2792, %v3195, 0.0
    %3216 = vadd.xlane.f32.xlu0 %v3215
    %v3217 = vpop.xlane.xlu0 %3216
    %v3218 = vsel %vm2792, %v3196, 0.0
    %3219 = vadd.xlane.f32.xlu0 %v3218
    %v3220 = vpop.xlane.xlu0 %3219
    %v3221 = vsel %vm2792, %v3197, 0.0
    %3222 = vadd.xlane.f32.xlu0 %v3221
    %v3223 = vpop.xlane.xlu0 %3222
    %v3224 = vsel %vm2792, %v3198, 0.0
    %3225 = vadd.xlane.f32.xlu0 %v3224
    %v3226 = vpop.xlane.xlu0 %3225
    %v3227 = vsel %vm2792, %v3199, 0.0
    %3228 = vadd.xlane.f32.xlu0 %v3227
    %v3229 = vpop.xlane.xlu0 %3228
    %v3230 = vsel %vm2792, %v3200, 0.0
    %3231 = vadd.xlane.f32.xlu0 %v3230
    %v3232 = vpop.xlane.xlu0 %3231
    %v3233 = vsel %vm2792, %v3201, 0.0
    %3234 = vadd.xlane.f32.xlu0 %v3233
    %v3235 = vpop.xlane.xlu0 %3234
    %v3236 = vsel %vm2792, %v3202, 0.0
    %3237 = vadd.xlane.f32.xlu0 %v3236
    %v3238 = vpop.xlane.xlu0 %3237
    %v3239 = vsel %vm2792, %v3203, 0.0
    %3240 = vadd.xlane.f32.xlu0 %v3239
    %v3241 = vpop.xlane.xlu0 %3240
    %v3242 = vsel %vm2792, %v3204, 0.0
    %3243 = vadd.xlane.f32.xlu0 %v3242
    %v3244 = vpop.xlane.xlu0 %3243
    %v3245 = vsel %vm2792, %v3205, 0.0
    %3246 = vadd.xlane.f32.xlu0 %v3245
    %v3247 = vpop.xlane.xlu0 %3246
    %v3248 = vsel %vm2792, %v3206, 0.0
    %3249 = vadd.xlane.f32.xlu0 %v3248
    %v3250 = vpop.xlane.xlu0 %3249
    %v3251 = vsel %vm2792, %v3207, 0.0
    %3252 = vadd.xlane.f32.xlu0 %v3251
    %v3253 = vpop.xlane.xlu0 %3252
    %v3254 = vsel %vm2792, %v3208, 0.0
    %3255 = vadd.xlane.f32.xlu0 %v3254
    %v3256 = vpop.xlane.xlu0 %3255
    %v3257 = vsel %vm2016, %v2953, 0.0
    %v3258 = vsel %vm2017, %v2954, 0.0
    %v3259 = vsel %vm2016, %v2955, 0.0
    %v3260 = vsel %vm2017, %v2956, 0.0
    %v3261 = vsel %vm2016, %v2957, 0.0
    %v3262 = vsel %vm2017, %v2958, 0.0
    %v3263 = vsel %vm2016, %v2959, 0.0
    %v3264 = vsel %vm2017, %v2960, 0.0
    %v3265 = vsel %vm2018, %v2961, 0.0
    %v3266 = vsel %vm2019, %v2962, 0.0
    %v3267 = vsel %vm2018, %v2963, 0.0
    %v3268 = vsel %vm2019, %v2964, 0.0
    %v3269 = vsel %vm2018, %v2965, 0.0
    %v3270 = vsel %vm2019, %v2966, 0.0
    %v3271 = vsel %vm2018, %v2967, 0.0
    %v3272 = vsel %vm2019, %v2968, 0.0
    %v3273 = vsel %vm2792, %v3257, 0.0
    %3274 = vadd.xlane.f32.xlu0 %v3273
    %v3275 = vpop.xlane.xlu0 %3274
    %v3276 = vsel %vm2792, %v3258, 0.0
    %3277 = vadd.xlane.f32.xlu0 %v3276
    %v3278 = vpop.xlane.xlu0 %3277
    %v3279 = vsel %vm2792, %v3259, 0.0
    %3280 = vadd.xlane.f32.xlu0 %v3279
    %v3281 = vpop.xlane.xlu0 %3280
    %v3282 = vsel %vm2792, %v3260, 0.0
    %3283 = vadd.xlane.f32.xlu0 %v3282
    %v3284 = vpop.xlane.xlu0 %3283
    %v3285 = vsel %vm2792, %v3261, 0.0
    %3286 = vadd.xlane.f32.xlu0 %v3285
    %v3287 = vpop.xlane.xlu0 %3286
    %v3288 = vsel %vm2792, %v3262, 0.0
    %3289 = vadd.xlane.f32.xlu0 %v3288
    %v3290 = vpop.xlane.xlu0 %3289
    %v3291 = vsel %vm2792, %v3263, 0.0
    %3292 = vadd.xlane.f32.xlu0 %v3291
    %v3293 = vpop.xlane.xlu0 %3292
    %v3294 = vsel %vm2792, %v3264, 0.0
    %3295 = vadd.xlane.f32.xlu0 %v3294
    %v3296 = vpop.xlane.xlu0 %3295
    %v3297 = vsel %vm2792, %v3265, 0.0
    %3298 = vadd.xlane.f32.xlu0 %v3297
    %v3299 = vpop.xlane.xlu0 %3298
    %v3300 = vsel %vm2792, %v3266, 0.0
    %3301 = vadd.xlane.f32.xlu0 %v3300
    %v3302 = vpop.xlane.xlu0 %3301
    %v3303 = vsel %vm2792, %v3267, 0.0
    %3304 = vadd.xlane.f32.xlu0 %v3303
    %v3305 = vpop.xlane.xlu0 %3304
    %v3306 = vsel %vm2792, %v3268, 0.0
    %3307 = vadd.xlane.f32.xlu0 %v3306
    %v3308 = vpop.xlane.xlu0 %3307
    %v3309 = vsel %vm2792, %v3269, 0.0
    %3310 = vadd.xlane.f32.xlu0 %v3309
    %v3311 = vpop.xlane.xlu0 %3310
    %v3312 = vsel %vm2792, %v3270, 0.0
    %3313 = vadd.xlane.f32.xlu0 %v3312
    %v3314 = vpop.xlane.xlu0 %3313
    %v3315 = vsel %vm2792, %v3271, 0.0
    %3316 = vadd.xlane.f32.xlu0 %v3315
    %v3317 = vpop.xlane.xlu0 %3316
    %v3318 = vsel %vm2792, %v3272, 0.0
    %3319 = vadd.xlane.f32.xlu0 %v3318
    %v3320 = vpop.xlane.xlu0 %3319
    %v3321 = vsel %vm2120, %v2953, 0.0
    %v3322 = vsel %vm2121, %v2954, 0.0
    %v3323 = vsel %vm2120, %v2955, 0.0
    %v3324 = vsel %vm2121, %v2956, 0.0
    %v3325 = vsel %vm2120, %v2957, 0.0
    %v3326 = vsel %vm2121, %v2958, 0.0
    %v3327 = vsel %vm2120, %v2959, 0.0
    %v3328 = vsel %vm2121, %v2960, 0.0
    %v3329 = vsel %vm2122, %v2961, 0.0
    %v3330 = vsel %vm2123, %v2962, 0.0
    %v3331 = vsel %vm2122, %v2963, 0.0
    %v3332 = vsel %vm2123, %v2964, 0.0
    %v3333 = vsel %vm2122, %v2965, 0.0
    %v3334 = vsel %vm2123, %v2966, 0.0
    %v3335 = vsel %vm2122, %v2967, 0.0
    %v3336 = vsel %vm2123, %v2968, 0.0
    %v3337 = vsel %vm2792, %v3321, 0.0
    %3338 = vadd.xlane.f32.xlu0 %v3337
    %v3339 = vpop.xlane.xlu0 %3338
    %v3340 = vsel %vm2792, %v3322, 0.0
    %3341 = vadd.xlane.f32.xlu0 %v3340
    %v3342 = vpop.xlane.xlu0 %3341
    %v3343 = vsel %vm2792, %v3323, 0.0
    %3344 = vadd.xlane.f32.xlu0 %v3343
    %v3345 = vpop.xlane.xlu0 %3344
    %v3346 = vsel %vm2792, %v3324, 0.0
    %3347 = vadd.xlane.f32.xlu0 %v3346
    %v3348 = vpop.xlane.xlu0 %3347
    %v3349 = vsel %vm2792, %v3325, 0.0
    %3350 = vadd.xlane.f32.xlu0 %v3349
    %v3351 = vpop.xlane.xlu0 %3350
    %v3352 = vsel %vm2792, %v3326, 0.0
    %3353 = vadd.xlane.f32.xlu0 %v3352
    %v3354 = vpop.xlane.xlu0 %3353
    %v3355 = vsel %vm2792, %v3327, 0.0
    %3356 = vadd.xlane.f32.xlu0 %v3355
    %v3357 = vpop.xlane.xlu0 %3356
    %v3358 = vsel %vm2792, %v3328, 0.0
    %3359 = vadd.xlane.f32.xlu0 %v3358
    %v3360 = vpop.xlane.xlu0 %3359
    %v3361 = vsel %vm2792, %v3329, 0.0
    %3362 = vadd.xlane.f32.xlu0 %v3361
    %v3363 = vpop.xlane.xlu0 %3362
    %v3364 = vsel %vm2792, %v3330, 0.0
    %3365 = vadd.xlane.f32.xlu0 %v3364
    %v3366 = vpop.xlane.xlu0 %3365
    %v3367 = vsel %vm2792, %v3331, 0.0
    %3368 = vadd.xlane.f32.xlu0 %v3367
    %v3369 = vpop.xlane.xlu0 %3368
    %v3370 = vsel %vm2792, %v3332, 0.0
    %3371 = vadd.xlane.f32.xlu0 %v3370
    %v3372 = vpop.xlane.xlu0 %3371
    %v3373 = vsel %vm2792, %v3333, 0.0
    %3374 = vadd.xlane.f32.xlu0 %v3373
    %v3375 = vpop.xlane.xlu0 %3374
    %v3376 = vsel %vm2792, %v3334, 0.0
    %3377 = vadd.xlane.f32.xlu0 %v3376
    %v3378 = vpop.xlane.xlu0 %3377
    %v3379 = vsel %vm2792, %v3335, 0.0
    %3380 = vadd.xlane.f32.xlu0 %v3379
    %v3381 = vpop.xlane.xlu0 %3380
    %v3382 = vsel %vm2792, %v3336, 0.0
    %3383 = vadd.xlane.f32.xlu0 %v3382
    %v3384 = vpop.xlane.xlu0 %3383
    %v3385 = vsel %vm2224, %v2953, 0.0
    %v3386 = vsel %vm2225, %v2954, 0.0
    %v3387 = vsel %vm2224, %v2955, 0.0
    %v3388 = vsel %vm2225, %v2956, 0.0
    %v3389 = vsel %vm2224, %v2957, 0.0
    %v3390 = vsel %vm2225, %v2958, 0.0
    %v3391 = vsel %vm2224, %v2959, 0.0
    %v3392 = vsel %vm2225, %v2960, 0.0
    %v3393 = vsel %vm2226, %v2961, 0.0
    %v3394 = vsel %vm2227, %v2962, 0.0
    %v3395 = vsel %vm2226, %v2963, 0.0
    %v3396 = vsel %vm2227, %v2964, 0.0
    %v3397 = vsel %vm2226, %v2965, 0.0
    %v3398 = vsel %vm2227, %v2966, 0.0
    %v3399 = vsel %vm2226, %v2967, 0.0
    %v3400 = vsel %vm2227, %v2968, 0.0
    %v3401 = vsel %vm2792, %v3385, 0.0
    %3402 = vadd.xlane.f32.xlu0 %v3401
    %v3403 = vpop.xlane.xlu0 %3402
    %v3404 = vsel %vm2792, %v3386, 0.0
    %3405 = vadd.xlane.f32.xlu0 %v3404
    %v3406 = vpop.xlane.xlu0 %3405
    %v3407 = vsel %vm2792, %v3387, 0.0
    %3408 = vadd.xlane.f32.xlu0 %v3407
    %v3409 = vpop.xlane.xlu0 %3408
    %v3410 = vsel %vm2792, %v3388, 0.0
    %3411 = vadd.xlane.f32.xlu0 %v3410
    %v3412 = vpop.xlane.xlu0 %3411
    %v3413 = vsel %vm2792, %v3389, 0.0
    %3414 = vadd.xlane.f32.xlu0 %v3413
    %v3415 = vpop.xlane.xlu0 %3414
    %v3416 = vsel %vm2792, %v3390, 0.0
    %3417 = vadd.xlane.f32.xlu0 %v3416
    %v3418 = vpop.xlane.xlu0 %3417
    %v3419 = vsel %vm2792, %v3391, 0.0
    %3420 = vadd.xlane.f32.xlu0 %v3419
    %v3421 = vpop.xlane.xlu0 %3420
    %v3422 = vsel %vm2792, %v3392, 0.0
    %3423 = vadd.xlane.f32.xlu0 %v3422
    %v3424 = vpop.xlane.xlu0 %3423
    %v3425 = vsel %vm2792, %v3393, 0.0
    %3426 = vadd.xlane.f32.xlu0 %v3425
    %v3427 = vpop.xlane.xlu0 %3426
    %v3428 = vsel %vm2792, %v3394, 0.0
    %3429 = vadd.xlane.f32.xlu0 %v3428
    %v3430 = vpop.xlane.xlu0 %3429
    %v3431 = vsel %vm2792, %v3395, 0.0
    %3432 = vadd.xlane.f32.xlu0 %v3431
    %v3433 = vpop.xlane.xlu0 %3432
    %v3434 = vsel %vm2792, %v3396, 0.0
    %3435 = vadd.xlane.f32.xlu0 %v3434
    %v3436 = vpop.xlane.xlu0 %3435
    %v3437 = vsel %vm2792, %v3397, 0.0
    %3438 = vadd.xlane.f32.xlu0 %v3437
    %v3439 = vpop.xlane.xlu0 %3438
    %v3440 = vsel %vm2792, %v3398, 0.0
    %3441 = vadd.xlane.f32.xlu0 %v3440
    %v3442 = vpop.xlane.xlu0 %3441
    %v3443 = vsel %vm2792, %v3399, 0.0
    %3444 = vadd.xlane.f32.xlu0 %v3443
    %v3445 = vpop.xlane.xlu0 %3444
    %v3446 = vsel %vm2792, %v3400, 0.0
    %3447 = vadd.xlane.f32.xlu0 %v3446
    %v3448 = vpop.xlane.xlu0 %3447
    %v3449 = vsel %vm2328, %v2953, 0.0
    %v3450 = vsel %vm2329, %v2954, 0.0
    %v3451 = vsel %vm2328, %v2955, 0.0
    %v3452 = vsel %vm2329, %v2956, 0.0
    %v3453 = vsel %vm2328, %v2957, 0.0
    %v3454 = vsel %vm2329, %v2958, 0.0
    %v3455 = vsel %vm2328, %v2959, 0.0
    %v3456 = vsel %vm2329, %v2960, 0.0
    %v3457 = vsel %vm2330, %v2961, 0.0
    %v3458 = vsel %vm2331, %v2962, 0.0
    %v3459 = vsel %vm2330, %v2963, 0.0
    %v3460 = vsel %vm2331, %v2964, 0.0
    %v3461 = vsel %vm2330, %v2965, 0.0
    %v3462 = vsel %vm2331, %v2966, 0.0
    %v3463 = vsel %vm2330, %v2967, 0.0
    %v3464 = vsel %vm2331, %v2968, 0.0
    %v3465 = vsel %vm2792, %v3449, 0.0
    %3466 = vadd.xlane.f32.xlu0 %v3465
    %v3467 = vpop.xlane.xlu0 %3466
    %v3468 = vsel %vm2792, %v3450, 0.0
    %3469 = vadd.xlane.f32.xlu0 %v3468
    %v3470 = vpop.xlane.xlu0 %3469
    %v3471 = vsel %vm2792, %v3451, 0.0
    %3472 = vadd.xlane.f32.xlu0 %v3471
    %v3473 = vpop.xlane.xlu0 %3472
    %v3474 = vsel %vm2792, %v3452, 0.0
    %3475 = vadd.xlane.f32.xlu0 %v3474
    %v3476 = vpop.xlane.xlu0 %3475
    %v3477 = vsel %vm2792, %v3453, 0.0
    %3478 = vadd.xlane.f32.xlu0 %v3477
    %v3479 = vpop.xlane.xlu0 %3478
    %v3480 = vsel %vm2792, %v3454, 0.0
    %3481 = vadd.xlane.f32.xlu0 %v3480
    %v3482 = vpop.xlane.xlu0 %3481
    %v3483 = vsel %vm2792, %v3455, 0.0
    %3484 = vadd.xlane.f32.xlu0 %v3483
    %v3485 = vpop.xlane.xlu0 %3484
    %v3486 = vsel %vm2792, %v3456, 0.0
    %3487 = vadd.xlane.f32.xlu0 %v3486
    %v3488 = vpop.xlane.xlu0 %3487
    %v3489 = vsel %vm2792, %v3457, 0.0
    %3490 = vadd.xlane.f32.xlu0 %v3489
    %v3491 = vpop.xlane.xlu0 %3490
    %v3492 = vsel %vm2792, %v3458, 0.0
    %3493 = vadd.xlane.f32.xlu0 %v3492
    %v3494 = vpop.xlane.xlu0 %3493
    %v3495 = vsel %vm2792, %v3459, 0.0
    %3496 = vadd.xlane.f32.xlu0 %v3495
    %v3497 = vpop.xlane.xlu0 %3496
    %v3498 = vsel %vm2792, %v3460, 0.0
    %3499 = vadd.xlane.f32.xlu0 %v3498
    %v3500 = vpop.xlane.xlu0 %3499
    %v3501 = vsel %vm2792, %v3461, 0.0
    %3502 = vadd.xlane.f32.xlu0 %v3501
    %v3503 = vpop.xlane.xlu0 %3502
    %v3504 = vsel %vm2792, %v3462, 0.0
    %3505 = vadd.xlane.f32.xlu0 %v3504
    %v3506 = vpop.xlane.xlu0 %3505
    %v3507 = vsel %vm2792, %v3463, 0.0
    %3508 = vadd.xlane.f32.xlu0 %v3507
    %v3509 = vpop.xlane.xlu0 %3508
    %v3510 = vsel %vm2792, %v3464, 0.0
    %3511 = vadd.xlane.f32.xlu0 %v3510
    %v3512 = vpop.xlane.xlu0 %3511
    %v3513 = vsel %vm2432, %v2953, 0.0
    %v3514 = vsel %vm2433, %v2954, 0.0
    %v3515 = vsel %vm2432, %v2955, 0.0
    %v3516 = vsel %vm2433, %v2956, 0.0
    %v3517 = vsel %vm2432, %v2957, 0.0
    %v3518 = vsel %vm2433, %v2958, 0.0
    %v3519 = vsel %vm2432, %v2959, 0.0
    %v3520 = vsel %vm2433, %v2960, 0.0
    %v3521 = vsel %vm2434, %v2961, 0.0
    %v3522 = vsel %vm2435, %v2962, 0.0
    %v3523 = vsel %vm2434, %v2963, 0.0
    %v3524 = vsel %vm2435, %v2964, 0.0
    %v3525 = vsel %vm2434, %v2965, 0.0
    %v3526 = vsel %vm2435, %v2966, 0.0
    %v3527 = vsel %vm2434, %v2967, 0.0
    %v3528 = vsel %vm2435, %v2968, 0.0
    %v3529 = vsel %vm2792, %v3513, 0.0
    %3530 = vadd.xlane.f32.xlu0 %v3529
    %v3531 = vpop.xlane.xlu0 %3530
    %v3532 = vsel %vm2792, %v3514, 0.0
    %3533 = vadd.xlane.f32.xlu0 %v3532
    %v3534 = vpop.xlane.xlu0 %3533
    %v3535 = vsel %vm2792, %v3515, 0.0
    %3536 = vadd.xlane.f32.xlu0 %v3535
    %v3537 = vpop.xlane.xlu0 %3536
    %v3538 = vsel %vm2792, %v3516, 0.0
    %3539 = vadd.xlane.f32.xlu0 %v3538
    %v3540 = vpop.xlane.xlu0 %3539
    %v3541 = vsel %vm2792, %v3517, 0.0
    %3542 = vadd.xlane.f32.xlu0 %v3541
    %v3543 = vpop.xlane.xlu0 %3542
    %v3544 = vsel %vm2792, %v3518, 0.0
    %3545 = vadd.xlane.f32.xlu0 %v3544
    %v3546 = vpop.xlane.xlu0 %3545
    %v3547 = vsel %vm2792, %v3519, 0.0
    %3548 = vadd.xlane.f32.xlu0 %v3547
    %v3549 = vpop.xlane.xlu0 %3548
    %v3550 = vsel %vm2792, %v3520, 0.0
    %3551 = vadd.xlane.f32.xlu0 %v3550
    %v3552 = vpop.xlane.xlu0 %3551
    %v3553 = vsel %vm2792, %v3521, 0.0
    %3554 = vadd.xlane.f32.xlu0 %v3553
    %v3555 = vpop.xlane.xlu0 %3554
    %v3556 = vsel %vm2792, %v3522, 0.0
    %3557 = vadd.xlane.f32.xlu0 %v3556
    %v3558 = vpop.xlane.xlu0 %3557
    %v3559 = vsel %vm2792, %v3523, 0.0
    %3560 = vadd.xlane.f32.xlu0 %v3559
    %v3561 = vpop.xlane.xlu0 %3560
    %v3562 = vsel %vm2792, %v3524, 0.0
    %3563 = vadd.xlane.f32.xlu0 %v3562
    %v3564 = vpop.xlane.xlu0 %3563
    %v3565 = vsel %vm2792, %v3525, 0.0
    %3566 = vadd.xlane.f32.xlu0 %v3565
    %v3567 = vpop.xlane.xlu0 %3566
    %v3568 = vsel %vm2792, %v3526, 0.0
    %3569 = vadd.xlane.f32.xlu0 %v3568
    %v3570 = vpop.xlane.xlu0 %3569
    %v3571 = vsel %vm2792, %v3527, 0.0
    %3572 = vadd.xlane.f32.xlu0 %v3571
    %v3573 = vpop.xlane.xlu0 %3572
    %v3574 = vsel %vm2792, %v3528, 0.0
    %3575 = vadd.xlane.f32.xlu0 %v3574
    %v3576 = vpop.xlane.xlu0 %3575
    %v3577 = vsel %vm2536, %v2953, 0.0
    %v3578 = vsel %vm2537, %v2954, 0.0
    %v3579 = vsel %vm2536, %v2955, 0.0
    %v3580 = vsel %vm2537, %v2956, 0.0
    %v3581 = vsel %vm2536, %v2957, 0.0
    %v3582 = vsel %vm2537, %v2958, 0.0
    %v3583 = vsel %vm2536, %v2959, 0.0
    %v3584 = vsel %vm2537, %v2960, 0.0
    %v3585 = vsel %vm2538, %v2961, 0.0
    %v3586 = vsel %vm2539, %v2962, 0.0
    %v3587 = vsel %vm2538, %v2963, 0.0
    %v3588 = vsel %vm2539, %v2964, 0.0
    %v3589 = vsel %vm2538, %v2965, 0.0
    %v3590 = vsel %vm2539, %v2966, 0.0
    %v3591 = vsel %vm2538, %v2967, 0.0
    %v3592 = vsel %vm2539, %v2968, 0.0
    %v3593 = vsel %vm2792, %v3577, 0.0
    %3594 = vadd.xlane.f32.xlu0 %v3593
    %v3595 = vpop.xlane.xlu0 %3594
    %v3596 = vsel %vm2792, %v3578, 0.0
    %3597 = vadd.xlane.f32.xlu0 %v3596
    %v3598 = vpop.xlane.xlu0 %3597
    %v3599 = vsel %vm2792, %v3579, 0.0
    %3600 = vadd.xlane.f32.xlu0 %v3599
    %v3601 = vpop.xlane.xlu0 %3600
    %v3602 = vsel %vm2792, %v3580, 0.0
    %3603 = vadd.xlane.f32.xlu0 %v3602
    %v3604 = vpop.xlane.xlu0 %3603
    %v3605 = vsel %vm2792, %v3581, 0.0
    %3606 = vadd.xlane.f32.xlu0 %v3605
    %v3607 = vpop.xlane.xlu0 %3606
    %v3608 = vsel %vm2792, %v3582, 0.0
    %3609 = vadd.xlane.f32.xlu0 %v3608
    %v3610 = vpop.xlane.xlu0 %3609
    %v3611 = vsel %vm2792, %v3583, 0.0
    %3612 = vadd.xlane.f32.xlu0 %v3611
    %v3613 = vpop.xlane.xlu0 %3612
    %v3614 = vsel %vm2792, %v3584, 0.0
    %3615 = vadd.xlane.f32.xlu0 %v3614
    %v3616 = vpop.xlane.xlu0 %3615
    %v3617 = vsel %vm2792, %v3585, 0.0
    %3618 = vadd.xlane.f32.xlu0 %v3617
    %v3619 = vpop.xlane.xlu0 %3618
    %v3620 = vsel %vm2792, %v3586, 0.0
    %3621 = vadd.xlane.f32.xlu0 %v3620
    %v3622 = vpop.xlane.xlu0 %3621
    %v3623 = vsel %vm2792, %v3587, 0.0
    %3624 = vadd.xlane.f32.xlu0 %v3623
    %v3625 = vpop.xlane.xlu0 %3624
    %v3626 = vsel %vm2792, %v3588, 0.0
    %3627 = vadd.xlane.f32.xlu0 %v3626
    %v3628 = vpop.xlane.xlu0 %3627
    %v3629 = vsel %vm2792, %v3589, 0.0
    %3630 = vadd.xlane.f32.xlu0 %v3629
    %v3631 = vpop.xlane.xlu0 %3630
    %v3632 = vsel %vm2792, %v3590, 0.0
    %3633 = vadd.xlane.f32.xlu0 %v3632
    %v3634 = vpop.xlane.xlu0 %3633
    %v3635 = vsel %vm2792, %v3591, 0.0
    %3636 = vadd.xlane.f32.xlu0 %v3635
    %v3637 = vpop.xlane.xlu0 %3636
    %v3638 = vsel %vm2792, %v3592, 0.0
    %3639 = vadd.xlane.f32.xlu0 %v3638
    %v3640 = vpop.xlane.xlu0 %3639
    %v3641 = vsel %vm2640, %v2953, 0.0
    %v3642 = vsel %vm2641, %v2954, 0.0
    %v3643 = vsel %vm2640, %v2955, 0.0
    %v3644 = vsel %vm2641, %v2956, 0.0
    %v3645 = vsel %vm2640, %v2957, 0.0
    %v3646 = vsel %vm2641, %v2958, 0.0
    %v3647 = vsel %vm2640, %v2959, 0.0
    %v3648 = vsel %vm2641, %v2960, 0.0
    %v3649 = vsel %vm2642, %v2961, 0.0
    %v3650 = vsel %vm2643, %v2962, 0.0
    %v3651 = vsel %vm2642, %v2963, 0.0
    %v3652 = vsel %vm2643, %v2964, 0.0
    %v3653 = vsel %vm2642, %v2965, 0.0
    %v3654 = vsel %vm2643, %v2966, 0.0
    %v3655 = vsel %vm2642, %v2967, 0.0
    %v3656 = vsel %vm2643, %v2968, 0.0
    %v3657 = vsel %vm2792, %v3641, 0.0
    %3658 = vadd.xlane.f32.xlu0 %v3657
    %v3659 = vpop.xlane.xlu0 %3658
    %v3660 = vsel %vm2792, %v3642, 0.0
    %3661 = vadd.xlane.f32.xlu0 %v3660
    %v3662 = vpop.xlane.xlu0 %3661
    %v3663 = vsel %vm2792, %v3643, 0.0
    %3664 = vadd.xlane.f32.xlu0 %v3663
    %v3665 = vpop.xlane.xlu0 %3664
    %v3666 = vsel %vm2792, %v3644, 0.0
    %3667 = vadd.xlane.f32.xlu0 %v3666
    %v3668 = vpop.xlane.xlu0 %3667
    %v3669 = vsel %vm2792, %v3645, 0.0
    %3670 = vadd.xlane.f32.xlu0 %v3669
    %v3671 = vpop.xlane.xlu0 %3670
    %v3672 = vsel %vm2792, %v3646, 0.0
    %3673 = vadd.xlane.f32.xlu0 %v3672
    %v3674 = vpop.xlane.xlu0 %3673
    %v3675 = vsel %vm2792, %v3647, 0.0
    %3676 = vadd.xlane.f32.xlu0 %v3675
    %v3677 = vpop.xlane.xlu0 %3676
    %v3678 = vsel %vm2792, %v3648, 0.0
    %3679 = vadd.xlane.f32.xlu0 %v3678
    %v3680 = vpop.xlane.xlu0 %3679
    %v3681 = vsel %vm2792, %v3649, 0.0
    %3682 = vadd.xlane.f32.xlu0 %v3681
    %v3683 = vpop.xlane.xlu0 %3682
    %v3684 = vsel %vm2792, %v3650, 0.0
    %3685 = vadd.xlane.f32.xlu0 %v3684
    %v3686 = vpop.xlane.xlu0 %3685
    %v3687 = vsel %vm2792, %v3651, 0.0
    %3688 = vadd.xlane.f32.xlu0 %v3687
    %v3689 = vpop.xlane.xlu0 %3688
    %v3690 = vsel %vm2792, %v3652, 0.0
    %3691 = vadd.xlane.f32.xlu0 %v3690
    %v3692 = vpop.xlane.xlu0 %3691
    %v3693 = vsel %vm2792, %v3653, 0.0
    %3694 = vadd.xlane.f32.xlu0 %v3693
    %v3695 = vpop.xlane.xlu0 %3694
    %v3696 = vsel %vm2792, %v3654, 0.0
    %3697 = vadd.xlane.f32.xlu0 %v3696
    %v3698 = vpop.xlane.xlu0 %3697
    %v3699 = vsel %vm2792, %v3655, 0.0
    %3700 = vadd.xlane.f32.xlu0 %v3699
    %v3701 = vpop.xlane.xlu0 %3700
    %v3702 = vsel %vm2792, %v3656, 0.0
    %3703 = vadd.xlane.f32.xlu0 %v3702
    %v3704 = vpop.xlane.xlu0 %3703
    %vm3705 = vcmask 7168
    %v3706 = vsel %vm3705, %v3019, %v3083
    %v3707 = vsel %vm3705, %v3022, %v3086
    %v3708 = vsel %vm3705, %v3025, %v3089
    %v3709 = vsel %vm3705, %v3028, %v3092
    %v3710 = vsel %vm3705, %v3031, %v3095
    %v3711 = vsel %vm3705, %v3034, %v3098
    %v3712 = vsel %vm3705, %v3037, %v3101
    %v3713 = vsel %vm3705, %v3040, %v3104
    %v3714 = vsel %vm3705, %v3043, %v3107
    %v3715 = vsel %vm3705, %v3046, %v3110
    %v3716 = vsel %vm3705, %v3049, %v3113
    %v3717 = vsel %vm3705, %v3052, %v3116
    %v3718 = vsel %vm3705, %v3055, %v3119
    %v3719 = vsel %vm3705, %v3058, %v3122
    %v3720 = vsel %vm3705, %v3061, %v3125
    %v3721 = vsel %vm3705, %v3064, %v3128
    %vm3722 = vcmask 15360
    %v3723 = vsel %vm3722, %v3706, %v3147
    %v3724 = vsel %vm3722, %v3707, %v3150
    %v3725 = vsel %vm3722, %v3708, %v3153
    %v3726 = vsel %vm3722, %v3709, %v3156
    %v3727 = vsel %vm3722, %v3710, %v3159
    %v3728 = vsel %vm3722, %v3711, %v3162
    %v3729 = vsel %vm3722, %v3712, %v3165
    %v3730 = vsel %vm3722, %v3713, %v3168
    %v3731 = vsel %vm3722, %v3714, %v3171
    %v3732 = vsel %vm3722, %v3715, %v3174
    %v3733 = vsel %vm3722, %v3716, %v3177
    %v3734 = vsel %vm3722, %v3717, %v3180
    %v3735 = vsel %vm3722, %v3718, %v3183
    %v3736 = vsel %vm3722, %v3719, %v3186
    %v3737 = vsel %vm3722, %v3720, %v3189
    %v3738 = vsel %vm3722, %v3721, %v3192
    %vm3739 = vcmask 23552
    %v3740 = vsel %vm3739, %v3723, %v3211
    %v3741 = vsel %vm3739, %v3724, %v3214
    %v3742 = vsel %vm3739, %v3725, %v3217
    %v3743 = vsel %vm3739, %v3726, %v3220
    %v3744 = vsel %vm3739, %v3727, %v3223
    %v3745 = vsel %vm3739, %v3728, %v3226
    %v3746 = vsel %vm3739, %v3729, %v3229
    %v3747 = vsel %vm3739, %v3730, %v3232
    %v3748 = vsel %vm3739, %v3731, %v3235
    %v3749 = vsel %vm3739, %v3732, %v3238
    %v3750 = vsel %vm3739, %v3733, %v3241
    %v3751 = vsel %vm3739, %v3734, %v3244
    %v3752 = vsel %vm3739, %v3735, %v3247
    %v3753 = vsel %vm3739, %v3736, %v3250
    %v3754 = vsel %vm3739, %v3737, %v3253
    %v3755 = vsel %vm3739, %v3738, %v3256
    %vm3756 = vcmask 31744
    %v3757 = vsel %vm3756, %v3740, %v3275
    %v3758 = vsel %vm3756, %v3741, %v3278
    %v3759 = vsel %vm3756, %v3742, %v3281
    %v3760 = vsel %vm3756, %v3743, %v3284
    %v3761 = vsel %vm3756, %v3744, %v3287
    %v3762 = vsel %vm3756, %v3745, %v3290
    %v3763 = vsel %vm3756, %v3746, %v3293
    %v3764 = vsel %vm3756, %v3747, %v3296
    %v3765 = vsel %vm3756, %v3748, %v3299
    %v3766 = vsel %vm3756, %v3749, %v3302
    %v3767 = vsel %vm3756, %v3750, %v3305
    %v3768 = vsel %vm3756, %v3751, %v3308
    %v3769 = vsel %vm3756, %v3752, %v3311
    %v3770 = vsel %vm3756, %v3753, %v3314
    %v3771 = vsel %vm3756, %v3754, %v3317
    %v3772 = vsel %vm3756, %v3755, %v3320
    %vm3773 = vcmask 39936
    %v3774 = vsel %vm3773, %v3757, %v3339
    %v3775 = vsel %vm3773, %v3758, %v3342
    %v3776 = vsel %vm3773, %v3759, %v3345
    %v3777 = vsel %vm3773, %v3760, %v3348
    %v3778 = vsel %vm3773, %v3761, %v3351
    %v3779 = vsel %vm3773, %v3762, %v3354
    %v3780 = vsel %vm3773, %v3763, %v3357
    %v3781 = vsel %vm3773, %v3764, %v3360
    %v3782 = vsel %vm3773, %v3765, %v3363
    %v3783 = vsel %vm3773, %v3766, %v3366
    %v3784 = vsel %vm3773, %v3767, %v3369
    %v3785 = vsel %vm3773, %v3768, %v3372
    %v3786 = vsel %vm3773, %v3769, %v3375
    %v3787 = vsel %vm3773, %v3770, %v3378
    %v3788 = vsel %vm3773, %v3771, %v3381
    %v3789 = vsel %vm3773, %v3772, %v3384
    %vm3790 = vcmask 48128
    %v3791 = vsel %vm3790, %v3774, %v3403
    %v3792 = vsel %vm3790, %v3775, %v3406
    %v3793 = vsel %vm3790, %v3776, %v3409
    %v3794 = vsel %vm3790, %v3777, %v3412
    %v3795 = vsel %vm3790, %v3778, %v3415
    %v3796 = vsel %vm3790, %v3779, %v3418
    %v3797 = vsel %vm3790, %v3780, %v3421
    %v3798 = vsel %vm3790, %v3781, %v3424
    %v3799 = vsel %vm3790, %v3782, %v3427
    %v3800 = vsel %vm3790, %v3783, %v3430
    %v3801 = vsel %vm3790, %v3784, %v3433
    %v3802 = vsel %vm3790, %v3785, %v3436
    %v3803 = vsel %vm3790, %v3786, %v3439
    %v3804 = vsel %vm3790, %v3787, %v3442
    %v3805 = vsel %vm3790, %v3788, %v3445
    %v3806 = vsel %vm3790, %v3789, %v3448
    %vm3807 = vcmask 56320
    %v3808 = vsel %vm3807, %v3791, %v3467
    %v3809 = vsel %vm3807, %v3792, %v3470
    %v3810 = vsel %vm3807, %v3793, %v3473
    %v3811 = vsel %vm3807, %v3794, %v3476
    %v3812 = vsel %vm3807, %v3795, %v3479
    %v3813 = vsel %vm3807, %v3796, %v3482
    %v3814 = vsel %vm3807, %v3797, %v3485
    %v3815 = vsel %vm3807, %v3798, %v3488
    %v3816 = vsel %vm3807, %v3799, %v3491
    %v3817 = vsel %vm3807, %v3800, %v3494
    %v3818 = vsel %vm3807, %v3801, %v3497
    %v3819 = vsel %vm3807, %v3802, %v3500
    %v3820 = vsel %vm3807, %v3803, %v3503
    %v3821 = vsel %vm3807, %v3804, %v3506
    %v3822 = vsel %vm3807, %v3805, %v3509
    %v3823 = vsel %vm3807, %v3806, %v3512
    %v3824 = vsel %vm1262, %v3808, %v3531
    %v3825 = vsel %vm1262, %v3809, %v3534
    %v3826 = vsel %vm1262, %v3810, %v3537
    %v3827 = vsel %vm1262, %v3811, %v3540
    %v3828 = vsel %vm1262, %v3812, %v3543
    %v3829 = vsel %vm1262, %v3813, %v3546
    %v3830 = vsel %vm1262, %v3814, %v3549
    %v3831 = vsel %vm1262, %v3815, %v3552
    %v3832 = vsel %vm1262, %v3816, %v3555
    %v3833 = vsel %vm1262, %v3817, %v3558
    %v3834 = vsel %vm1262, %v3818, %v3561
    %v3835 = vsel %vm1262, %v3819, %v3564
    %v3836 = vsel %vm1262, %v3820, %v3567
    %v3837 = vsel %vm1262, %v3821, %v3570
    %v3838 = vsel %vm1262, %v3822, %v3573
    %v3839 = vsel %vm1262, %v3823, %v3576
    %vm3840 = vcmask 72704
    %v3841 = vsel %vm3840, %v3824, %v3595
    %v3842 = vsel %vm3840, %v3825, %v3598
    %v3843 = vsel %vm3840, %v3826, %v3601
    %v3844 = vsel %vm3840, %v3827, %v3604
    %v3845 = vsel %vm3840, %v3828, %v3607
    %v3846 = vsel %vm3840, %v3829, %v3610
    %v3847 = vsel %vm3840, %v3830, %v3613
    %v3848 = vsel %vm3840, %v3831, %v3616
    %v3849 = vsel %vm3840, %v3832, %v3619
    %v3850 = vsel %vm3840, %v3833, %v3622
    %v3851 = vsel %vm3840, %v3834, %v3625
    %v3852 = vsel %vm3840, %v3835, %v3628
    %v3853 = vsel %vm3840, %v3836, %v3631
    %v3854 = vsel %vm3840, %v3837, %v3634
    %v3855 = vsel %vm3840, %v3838, %v3637
    %v3856 = vsel %vm3840, %v3839, %v3640
    %vm3857 = vcmask 80896
    %v3858 = vsel %vm3857, %v3841, %v3659
    %v3859 = vsel %vm3857, %v3842, %v3662
    %v3860 = vsel %vm3857, %v3843, %v3665
    %v3861 = vsel %vm3857, %v3844, %v3668
    %v3862 = vsel %vm3857, %v3845, %v3671
    %v3863 = vsel %vm3857, %v3846, %v3674
    %v3864 = vsel %vm3857, %v3847, %v3677
    %v3865 = vsel %vm3857, %v3848, %v3680
    %v3866 = vsel %vm3857, %v3849, %v3683
    %v3867 = vsel %vm3857, %v3850, %v3686
    %v3868 = vsel %vm3857, %v3851, %v3689
    %v3869 = vsel %vm3857, %v3852, %v3692
    %v3870 = vsel %vm3857, %v3853, %v3695
    %v3871 = vsel %vm3857, %v3854, %v3698
    %v3872 = vsel %vm3857, %v3855, %v3701
    %v3873 = vsel %vm3857, %v3856, %v3704
    %v3874 = vld [vmem:[%s17] sm:$0xff]
    %v3875 = vld [vmem:[%s17 + $0x8] sm:$0x7]
    %v3876 = vpack.c.bf16 %v3859, %v3858
    %v3877 = vpack.c.bf16 %v3861, %v3860
    %v3878 = vpack.c.bf16 %v3863, %v3862
    %v3879 = vpack.c.bf16 %v3865, %v3864
    %v3880 = vpack.c.bf16 %v3867, %v3866
    %v3881 = vpack.c.bf16 %v3869, %v3868
    %v3882 = vpack.c.bf16 %v3871, %v3870
    %v3883 = vpack.c.bf16 %v3873, %v3872
    %v3884 = vpack.c.bf16 %v3875, %v3874
    %vm3885 = vcmask 89088
    %v3887 = vsel %vm3885, %v3876, 0
    %v3890 = vsel %vm3885, %v3877, 0
    %v3893 = vsel %vm3885, %v3878, 0
    %v3896 = vsel %vm3885, %v3879, 0
    %v3899 = vsel %vm3885, %v3880, 0
    %v3902 = vsel %vm3885, %v3881, 0
    %v3905 = vsel %vm3885, %v3882, 0
    %v3908 = vsel %vm3885, %v3883, 0
    %vm3910 = vcmask 1044480
    %vm3911 = vcmask 1045504
    %v3912 = vsel %vm3910, 4294967295, 65535
    %v3913 = vsel %vm3911, %v3912, 0
    %v3915 = vand.u32 %v3884, %v3913
    %3917 = vmatpush.bf16.msra.mxu0 0
    %3918 = vmatpush.bf16.msra.mxu0 0
    %3919 = vmatpush.bf16.msra.mxu0 0
    %3920 = vmatpush.bf16.msra.mxu0 0
    %3921 = vmatpush.bf16.msra.mxu0 0
    %3922 = vmatpush.bf16.msra.mxu0 0
    %3923 = vmatpush.bf16.msra.mxu0 0
    %3924 = vmatpush.bf16.msra.mxu0 %v3915
    %3925 = vmatmul.bf16.gmra.mxu0 %v3887
    %v3926 = vpop.f32.mrf.mxu0
    %v3927 = vadd.f32 0.0, %v3926
    %v3928 = vpop.f32.mrf.mxu0
    %v3929 = vadd.f32 0.0, %v3928
    %3930 = vmatmul.bf16.gmra.mxu0 %v3890
    %v3931 = vpop.f32.mrf.mxu0
    %v3932 = vadd.f32 0.0, %v3931
    %v3933 = vpop.f32.mrf.mxu0
    %v3934 = vadd.f32 0.0, %v3933
    %3935 = vmatmul.bf16.gmra.mxu0 %v3893
    %v3936 = vpop.f32.mrf.mxu0
    %v3937 = vadd.f32 0.0, %v3936
    %v3938 = vpop.f32.mrf.mxu0
    %v3939 = vadd.f32 0.0, %v3938
    %3940 = vmatmul.bf16.gmra.mxu0 %v3896
    %v3941 = vpop.f32.mrf.mxu0
    %v3942 = vadd.f32 0.0, %v3941
    %v3943 = vpop.f32.mrf.mxu0
    %v3944 = vadd.f32 0.0, %v3943
    %3945 = vmatmul.bf16.gmra.mxu0 %v3899
    %v3946 = vpop.f32.mrf.mxu0
    %v3947 = vadd.f32 0.0, %v3946
    %v3948 = vpop.f32.mrf.mxu0
    %v3949 = vadd.f32 0.0, %v3948
    %3950 = vmatmul.bf16.gmra.mxu0 %v3902
    %v3951 = vpop.f32.mrf.mxu0
    %v3952 = vadd.f32 0.0, %v3951
    %v3953 = vpop.f32.mrf.mxu0
    %v3954 = vadd.f32 0.0, %v3953
    %3955 = vmatmul.bf16.gmra.mxu0 %v3905
    %v3956 = vpop.f32.mrf.mxu0
    %v3957 = vadd.f32 0.0, %v3956
    %v3958 = vpop.f32.mrf.mxu0
    %v3959 = vadd.f32 0.0, %v3958
    %3960 = vmatmul.bf16.gmra.mxu0 %v3908
    %v3961 = vpop.f32.mrf.mxu0
    %v3962 = vadd.f32 0.0, %v3961
    %v3963 = vpop.f32.mrf.mxu0
    %v3964 = vadd.f32 0.0, %v3963
    %3965 = vdwg.mxu0
    %v3968 = vunpack.c.l.b16 %v2969
    %v3969 = vunpack.c.l.b16 %v2970
    %v3970 = vpack.c.b16 %v3969, %v3968
    %v3973 = vunpack.c.l.b16 %v2985
    %v3974 = vunpack.c.l.b16 %v2986
    %v3975 = vpack.c.b16 %v3974, %v3973
    %v3978 = vsel %vm2792, %v3970, 0
    %3980 = vmatpush.bf16.msra.mxu0 0
    %3981 = vmatpush.bf16.msra.mxu0 0
    %3982 = vmatpush.bf16.msra.mxu0 0
    %3983 = vmatpush.bf16.msra.mxu0 0
    %3984 = vmatpush.bf16.msra.mxu0 0
    %3985 = vmatpush.bf16.msra.mxu0 0
    %3986 = vmatpush.bf16.msra.mxu0 0
    %3987 = vmatpush.bf16.msra.mxu0 %v3975
    %3988 = vmatmul.bf16.gmra.mxu0 %v3978
    %v3989 = vpop.f32.mrf.mxu0
    %v3990 = vadd.f32 %v3927, %v3989
    %v3991 = vpop.f32.mrf.mxu0
    %v3992 = vadd.f32 %v3929, %v3991
    %3993 = vdwg.mxu0
    %v3996 = vunpack.c.l.b16 %v2971
    %v3997 = vunpack.c.l.b16 %v2972
    %v3998 = vpack.c.b16 %v3997, %v3996
    %v4001 = vunpack.c.l.b16 %v2987
    %v4002 = vunpack.c.l.b16 %v2988
    %v4003 = vpack.c.b16 %v4002, %v4001
    %v4006 = vsel %vm2792, %v3998, 0
    %4008 = vmatpush.bf16.msra.mxu0 0
    %4009 = vmatpush.bf16.msra.mxu0 0
    %4010 = vmatpush.bf16.msra.mxu0 0
    %4011 = vmatpush.bf16.msra.mxu0 0
    %4012 = vmatpush.bf16.msra.mxu0 0
    %4013 = vmatpush.bf16.msra.mxu0 0
    %4014 = vmatpush.bf16.msra.mxu0 0
    %4015 = vmatpush.bf16.msra.mxu0 %v4003
    %4016 = vmatmul.bf16.gmra.mxu0 %v4006
    %v4017 = vpop.f32.mrf.mxu0
    %v4018 = vadd.f32 %v3932, %v4017
    %v4019 = vpop.f32.mrf.mxu0
    %v4020 = vadd.f32 %v3934, %v4019
    %4021 = vdwg.mxu0
    %v4024 = vunpack.c.l.b16 %v2973
    %v4025 = vunpack.c.l.b16 %v2974
    %v4026 = vpack.c.b16 %v4025, %v4024
    %v4029 = vunpack.c.l.b16 %v2989
    %v4030 = vunpack.c.l.b16 %v2990
    %v4031 = vpack.c.b16 %v4030, %v4029
    %v4034 = vsel %vm2792, %v4026, 0
    %4036 = vmatpush.bf16.msra.mxu0 0
    %4037 = vmatpush.bf16.msra.mxu0 0
    %4038 = vmatpush.bf16.msra.mxu0 0
    %4039 = vmatpush.bf16.msra.mxu0 0
    %4040 = vmatpush.bf16.msra.mxu0 0
    %4041 = vmatpush.bf16.msra.mxu0 0
    %4042 = vmatpush.bf16.msra.mxu0 0
    %4043 = vmatpush.bf16.msra.mxu0 %v4031
    %4044 = vmatmul.bf16.gmra.mxu0 %v4034
    %v4045 = vpop.f32.mrf.mxu0
    %v4046 = vadd.f32 %v3937, %v4045
    %v4047 = vpop.f32.mrf.mxu0
    %v4048 = vadd.f32 %v3939, %v4047
    %4049 = vdwg.mxu0
    %v4052 = vunpack.c.l.b16 %v2975
    %v4053 = vunpack.c.l.b16 %v2976
    %v4054 = vpack.c.b16 %v4053, %v4052
    %v4057 = vunpack.c.l.b16 %v2991
    %v4058 = vunpack.c.l.b16 %v2992
    %v4059 = vpack.c.b16 %v4058, %v4057
    %v4062 = vsel %vm2792, %v4054, 0
    %4064 = vmatpush.bf16.msra.mxu0 0
    %4065 = vmatpush.bf16.msra.mxu0 0
    %4066 = vmatpush.bf16.msra.mxu0 0
    %4067 = vmatpush.bf16.msra.mxu0 0
    %4068 = vmatpush.bf16.msra.mxu0 0
    %4069 = vmatpush.bf16.msra.mxu0 0
    %4070 = vmatpush.bf16.msra.mxu0 0
    %4071 = vmatpush.bf16.msra.mxu0 %v4059
    %4072 = vmatmul.bf16.gmra.mxu0 %v4062
    %v4073 = vpop.f32.mrf.mxu0
    %v4074 = vadd.f32 %v3942, %v4073
    %v4075 = vpop.f32.mrf.mxu0
    %v4076 = vadd.f32 %v3944, %v4075
    %4077 = vdwg.mxu0
    %v4080 = vunpack.c.l.b16 %v2977
    %v4081 = vunpack.c.l.b16 %v2978
    %v4082 = vpack.c.b16 %v4081, %v4080
    %v4085 = vunpack.c.l.b16 %v2993
    %v4086 = vunpack.c.l.b16 %v2994
    %v4087 = vpack.c.b16 %v4086, %v4085
    %v4090 = vsel %vm2792, %v4082, 0
    %4092 = vmatpush.bf16.msra.mxu0 0
    %4093 = vmatpush.bf16.msra.mxu0 0
    %4094 = vmatpush.bf16.msra.mxu0 0
    %4095 = vmatpush.bf16.msra.mxu0 0
    %4096 = vmatpush.bf16.msra.mxu0 0
    %4097 = vmatpush.bf16.msra.mxu0 0
    %4098 = vmatpush.bf16.msra.mxu0 0
    %4099 = vmatpush.bf16.msra.mxu0 %v4087
    %4100 = vmatmul.bf16.gmra.mxu0 %v4090
    %v4101 = vpop.f32.mrf.mxu0
    %v4102 = vadd.f32 %v3947, %v4101
    %v4103 = vpop.f32.mrf.mxu0
    %v4104 = vadd.f32 %v3949, %v4103
    %4105 = vdwg.mxu0
    %v4108 = vunpack.c.l.b16 %v2979
    %v4109 = vunpack.c.l.b16 %v2980
    %v4110 = vpack.c.b16 %v4109, %v4108
    %v4113 = vunpack.c.l.b16 %v2995
    %v4114 = vunpack.c.l.b16 %v2996
    %v4115 = vpack.c.b16 %v4114, %v4113
    %v4118 = vsel %vm2792, %v4110, 0
    %4120 = vmatpush.bf16.msra.mxu0 0
    %4121 = vmatpush.bf16.msra.mxu0 0
    %4122 = vmatpush.bf16.msra.mxu0 0
    %4123 = vmatpush.bf16.msra.mxu0 0
    %4124 = vmatpush.bf16.msra.mxu0 0
    %4125 = vmatpush.bf16.msra.mxu0 0
    %4126 = vmatpush.bf16.msra.mxu0 0
    %4127 = vmatpush.bf16.msra.mxu0 %v4115
    %4128 = vmatmul.bf16.gmra.mxu0 %v4118
    %v4129 = vpop.f32.mrf.mxu0
    %v4130 = vadd.f32 %v3952, %v4129
    %v4131 = vpop.f32.mrf.mxu0
    %v4132 = vadd.f32 %v3954, %v4131
    %4133 = vdwg.mxu0
    %v4136 = vunpack.c.l.b16 %v2981
    %v4137 = vunpack.c.l.b16 %v2982
    %v4138 = vpack.c.b16 %v4137, %v4136
    %v4141 = vunpack.c.l.b16 %v2997
    %v4142 = vunpack.c.l.b16 %v2998
    %v4143 = vpack.c.b16 %v4142, %v4141
    %v4146 = vsel %vm2792, %v4138, 0
    %4148 = vmatpush.bf16.msra.mxu0 0
    %4149 = vmatpush.bf16.msra.mxu0 0
    %4150 = vmatpush.bf16.msra.mxu0 0
    %4151 = vmatpush.bf16.msra.mxu0 0
    %4152 = vmatpush.bf16.msra.mxu0 0
    %4153 = vmatpush.bf16.msra.mxu0 0
    %4154 = vmatpush.bf16.msra.mxu0 0
    %4155 = vmatpush.bf16.msra.mxu0 %v4143
    %4156 = vmatmul.bf16.gmra.mxu0 %v4146
    %v4157 = vpop.f32.mrf.mxu0
    %v4158 = vadd.f32 %v3957, %v4157
    %v4159 = vpop.f32.mrf.mxu0
    %v4160 = vadd.f32 %v3959, %v4159
    %4161 = vdwg.mxu0
    %v4164 = vunpack.c.l.b16 %v2983
    %v4165 = vunpack.c.l.b16 %v2984
    %v4166 = vpack.c.b16 %v4165, %v4164
    %v4169 = vunpack.c.l.b16 %v2999
    %v4170 = vunpack.c.l.b16 %v3000
    %v4171 = vpack.c.b16 %v4170, %v4169
    %v4174 = vsel %vm2792, %v4166, 0
    %4176 = vmatpush.bf16.msra.mxu0 0
    %4177 = vmatpush.bf16.msra.mxu0 0
    %4178 = vmatpush.bf16.msra.mxu0 0
    %4179 = vmatpush.bf16.msra.mxu0 0
    %4180 = vmatpush.bf16.msra.mxu0 0
    %4181 = vmatpush.bf16.msra.mxu0 0
    %4182 = vmatpush.bf16.msra.mxu0 0
    %4183 = vmatpush.bf16.msra.mxu0 %v4171
    %4184 = vmatmul.bf16.gmra.mxu0 %v4174
    %v4185 = vpop.f32.mrf.mxu0
    %v4186 = vadd.f32 %v3962, %v4185
    %v4187 = vpop.f32.mrf.mxu0
    %v4188 = vadd.f32 %v3964, %v4187
    %4189 = vdwg.mxu0
    %4190 = vxpose.xlu0.b32.start [1/16] %v3990, 128
    %4191 = vxpose.xlu0.b32.cont [2/16] %v3992, 128
    %4192 = vxpose.xlu0.b32.cont [3/16] 0.0, 128
    %4193 = vxpose.xlu0.b32.cont [4/16] 0.0, 128
    %4194 = vxpose.xlu0.b32.cont [5/16] 0.0, 128
    %4195 = vxpose.xlu0.b32.cont [6/16] 0.0, 128
    %4196 = vxpose.xlu0.b32.cont [7/16] 0.0, 128
    %4197 = vxpose.xlu0.b32.cont [8/16] 0.0, 128
    %4198 = vxpose.xlu0.b32.cont [9/16] 0.0, 128
    %4199 = vxpose.xlu0.b32.cont [10/16] 0.0, 128
    %4200 = vxpose.xlu0.b32.cont [11/16] 0.0, 128
    %4201 = vxpose.xlu0.b32.cont [12/16] 0.0, 128
    %4202 = vxpose.xlu0.b32.cont [13/16] 0.0, 128
    %4203 = vxpose.xlu0.b32.cont [14/16] 0.0, 128
    %4204 = vxpose.xlu0.b32.cont [15/16] 0.0, 128
    %4205 = vxpose.xlu0.b32.end [16/16] 0.0, 128
    %v4206 = vpop.trf.xlu0
    %v4207 = vpop.trf.xlu0
    %v4208 = vpop.trf.xlu0
    %v4209 = vpop.trf.xlu0
    %v4210 = vpop.trf.xlu0
    %v4211 = vpop.trf.xlu0
    %v4212 = vpop.trf.xlu0
    %v4213 = vpop.trf.xlu0
    %v4214 = vpop.trf.xlu0
    %v4215 = vpop.trf.xlu0
    %v4216 = vpop.trf.xlu0
    %v4217 = vpop.trf.xlu0
    %v4218 = vpop.trf.xlu0
    %v4219 = vpop.trf.xlu0
    %v4220 = vpop.trf.xlu0
    %v4221 = vpop.trf.xlu0
    %4222 = vxpose.xlu0.b32.start [1/16] %v4018, 128
    %4223 = vxpose.xlu0.b32.cont [2/16] %v4020, 128
    %4224 = vxpose.xlu0.b32.cont [3/16] 0.0, 128
    %4225 = vxpose.xlu0.b32.cont [4/16] 0.0, 128
    %4226 = vxpose.xlu0.b32.cont [5/16] 0.0, 128
    %4227 = vxpose.xlu0.b32.cont [6/16] 0.0, 128
    %4228 = vxpose.xlu0.b32.cont [7/16] 0.0, 128
    %4229 = vxpose.xlu0.b32.cont [8/16] 0.0, 128
    %4230 = vxpose.xlu0.b32.cont [9/16] 0.0, 128
    %4231 = vxpose.xlu0.b32.cont [10/16] 0.0, 128
    %4232 = vxpose.xlu0.b32.cont [11/16] 0.0, 128
    %4233 = vxpose.xlu0.b32.cont [12/16] 0.0, 128
    %4234 = vxpose.xlu0.b32.cont [13/16] 0.0, 128
    %4235 = vxpose.xlu0.b32.cont [14/16] 0.0, 128
    %4236 = vxpose.xlu0.b32.cont [15/16] 0.0, 128
    %4237 = vxpose.xlu0.b32.end [16/16] 0.0, 128
    %v4238 = vpop.trf.xlu0
    %v4239 = vpop.trf.xlu0
    %v4240 = vpop.trf.xlu0
    %v4241 = vpop.trf.xlu0
    %v4242 = vpop.trf.xlu0
    %v4243 = vpop.trf.xlu0
    %v4244 = vpop.trf.xlu0
    %v4245 = vpop.trf.xlu0
    %v4246 = vpop.trf.xlu0
    %v4247 = vpop.trf.xlu0
    %v4248 = vpop.trf.xlu0
    %v4249 = vpop.trf.xlu0
    %v4250 = vpop.trf.xlu0
    %v4251 = vpop.trf.xlu0
    %v4252 = vpop.trf.xlu0
    %v4253 = vpop.trf.xlu0
    %4254 = vxpose.xlu0.b32.start [1/16] %v4046, 128
    %4255 = vxpose.xlu0.b32.cont [2/16] %v4048, 128
    %4256 = vxpose.xlu0.b32.cont [3/16] 0.0, 128
    %4257 = vxpose.xlu0.b32.cont [4/16] 0.0, 128
    %4258 = vxpose.xlu0.b32.cont [5/16] 0.0, 128
    %4259 = vxpose.xlu0.b32.cont [6/16] 0.0, 128
    %4260 = vxpose.xlu0.b32.cont [7/16] 0.0, 128
    %4261 = vxpose.xlu0.b32.cont [8/16] 0.0, 128
    %4262 = vxpose.xlu0.b32.cont [9/16] 0.0, 128
    %4263 = vxpose.xlu0.b32.cont [10/16] 0.0, 128
    %4264 = vxpose.xlu0.b32.cont [11/16] 0.0, 128
    %4265 = vxpose.xlu0.b32.cont [12/16] 0.0, 128
    %4266 = vxpose.xlu0.b32.cont [13/16] 0.0, 128
    %4267 = vxpose.xlu0.b32.cont [14/16] 0.0, 128
    %4268 = vxpose.xlu0.b32.cont [15/16] 0.0, 128
    %4269 = vxpose.xlu0.b32.end [16/16] 0.0, 128
    %v4270 = vpop.trf.xlu0
    %v4271 = vpop.trf.xlu0
    %v4272 = vpop.trf.xlu0
    %v4273 = vpop.trf.xlu0
    %v4274 = vpop.trf.xlu0
    %v4275 = vpop.trf.xlu0
    %v4276 = vpop.trf.xlu0
    %v4277 = vpop.trf.xlu0
    %v4278 = vpop.trf.xlu0
    %v4279 = vpop.trf.xlu0
    %v4280 = vpop.trf.xlu0
    %v4281 = vpop.trf.xlu0
    %v4282 = vpop.trf.xlu0
    %v4283 = vpop.trf.xlu0
    %v4284 = vpop.trf.xlu0
    %v4285 = vpop.trf.xlu0
    %4286 = vxpose.xlu0.b32.start [1/16] %v4074, 128
    %4287 = vxpose.xlu0.b32.cont [2/16] %v4076, 128
    %4288 = vxpose.xlu0.b32.cont [3/16] 0.0, 128
    %4289 = vxpose.xlu0.b32.cont [4/16] 0.0, 128
    %4290 = vxpose.xlu0.b32.cont [5/16] 0.0, 128
    %4291 = vxpose.xlu0.b32.cont [6/16] 0.0, 128
    %4292 = vxpose.xlu0.b32.cont [7/16] 0.0, 128
    %4293 = vxpose.xlu0.b32.cont [8/16] 0.0, 128
    %4294 = vxpose.xlu0.b32.cont [9/16] 0.0, 128
    %4295 = vxpose.xlu0.b32.cont [10/16] 0.0, 128
    %4296 = vxpose.xlu0.b32.cont [11/16] 0.0, 128
    %4297 = vxpose.xlu0.b32.cont [12/16] 0.0, 128
    %4298 = vxpose.xlu0.b32.cont [13/16] 0.0, 128
    %4299 = vxpose.xlu0.b32.cont [14/16] 0.0, 128
    %4300 = vxpose.xlu0.b32.cont [15/16] 0.0, 128
    %4301 = vxpose.xlu0.b32.end [16/16] 0.0, 128
    %v4302 = vpop.trf.xlu0
    %v4303 = vpop.trf.xlu0
    %v4304 = vpop.trf.xlu0
    %v4305 = vpop.trf.xlu0
    %v4306 = vpop.trf.xlu0
    %v4307 = vpop.trf.xlu0
    %v4308 = vpop.trf.xlu0
    %v4309 = vpop.trf.xlu0
    %v4310 = vpop.trf.xlu0
    %v4311 = vpop.trf.xlu0
    %v4312 = vpop.trf.xlu0
    %v4313 = vpop.trf.xlu0
    %v4314 = vpop.trf.xlu0
    %v4315 = vpop.trf.xlu0
    %v4316 = vpop.trf.xlu0
    %v4317 = vpop.trf.xlu0
    %4318 = vxpose.xlu0.b32.start [1/16] %v4102, 128
    %4319 = vxpose.xlu0.b32.cont [2/16] %v4104, 128
    %4320 = vxpose.xlu0.b32.cont [3/16] 0.0, 128
    %4321 = vxpose.xlu0.b32.cont [4/16] 0.0, 128
    %4322 = vxpose.xlu0.b32.cont [5/16] 0.0, 128
    %4323 = vxpose.xlu0.b32.cont [6/16] 0.0, 128
    %4324 = vxpose.xlu0.b32.cont [7/16] 0.0, 128
    %4325 = vxpose.xlu0.b32.cont [8/16] 0.0, 128
    %4326 = vxpose.xlu0.b32.cont [9/16] 0.0, 128
    %4327 = vxpose.xlu0.b32.cont [10/16] 0.0, 128
    %4328 = vxpose.xlu0.b32.cont [11/16] 0.0, 128
    %4329 = vxpose.xlu0.b32.cont [12/16] 0.0, 128
    %4330 = vxpose.xlu0.b32.cont [13/16] 0.0, 128
    %4331 = vxpose.xlu0.b32.cont [14/16] 0.0, 128
    %4332 = vxpose.xlu0.b32.cont [15/16] 0.0, 128
    %4333 = vxpose.xlu0.b32.end [16/16] 0.0, 128
    %v4334 = vpop.trf.xlu0
    %v4335 = vpop.trf.xlu0
    %v4336 = vpop.trf.xlu0
    %v4337 = vpop.trf.xlu0
    %v4338 = vpop.trf.xlu0
    %v4339 = vpop.trf.xlu0
    %v4340 = vpop.trf.xlu0
    %v4341 = vpop.trf.xlu0
    %v4342 = vpop.trf.xlu0
    %v4343 = vpop.trf.xlu0
    %v4344 = vpop.trf.xlu0
    %v4345 = vpop.trf.xlu0
    %v4346 = vpop.trf.xlu0
    %v4347 = vpop.trf.xlu0
    %v4348 = vpop.trf.xlu0
    %v4349 = vpop.trf.xlu0
    %4350 = vxpose.xlu0.b32.start [1/16] %v4130, 128
    %4351 = vxpose.xlu0.b32.cont [2/16] %v4132, 128
    %4352 = vxpose.xlu0.b32.cont [3/16] 0.0, 128
    %4353 = vxpose.xlu0.b32.cont [4/16] 0.0, 128
    %4354 = vxpose.xlu0.b32.cont [5/16] 0.0, 128
    %4355 = vxpose.xlu0.b32.cont [6/16] 0.0, 128
    %4356 = vxpose.xlu0.b32.cont [7/16] 0.0, 128
    %4357 = vxpose.xlu0.b32.cont [8/16] 0.0, 128
    %4358 = vxpose.xlu0.b32.cont [9/16] 0.0, 128
    %4359 = vxpose.xlu0.b32.cont [10/16] 0.0, 128
    %4360 = vxpose.xlu0.b32.cont [11/16] 0.0, 128
    %4361 = vxpose.xlu0.b32.cont [12/16] 0.0, 128
    %4362 = vxpose.xlu0.b32.cont [13/16] 0.0, 128
    %4363 = vxpose.xlu0.b32.cont [14/16] 0.0, 128
    %4364 = vxpose.xlu0.b32.cont [15/16] 0.0, 128
    %4365 = vxpose.xlu0.b32.end [16/16] 0.0, 128
    %v4366 = vpop.trf.xlu0
    %v4367 = vpop.trf.xlu0
    %v4368 = vpop.trf.xlu0
    %v4369 = vpop.trf.xlu0
    %v4370 = vpop.trf.xlu0
    %v4371 = vpop.trf.xlu0
    %v4372 = vpop.trf.xlu0
    %v4373 = vpop.trf.xlu0
    %v4374 = vpop.trf.xlu0
    %v4375 = vpop.trf.xlu0
    %v4376 = vpop.trf.xlu0
    %v4377 = vpop.trf.xlu0
    %v4378 = vpop.trf.xlu0
    %v4379 = vpop.trf.xlu0
    %v4380 = vpop.trf.xlu0
    %v4381 = vpop.trf.xlu0
    %4382 = vxpose.xlu0.b32.start [1/16] %v4158, 128
    %4383 = vxpose.xlu0.b32.cont [2/16] %v4160, 128
    %4384 = vxpose.xlu0.b32.cont [3/16] 0.0, 128
    %4385 = vxpose.xlu0.b32.cont [4/16] 0.0, 128
    %4386 = vxpose.xlu0.b32.cont [5/16] 0.0, 128
    %4387 = vxpose.xlu0.b32.cont [6/16] 0.0, 128
    %4388 = vxpose.xlu0.b32.cont [7/16] 0.0, 128
    %4389 = vxpose.xlu0.b32.cont [8/16] 0.0, 128
    %4390 = vxpose.xlu0.b32.cont [9/16] 0.0, 128
    %4391 = vxpose.xlu0.b32.cont [10/16] 0.0, 128
    %4392 = vxpose.xlu0.b32.cont [11/16] 0.0, 128
    %4393 = vxpose.xlu0.b32.cont [12/16] 0.0, 128
    %4394 = vxpose.xlu0.b32.cont [13/16] 0.0, 128
    %4395 = vxpose.xlu0.b32.cont [14/16] 0.0, 128
    %4396 = vxpose.xlu0.b32.cont [15/16] 0.0, 128
    %4397 = vxpose.xlu0.b32.end [16/16] 0.0, 128
    %v4398 = vpop.trf.xlu0
    %v4399 = vpop.trf.xlu0
    %v4400 = vpop.trf.xlu0
    %v4401 = vpop.trf.xlu0
    %v4402 = vpop.trf.xlu0
    %v4403 = vpop.trf.xlu0
    %v4404 = vpop.trf.xlu0
    %v4405 = vpop.trf.xlu0
    %v4406 = vpop.trf.xlu0
    %v4407 = vpop.trf.xlu0
    %v4408 = vpop.trf.xlu0
    %v4409 = vpop.trf.xlu0
    %v4410 = vpop.trf.xlu0
    %v4411 = vpop.trf.xlu0
    %v4412 = vpop.trf.xlu0
    %v4413 = vpop.trf.xlu0
    %4414 = vxpose.xlu0.b32.start [1/16] %v4186, 128
    %4415 = vxpose.xlu0.b32.cont [2/16] %v4188, 128
    %4416 = vxpose.xlu0.b32.cont [3/16] 0.0, 128
    %4417 = vxpose.xlu0.b32.cont [4/16] 0.0, 128
    %4418 = vxpose.xlu0.b32.cont [5/16] 0.0, 128
    %4419 = vxpose.xlu0.b32.cont [6/16] 0.0, 128
    %4420 = vxpose.xlu0.b32.cont [7/16] 0.0, 128
    %4421 = vxpose.xlu0.b32.cont [8/16] 0.0, 128
    %4422 = vxpose.xlu0.b32.cont [9/16] 0.0, 128
    %4423 = vxpose.xlu0.b32.cont [10/16] 0.0, 128
    %4424 = vxpose.xlu0.b32.cont [11/16] 0.0, 128
    %4425 = vxpose.xlu0.b32.cont [12/16] 0.0, 128
    %4426 = vxpose.xlu0.b32.cont [13/16] 0.0, 128
    %4427 = vxpose.xlu0.b32.cont [14/16] 0.0, 128
    %4428 = vxpose.xlu0.b32.cont [15/16] 0.0, 128
    %4429 = vxpose.xlu0.b32.end [16/16] 0.0, 128
    %v4430 = vpop.trf.xlu0
    %v4431 = vpop.trf.xlu0
    %v4432 = vpop.trf.xlu0
    %v4433 = vpop.trf.xlu0
    %v4434 = vpop.trf.xlu0
    %v4435 = vpop.trf.xlu0
    %v4436 = vpop.trf.xlu0
    %v4437 = vpop.trf.xlu0
    %v4438 = vpop.trf.xlu0
    %v4439 = vpop.trf.xlu0
    %v4440 = vpop.trf.xlu0
    %v4441 = vpop.trf.xlu0
    %v4442 = vpop.trf.xlu0
    %v4443 = vpop.trf.xlu0
    %v4444 = vpop.trf.xlu0
    %v4445 = vpop.trf.xlu0
    %4446 = vxpose.xlu0.b32.start [1/16] %v4206, 128
    %4447 = vxpose.xlu0.b32.cont [2/16] %v4238, 128
    %4448 = vxpose.xlu0.b32.cont [3/16] %v4270, 128
    %4449 = vxpose.xlu0.b32.cont [4/16] %v4302, 128
    %4450 = vxpose.xlu0.b32.cont [5/16] 0.0, 128
    %4451 = vxpose.xlu0.b32.cont [6/16] 0.0, 128
    %4452 = vxpose.xlu0.b32.cont [7/16] 0.0, 128
    %4453 = vxpose.xlu0.b32.cont [8/16] 0.0, 128
    %4454 = vxpose.xlu0.b32.cont [9/16] 0.0, 128
    %4455 = vxpose.xlu0.b32.cont [10/16] 0.0, 128
    %4456 = vxpose.xlu0.b32.cont [11/16] 0.0, 128
    %4457 = vxpose.xlu0.b32.cont [12/16] 0.0, 128
    %4458 = vxpose.xlu0.b32.cont [13/16] 0.0, 128
    %4459 = vxpose.xlu0.b32.cont [14/16] 0.0, 128
    %4460 = vxpose.xlu0.b32.cont [15/16] 0.0, 128
    %4461 = vxpose.xlu0.b32.end [16/16] 0.0, 128
    %v4462 = vpop.trf.xlu0
    %v4463 = vpop.trf.xlu0
    %v4464 = vpop.trf.xlu0
    %v4465 = vpop.trf.xlu0
    %v4466 = vpop.trf.xlu0
    %v4467 = vpop.trf.xlu0
    %v4468 = vpop.trf.xlu0
    %v4469 = vpop.trf.xlu0
    %v4470 = vpop.trf.xlu0
    %v4471 = vpop.trf.xlu0
    %v4472 = vpop.trf.xlu0
    %v4473 = vpop.trf.xlu0
    %v4474 = vpop.trf.xlu0
    %v4475 = vpop.trf.xlu0
    %v4476 = vpop.trf.xlu0
    %v4477 = vpop.trf.xlu0
    %4478 = vxpose.xlu0.b32.start [1/16] %v4334, 128
    %4479 = vxpose.xlu0.b32.cont [2/16] %v4366, 128
    %4480 = vxpose.xlu0.b32.cont [3/16] %v4398, 128
    %4481 = vxpose.xlu0.b32.cont [4/16] %v4430, 128
    %4482 = vxpose.xlu0.b32.cont [5/16] 0.0, 128
    %4483 = vxpose.xlu0.b32.cont [6/16] 0.0, 128
    %4484 = vxpose.xlu0.b32.cont [7/16] 0.0, 128
    %4485 = vxpose.xlu0.b32.cont [8/16] 0.0, 128
    %4486 = vxpose.xlu0.b32.cont [9/16] 0.0, 128
    %4487 = vxpose.xlu0.b32.cont [10/16] 0.0, 128
    %4488 = vxpose.xlu0.b32.cont [11/16] 0.0, 128
    %4489 = vxpose.xlu0.b32.cont [12/16] 0.0, 128
    %4490 = vxpose.xlu0.b32.cont [13/16] 0.0, 128
    %4491 = vxpose.xlu0.b32.cont [14/16] 0.0, 128
    %4492 = vxpose.xlu0.b32.cont [15/16] 0.0, 128
    %4493 = vxpose.xlu0.b32.end [16/16] 0.0, 128
    %v4494 = vpop.trf.xlu0
    %v4495 = vpop.trf.xlu0
    %v4496 = vpop.trf.xlu0
    %v4497 = vpop.trf.xlu0
    %v4498 = vpop.trf.xlu0
    %v4499 = vpop.trf.xlu0
    %v4500 = vpop.trf.xlu0
    %v4501 = vpop.trf.xlu0
    %v4502 = vpop.trf.xlu0
    %v4503 = vpop.trf.xlu0
    %v4504 = vpop.trf.xlu0
    %v4505 = vpop.trf.xlu0
    %v4506 = vpop.trf.xlu0
    %v4507 = vpop.trf.xlu0
    %v4508 = vpop.trf.xlu0
    %v4509 = vpop.trf.xlu0
    %v4510 = vld [vmem:[%s6] sm:$0xff]
    %v4511 = vld [vmem:[%s6 + $0x8] sm:$0xff]
    %v4512 = vld [vmem:[%s6 + $0x10] sm:$0xff]
    %v4513 = vld [vmem:[%s6 + $0x18] sm:$0xff]
    %v4514 = vpack.c.bf16 %v4463, %v4462
    %v4515 = vpack.c.bf16 %v4495, %v4494
    %v4516 = vpack.c.bf16 %v4511, %v4510
    %v4517 = vpack.c.bf16 %v4513, %v4512
    %v4518 = vld [vmem:[%s7] sm:$0x1]
    %v4520 = vperm.slane %v4518, 0
    %v4523 = vsel %vm184, %v4514, 0
    %v4526 = vsel %vm184, %v4515, 0
    %4528 = vmatpush.bf16.msra.mxu0 0
    %4529 = vmatpush.bf16.msra.mxu0 0
    %4530 = vmatpush.bf16.msra.mxu0 0
    %4531 = vmatpush.bf16.msra.mxu0 0
    %4532 = vmatpush.bf16.msra.mxu0 0
    %4533 = vmatpush.bf16.msra.mxu0 0
    %4534 = vmatpush.bf16.msra.mxu0 %v4517
    %4535 = vmatpush.bf16.msra.mxu0 %v4516
    %4536 = vmatmul.bf16.gmra.mxu0 %v4523
    %v4537 = vpop.f32.mrf.mxu0
    %v4538 = vadd.f32 %v4520, %v4537
    %v4539 = vpop.f32.mrf.mxu0
    %v4540 = vadd.f32 %v4520, %v4539
    %4541 = vmatmul.bf16.gmra.mxu0 %v4526
    %v4542 = vpop.f32.mrf.mxu0
    %v4543 = vadd.f32 %v4520, %v4542
    %v4544 = vpop.f32.mrf.mxu0
    %v4545 = vadd.f32 %v4520, %v4544
    %4546 = vdwg.mxu0
    %v4547 = vadd.f32 %v172, %v4538
    %v4548 = vadd.f32 %v173, %v4540
    %v4549 = vadd.f32 %v174, %v4543
    %v4550 = vadd.f32 %v175, %v4545
    %v4551 = vld [vmem:[%s8] sm:$0x1]
    %v4552 = vld [vmem:[%s9] sm:$0x1]
    %v4553 = vsel %vm184, %v4547, 0.0
    %4554 = vadd.xlane.f32.xlu0 %v4553
    %v4555 = vpop.xlane.xlu0 %4554
    %v4556 = vsel %vm184, %v4548, 0.0
    %4557 = vadd.xlane.f32.xlu0 %v4556
    %v4558 = vpop.xlane.xlu0 %4557
    %v4559 = vsel %vm184, %v4549, 0.0
    %4560 = vadd.xlane.f32.xlu0 %v4559
    %v4561 = vpop.xlane.xlu0 %4560
    %v4562 = vsel %vm184, %v4550, 0.0
    %4563 = vadd.xlane.f32.xlu0 %v4562
    %v4564 = vpop.xlane.xlu0 %4563
    %v4565 = vrcp.pop 32.0
    %v4566 = vmul.f32 32.0, %v4565
    %v4567 = vsub.f32 1.0, %v4566
    %v4568 = vmul.f32 %v4565, %v4567
    %v4569 = vadd.f32 %v4565, %v4568
    %vm4570 = vweird.f32 %v4565
    %v4571 = vsel %vm4570, %v4565, %v4569
    %v4572 = vmul.f32 %v4555, %v4571
    %v4573 = vmul.f32 %v4558, %v4571
    %v4574 = vmul.f32 %v4561, %v4571
    %v4575 = vmul.f32 %v4564, %v4571
    %v4576 = vsub.f32 %v4547, %v4572
    %v4577 = vsub.f32 %v4548, %v4573
    %v4578 = vsub.f32 %v4549, %v4574
    %v4579 = vsub.f32 %v4550, %v4575
    %v4580 = vmul.f32 %v4576, %v4576
    %v4581 = vmul.f32 %v4577, %v4577
    %v4582 = vmul.f32 %v4578, %v4578
    %v4583 = vmul.f32 %v4579, %v4579
    %v4584 = vsel %vm184, %v4580, 0.0
    %4585 = vadd.xlane.f32.xlu0 %v4584
    %v4586 = vpop.xlane.xlu0 %4585
    %v4587 = vsel %vm184, %v4581, 0.0
    %4588 = vadd.xlane.f32.xlu0 %v4587
    %v4589 = vpop.xlane.xlu0 %4588
    %v4590 = vsel %vm184, %v4582, 0.0
    %4591 = vadd.xlane.f32.xlu0 %v4590
    %v4592 = vpop.xlane.xlu0 %4591
    %v4593 = vsel %vm184, %v4583, 0.0
    %4594 = vadd.xlane.f32.xlu0 %v4593
    %v4595 = vpop.xlane.xlu0 %4594
    %v4596 = vmul.f32 %v4586, %v4571
    %v4597 = vmul.f32 %v4589, %v4571
    %v4598 = vmul.f32 %v4592, %v4571
    %v4599 = vmul.f32 %v4595, %v4571
    %v4600 = vadd.f32 %v4596, 1e-05
    %v4601 = vadd.f32 %v4597, 1e-05
    %v4602 = vadd.f32 %v4598, 1e-05
    %v4603 = vadd.f32 %v4599, 1e-05
    %v4604 = vrsqrt.pop %v4600
    %v4605 = vmul.f32 %v4604, %v4600
    %v4606 = vmul.f32 %v4605, %v4604
    %v4607 = vmul.f32 0.5, %v4606
    %v4608 = vsub.f32 1.5, %v4607
    %v4609 = vmul.f32 %v4604, %v4608
    %vm4610 = vweird.f32 %v4600
    %vm4611 = vweird.f32 %v4604
    %vm4612 = vmor %vm4610, %vm4611
    %v4613 = vsel %vm4612, %v4604, %v4609
    %v4614 = vrsqrt.pop %v4601
    %v4615 = vmul.f32 %v4614, %v4601
    %v4616 = vmul.f32 %v4615, %v4614
    %v4617 = vmul.f32 0.5, %v4616
    %v4618 = vsub.f32 1.5, %v4617
    %v4619 = vmul.f32 %v4614, %v4618
    %vm4620 = vweird.f32 %v4601
    %vm4621 = vweird.f32 %v4614
    %vm4622 = vmor %vm4620, %vm4621
    %v4623 = vsel %vm4622, %v4614, %v4619
    %v4624 = vrsqrt.pop %v4602
    %v4625 = vmul.f32 %v4624, %v4602
    %v4626 = vmul.f32 %v4625, %v4624
    %v4627 = vmul.f32 0.5, %v4626
    %v4628 = vsub.f32 1.5, %v4627
    %v4629 = vmul.f32 %v4624, %v4628
    %vm4630 = vweird.f32 %v4602
    %vm4631 = vweird.f32 %v4624
    %vm4632 = vmor %vm4630, %vm4631
    %v4633 = vsel %vm4632, %v4624, %v4629
    %v4634 = vrsqrt.pop %v4603
    %v4635 = vmul.f32 %v4634, %v4603
    %v4636 = vmul.f32 %v4635, %v4634
    %v4637 = vmul.f32 0.5, %v4636
    %v4638 = vsub.f32 1.5, %v4637
    %v4639 = vmul.f32 %v4634, %v4638
    %vm4640 = vweird.f32 %v4603
    %vm4641 = vweird.f32 %v4634
    %vm4642 = vmor %vm4640, %vm4641
    %v4643 = vsel %vm4642, %v4634, %v4639
    %v4644 = vmul.f32 %v4576, %v4613
    %v4645 = vmul.f32 %v4577, %v4623
    %v4646 = vmul.f32 %v4578, %v4633
    %v4647 = vmul.f32 %v4579, %v4643
    %v4649 = vperm.slane %v4551, 0
    %v4651 = vmul.f32 %v4644, %v4649
    %v4652 = vmul.f32 %v4645, %v4649
    %v4653 = vmul.f32 %v4646, %v4649
    %v4654 = vmul.f32 %v4647, %v4649
    %v4656 = vperm.slane %v4552, 0
    %v4658 = vadd.f32 %v4651, %v4656
    %v4659 = vadd.f32 %v4652, %v4656
    %v4660 = vadd.f32 %v4653, %v4656
    %v4661 = vadd.f32 %v4654, %v4656
    %v4662 = vld [vmem:[%s10] sm:$0xff]
    %v4663 = vld [vmem:[%s10 + $0x8] sm:$0xff]
    %v4664 = vld [vmem:[%s10 + $0x10] sm:$0xff]
    %v4665 = vld [vmem:[%s10 + $0x18] sm:$0xff]
    %v4666 = vpack.c.bf16 %v4659, %v4658
    %v4667 = vpack.c.bf16 %v4661, %v4660
    %v4668 = vpack.c.bf16 %v4663, %v4662
    %v4669 = vpack.c.bf16 %v4665, %v4664
    %v4670 = vld [vmem:[%s11] sm:$0x1]
    %v4672 = vperm.slane %v4670, 0
    %v4675 = vsel %vm184, %v4666, 0
    %v4678 = vsel %vm184, %v4667, 0
    %4680 = vmatpush.bf16.msra.mxu0 0
    %4681 = vmatpush.bf16.msra.mxu0 0
    %4682 = vmatpush.bf16.msra.mxu0 0
    %4683 = vmatpush.bf16.msra.mxu0 0
    %4684 = vmatpush.bf16.msra.mxu0 0
    %4685 = vmatpush.bf16.msra.mxu0 0
    %4686 = vmatpush.bf16.msra.mxu0 %v4669
    %4687 = vmatpush.bf16.msra.mxu0 %v4668
    %4688 = vmatmul.bf16.gmra.mxu0 %v4675
    %v4689 = vpop.f32.mrf.mxu0
    %v4690 = vadd.f32 %v4672, %v4689
    %v4691 = vpop.f32.mrf.mxu0
    %v4692 = vadd.f32 %v4672, %v4691
    %4693 = vmatmul.bf16.gmra.mxu0 %v4678
    %v4694 = vpop.f32.mrf.mxu0
    %v4695 = vadd.f32 %v4672, %v4694
    %v4696 = vpop.f32.mrf.mxu0
    %v4697 = vadd.f32 %v4672, %v4696
    %4698 = vdwg.mxu0
    %v4699 = vmax.f32 %v4690, 0.0
    %v4700 = vmax.f32 %v4692, 0.0
    %v4701 = vmax.f32 %v4695, 0.0
    %v4702 = vmax.f32 %v4697, 0.0
    %v4703 = vld [vmem:[%s12] sm:$0xff]
    %v4704 = vld [vmem:[%s12 + $0x8] sm:$0xff]
    %v4705 = vld [vmem:[%s12 + $0x10] sm:$0xff]
    %v4706 = vld [vmem:[%s12 + $0x18] sm:$0xff]
    %v4707 = vld [vmem:[%s12 + $0x20] sm:$0xff]
    %v4708 = vld [vmem:[%s12 + $0x28] sm:$0xff]
    %v4709 = vld [vmem:[%s12 + $0x30] sm:$0xff]
    %v4710 = vld [vmem:[%s12 + $0x38] sm:$0xff]
    %v4711 = vld [vmem:[%s12 + $0x40] sm:$0xff]
    %v4712 = vld [vmem:[%s12 + $0x48] sm:$0xff]
    %v4713 = vld [vmem:[%s12 + $0x50] sm:$0xff]
    %v4714 = vld [vmem:[%s12 + $0x58] sm:$0xff]
    %v4715 = vld [vmem:[%s12 + $0x60] sm:$0xff]
    %v4716 = vld [vmem:[%s12 + $0x68] sm:$0xff]
    %v4717 = vld [vmem:[%s12 + $0x70] sm:$0xff]
    %v4718 = vld [vmem:[%s12 + $0x78] sm:$0xff]
    %v4719 = vpack.c.bf16 %v4700, %v4699
    %v4720 = vpack.c.bf16 %v4702, %v4701
    %v4721 = vpack.c.bf16 %v4704, %v4703
    %v4722 = vpack.c.bf16 %v4706, %v4705
    %v4723 = vpack.c.bf16 %v4708, %v4707
    %v4724 = vpack.c.bf16 %v4710, %v4709
    %v4725 = vpack.c.bf16 %v4712, %v4711
    %v4726 = vpack.c.bf16 %v4714, %v4713
    %v4727 = vpack.c.bf16 %v4716, %v4715
    %v4728 = vpack.c.bf16 %v4718, %v4717
    %v4729 = vld [vmem:[%s13] sm:$0x1]
    %v4731 = vperm.slane %v4729, 0
    %4733 = vmatpush.bf16.msra.mxu0 %v4728
    %4734 = vmatpush.bf16.msra.mxu0 %v4727
    %4735 = vmatpush.bf16.msra.mxu0 %v4726
    %4736 = vmatpush.bf16.msra.mxu0 %v4725
    %4737 = vmatpush.bf16.msra.mxu0 %v4724
    %4738 = vmatpush.bf16.msra.mxu0 %v4723
    %4739 = vmatpush.bf16.msra.mxu0 %v4722
    %4740 = vmatpush.bf16.msra.mxu0 %v4721
    %4741 = vmatmul.bf16.gmra.mxu0 %v4719
    %v4742 = vpop.f32.mrf.mxu0
    %v4743 = vadd.f32 %v4731, %v4742
    %v4744 = vpop.f32.mrf.mxu0
    %v4745 = vadd.f32 %v4731, %v4744
    %4746 = vmatmul.bf16.gmra.mxu0 %v4720
    %v4747 = vpop.f32.mrf.mxu0
    %v4748 = vadd.f32 %v4731, %v4747
    %v4749 = vpop.f32.mrf.mxu0
    %v4750 = vadd.f32 %v4731, %v4749
    %4751 = vdwg.mxu0
    %v4752 = vadd.f32 %v4658, %v4743
    %v4753 = vadd.f32 %v4659, %v4745
    %v4754 = vadd.f32 %v4660, %v4748
    %v4755 = vadd.f32 %v4661, %v4750
    %v4756 = vld [vmem:[%s14] sm:$0x1]
    %v4757 = vld [vmem:[%s15] sm:$0x1]
    %v4758 = vsel %vm184, %v4752, 0.0
    %4759 = vadd.xlane.f32.xlu0 %v4758
    %v4760 = vpop.xlane.xlu0 %4759
    %v4761 = vsel %vm184, %v4753, 0.0
    %4762 = vadd.xlane.f32.xlu0 %v4761
    %v4763 = vpop.xlane.xlu0 %4762
    %v4764 = vsel %vm184, %v4754, 0.0
    %4765 = vadd.xlane.f32.xlu0 %v4764
    %v4766 = vpop.xlane.xlu0 %4765
    %v4767 = vsel %vm184, %v4755, 0.0
    %4768 = vadd.xlane.f32.xlu0 %v4767
    %v4769 = vpop.xlane.xlu0 %4768
    %v4770 = vmul.f32 %v4760, %v4571
    %v4771 = vmul.f32 %v4763, %v4571
    %v4772 = vmul.f32 %v4766, %v4571
    %v4773 = vmul.f32 %v4769, %v4571
    %v4774 = vsub.f32 %v4752, %v4770
    %v4775 = vsub.f32 %v4753, %v4771
    %v4776 = vsub.f32 %v4754, %v4772
    %v4777 = vsub.f32 %v4755, %v4773
    %v4778 = vmul.f32 %v4774, %v4774
    %v4779 = vmul.f32 %v4775, %v4775
    %v4780 = vmul.f32 %v4776, %v4776
    %v4781 = vmul.f32 %v4777, %v4777
    %v4782 = vsel %vm184, %v4778, 0.0
    %4783 = vadd.xlane.f32.xlu0 %v4782
    %v4784 = vpop.xlane.xlu0 %4783
    %v4785 = vsel %vm184, %v4779, 0.0
    %4786 = vadd.xlane.f32.xlu0 %v4785
    %v4787 = vpop.xlane.xlu0 %4786
    %v4788 = vsel %vm184, %v4780, 0.0
    %4789 = vadd.xlane.f32.xlu0 %v4788
    %v4790 = vpop.xlane.xlu0 %4789
    %v4791 = vsel %vm184, %v4781, 0.0
    %4792 = vadd.xlane.f32.xlu0 %v4791
    %v4793 = vpop.xlane.xlu0 %4792
    %v4794 = vmul.f32 %v4784, %v4571
    %v4795 = vmul.f32 %v4787, %v4571
    %v4796 = vmul.f32 %v4790, %v4571
    %v4797 = vmul.f32 %v4793, %v4571
    %v4798 = vadd.f32 %v4794, 1e-05
    %v4799 = vadd.f32 %v4795, 1e-05
    %v4800 = vadd.f32 %v4796, 1e-05
    %v4801 = vadd.f32 %v4797, 1e-05
    %v4802 = vrsqrt.pop %v4798
    %v4803 = vmul.f32 %v4802, %v4798
    %v4804 = vmul.f32 %v4803, %v4802
    %v4805 = vmul.f32 0.5, %v4804
    %v4806 = vsub.f32 1.5, %v4805
    %v4807 = vmul.f32 %v4802, %v4806
    %vm4808 = vweird.f32 %v4798
    %vm4809 = vweird.f32 %v4802
    %vm4810 = vmor %vm4808, %vm4809
    %v4811 = vsel %vm4810, %v4802, %v4807
    %v4812 = vrsqrt.pop %v4799
    %v4813 = vmul.f32 %v4812, %v4799
    %v4814 = vmul.f32 %v4813, %v4812
    %v4815 = vmul.f32 0.5, %v4814
    %v4816 = vsub.f32 1.5, %v4815
    %v4817 = vmul.f32 %v4812, %v4816
    %vm4818 = vweird.f32 %v4799
    %vm4819 = vweird.f32 %v4812
    %vm4820 = vmor %vm4818, %vm4819
    %v4821 = vsel %vm4820, %v4812, %v4817
    %v4822 = vrsqrt.pop %v4800
    %v4823 = vmul.f32 %v4822, %v4800
    %v4824 = vmul.f32 %v4823, %v4822
    %v4825 = vmul.f32 0.5, %v4824
    %v4826 = vsub.f32 1.5, %v4825
    %v4827 = vmul.f32 %v4822, %v4826
    %vm4828 = vweird.f32 %v4800
    %vm4829 = vweird.f32 %v4822
    %vm4830 = vmor %vm4828, %vm4829
    %v4831 = vsel %vm4830, %v4822, %v4827
    %v4832 = vrsqrt.pop %v4801
    %v4833 = vmul.f32 %v4832, %v4801
    %v4834 = vmul.f32 %v4833, %v4832
    %v4835 = vmul.f32 0.5, %v4834
    %v4836 = vsub.f32 1.5, %v4835
    %v4837 = vmul.f32 %v4832, %v4836
    %vm4838 = vweird.f32 %v4801
    %vm4839 = vweird.f32 %v4832
    %vm4840 = vmor %vm4838, %vm4839
    %v4841 = vsel %vm4840, %v4832, %v4837
    %v4842 = vmul.f32 %v4774, %v4811
    %v4843 = vmul.f32 %v4775, %v4821
    %v4844 = vmul.f32 %v4776, %v4831
    %v4845 = vmul.f32 %v4777, %v4841
    %v4847 = vperm.slane %v4756, 0
    %v4849 = vmul.f32 %v4842, %v4847
    %v4850 = vmul.f32 %v4843, %v4847
    %v4851 = vmul.f32 %v4844, %v4847
    %v4852 = vmul.f32 %v4845, %v4847
    %v4854 = vperm.slane %v4757, 0
    %v4856 = vadd.f32 %v4849, %v4854
    %v4857 = vadd.f32 %v4850, %v4854
    %v4858 = vadd.f32 %v4851, %v4854
    %v4859 = vadd.f32 %v4852, %v4854
    %s4860 = scalar_lea.vmem %s3, 32
    %v4861 = vld [vmem:[%s4860] sm:$0xff]
    %v4862 = vld [vmem:[%s4860 + $0x8] sm:$0xff]
    %v4863 = vld [vmem:[%s4860 + $0x10] sm:$0xff]
    %v4864 = vld [vmem:[%s4860 + $0x18] sm:$0xff]
    %v4865 = vpack.c.bf16 %v4857, %v4856
    %v4866 = vpack.c.bf16 %v4859, %v4858
    %v4867 = vpack.c.bf16 %v4862, %v4861
    %v4868 = vpack.c.bf16 %v4864, %v4863
    %v4870 = vsel %vm184, %v4865, 0
    %v4873 = vsel %vm184, %v4866, 0
    %4875 = vmatpush.bf16.msra.mxu0 0
    %4876 = vmatpush.bf16.msra.mxu0 0
    %4877 = vmatpush.bf16.msra.mxu0 0
    %4878 = vmatpush.bf16.msra.mxu0 0
    %4879 = vmatpush.bf16.msra.mxu0 0
    %4880 = vmatpush.bf16.msra.mxu0 0
    %4881 = vmatpush.bf16.msra.mxu0 %v4868
    %4882 = vmatpush.bf16.msra.mxu0 %v4867
    %4883 = vmatmul.bf16.gmra.mxu0 %v4870
    %v4884 = vpop.f32.mrf.mxu0
    %v4885 = vadd.f32 0.0, %v4884
    %v4886 = vpop.f32.mrf.mxu0
    %v4887 = vadd.f32 0.0, %v4886
    %4888 = vmatmul.bf16.gmra.mxu0 %v4873
    %v4889 = vpop.f32.mrf.mxu0
    %v4890 = vadd.f32 0.0, %v4889
    %v4891 = vpop.f32.mrf.mxu0
    %v4892 = vadd.f32 0.0, %v4891
    %4893 = vdwg.mxu0
    %4894 = vxpose.xlu0.b32.start [1/16] %v4885, 128
    %4895 = vxpose.xlu0.b32.cont [2/16] %v4887, 128
    %4896 = vxpose.xlu0.b32.cont [3/16] 0.0, 128
    %4897 = vxpose.xlu0.b32.cont [4/16] 0.0, 128
    %4898 = vxpose.xlu0.b32.cont [5/16] 0.0, 128
    %4899 = vxpose.xlu0.b32.cont [6/16] 0.0, 128
    %4900 = vxpose.xlu0.b32.cont [7/16] 0.0, 128
    %4901 = vxpose.xlu0.b32.cont [8/16] 0.0, 128
    %4902 = vxpose.xlu0.b32.cont [9/16] 0.0, 128
    %4903 = vxpose.xlu0.b32.cont [10/16] 0.0, 128
    %4904 = vxpose.xlu0.b32.cont [11/16] 0.0, 128
    %4905 = vxpose.xlu0.b32.cont [12/16] 0.0, 128
    %4906 = vxpose.xlu0.b32.cont [13/16] 0.0, 128
    %4907 = vxpose.xlu0.b32.cont [14/16] 0.0, 128
    %4908 = vxpose.xlu0.b32.cont [15/16] 0.0, 128
    %4909 = vxpose.xlu0.b32.end [16/16] 0.0, 128
    %v4910 = vpop.trf.xlu0
    %v4911 = vpop.trf.xlu0
    %v4912 = vpop.trf.xlu0
    %v4913 = vpop.trf.xlu0
    %v4914 = vpop.trf.xlu0
    %v4915 = vpop.trf.xlu0
    %v4916 = vpop.trf.xlu0
    %v4917 = vpop.trf.xlu0
    %v4918 = vpop.trf.xlu0
    %v4919 = vpop.trf.xlu0
    %v4920 = vpop.trf.xlu0
    %v4921 = vpop.trf.xlu0
    %v4922 = vpop.trf.xlu0
    %v4923 = vpop.trf.xlu0
    %v4924 = vpop.trf.xlu0
    %v4925 = vpop.trf.xlu0
    %4926 = vxpose.xlu0.b32.start [1/16] %v4890, 128
    %4927 = vxpose.xlu0.b32.cont [2/16] %v4892, 128
    %4928 = vxpose.xlu0.b32.cont [3/16] 0.0, 128
    %4929 = vxpose.xlu0.b32.cont [4/16] 0.0, 128
    %4930 = vxpose.xlu0.b32.cont [5/16] 0.0, 128
    %4931 = vxpose.xlu0.b32.cont [6/16] 0.0, 128
    %4932 = vxpose.xlu0.b32.cont [7/16] 0.0, 128
    %4933 = vxpose.xlu0.b32.cont [8/16] 0.0, 128
    %4934 = vxpose.xlu0.b32.cont [9/16] 0.0, 128
    %4935 = vxpose.xlu0.b32.cont [10/16] 0.0, 128
    %4936 = vxpose.xlu0.b32.cont [11/16] 0.0, 128
    %4937 = vxpose.xlu0.b32.cont [12/16] 0.0, 128
    %4938 = vxpose.xlu0.b32.cont [13/16] 0.0, 128
    %4939 = vxpose.xlu0.b32.cont [14/16] 0.0, 128
    %4940 = vxpose.xlu0.b32.cont [15/16] 0.0, 128
    %4941 = vxpose.xlu0.b32.end [16/16] 0.0, 128
    %v4942 = vpop.trf.xlu0
    %v4943 = vpop.trf.xlu0
    %v4944 = vpop.trf.xlu0
    %v4945 = vpop.trf.xlu0
    %v4946 = vpop.trf.xlu0
    %v4947 = vpop.trf.xlu0
    %v4948 = vpop.trf.xlu0
    %v4949 = vpop.trf.xlu0
    %v4950 = vpop.trf.xlu0
    %v4951 = vpop.trf.xlu0
    %v4952 = vpop.trf.xlu0
    %v4953 = vpop.trf.xlu0
    %v4954 = vpop.trf.xlu0
    %v4955 = vpop.trf.xlu0
    %v4956 = vpop.trf.xlu0
    %v4957 = vpop.trf.xlu0
    %4958 = vxpose.xlu0.b32.start [1/16] %v4910, 128
    %4959 = vxpose.xlu0.b32.cont [2/16] 0.0, 128
    %4960 = vxpose.xlu0.b32.cont [3/16] 0.0, 128
    %4961 = vxpose.xlu0.b32.cont [4/16] 0.0, 128
    %4962 = vxpose.xlu0.b32.cont [5/16] 0.0, 128
    %4963 = vxpose.xlu0.b32.cont [6/16] 0.0, 128
    %4964 = vxpose.xlu0.b32.cont [7/16] 0.0, 128
    %4965 = vxpose.xlu0.b32.cont [8/16] 0.0, 128
    %4966 = vxpose.xlu0.b32.cont [9/16] 0.0, 128
    %4967 = vxpose.xlu0.b32.cont [10/16] 0.0, 128
    %4968 = vxpose.xlu0.b32.cont [11/16] 0.0, 128
    %4969 = vxpose.xlu0.b32.cont [12/16] 0.0, 128
    %4970 = vxpose.xlu0.b32.cont [13/16] 0.0, 128
    %4971 = vxpose.xlu0.b32.cont [14/16] 0.0, 128
    %4972 = vxpose.xlu0.b32.cont [15/16] 0.0, 128
    %4973 = vxpose.xlu0.b32.end [16/16] 0.0, 128
    %v4974 = vpop.trf.xlu0
    %v4975 = vpop.trf.xlu0
    %v4976 = vpop.trf.xlu0
    %v4977 = vpop.trf.xlu0
    %v4978 = vpop.trf.xlu0
    %v4979 = vpop.trf.xlu0
    %v4980 = vpop.trf.xlu0
    %v4981 = vpop.trf.xlu0
    %v4982 = vpop.trf.xlu0
    %v4983 = vpop.trf.xlu0
    %v4984 = vpop.trf.xlu0
    %v4985 = vpop.trf.xlu0
    %v4986 = vpop.trf.xlu0
    %v4987 = vpop.trf.xlu0
    %v4988 = vpop.trf.xlu0
    %v4989 = vpop.trf.xlu0
    %4990 = vxpose.xlu0.b32.start [1/16] %v4911, 128
    %4991 = vxpose.xlu0.b32.cont [2/16] 0.0, 128
    %4992 = vxpose.xlu0.b32.cont [3/16] 0.0, 128
    %4993 = vxpose.xlu0.b32.cont [4/16] 0.0, 128
    %4994 = vxpose.xlu0.b32.cont [5/16] 0.0, 128
    %4995 = vxpose.xlu0.b32.cont [6/16] 0.0, 128
    %4996 = vxpose.xlu0.b32.cont [7/16] 0.0, 128
    %4997 = vxpose.xlu0.b32.cont [8/16] 0.0, 128
    %4998 = vxpose.xlu0.b32.cont [9/16] 0.0, 128
    %4999 = vxpose.xlu0.b32.cont [10/16] 0.0, 128
    %5000 = vxpose.xlu0.b32.cont [11/16] 0.0, 128
    %5001 = vxpose.xlu0.b32.cont [12/16] 0.0, 128
    %5002 = vxpose.xlu0.b32.cont [13/16] 0.0, 128
    %5003 = vxpose.xlu0.b32.cont [14/16] 0.0, 128
    %5004 = vxpose.xlu0.b32.cont [15/16] 0.0, 128
    %5005 = vxpose.xlu0.b32.end [16/16] 0.0, 128
    %v5006 = vpop.trf.xlu0
    %v5007 = vpop.trf.xlu0
    %v5008 = vpop.trf.xlu0
    %v5009 = vpop.trf.xlu0
    %v5010 = vpop.trf.xlu0
    %v5011 = vpop.trf.xlu0
    %v5012 = vpop.trf.xlu0
    %v5013 = vpop.trf.xlu0
    %v5014 = vpop.trf.xlu0
    %v5015 = vpop.trf.xlu0
    %v5016 = vpop.trf.xlu0
    %v5017 = vpop.trf.xlu0
    %v5018 = vpop.trf.xlu0
    %v5019 = vpop.trf.xlu0
    %v5020 = vpop.trf.xlu0
    %v5021 = vpop.trf.xlu0
    %5022 = vxpose.xlu0.b32.start [1/16] %v4912, 128
    %5023 = vxpose.xlu0.b32.cont [2/16] 0.0, 128
    %5024 = vxpose.xlu0.b32.cont [3/16] 0.0, 128
    %5025 = vxpose.xlu0.b32.cont [4/16] 0.0, 128
    %5026 = vxpose.xlu0.b32.cont [5/16] 0.0, 128
    %5027 = vxpose.xlu0.b32.cont [6/16] 0.0, 128
    %5028 = vxpose.xlu0.b32.cont [7/16] 0.0, 128
    %5029 = vxpose.xlu0.b32.cont [8/16] 0.0, 128
    %5030 = vxpose.xlu0.b32.cont [9/16] 0.0, 128
    %5031 = vxpose.xlu0.b32.cont [10/16] 0.0, 128
    %5032 = vxpose.xlu0.b32.cont [11/16] 0.0, 128
    %5033 = vxpose.xlu0.b32.cont [12/16] 0.0, 128
    %5034 = vxpose.xlu0.b32.cont [13/16] 0.0, 128
    %5035 = vxpose.xlu0.b32.cont [14/16] 0.0, 128
    %5036 = vxpose.xlu0.b32.cont [15/16] 0.0, 128
    %5037 = vxpose.xlu0.b32.end [16/16] 0.0, 128
    %v5038 = vpop.trf.xlu0
    %v5039 = vpop.trf.xlu0
    %v5040 = vpop.trf.xlu0
    %v5041 = vpop.trf.xlu0
    %v5042 = vpop.trf.xlu0
    %v5043 = vpop.trf.xlu0
    %v5044 = vpop.trf.xlu0
    %v5045 = vpop.trf.xlu0
    %v5046 = vpop.trf.xlu0
    %v5047 = vpop.trf.xlu0
    %v5048 = vpop.trf.xlu0
    %v5049 = vpop.trf.xlu0
    %v5050 = vpop.trf.xlu0
    %v5051 = vpop.trf.xlu0
    %v5052 = vpop.trf.xlu0
    %v5053 = vpop.trf.xlu0
    %5054 = vxpose.xlu0.b32.start [1/16] %v4913, 128
    %5055 = vxpose.xlu0.b32.cont [2/16] 0.0, 128
    %5056 = vxpose.xlu0.b32.cont [3/16] 0.0, 128
    %5057 = vxpose.xlu0.b32.cont [4/16] 0.0, 128
    %5058 = vxpose.xlu0.b32.cont [5/16] 0.0, 128
    %5059 = vxpose.xlu0.b32.cont [6/16] 0.0, 128
    %5060 = vxpose.xlu0.b32.cont [7/16] 0.0, 128
    %5061 = vxpose.xlu0.b32.cont [8/16] 0.0, 128
    %5062 = vxpose.xlu0.b32.cont [9/16] 0.0, 128
    %5063 = vxpose.xlu0.b32.cont [10/16] 0.0, 128
    %5064 = vxpose.xlu0.b32.cont [11/16] 0.0, 128
    %5065 = vxpose.xlu0.b32.cont [12/16] 0.0, 128
    %5066 = vxpose.xlu0.b32.cont [13/16] 0.0, 128
    %5067 = vxpose.xlu0.b32.cont [14/16] 0.0, 128
    %5068 = vxpose.xlu0.b32.cont [15/16] 0.0, 128
    %5069 = vxpose.xlu0.b32.end [16/16] 0.0, 128
    %v5070 = vpop.trf.xlu0
    %v5071 = vpop.trf.xlu0
    %v5072 = vpop.trf.xlu0
    %v5073 = vpop.trf.xlu0
    %v5074 = vpop.trf.xlu0
    %v5075 = vpop.trf.xlu0
    %v5076 = vpop.trf.xlu0
    %v5077 = vpop.trf.xlu0
    %v5078 = vpop.trf.xlu0
    %v5079 = vpop.trf.xlu0
    %v5080 = vpop.trf.xlu0
    %v5081 = vpop.trf.xlu0
    %v5082 = vpop.trf.xlu0
    %v5083 = vpop.trf.xlu0
    %v5084 = vpop.trf.xlu0
    %v5085 = vpop.trf.xlu0
    %5086 = vxpose.xlu0.b32.start [1/16] %v4942, 128
    %5087 = vxpose.xlu0.b32.cont [2/16] 0.0, 128
    %5088 = vxpose.xlu0.b32.cont [3/16] 0.0, 128
    %5089 = vxpose.xlu0.b32.cont [4/16] 0.0, 128
    %5090 = vxpose.xlu0.b32.cont [5/16] 0.0, 128
    %5091 = vxpose.xlu0.b32.cont [6/16] 0.0, 128
    %5092 = vxpose.xlu0.b32.cont [7/16] 0.0, 128
    %5093 = vxpose.xlu0.b32.cont [8/16] 0.0, 128
    %5094 = vxpose.xlu0.b32.cont [9/16] 0.0, 128
    %5095 = vxpose.xlu0.b32.cont [10/16] 0.0, 128
    %5096 = vxpose.xlu0.b32.cont [11/16] 0.0, 128
    %5097 = vxpose.xlu0.b32.cont [12/16] 0.0, 128
    %5098 = vxpose.xlu0.b32.cont [13/16] 0.0, 128
    %5099 = vxpose.xlu0.b32.cont [14/16] 0.0, 128
    %5100 = vxpose.xlu0.b32.cont [15/16] 0.0, 128
    %5101 = vxpose.xlu0.b32.end [16/16] 0.0, 128
    %v5102 = vpop.trf.xlu0
    %v5103 = vpop.trf.xlu0
    %v5104 = vpop.trf.xlu0
    %v5105 = vpop.trf.xlu0
    %v5106 = vpop.trf.xlu0
    %v5107 = vpop.trf.xlu0
    %v5108 = vpop.trf.xlu0
    %v5109 = vpop.trf.xlu0
    %v5110 = vpop.trf.xlu0
    %v5111 = vpop.trf.xlu0
    %v5112 = vpop.trf.xlu0
    %v5113 = vpop.trf.xlu0
    %v5114 = vpop.trf.xlu0
    %v5115 = vpop.trf.xlu0
    %v5116 = vpop.trf.xlu0
    %v5117 = vpop.trf.xlu0
    %5118 = vxpose.xlu0.b32.start [1/16] %v4943, 128
    %5119 = vxpose.xlu0.b32.cont [2/16] 0.0, 128
    %5120 = vxpose.xlu0.b32.cont [3/16] 0.0, 128
    %5121 = vxpose.xlu0.b32.cont [4/16] 0.0, 128
    %5122 = vxpose.xlu0.b32.cont [5/16] 0.0, 128
    %5123 = vxpose.xlu0.b32.cont [6/16] 0.0, 128
    %5124 = vxpose.xlu0.b32.cont [7/16] 0.0, 128
    %5125 = vxpose.xlu0.b32.cont [8/16] 0.0, 128
    %5126 = vxpose.xlu0.b32.cont [9/16] 0.0, 128
    %5127 = vxpose.xlu0.b32.cont [10/16] 0.0, 128
    %5128 = vxpose.xlu0.b32.cont [11/16] 0.0, 128
    %5129 = vxpose.xlu0.b32.cont [12/16] 0.0, 128
    %5130 = vxpose.xlu0.b32.cont [13/16] 0.0, 128
    %5131 = vxpose.xlu0.b32.cont [14/16] 0.0, 128
    %5132 = vxpose.xlu0.b32.cont [15/16] 0.0, 128
    %5133 = vxpose.xlu0.b32.end [16/16] 0.0, 128
    %v5134 = vpop.trf.xlu0
    %v5135 = vpop.trf.xlu0
    %v5136 = vpop.trf.xlu0
    %v5137 = vpop.trf.xlu0
    %v5138 = vpop.trf.xlu0
    %v5139 = vpop.trf.xlu0
    %v5140 = vpop.trf.xlu0
    %v5141 = vpop.trf.xlu0
    %v5142 = vpop.trf.xlu0
    %v5143 = vpop.trf.xlu0
    %v5144 = vpop.trf.xlu0
    %v5145 = vpop.trf.xlu0
    %v5146 = vpop.trf.xlu0
    %v5147 = vpop.trf.xlu0
    %v5148 = vpop.trf.xlu0
    %v5149 = vpop.trf.xlu0
    %5150 = vxpose.xlu0.b32.start [1/16] %v4944, 128
    %5151 = vxpose.xlu0.b32.cont [2/16] 0.0, 128
    %5152 = vxpose.xlu0.b32.cont [3/16] 0.0, 128
    %5153 = vxpose.xlu0.b32.cont [4/16] 0.0, 128
    %5154 = vxpose.xlu0.b32.cont [5/16] 0.0, 128
    %5155 = vxpose.xlu0.b32.cont [6/16] 0.0, 128
    %5156 = vxpose.xlu0.b32.cont [7/16] 0.0, 128
    %5157 = vxpose.xlu0.b32.cont [8/16] 0.0, 128
    %5158 = vxpose.xlu0.b32.cont [9/16] 0.0, 128
    %5159 = vxpose.xlu0.b32.cont [10/16] 0.0, 128
    %5160 = vxpose.xlu0.b32.cont [11/16] 0.0, 128
    %5161 = vxpose.xlu0.b32.cont [12/16] 0.0, 128
    %5162 = vxpose.xlu0.b32.cont [13/16] 0.0, 128
    %5163 = vxpose.xlu0.b32.cont [14/16] 0.0, 128
    %5164 = vxpose.xlu0.b32.cont [15/16] 0.0, 128
    %5165 = vxpose.xlu0.b32.end [16/16] 0.0, 128
    %v5166 = vpop.trf.xlu0
    %v5167 = vpop.trf.xlu0
    %v5168 = vpop.trf.xlu0
    %v5169 = vpop.trf.xlu0
    %v5170 = vpop.trf.xlu0
    %v5171 = vpop.trf.xlu0
    %v5172 = vpop.trf.xlu0
    %v5173 = vpop.trf.xlu0
    %v5174 = vpop.trf.xlu0
    %v5175 = vpop.trf.xlu0
    %v5176 = vpop.trf.xlu0
    %v5177 = vpop.trf.xlu0
    %v5178 = vpop.trf.xlu0
    %v5179 = vpop.trf.xlu0
    %v5180 = vpop.trf.xlu0
    %v5181 = vpop.trf.xlu0
    %5182 = vxpose.xlu0.b32.start [1/16] %v4945, 128
    %5183 = vxpose.xlu0.b32.cont [2/16] 0.0, 128
    %5184 = vxpose.xlu0.b32.cont [3/16] 0.0, 128
    %5185 = vxpose.xlu0.b32.cont [4/16] 0.0, 128
    %5186 = vxpose.xlu0.b32.cont [5/16] 0.0, 128
    %5187 = vxpose.xlu0.b32.cont [6/16] 0.0, 128
    %5188 = vxpose.xlu0.b32.cont [7/16] 0.0, 128
    %5189 = vxpose.xlu0.b32.cont [8/16] 0.0, 128
    %5190 = vxpose.xlu0.b32.cont [9/16] 0.0, 128
    %5191 = vxpose.xlu0.b32.cont [10/16] 0.0, 128
    %5192 = vxpose.xlu0.b32.cont [11/16] 0.0, 128
    %5193 = vxpose.xlu0.b32.cont [12/16] 0.0, 128
    %5194 = vxpose.xlu0.b32.cont [13/16] 0.0, 128
    %5195 = vxpose.xlu0.b32.cont [14/16] 0.0, 128
    %5196 = vxpose.xlu0.b32.cont [15/16] 0.0, 128
    %5197 = vxpose.xlu0.b32.end [16/16] 0.0, 128
    %v5198 = vpop.trf.xlu0
    %v5199 = vpop.trf.xlu0
    %v5200 = vpop.trf.xlu0
    %v5201 = vpop.trf.xlu0
    %v5202 = vpop.trf.xlu0
    %v5203 = vpop.trf.xlu0
    %v5204 = vpop.trf.xlu0
    %v5205 = vpop.trf.xlu0
    %v5206 = vpop.trf.xlu0
    %v5207 = vpop.trf.xlu0
    %v5208 = vpop.trf.xlu0
    %v5209 = vpop.trf.xlu0
    %v5210 = vpop.trf.xlu0
    %v5211 = vpop.trf.xlu0
    %v5212 = vpop.trf.xlu0
    %v5213 = vpop.trf.xlu0
    %s5214 = scalar_lea.vmem %s4, 32
    %v5215 = vld [vmem:[%s5214] sm:$0xff]
    %v5216 = vld [vmem:[%s5214 + $0x8] sm:$0xff]
    %v5217 = vld [vmem:[%s5214 + $0x10] sm:$0xff]
    %v5218 = vld [vmem:[%s5214 + $0x18] sm:$0xff]
    %v5219 = vpack.c.bf16 %v5216, %v5215
    %v5220 = vpack.c.bf16 %v5218, %v5217
    %5221 = vmatpush.bf16.msra.mxu0 0
    %5222 = vmatpush.bf16.msra.mxu0 0
    %5223 = vmatpush.bf16.msra.mxu0 0
    %5224 = vmatpush.bf16.msra.mxu0 0
    %5225 = vmatpush.bf16.msra.mxu0 0
    %5226 = vmatpush.bf16.msra.mxu0 0
    %5227 = vmatpush.bf16.msra.mxu0 %v5220
    %5228 = vmatpush.bf16.msra.mxu0 %v5219
    %5229 = vmatmul.bf16.gmra.mxu0 %v4870
    %v5230 = vpop.f32.mrf.mxu0
    %v5231 = vadd.f32 0.0, %v5230
    %v5232 = vpop.f32.mrf.mxu0
    %v5233 = vadd.f32 0.0, %v5232
    %5234 = vmatmul.bf16.gmra.mxu0 %v4873
    %v5235 = vpop.f32.mrf.mxu0
    %v5236 = vadd.f32 0.0, %v5235
    %v5237 = vpop.f32.mrf.mxu0
    %v5238 = vadd.f32 0.0, %v5237
    %5239 = vdwg.mxu0
    %5240 = vxpose.xlu0.b32.start [1/16] %v5231, 128
    %5241 = vxpose.xlu0.b32.cont [2/16] %v5233, 128
    %5242 = vxpose.xlu0.b32.cont [3/16] 0.0, 128
    %5243 = vxpose.xlu0.b32.cont [4/16] 0.0, 128
    %5244 = vxpose.xlu0.b32.cont [5/16] 0.0, 128
    %5245 = vxpose.xlu0.b32.cont [6/16] 0.0, 128
    %5246 = vxpose.xlu0.b32.cont [7/16] 0.0, 128
    %5247 = vxpose.xlu0.b32.cont [8/16] 0.0, 128
    %5248 = vxpose.xlu0.b32.cont [9/16] 0.0, 128
    %5249 = vxpose.xlu0.b32.cont [10/16] 0.0, 128
    %5250 = vxpose.xlu0.b32.cont [11/16] 0.0, 128
    %5251 = vxpose.xlu0.b32.cont [12/16] 0.0, 128
    %5252 = vxpose.xlu0.b32.cont [13/16] 0.0, 128
    %5253 = vxpose.xlu0.b32.cont [14/16] 0.0, 128
    %5254 = vxpose.xlu0.b32.cont [15/16] 0.0, 128
    %5255 = vxpose.xlu0.b32.end [16/16] 0.0, 128
    %v5256 = vpop.trf.xlu0
    %v5257 = vpop.trf.xlu0
    %v5258 = vpop.trf.xlu0
    %v5259 = vpop.trf.xlu0
    %v5260 = vpop.trf.xlu0
    %v5261 = vpop.trf.xlu0
    %v5262 = vpop.trf.xlu0
    %v5263 = vpop.trf.xlu0
    %v5264 = vpop.trf.xlu0
    %v5265 = vpop.trf.xlu0
    %v5266 = vpop.trf.xlu0
    %v5267 = vpop.trf.xlu0
    %v5268 = vpop.trf.xlu0
    %v5269 = vpop.trf.xlu0
    %v5270 = vpop.trf.xlu0
    %v5271 = vpop.trf.xlu0
    %5272 = vxpose.xlu0.b32.start [1/16] %v5236, 128
    %5273 = vxpose.xlu0.b32.cont [2/16] %v5238, 128
    %5274 = vxpose.xlu0.b32.cont [3/16] 0.0, 128
    %5275 = vxpose.xlu0.b32.cont [4/16] 0.0, 128
    %5276 = vxpose.xlu0.b32.cont [5/16] 0.0, 128
    %5277 = vxpose.xlu0.b32.cont [6/16] 0.0, 128
    %5278 = vxpose.xlu0.b32.cont [7/16] 0.0, 128
    %5279 = vxpose.xlu0.b32.cont [8/16] 0.0, 128
    %5280 = vxpose.xlu0.b32.cont [9/16] 0.0, 128
    %5281 = vxpose.xlu0.b32.cont [10/16] 0.0, 128
    %5282 = vxpose.xlu0.b32.cont [11/16] 0.0, 128
    %5283 = vxpose.xlu0.b32.cont [12/16] 0.0, 128
    %5284 = vxpose.xlu0.b32.cont [13/16] 0.0, 128
    %5285 = vxpose.xlu0.b32.cont [14/16] 0.0, 128
    %5286 = vxpose.xlu0.b32.cont [15/16] 0.0, 128
    %5287 = vxpose.xlu0.b32.end [16/16] 0.0, 128
    %v5288 = vpop.trf.xlu0
    %v5289 = vpop.trf.xlu0
    %v5290 = vpop.trf.xlu0
    %v5291 = vpop.trf.xlu0
    %v5292 = vpop.trf.xlu0
    %v5293 = vpop.trf.xlu0
    %v5294 = vpop.trf.xlu0
    %v5295 = vpop.trf.xlu0
    %v5296 = vpop.trf.xlu0
    %v5297 = vpop.trf.xlu0
    %v5298 = vpop.trf.xlu0
    %v5299 = vpop.trf.xlu0
    %v5300 = vpop.trf.xlu0
    %v5301 = vpop.trf.xlu0
    %v5302 = vpop.trf.xlu0
    %v5303 = vpop.trf.xlu0
    %5304 = vxpose.xlu0.b32.start [1/16] %v5256, 128
    %5305 = vxpose.xlu0.b32.cont [2/16] 0.0, 128
    %5306 = vxpose.xlu0.b32.cont [3/16] 0.0, 128
    %5307 = vxpose.xlu0.b32.cont [4/16] 0.0, 128
    %5308 = vxpose.xlu0.b32.cont [5/16] 0.0, 128
    %5309 = vxpose.xlu0.b32.cont [6/16] 0.0, 128
    %5310 = vxpose.xlu0.b32.cont [7/16] 0.0, 128
    %5311 = vxpose.xlu0.b32.cont [8/16] 0.0, 128
    %5312 = vxpose.xlu0.b32.cont [9/16] 0.0, 128
    %5313 = vxpose.xlu0.b32.cont [10/16] 0.0, 128
    %5314 = vxpose.xlu0.b32.cont [11/16] 0.0, 128
    %5315 = vxpose.xlu0.b32.cont [12/16] 0.0, 128
    %5316 = vxpose.xlu0.b32.cont [13/16] 0.0, 128
    %5317 = vxpose.xlu0.b32.cont [14/16] 0.0, 128
    %5318 = vxpose.xlu0.b32.cont [15/16] 0.0, 128
    %5319 = vxpose.xlu0.b32.end [16/16] 0.0, 128
    %v5320 = vpop.trf.xlu0
    %v5321 = vpop.trf.xlu0
    %v5322 = vpop.trf.xlu0
    %v5323 = vpop.trf.xlu0
    %v5324 = vpop.trf.xlu0
    %v5325 = vpop.trf.xlu0
    %v5326 = vpop.trf.xlu0
    %v5327 = vpop.trf.xlu0
    %v5328 = vpop.trf.xlu0
    %v5329 = vpop.trf.xlu0
    %v5330 = vpop.trf.xlu0
    %v5331 = vpop.trf.xlu0
    %v5332 = vpop.trf.xlu0
    %v5333 = vpop.trf.xlu0
    %v5334 = vpop.trf.xlu0
    %v5335 = vpop.trf.xlu0
    %5336 = vxpose.xlu0.b32.start [1/16] %v5257, 128
    %5337 = vxpose.xlu0.b32.cont [2/16] 0.0, 128
    %5338 = vxpose.xlu0.b32.cont [3/16] 0.0, 128
    %5339 = vxpose.xlu0.b32.cont [4/16] 0.0, 128
    %5340 = vxpose.xlu0.b32.cont [5/16] 0.0, 128
    %5341 = vxpose.xlu0.b32.cont [6/16] 0.0, 128
    %5342 = vxpose.xlu0.b32.cont [7/16] 0.0, 128
    %5343 = vxpose.xlu0.b32.cont [8/16] 0.0, 128
    %5344 = vxpose.xlu0.b32.cont [9/16] 0.0, 128
    %5345 = vxpose.xlu0.b32.cont [10/16] 0.0, 128
    %5346 = vxpose.xlu0.b32.cont [11/16] 0.0, 128
    %5347 = vxpose.xlu0.b32.cont [12/16] 0.0, 128
    %5348 = vxpose.xlu0.b32.cont [13/16] 0.0, 128
    %5349 = vxpose.xlu0.b32.cont [14/16] 0.0, 128
    %5350 = vxpose.xlu0.b32.cont [15/16] 0.0, 128
    %5351 = vxpose.xlu0.b32.end [16/16] 0.0, 128
    %v5352 = vpop.trf.xlu0
    %v5353 = vpop.trf.xlu0
    %v5354 = vpop.trf.xlu0
    %v5355 = vpop.trf.xlu0
    %v5356 = vpop.trf.xlu0
    %v5357 = vpop.trf.xlu0
    %v5358 = vpop.trf.xlu0
    %v5359 = vpop.trf.xlu0
    %v5360 = vpop.trf.xlu0
    %v5361 = vpop.trf.xlu0
    %v5362 = vpop.trf.xlu0
    %v5363 = vpop.trf.xlu0
    %v5364 = vpop.trf.xlu0
    %v5365 = vpop.trf.xlu0
    %v5366 = vpop.trf.xlu0
    %v5367 = vpop.trf.xlu0
    %5368 = vxpose.xlu0.b32.start [1/16] %v5258, 128
    %5369 = vxpose.xlu0.b32.cont [2/16] 0.0, 128
    %5370 = vxpose.xlu0.b32.cont [3/16] 0.0, 128
    %5371 = vxpose.xlu0.b32.cont [4/16] 0.0, 128
    %5372 = vxpose.xlu0.b32.cont [5/16] 0.0, 128
    %5373 = vxpose.xlu0.b32.cont [6/16] 0.0, 128
    %5374 = vxpose.xlu0.b32.cont [7/16] 0.0, 128
    %5375 = vxpose.xlu0.b32.cont [8/16] 0.0, 128
    %5376 = vxpose.xlu0.b32.cont [9/16] 0.0, 128
    %5377 = vxpose.xlu0.b32.cont [10/16] 0.0, 128
    %5378 = vxpose.xlu0.b32.cont [11/16] 0.0, 128
    %5379 = vxpose.xlu0.b32.cont [12/16] 0.0, 128
    %5380 = vxpose.xlu0.b32.cont [13/16] 0.0, 128
    %5381 = vxpose.xlu0.b32.cont [14/16] 0.0, 128
    %5382 = vxpose.xlu0.b32.cont [15/16] 0.0, 128
    %5383 = vxpose.xlu0.b32.end [16/16] 0.0, 128
    %v5384 = vpop.trf.xlu0
    %v5385 = vpop.trf.xlu0
    %v5386 = vpop.trf.xlu0
    %v5387 = vpop.trf.xlu0
    %v5388 = vpop.trf.xlu0
    %v5389 = vpop.trf.xlu0
    %v5390 = vpop.trf.xlu0
    %v5391 = vpop.trf.xlu0
    %v5392 = vpop.trf.xlu0
    %v5393 = vpop.trf.xlu0
    %v5394 = vpop.trf.xlu0
    %v5395 = vpop.trf.xlu0
    %v5396 = vpop.trf.xlu0
    %v5397 = vpop.trf.xlu0
    %v5398 = vpop.trf.xlu0
    %v5399 = vpop.trf.xlu0
    %5400 = vxpose.xlu0.b32.start [1/16] %v5259, 128
    %5401 = vxpose.xlu0.b32.cont [2/16] 0.0, 128
    %5402 = vxpose.xlu0.b32.cont [3/16] 0.0, 128
    %5403 = vxpose.xlu0.b32.cont [4/16] 0.0, 128
    %5404 = vxpose.xlu0.b32.cont [5/16] 0.0, 128
    %5405 = vxpose.xlu0.b32.cont [6/16] 0.0, 128
    %5406 = vxpose.xlu0.b32.cont [7/16] 0.0, 128
    %5407 = vxpose.xlu0.b32.cont [8/16] 0.0, 128
    %5408 = vxpose.xlu0.b32.cont [9/16] 0.0, 128
    %5409 = vxpose.xlu0.b32.cont [10/16] 0.0, 128
    %5410 = vxpose.xlu0.b32.cont [11/16] 0.0, 128
    %5411 = vxpose.xlu0.b32.cont [12/16] 0.0, 128
    %5412 = vxpose.xlu0.b32.cont [13/16] 0.0, 128
    %5413 = vxpose.xlu0.b32.cont [14/16] 0.0, 128
    %5414 = vxpose.xlu0.b32.cont [15/16] 0.0, 128
    %5415 = vxpose.xlu0.b32.end [16/16] 0.0, 128
    %v5416 = vpop.trf.xlu0
    %v5417 = vpop.trf.xlu0
    %v5418 = vpop.trf.xlu0
    %v5419 = vpop.trf.xlu0
    %v5420 = vpop.trf.xlu0
    %v5421 = vpop.trf.xlu0
    %v5422 = vpop.trf.xlu0
    %v5423 = vpop.trf.xlu0
    %v5424 = vpop.trf.xlu0
    %v5425 = vpop.trf.xlu0
    %v5426 = vpop.trf.xlu0
    %v5427 = vpop.trf.xlu0
    %v5428 = vpop.trf.xlu0
    %v5429 = vpop.trf.xlu0
    %v5430 = vpop.trf.xlu0
    %v5431 = vpop.trf.xlu0
    %5432 = vxpose.xlu0.b32.start [1/16] %v5288, 128
    %5433 = vxpose.xlu0.b32.cont [2/16] 0.0, 128
    %5434 = vxpose.xlu0.b32.cont [3/16] 0.0, 128
    %5435 = vxpose.xlu0.b32.cont [4/16] 0.0, 128
    %5436 = vxpose.xlu0.b32.cont [5/16] 0.0, 128
    %5437 = vxpose.xlu0.b32.cont [6/16] 0.0, 128
    %5438 = vxpose.xlu0.b32.cont [7/16] 0.0, 128
    %5439 = vxpose.xlu0.b32.cont [8/16] 0.0, 128
    %5440 = vxpose.xlu0.b32.cont [9/16] 0.0, 128
    %5441 = vxpose.xlu0.b32.cont [10/16] 0.0, 128
    %5442 = vxpose.xlu0.b32.cont [11/16] 0.0, 128
    %5443 = vxpose.xlu0.b32.cont [12/16] 0.0, 128
    %5444 = vxpose.xlu0.b32.cont [13/16] 0.0, 128
    %5445 = vxpose.xlu0.b32.cont [14/16] 0.0, 128
    %5446 = vxpose.xlu0.b32.cont [15/16] 0.0, 128
    %5447 = vxpose.xlu0.b32.end [16/16] 0.0, 128
    %v5448 = vpop.trf.xlu0
    %v5449 = vpop.trf.xlu0
    %v5450 = vpop.trf.xlu0
    %v5451 = vpop.trf.xlu0
    %v5452 = vpop.trf.xlu0
    %v5453 = vpop.trf.xlu0
    %v5454 = vpop.trf.xlu0
    %v5455 = vpop.trf.xlu0
    %v5456 = vpop.trf.xlu0
    %v5457 = vpop.trf.xlu0
    %v5458 = vpop.trf.xlu0
    %v5459 = vpop.trf.xlu0
    %v5460 = vpop.trf.xlu0
    %v5461 = vpop.trf.xlu0
    %v5462 = vpop.trf.xlu0
    %v5463 = vpop.trf.xlu0
    %5464 = vxpose.xlu0.b32.start [1/16] %v5289, 128
    %5465 = vxpose.xlu0.b32.cont [2/16] 0.0, 128
    %5466 = vxpose.xlu0.b32.cont [3/16] 0.0, 128
    %5467 = vxpose.xlu0.b32.cont [4/16] 0.0, 128
    %5468 = vxpose.xlu0.b32.cont [5/16] 0.0, 128
    %5469 = vxpose.xlu0.b32.cont [6/16] 0.0, 128
    %5470 = vxpose.xlu0.b32.cont [7/16] 0.0, 128
    %5471 = vxpose.xlu0.b32.cont [8/16] 0.0, 128
    %5472 = vxpose.xlu0.b32.cont [9/16] 0.0, 128
    %5473 = vxpose.xlu0.b32.cont [10/16] 0.0, 128
    %5474 = vxpose.xlu0.b32.cont [11/16] 0.0, 128
    %5475 = vxpose.xlu0.b32.cont [12/16] 0.0, 128
    %5476 = vxpose.xlu0.b32.cont [13/16] 0.0, 128
    %5477 = vxpose.xlu0.b32.cont [14/16] 0.0, 128
    %5478 = vxpose.xlu0.b32.cont [15/16] 0.0, 128
    %5479 = vxpose.xlu0.b32.end [16/16] 0.0, 128
    %v5480 = vpop.trf.xlu0
    %v5481 = vpop.trf.xlu0
    %v5482 = vpop.trf.xlu0
    %v5483 = vpop.trf.xlu0
    %v5484 = vpop.trf.xlu0
    %v5485 = vpop.trf.xlu0
    %v5486 = vpop.trf.xlu0
    %v5487 = vpop.trf.xlu0
    %v5488 = vpop.trf.xlu0
    %v5489 = vpop.trf.xlu0
    %v5490 = vpop.trf.xlu0
    %v5491 = vpop.trf.xlu0
    %v5492 = vpop.trf.xlu0
    %v5493 = vpop.trf.xlu0
    %v5494 = vpop.trf.xlu0
    %v5495 = vpop.trf.xlu0
    %5496 = vxpose.xlu0.b32.start [1/16] %v5290, 128
    %5497 = vxpose.xlu0.b32.cont [2/16] 0.0, 128
    %5498 = vxpose.xlu0.b32.cont [3/16] 0.0, 128
    %5499 = vxpose.xlu0.b32.cont [4/16] 0.0, 128
    %5500 = vxpose.xlu0.b32.cont [5/16] 0.0, 128
    %5501 = vxpose.xlu0.b32.cont [6/16] 0.0, 128
    %5502 = vxpose.xlu0.b32.cont [7/16] 0.0, 128
    %5503 = vxpose.xlu0.b32.cont [8/16] 0.0, 128
    %5504 = vxpose.xlu0.b32.cont [9/16] 0.0, 128
    %5505 = vxpose.xlu0.b32.cont [10/16] 0.0, 128
    %5506 = vxpose.xlu0.b32.cont [11/16] 0.0, 128
    %5507 = vxpose.xlu0.b32.cont [12/16] 0.0, 128
    %5508 = vxpose.xlu0.b32.cont [13/16] 0.0, 128
    %5509 = vxpose.xlu0.b32.cont [14/16] 0.0, 128
    %5510 = vxpose.xlu0.b32.cont [15/16] 0.0, 128
    %5511 = vxpose.xlu0.b32.end [16/16] 0.0, 128
    %v5512 = vpop.trf.xlu0
    %v5513 = vpop.trf.xlu0
    %v5514 = vpop.trf.xlu0
    %v5515 = vpop.trf.xlu0
    %v5516 = vpop.trf.xlu0
    %v5517 = vpop.trf.xlu0
    %v5518 = vpop.trf.xlu0
    %v5519 = vpop.trf.xlu0
    %v5520 = vpop.trf.xlu0
    %v5521 = vpop.trf.xlu0
    %v5522 = vpop.trf.xlu0
    %v5523 = vpop.trf.xlu0
    %v5524 = vpop.trf.xlu0
    %v5525 = vpop.trf.xlu0
    %v5526 = vpop.trf.xlu0
    %v5527 = vpop.trf.xlu0
    %5528 = vxpose.xlu0.b32.start [1/16] %v5291, 128
    %5529 = vxpose.xlu0.b32.cont [2/16] 0.0, 128
    %5530 = vxpose.xlu0.b32.cont [3/16] 0.0, 128
    %5531 = vxpose.xlu0.b32.cont [4/16] 0.0, 128
    %5532 = vxpose.xlu0.b32.cont [5/16] 0.0, 128
    %5533 = vxpose.xlu0.b32.cont [6/16] 0.0, 128
    %5534 = vxpose.xlu0.b32.cont [7/16] 0.0, 128
    %5535 = vxpose.xlu0.b32.cont [8/16] 0.0, 128
    %5536 = vxpose.xlu0.b32.cont [9/16] 0.0, 128
    %5537 = vxpose.xlu0.b32.cont [10/16] 0.0, 128
    %5538 = vxpose.xlu0.b32.cont [11/16] 0.0, 128
    %5539 = vxpose.xlu0.b32.cont [12/16] 0.0, 128
    %5540 = vxpose.xlu0.b32.cont [13/16] 0.0, 128
    %5541 = vxpose.xlu0.b32.cont [14/16] 0.0, 128
    %5542 = vxpose.xlu0.b32.cont [15/16] 0.0, 128
    %5543 = vxpose.xlu0.b32.end [16/16] 0.0, 128
    %v5544 = vpop.trf.xlu0
    %v5545 = vpop.trf.xlu0
    %v5546 = vpop.trf.xlu0
    %v5547 = vpop.trf.xlu0
    %v5548 = vpop.trf.xlu0
    %v5549 = vpop.trf.xlu0
    %v5550 = vpop.trf.xlu0
    %v5551 = vpop.trf.xlu0
    %v5552 = vpop.trf.xlu0
    %v5553 = vpop.trf.xlu0
    %v5554 = vpop.trf.xlu0
    %v5555 = vpop.trf.xlu0
    %v5556 = vpop.trf.xlu0
    %v5557 = vpop.trf.xlu0
    %v5558 = vpop.trf.xlu0
    %v5559 = vpop.trf.xlu0
    %s5560 = scalar_lea.vmem %s5, 32
    %v5561 = vld [vmem:[%s5560] sm:$0xff]
    %v5562 = vld [vmem:[%s5560 + $0x8] sm:$0xff]
    %v5563 = vld [vmem:[%s5560 + $0x10] sm:$0xff]
    %v5564 = vld [vmem:[%s5560 + $0x18] sm:$0xff]
    %v5565 = vpack.c.bf16 %v5562, %v5561
    %v5566 = vpack.c.bf16 %v5564, %v5563
    %5567 = vmatpush.bf16.msra.mxu0 0
    %5568 = vmatpush.bf16.msra.mxu0 0
    %5569 = vmatpush.bf16.msra.mxu0 0
    %5570 = vmatpush.bf16.msra.mxu0 0
    %5571 = vmatpush.bf16.msra.mxu0 0
    %5572 = vmatpush.bf16.msra.mxu0 0
    %5573 = vmatpush.bf16.msra.mxu0 %v5566
    %5574 = vmatpush.bf16.msra.mxu0 %v5565
    %5575 = vmatmul.bf16.gmra.mxu0 %v4870
    %v5576 = vpop.f32.mrf.mxu0
    %v5577 = vadd.f32 0.0, %v5576
    %v5578 = vpop.f32.mrf.mxu0
    %v5579 = vadd.f32 0.0, %v5578
    %5580 = vmatmul.bf16.gmra.mxu0 %v4873
    %v5581 = vpop.f32.mrf.mxu0
    %v5582 = vadd.f32 0.0, %v5581
    %v5583 = vpop.f32.mrf.mxu0
    %v5584 = vadd.f32 0.0, %v5583
    %5585 = vdwg.mxu0
    %5586 = vxpose.xlu0.b32.start [1/16] %v5577, 128
    %5587 = vxpose.xlu0.b32.cont [2/16] %v5579, 128
    %5588 = vxpose.xlu0.b32.cont [3/16] 0.0, 128
    %5589 = vxpose.xlu0.b32.cont [4/16] 0.0, 128
    %5590 = vxpose.xlu0.b32.cont [5/16] 0.0, 128
    %5591 = vxpose.xlu0.b32.cont [6/16] 0.0, 128
    %5592 = vxpose.xlu0.b32.cont [7/16] 0.0, 128
    %5593 = vxpose.xlu0.b32.cont [8/16] 0.0, 128
    %5594 = vxpose.xlu0.b32.cont [9/16] 0.0, 128
    %5595 = vxpose.xlu0.b32.cont [10/16] 0.0, 128
    %5596 = vxpose.xlu0.b32.cont [11/16] 0.0, 128
    %5597 = vxpose.xlu0.b32.cont [12/16] 0.0, 128
    %5598 = vxpose.xlu0.b32.cont [13/16] 0.0, 128
    %5599 = vxpose.xlu0.b32.cont [14/16] 0.0, 128
    %5600 = vxpose.xlu0.b32.cont [15/16] 0.0, 128
    %5601 = vxpose.xlu0.b32.end [16/16] 0.0, 128
    %v5602 = vpop.trf.xlu0
    %v5603 = vpop.trf.xlu0
    %v5604 = vpop.trf.xlu0
    %v5605 = vpop.trf.xlu0
    %v5606 = vpop.trf.xlu0
    %v5607 = vpop.trf.xlu0
    %v5608 = vpop.trf.xlu0
    %v5609 = vpop.trf.xlu0
    %v5610 = vpop.trf.xlu0
    %v5611 = vpop.trf.xlu0
    %v5612 = vpop.trf.xlu0
    %v5613 = vpop.trf.xlu0
    %v5614 = vpop.trf.xlu0
    %v5615 = vpop.trf.xlu0
    %v5616 = vpop.trf.xlu0
    %v5617 = vpop.trf.xlu0
    %5618 = vxpose.xlu0.b32.start [1/16] %v5582, 128
    %5619 = vxpose.xlu0.b32.cont [2/16] %v5584, 128
    %5620 = vxpose.xlu0.b32.cont [3/16] 0.0, 128
    %5621 = vxpose.xlu0.b32.cont [4/16] 0.0, 128
    %5622 = vxpose.xlu0.b32.cont [5/16] 0.0, 128
    %5623 = vxpose.xlu0.b32.cont [6/16] 0.0, 128
    %5624 = vxpose.xlu0.b32.cont [7/16] 0.0, 128
    %5625 = vxpose.xlu0.b32.cont [8/16] 0.0, 128
    %5626 = vxpose.xlu0.b32.cont [9/16] 0.0, 128
    %5627 = vxpose.xlu0.b32.cont [10/16] 0.0, 128
    %5628 = vxpose.xlu0.b32.cont [11/16] 0.0, 128
    %5629 = vxpose.xlu0.b32.cont [12/16] 0.0, 128
    %5630 = vxpose.xlu0.b32.cont [13/16] 0.0, 128
    %5631 = vxpose.xlu0.b32.cont [14/16] 0.0, 128
    %5632 = vxpose.xlu0.b32.cont [15/16] 0.0, 128
    %5633 = vxpose.xlu0.b32.end [16/16] 0.0, 128
    %v5634 = vpop.trf.xlu0
    %v5635 = vpop.trf.xlu0
    %v5636 = vpop.trf.xlu0
    %v5637 = vpop.trf.xlu0
    %v5638 = vpop.trf.xlu0
    %v5639 = vpop.trf.xlu0
    %v5640 = vpop.trf.xlu0
    %v5641 = vpop.trf.xlu0
    %v5642 = vpop.trf.xlu0
    %v5643 = vpop.trf.xlu0
    %v5644 = vpop.trf.xlu0
    %v5645 = vpop.trf.xlu0
    %v5646 = vpop.trf.xlu0
    %v5647 = vpop.trf.xlu0
    %v5648 = vpop.trf.xlu0
    %v5649 = vpop.trf.xlu0
    %5650 = vxpose.xlu0.b32.start [1/16] %v5602, 128
    %5651 = vxpose.xlu0.b32.cont [2/16] 0.0, 128
    %5652 = vxpose.xlu0.b32.cont [3/16] 0.0, 128
    %5653 = vxpose.xlu0.b32.cont [4/16] 0.0, 128
    %5654 = vxpose.xlu0.b32.cont [5/16] 0.0, 128
    %5655 = vxpose.xlu0.b32.cont [6/16] 0.0, 128
    %5656 = vxpose.xlu0.b32.cont [7/16] 0.0, 128
    %5657 = vxpose.xlu0.b32.cont [8/16] 0.0, 128
    %5658 = vxpose.xlu0.b32.cont [9/16] 0.0, 128
    %5659 = vxpose.xlu0.b32.cont [10/16] 0.0, 128
    %5660 = vxpose.xlu0.b32.cont [11/16] 0.0, 128
    %5661 = vxpose.xlu0.b32.cont [12/16] 0.0, 128
    %5662 = vxpose.xlu0.b32.cont [13/16] 0.0, 128
    %5663 = vxpose.xlu0.b32.cont [14/16] 0.0, 128
    %5664 = vxpose.xlu0.b32.cont [15/16] 0.0, 128
    %5665 = vxpose.xlu0.b32.end [16/16] 0.0, 128
    %v5666 = vpop.trf.xlu0
    %v5667 = vpop.trf.xlu0
    %v5668 = vpop.trf.xlu0
    %v5669 = vpop.trf.xlu0
    %v5670 = vpop.trf.xlu0
    %v5671 = vpop.trf.xlu0
    %v5672 = vpop.trf.xlu0
    %v5673 = vpop.trf.xlu0
    %v5674 = vpop.trf.xlu0
    %v5675 = vpop.trf.xlu0
    %v5676 = vpop.trf.xlu0
    %v5677 = vpop.trf.xlu0
    %v5678 = vpop.trf.xlu0
    %v5679 = vpop.trf.xlu0
    %v5680 = vpop.trf.xlu0
    %v5681 = vpop.trf.xlu0
    %5682 = vxpose.xlu0.b32.start [1/16] %v5603, 128
    %5683 = vxpose.xlu0.b32.cont [2/16] 0.0, 128
    %5684 = vxpose.xlu0.b32.cont [3/16] 0.0, 128
    %5685 = vxpose.xlu0.b32.cont [4/16] 0.0, 128
    %5686 = vxpose.xlu0.b32.cont [5/16] 0.0, 128
    %5687 = vxpose.xlu0.b32.cont [6/16] 0.0, 128
    %5688 = vxpose.xlu0.b32.cont [7/16] 0.0, 128
    %5689 = vxpose.xlu0.b32.cont [8/16] 0.0, 128
    %5690 = vxpose.xlu0.b32.cont [9/16] 0.0, 128
    %5691 = vxpose.xlu0.b32.cont [10/16] 0.0, 128
    %5692 = vxpose.xlu0.b32.cont [11/16] 0.0, 128
    %5693 = vxpose.xlu0.b32.cont [12/16] 0.0, 128
    %5694 = vxpose.xlu0.b32.cont [13/16] 0.0, 128
    %5695 = vxpose.xlu0.b32.cont [14/16] 0.0, 128
    %5696 = vxpose.xlu0.b32.cont [15/16] 0.0, 128
    %5697 = vxpose.xlu0.b32.end [16/16] 0.0, 128
    %v5698 = vpop.trf.xlu0
    %v5699 = vpop.trf.xlu0
    %v5700 = vpop.trf.xlu0
    %v5701 = vpop.trf.xlu0
    %v5702 = vpop.trf.xlu0
    %v5703 = vpop.trf.xlu0
    %v5704 = vpop.trf.xlu0
    %v5705 = vpop.trf.xlu0
    %v5706 = vpop.trf.xlu0
    %v5707 = vpop.trf.xlu0
    %v5708 = vpop.trf.xlu0
    %v5709 = vpop.trf.xlu0
    %v5710 = vpop.trf.xlu0
    %v5711 = vpop.trf.xlu0
    %v5712 = vpop.trf.xlu0
    %v5713 = vpop.trf.xlu0
    %5714 = vxpose.xlu0.b32.start [1/16] %v5604, 128
    %5715 = vxpose.xlu0.b32.cont [2/16] 0.0, 128
    %5716 = vxpose.xlu0.b32.cont [3/16] 0.0, 128
    %5717 = vxpose.xlu0.b32.cont [4/16] 0.0, 128
    %5718 = vxpose.xlu0.b32.cont [5/16] 0.0, 128
    %5719 = vxpose.xlu0.b32.cont [6/16] 0.0, 128
    %5720 = vxpose.xlu0.b32.cont [7/16] 0.0, 128
    %5721 = vxpose.xlu0.b32.cont [8/16] 0.0, 128
    %5722 = vxpose.xlu0.b32.cont [9/16] 0.0, 128
    %5723 = vxpose.xlu0.b32.cont [10/16] 0.0, 128
    %5724 = vxpose.xlu0.b32.cont [11/16] 0.0, 128
    %5725 = vxpose.xlu0.b32.cont [12/16] 0.0, 128
    %5726 = vxpose.xlu0.b32.cont [13/16] 0.0, 128
    %5727 = vxpose.xlu0.b32.cont [14/16] 0.0, 128
    %5728 = vxpose.xlu0.b32.cont [15/16] 0.0, 128
    %5729 = vxpose.xlu0.b32.end [16/16] 0.0, 128
    %v5730 = vpop.trf.xlu0
    %v5731 = vpop.trf.xlu0
    %v5732 = vpop.trf.xlu0
    %v5733 = vpop.trf.xlu0
    %v5734 = vpop.trf.xlu0
    %v5735 = vpop.trf.xlu0
    %v5736 = vpop.trf.xlu0
    %v5737 = vpop.trf.xlu0
    %v5738 = vpop.trf.xlu0
    %v5739 = vpop.trf.xlu0
    %v5740 = vpop.trf.xlu0
    %v5741 = vpop.trf.xlu0
    %v5742 = vpop.trf.xlu0
    %v5743 = vpop.trf.xlu0
    %v5744 = vpop.trf.xlu0
    %v5745 = vpop.trf.xlu0
    %5746 = vxpose.xlu0.b32.start [1/16] %v5605, 128
    %5747 = vxpose.xlu0.b32.cont [2/16] 0.0, 128
    %5748 = vxpose.xlu0.b32.cont [3/16] 0.0, 128
    %5749 = vxpose.xlu0.b32.cont [4/16] 0.0, 128
    %5750 = vxpose.xlu0.b32.cont [5/16] 0.0, 128
    %5751 = vxpose.xlu0.b32.cont [6/16] 0.0, 128
    %5752 = vxpose.xlu0.b32.cont [7/16] 0.0, 128
    %5753 = vxpose.xlu0.b32.cont [8/16] 0.0, 128
    %5754 = vxpose.xlu0.b32.cont [9/16] 0.0, 128
    %5755 = vxpose.xlu0.b32.cont [10/16] 0.0, 128
    %5756 = vxpose.xlu0.b32.cont [11/16] 0.0, 128
    %5757 = vxpose.xlu0.b32.cont [12/16] 0.0, 128
    %5758 = vxpose.xlu0.b32.cont [13/16] 0.0, 128
    %5759 = vxpose.xlu0.b32.cont [14/16] 0.0, 128
    %5760 = vxpose.xlu0.b32.cont [15/16] 0.0, 128
    %5761 = vxpose.xlu0.b32.end [16/16] 0.0, 128
    %v5762 = vpop.trf.xlu0
    %v5763 = vpop.trf.xlu0
    %v5764 = vpop.trf.xlu0
    %v5765 = vpop.trf.xlu0
    %v5766 = vpop.trf.xlu0
    %v5767 = vpop.trf.xlu0
    %v5768 = vpop.trf.xlu0
    %v5769 = vpop.trf.xlu0
    %v5770 = vpop.trf.xlu0
    %v5771 = vpop.trf.xlu0
    %v5772 = vpop.trf.xlu0
    %v5773 = vpop.trf.xlu0
    %v5774 = vpop.trf.xlu0
    %v5775 = vpop.trf.xlu0
    %v5776 = vpop.trf.xlu0
    %v5777 = vpop.trf.xlu0
    %5778 = vxpose.xlu0.b32.start [1/16] %v5634, 128
    %5779 = vxpose.xlu0.b32.cont [2/16] 0.0, 128
    %5780 = vxpose.xlu0.b32.cont [3/16] 0.0, 128
    %5781 = vxpose.xlu0.b32.cont [4/16] 0.0, 128
    %5782 = vxpose.xlu0.b32.cont [5/16] 0.0, 128
    %5783 = vxpose.xlu0.b32.cont [6/16] 0.0, 128
    %5784 = vxpose.xlu0.b32.cont [7/16] 0.0, 128
    %5785 = vxpose.xlu0.b32.cont [8/16] 0.0, 128
    %5786 = vxpose.xlu0.b32.cont [9/16] 0.0, 128
    %5787 = vxpose.xlu0.b32.cont [10/16] 0.0, 128
    %5788 = vxpose.xlu0.b32.cont [11/16] 0.0, 128
    %5789 = vxpose.xlu0.b32.cont [12/16] 0.0, 128
    %5790 = vxpose.xlu0.b32.cont [13/16] 0.0, 128
    %5791 = vxpose.xlu0.b32.cont [14/16] 0.0, 128
    %5792 = vxpose.xlu0.b32.cont [15/16] 0.0, 128
    %5793 = vxpose.xlu0.b32.end [16/16] 0.0, 128
    %v5794 = vpop.trf.xlu0
    %v5795 = vpop.trf.xlu0
    %v5796 = vpop.trf.xlu0
    %v5797 = vpop.trf.xlu0
    %v5798 = vpop.trf.xlu0
    %v5799 = vpop.trf.xlu0
    %v5800 = vpop.trf.xlu0
    %v5801 = vpop.trf.xlu0
    %v5802 = vpop.trf.xlu0
    %v5803 = vpop.trf.xlu0
    %v5804 = vpop.trf.xlu0
    %v5805 = vpop.trf.xlu0
    %v5806 = vpop.trf.xlu0
    %v5807 = vpop.trf.xlu0
    %v5808 = vpop.trf.xlu0
    %v5809 = vpop.trf.xlu0
    %5810 = vxpose.xlu0.b32.start [1/16] %v5635, 128
    %5811 = vxpose.xlu0.b32.cont [2/16] 0.0, 128
    %5812 = vxpose.xlu0.b32.cont [3/16] 0.0, 128
    %5813 = vxpose.xlu0.b32.cont [4/16] 0.0, 128
    %5814 = vxpose.xlu0.b32.cont [5/16] 0.0, 128
    %5815 = vxpose.xlu0.b32.cont [6/16] 0.0, 128
    %5816 = vxpose.xlu0.b32.cont [7/16] 0.0, 128
    %5817 = vxpose.xlu0.b32.cont [8/16] 0.0, 128
    %5818 = vxpose.xlu0.b32.cont [9/16] 0.0, 128
    %5819 = vxpose.xlu0.b32.cont [10/16] 0.0, 128
    %5820 = vxpose.xlu0.b32.cont [11/16] 0.0, 128
    %5821 = vxpose.xlu0.b32.cont [12/16] 0.0, 128
    %5822 = vxpose.xlu0.b32.cont [13/16] 0.0, 128
    %5823 = vxpose.xlu0.b32.cont [14/16] 0.0, 128
    %5824 = vxpose.xlu0.b32.cont [15/16] 0.0, 128
    %5825 = vxpose.xlu0.b32.end [16/16] 0.0, 128
    %v5826 = vpop.trf.xlu0
    %v5827 = vpop.trf.xlu0
    %v5828 = vpop.trf.xlu0
    %v5829 = vpop.trf.xlu0
    %v5830 = vpop.trf.xlu0
    %v5831 = vpop.trf.xlu0
    %v5832 = vpop.trf.xlu0
    %v5833 = vpop.trf.xlu0
    %v5834 = vpop.trf.xlu0
    %v5835 = vpop.trf.xlu0
    %v5836 = vpop.trf.xlu0
    %v5837 = vpop.trf.xlu0
    %v5838 = vpop.trf.xlu0
    %v5839 = vpop.trf.xlu0
    %v5840 = vpop.trf.xlu0
    %v5841 = vpop.trf.xlu0
    %5842 = vxpose.xlu0.b32.start [1/16] %v5636, 128
    %5843 = vxpose.xlu0.b32.cont [2/16] 0.0, 128
    %5844 = vxpose.xlu0.b32.cont [3/16] 0.0, 128
    %5845 = vxpose.xlu0.b32.cont [4/16] 0.0, 128
    %5846 = vxpose.xlu0.b32.cont [5/16] 0.0, 128
    %5847 = vxpose.xlu0.b32.cont [6/16] 0.0, 128
    %5848 = vxpose.xlu0.b32.cont [7/16] 0.0, 128
    %5849 = vxpose.xlu0.b32.cont [8/16] 0.0, 128
    %5850 = vxpose.xlu0.b32.cont [9/16] 0.0, 128
    %5851 = vxpose.xlu0.b32.cont [10/16] 0.0, 128
    %5852 = vxpose.xlu0.b32.cont [11/16] 0.0, 128
    %5853 = vxpose.xlu0.b32.cont [12/16] 0.0, 128
    %5854 = vxpose.xlu0.b32.cont [13/16] 0.0, 128
    %5855 = vxpose.xlu0.b32.cont [14/16] 0.0, 128
    %5856 = vxpose.xlu0.b32.cont [15/16] 0.0, 128
    %5857 = vxpose.xlu0.b32.end [16/16] 0.0, 128
    %v5858 = vpop.trf.xlu0
    %v5859 = vpop.trf.xlu0
    %v5860 = vpop.trf.xlu0
    %v5861 = vpop.trf.xlu0
    %v5862 = vpop.trf.xlu0
    %v5863 = vpop.trf.xlu0
    %v5864 = vpop.trf.xlu0
    %v5865 = vpop.trf.xlu0
    %v5866 = vpop.trf.xlu0
    %v5867 = vpop.trf.xlu0
    %v5868 = vpop.trf.xlu0
    %v5869 = vpop.trf.xlu0
    %v5870 = vpop.trf.xlu0
    %v5871 = vpop.trf.xlu0
    %v5872 = vpop.trf.xlu0
    %v5873 = vpop.trf.xlu0
    %5874 = vxpose.xlu0.b32.start [1/16] %v5637, 128
    %5875 = vxpose.xlu0.b32.cont [2/16] 0.0, 128
    %5876 = vxpose.xlu0.b32.cont [3/16] 0.0, 128
    %5877 = vxpose.xlu0.b32.cont [4/16] 0.0, 128
    %5878 = vxpose.xlu0.b32.cont [5/16] 0.0, 128
    %5879 = vxpose.xlu0.b32.cont [6/16] 0.0, 128
    %5880 = vxpose.xlu0.b32.cont [7/16] 0.0, 128
    %5881 = vxpose.xlu0.b32.cont [8/16] 0.0, 128
    %5882 = vxpose.xlu0.b32.cont [9/16] 0.0, 128
    %5883 = vxpose.xlu0.b32.cont [10/16] 0.0, 128
    %5884 = vxpose.xlu0.b32.cont [11/16] 0.0, 128
    %5885 = vxpose.xlu0.b32.cont [12/16] 0.0, 128
    %5886 = vxpose.xlu0.b32.cont [13/16] 0.0, 128
    %5887 = vxpose.xlu0.b32.cont [14/16] 0.0, 128
    %5888 = vxpose.xlu0.b32.cont [15/16] 0.0, 128
    %5889 = vxpose.xlu0.b32.end [16/16] 0.0, 128
    %v5890 = vpop.trf.xlu0
    %v5891 = vpop.trf.xlu0
    %v5892 = vpop.trf.xlu0
    %v5893 = vpop.trf.xlu0
    %v5894 = vpop.trf.xlu0
    %v5895 = vpop.trf.xlu0
    %v5896 = vpop.trf.xlu0
    %v5897 = vpop.trf.xlu0
    %v5898 = vpop.trf.xlu0
    %v5899 = vpop.trf.xlu0
    %v5900 = vpop.trf.xlu0
    %v5901 = vpop.trf.xlu0
    %v5902 = vpop.trf.xlu0
    %v5903 = vpop.trf.xlu0
    %v5904 = vpop.trf.xlu0
    %v5905 = vpop.trf.xlu0
    %v5906 = vpack.c.bf16 %v4974, %v4974
    %v5907 = vpack.c.bf16 %v4975, %v4975
    %v5908 = vpack.c.bf16 %v5006, %v5006
    %v5909 = vpack.c.bf16 %v5007, %v5007
    %v5910 = vpack.c.bf16 %v5038, %v5038
    %v5911 = vpack.c.bf16 %v5039, %v5039
    %v5912 = vpack.c.bf16 %v5070, %v5070
    %v5913 = vpack.c.bf16 %v5071, %v5071
    %v5914 = vpack.c.bf16 %v5102, %v5102
    %v5915 = vpack.c.bf16 %v5103, %v5103
    %v5916 = vpack.c.bf16 %v5134, %v5134
    %v5917 = vpack.c.bf16 %v5135, %v5135
    %v5918 = vpack.c.bf16 %v5166, %v5166
    %v5919 = vpack.c.bf16 %v5167, %v5167
    %v5920 = vpack.c.bf16 %v5198, %v5198
    %v5921 = vpack.c.bf16 %v5199, %v5199
    %v5922 = vpack.c.bf16 %v5320, %v5320
    %v5923 = vpack.c.bf16 %v5321, %v5321
    %v5924 = vpack.c.bf16 %v5352, %v5352
    %v5925 = vpack.c.bf16 %v5353, %v5353
    %v5926 = vpack.c.bf16 %v5384, %v5384
    %v5927 = vpack.c.bf16 %v5385, %v5385
    %v5928 = vpack.c.bf16 %v5416, %v5416
    %v5929 = vpack.c.bf16 %v5417, %v5417
    %v5930 = vpack.c.bf16 %v5448, %v5448
    %v5931 = vpack.c.bf16 %v5449, %v5449
    %v5932 = vpack.c.bf16 %v5480, %v5480
    %v5933 = vpack.c.bf16 %v5481, %v5481
    %v5934 = vpack.c.bf16 %v5512, %v5512
    %v5935 = vpack.c.bf16 %v5513, %v5513
    %v5936 = vpack.c.bf16 %v5544, %v5544
    %v5937 = vpack.c.bf16 %v5545, %v5545
    %v5940 = vunpack.c.l.b16 %v5906
    %v5941 = vunpack.c.l.b16 %v5907
    %v5942 = vpack.c.b16 %v5941, %v5940
    %v5945 = vunpack.c.l.b16 %v5922
    %v5946 = vunpack.c.l.b16 %v5923
    %v5947 = vpack.c.b16 %v5946, %v5945
    %v5949 = vsel %vm1262, %v5942, 0
    %v5952 = vsel %vm1262, %v5947, 0
    %5954 = vmatpush.bf16.xpose.msra.mxu0 0
    %5955 = vmatpush.bf16.xpose.msra.mxu0 0
    %5956 = vmatpush.bf16.xpose.msra.mxu0 0
    %5957 = vmatpush.bf16.xpose.msra.mxu0 0
    %5958 = vmatpush.bf16.xpose.msra.mxu0 0
    %5959 = vmatpush.bf16.xpose.msra.mxu0 0
    %5960 = vmatpush.bf16.xpose.msra.mxu0 0
    %5961 = vmatpush.bf16.xpose.msra.mxu0 %v5952
    %5962 = vmatmul.bf16.gmra.mxu0 %v5949
    %v5963 = vpop.f32.mrf.mxu0
    %v5964 = vadd.f32 0.0, %v5963
    %v5965 = vpop.f32.mrf.mxu0
    %v5966 = vadd.f32 0.0, %v5965
    %5967 = vdwg.mxu0
    %v5970 = vunpack.c.l.b16 %v5908
    %v5971 = vunpack.c.l.b16 %v5909
    %v5972 = vpack.c.b16 %v5971, %v5970
    %v5975 = vunpack.c.l.b16 %v5924
    %v5976 = vunpack.c.l.b16 %v5925
    %v5977 = vpack.c.b16 %v5976, %v5975
    %v5979 = vsel %vm1262, %v5972, 0
    %v5982 = vsel %vm1262, %v5977, 0
    %5984 = vmatpush.bf16.xpose.msra.mxu0 0
    %5985 = vmatpush.bf16.xpose.msra.mxu0 0
    %5986 = vmatpush.bf16.xpose.msra.mxu0 0
    %5987 = vmatpush.bf16.xpose.msra.mxu0 0
    %5988 = vmatpush.bf16.xpose.msra.mxu0 0
    %5989 = vmatpush.bf16.xpose.msra.mxu0 0
    %5990 = vmatpush.bf16.xpose.msra.mxu0 0
    %5991 = vmatpush.bf16.xpose.msra.mxu0 %v5982
    %5992 = vmatmul.bf16.gmra.mxu0 %v5979
    %v5993 = vpop.f32.mrf.mxu0
    %v5994 = vadd.f32 0.0, %v5993
    %v5995 = vpop.f32.mrf.mxu0
    %v5996 = vadd.f32 0.0, %v5995
    %5997 = vdwg.mxu0
    %v6000 = vunpack.c.l.b16 %v5910
    %v6001 = vunpack.c.l.b16 %v5911
    %v6002 = vpack.c.b16 %v6001, %v6000
    %v6005 = vunpack.c.l.b16 %v5926
    %v6006 = vunpack.c.l.b16 %v5927
    %v6007 = vpack.c.b16 %v6006, %v6005
    %v6009 = vsel %vm1262, %v6002, 0
    %v6012 = vsel %vm1262, %v6007, 0
    %6014 = vmatpush.bf16.xpose.msra.mxu0 0
    %6015 = vmatpush.bf16.xpose.msra.mxu0 0
    %6016 = vmatpush.bf16.xpose.msra.mxu0 0
    %6017 = vmatpush.bf16.xpose.msra.mxu0 0
    %6018 = vmatpush.bf16.xpose.msra.mxu0 0
    %6019 = vmatpush.bf16.xpose.msra.mxu0 0
    %6020 = vmatpush.bf16.xpose.msra.mxu0 0
    %6021 = vmatpush.bf16.xpose.msra.mxu0 %v6012
    %6022 = vmatmul.bf16.gmra.mxu0 %v6009
    %v6023 = vpop.f32.mrf.mxu0
    %v6024 = vadd.f32 0.0, %v6023
    %v6025 = vpop.f32.mrf.mxu0
    %v6026 = vadd.f32 0.0, %v6025
    %6027 = vdwg.mxu0
    %v6030 = vunpack.c.l.b16 %v5912
    %v6031 = vunpack.c.l.b16 %v5913
    %v6032 = vpack.c.b16 %v6031, %v6030
    %v6035 = vunpack.c.l.b16 %v5928
    %v6036 = vunpack.c.l.b16 %v5929
    %v6037 = vpack.c.b16 %v6036, %v6035
    %v6039 = vsel %vm1262, %v6032, 0
    %v6042 = vsel %vm1262, %v6037, 0
    %6044 = vmatpush.bf16.xpose.msra.mxu0 0
    %6045 = vmatpush.bf16.xpose.msra.mxu0 0
    %6046 = vmatpush.bf16.xpose.msra.mxu0 0
    %6047 = vmatpush.bf16.xpose.msra.mxu0 0
    %6048 = vmatpush.bf16.xpose.msra.mxu0 0
    %6049 = vmatpush.bf16.xpose.msra.mxu0 0
    %6050 = vmatpush.bf16.xpose.msra.mxu0 0
    %6051 = vmatpush.bf16.xpose.msra.mxu0 %v6042
    %6052 = vmatmul.bf16.gmra.mxu0 %v6039
    %v6053 = vpop.f32.mrf.mxu0
    %v6054 = vadd.f32 0.0, %v6053
    %v6055 = vpop.f32.mrf.mxu0
    %v6056 = vadd.f32 0.0, %v6055
    %6057 = vdwg.mxu0
    %v6060 = vunpack.c.l.b16 %v5914
    %v6061 = vunpack.c.l.b16 %v5915
    %v6062 = vpack.c.b16 %v6061, %v6060
    %v6065 = vunpack.c.l.b16 %v5930
    %v6066 = vunpack.c.l.b16 %v5931
    %v6067 = vpack.c.b16 %v6066, %v6065
    %v6069 = vsel %vm1262, %v6062, 0
    %v6072 = vsel %vm1262, %v6067, 0
    %6074 = vmatpush.bf16.xpose.msra.mxu0 0
    %6075 = vmatpush.bf16.xpose.msra.mxu0 0
    %6076 = vmatpush.bf16.xpose.msra.mxu0 0
    %6077 = vmatpush.bf16.xpose.msra.mxu0 0
    %6078 = vmatpush.bf16.xpose.msra.mxu0 0
    %6079 = vmatpush.bf16.xpose.msra.mxu0 0
    %6080 = vmatpush.bf16.xpose.msra.mxu0 0
    %6081 = vmatpush.bf16.xpose.msra.mxu0 %v6072
    %6082 = vmatmul.bf16.gmra.mxu0 %v6069
    %v6083 = vpop.f32.mrf.mxu0
    %v6084 = vadd.f32 0.0, %v6083
    %v6085 = vpop.f32.mrf.mxu0
    %v6086 = vadd.f32 0.0, %v6085
    %6087 = vdwg.mxu0
    %v6090 = vunpack.c.l.b16 %v5916
    %v6091 = vunpack.c.l.b16 %v5917
    %v6092 = vpack.c.b16 %v6091, %v6090
    %v6095 = vunpack.c.l.b16 %v5932
    %v6096 = vunpack.c.l.b16 %v5933
    %v6097 = vpack.c.b16 %v6096, %v6095
    %v6099 = vsel %vm1262, %v6092, 0
    %v6102 = vsel %vm1262, %v6097, 0
    %6104 = vmatpush.bf16.xpose.msra.mxu0 0
    %6105 = vmatpush.bf16.xpose.msra.mxu0 0
    %6106 = vmatpush.bf16.xpose.msra.mxu0 0
    %6107 = vmatpush.bf16.xpose.msra.mxu0 0
    %6108 = vmatpush.bf16.xpose.msra.mxu0 0
    %6109 = vmatpush.bf16.xpose.msra.mxu0 0
    %6110 = vmatpush.bf16.xpose.msra.mxu0 0
    %6111 = vmatpush.bf16.xpose.msra.mxu0 %v6102
    %6112 = vmatmul.bf16.gmra.mxu0 %v6099
    %v6113 = vpop.f32.mrf.mxu0
    %v6114 = vadd.f32 0.0, %v6113
    %v6115 = vpop.f32.mrf.mxu0
    %v6116 = vadd.f32 0.0, %v6115
    %6117 = vdwg.mxu0
    %v6120 = vunpack.c.l.b16 %v5918
    %v6121 = vunpack.c.l.b16 %v5919
    %v6122 = vpack.c.b16 %v6121, %v6120
    %v6125 = vunpack.c.l.b16 %v5934
    %v6126 = vunpack.c.l.b16 %v5935
    %v6127 = vpack.c.b16 %v6126, %v6125
    %v6129 = vsel %vm1262, %v6122, 0
    %v6132 = vsel %vm1262, %v6127, 0
    %6134 = vmatpush.bf16.xpose.msra.mxu0 0
    %6135 = vmatpush.bf16.xpose.msra.mxu0 0
    %6136 = vmatpush.bf16.xpose.msra.mxu0 0
    %6137 = vmatpush.bf16.xpose.msra.mxu0 0
    %6138 = vmatpush.bf16.xpose.msra.mxu0 0
    %6139 = vmatpush.bf16.xpose.msra.mxu0 0
    %6140 = vmatpush.bf16.xpose.msra.mxu0 0
    %6141 = vmatpush.bf16.xpose.msra.mxu0 %v6132
    %6142 = vmatmul.bf16.gmra.mxu0 %v6129
    %v6143 = vpop.f32.mrf.mxu0
    %v6144 = vadd.f32 0.0, %v6143
    %v6145 = vpop.f32.mrf.mxu0
    %v6146 = vadd.f32 0.0, %v6145
    %6147 = vdwg.mxu0
    %v6150 = vunpack.c.l.b16 %v5920
    %v6151 = vunpack.c.l.b16 %v5921
    %v6152 = vpack.c.b16 %v6151, %v6150
    %v6155 = vunpack.c.l.b16 %v5936
    %v6156 = vunpack.c.l.b16 %v5937
    %v6157 = vpack.c.b16 %v6156, %v6155
    %v6159 = vsel %vm1262, %v6152, 0
    %v6162 = vsel %vm1262, %v6157, 0
    %6164 = vmatpush.bf16.xpose.msra.mxu0 0
    %6165 = vmatpush.bf16.xpose.msra.mxu0 0
    %6166 = vmatpush.bf16.xpose.msra.mxu0 0
    %6167 = vmatpush.bf16.xpose.msra.mxu0 0
    %6168 = vmatpush.bf16.xpose.msra.mxu0 0
    %6169 = vmatpush.bf16.xpose.msra.mxu0 0
    %6170 = vmatpush.bf16.xpose.msra.mxu0 0
    %6171 = vmatpush.bf16.xpose.msra.mxu0 %v6162
    %6172 = vmatmul.bf16.gmra.mxu0 %v6159
    %v6173 = vpop.f32.mrf.mxu0
    %v6174 = vadd.f32 0.0, %v6173
    %v6175 = vpop.f32.mrf.mxu0
    %v6176 = vadd.f32 0.0, %v6175
    %6177 = vdwg.mxu0
    %s6178 = scalar_lea.vmem %s16, 16
    %v6179 = vld [vmem:[%s6178] sm:$0xff]
    %v6180 = vld [vmem:[%s6178 + $0x8] sm:$0x7]
    %v6181 = vpack.c.bf16 %v4975, %v4974
    %v6182 = vpack.c.bf16 %v5007, %v5006
    %v6183 = vpack.c.bf16 %v5039, %v5038
    %v6184 = vpack.c.bf16 %v5071, %v5070
    %v6185 = vpack.c.bf16 %v5103, %v5102
    %v6186 = vpack.c.bf16 %v5135, %v5134
    %v6187 = vpack.c.bf16 %v5167, %v5166
    %v6188 = vpack.c.bf16 %v5199, %v5198
    %v6189 = vpack.c.bf16 %v6180, %v6179
    %v6191 = vsel %vm1262, %v6181, 0
    %v6194 = vsel %vm1262, %v6182, 0
    %v6197 = vsel %vm1262, %v6183, 0
    %v6200 = vsel %vm1262, %v6184, 0
    %v6203 = vsel %vm1262, %v6185, 0
    %v6206 = vsel %vm1262, %v6186, 0
    %v6209 = vsel %vm1262, %v6187, 0
    %v6212 = vsel %vm1262, %v6188, 0
    %v6215 = vsel %vm1262, %v6189, 0
    %6217 = vmatpush.bf16.xpose.msra.mxu0 0
    %6218 = vmatpush.bf16.xpose.msra.mxu0 0
    %6219 = vmatpush.bf16.xpose.msra.mxu0 0
    %6220 = vmatpush.bf16.xpose.msra.mxu0 0
    %6221 = vmatpush.bf16.xpose.msra.mxu0 0
    %6222 = vmatpush.bf16.xpose.msra.mxu0 0
    %6223 = vmatpush.bf16.xpose.msra.mxu0 0
    %6224 = vmatpush.bf16.xpose.msra.mxu0 %v6215
    %6225 = vmatmul.bf16.gmra.mxu0 %v6191
    %v6226 = vpop.f32.mrf.mxu0
    %v6227 = vadd.f32 0.0, %v6226
    %v6228 = vpop.f32.mrf.mxu0
    %v6229 = vadd.f32 0.0, %v6228
    %6230 = vmatmul.bf16.gmra.mxu0 %v6194
    %v6231 = vpop.f32.mrf.mxu0
    %v6232 = vadd.f32 0.0, %v6231
    %v6233 = vpop.f32.mrf.mxu0
    %v6234 = vadd.f32 0.0, %v6233
    %6235 = vmatmul.bf16.gmra.mxu0 %v6197
    %v6236 = vpop.f32.mrf.mxu0
    %v6237 = vadd.f32 0.0, %v6236
    %v6238 = vpop.f32.mrf.mxu0
    %v6239 = vadd.f32 0.0, %v6238
    %6240 = vmatmul.bf16.gmra.mxu0 %v6200
    %v6241 = vpop.f32.mrf.mxu0
    %v6242 = vadd.f32 0.0, %v6241
    %v6243 = vpop.f32.mrf.mxu0
    %v6244 = vadd.f32 0.0, %v6243
    %6245 = vmatmul.bf16.gmra.mxu0 %v6203
    %v6246 = vpop.f32.mrf.mxu0
    %v6247 = vadd.f32 0.0, %v6246
    %v6248 = vpop.f32.mrf.mxu0
    %v6249 = vadd.f32 0.0, %v6248
    %6250 = vmatmul.bf16.gmra.mxu0 %v6206
    %v6251 = vpop.f32.mrf.mxu0
    %v6252 = vadd.f32 0.0, %v6251
    %v6253 = vpop.f32.mrf.mxu0
    %v6254 = vadd.f32 0.0, %v6253
    %6255 = vmatmul.bf16.gmra.mxu0 %v6209
    %v6256 = vpop.f32.mrf.mxu0
    %v6257 = vadd.f32 0.0, %v6256
    %v6258 = vpop.f32.mrf.mxu0
    %v6259 = vadd.f32 0.0, %v6258
    %6260 = vmatmul.bf16.gmra.mxu0 %v6212
    %v6261 = vpop.f32.mrf.mxu0
    %v6262 = vadd.f32 0.0, %v6261
    %v6263 = vpop.f32.mrf.mxu0
    %v6264 = vadd.f32 0.0, %v6263
    %6265 = vdwg.mxu0
    %6267 = vset.pattern.permute.xlu0 0
    %6268 = vperm.xlu0 %6267, %v6227
    %v6269 = vpop.permute.xlu0 %6268
    %6272 = vset.pattern.permute.xlu0 0
    %6273 = vperm.xlu0 %6272, %v6229
    %v6274 = vpop.permute.xlu0 %6273
    %6277 = vset.pattern.permute.xlu0 0
    %6278 = vperm.xlu0 %6277, %v6232
    %v6279 = vpop.permute.xlu0 %6278
    %6282 = vset.pattern.permute.xlu0 0
    %6283 = vperm.xlu0 %6282, %v6234
    %v6284 = vpop.permute.xlu0 %6283
    %6287 = vset.pattern.permute.xlu0 0
    %6288 = vperm.xlu0 %6287, %v6237
    %v6289 = vpop.permute.xlu0 %6288
    %6292 = vset.pattern.permute.xlu0 0
    %6293 = vperm.xlu0 %6292, %v6239
    %v6294 = vpop.permute.xlu0 %6293
    %6297 = vset.pattern.permute.xlu0 0
    %6298 = vperm.xlu0 %6297, %v6242
    %v6299 = vpop.permute.xlu0 %6298
    %6302 = vset.pattern.permute.xlu0 0
    %6303 = vperm.xlu0 %6302, %v6244
    %v6304 = vpop.permute.xlu0 %6303
    %6307 = vset.pattern.permute.xlu0 0
    %6308 = vperm.xlu0 %6307, %v6247
    %v6309 = vpop.permute.xlu0 %6308
    %6312 = vset.pattern.permute.xlu0 0
    %6313 = vperm.xlu0 %6312, %v6249
    %v6314 = vpop.permute.xlu0 %6313
    %6317 = vset.pattern.permute.xlu0 0
    %6318 = vperm.xlu0 %6317, %v6252
    %v6319 = vpop.permute.xlu0 %6318
    %6322 = vset.pattern.permute.xlu0 0
    %6323 = vperm.xlu0 %6322, %v6254
    %v6324 = vpop.permute.xlu0 %6323
    %6327 = vset.pattern.permute.xlu0 0
    %6328 = vperm.xlu0 %6327, %v6257
    %v6329 = vpop.permute.xlu0 %6328
    %6332 = vset.pattern.permute.xlu0 0
    %6333 = vperm.xlu0 %6332, %v6259
    %v6334 = vpop.permute.xlu0 %6333
    %6337 = vset.pattern.permute.xlu0 0
    %6338 = vperm.xlu0 %6337, %v6262
    %v6339 = vpop.permute.xlu0 %6338
    %6342 = vset.pattern.permute.xlu0 0
    %6343 = vperm.xlu0 %6342, %v6264
    %v6344 = vpop.permute.xlu0 %6343
    %v6346 = vsel %vm1584, %v6269, 0.0
    %v6347 = vsel %vm1585, %v6274, 0.0
    %v6348 = vsel %vm1584, %v6279, 0.0
    %v6349 = vsel %vm1585, %v6284, 0.0
    %v6350 = vsel %vm1584, %v6289, 0.0
    %v6351 = vsel %vm1585, %v6294, 0.0
    %v6352 = vsel %vm1584, %v6299, 0.0
    %v6353 = vsel %vm1585, %v6304, 0.0
    %v6354 = vsel %vm1586, %v6309, 0.0
    %v6355 = vsel %vm1587, %v6314, 0.0
    %v6356 = vsel %vm1586, %v6319, 0.0
    %v6357 = vsel %vm1587, %v6324, 0.0
    %v6358 = vsel %vm1586, %v6329, 0.0
    %v6359 = vsel %vm1587, %v6334, 0.0
    %v6360 = vsel %vm1586, %v6339, 0.0
    %v6361 = vsel %vm1587, %v6344, 0.0
    %v6362 = vadd.f32 %v6346, 0.0
    %v6363 = vadd.f32 %v6347, 0.0
    %v6364 = vadd.f32 %v6348, 0.0
    %v6365 = vadd.f32 %v6349, 0.0
    %v6366 = vadd.f32 %v6350, 0.0
    %v6367 = vadd.f32 %v6351, 0.0
    %v6368 = vadd.f32 %v6352, 0.0
    %v6369 = vadd.f32 %v6353, 0.0
    %v6370 = vadd.f32 %v6354, 0.0
    %v6371 = vadd.f32 %v6355, 0.0
    %v6372 = vadd.f32 %v6356, 0.0
    %v6373 = vadd.f32 %v6357, 0.0
    %v6374 = vadd.f32 %v6358, 0.0
    %v6375 = vadd.f32 %v6359, 0.0
    %v6376 = vadd.f32 %v6360, 0.0
    %v6377 = vadd.f32 %v6361, 0.0
    %6378 = vset.pattern.permute.xlu0 1
    %6379 = vperm.xlu0 %6378, %v6227
    %v6380 = vpop.permute.xlu0 %6379
    %6382 = vset.pattern.permute.xlu0 1
    %6383 = vperm.xlu0 %6382, %v6229
    %v6384 = vpop.permute.xlu0 %6383
    %6386 = vset.pattern.permute.xlu0 1
    %6387 = vperm.xlu0 %6386, %v6232
    %v6388 = vpop.permute.xlu0 %6387
    %6390 = vset.pattern.permute.xlu0 1
    %6391 = vperm.xlu0 %6390, %v6234
    %v6392 = vpop.permute.xlu0 %6391
    %6394 = vset.pattern.permute.xlu0 1
    %6395 = vperm.xlu0 %6394, %v6237
    %v6396 = vpop.permute.xlu0 %6395
    %6398 = vset.pattern.permute.xlu0 1
    %6399 = vperm.xlu0 %6398, %v6239
    %v6400 = vpop.permute.xlu0 %6399
    %6402 = vset.pattern.permute.xlu0 1
    %6403 = vperm.xlu0 %6402, %v6242
    %v6404 = vpop.permute.xlu0 %6403
    %6406 = vset.pattern.permute.xlu0 1
    %6407 = vperm.xlu0 %6406, %v6244
    %v6408 = vpop.permute.xlu0 %6407
    %6410 = vset.pattern.permute.xlu0 1
    %6411 = vperm.xlu0 %6410, %v6247
    %v6412 = vpop.permute.xlu0 %6411
    %6414 = vset.pattern.permute.xlu0 1
    %6415 = vperm.xlu0 %6414, %v6249
    %v6416 = vpop.permute.xlu0 %6415
    %6418 = vset.pattern.permute.xlu0 1
    %6419 = vperm.xlu0 %6418, %v6252
    %v6420 = vpop.permute.xlu0 %6419
    %6422 = vset.pattern.permute.xlu0 1
    %6423 = vperm.xlu0 %6422, %v6254
    %v6424 = vpop.permute.xlu0 %6423
    %6426 = vset.pattern.permute.xlu0 1
    %6427 = vperm.xlu0 %6426, %v6257
    %v6428 = vpop.permute.xlu0 %6427
    %6430 = vset.pattern.permute.xlu0 1
    %6431 = vperm.xlu0 %6430, %v6259
    %v6432 = vpop.permute.xlu0 %6431
    %6434 = vset.pattern.permute.xlu0 1
    %6435 = vperm.xlu0 %6434, %v6262
    %v6436 = vpop.permute.xlu0 %6435
    %6438 = vset.pattern.permute.xlu0 1
    %6439 = vperm.xlu0 %6438, %v6264
    %v6440 = vpop.permute.xlu0 %6439
    %v6442 = vsel %vm1704, %v6380, 0.0
    %v6443 = vsel %vm1705, %v6384, 0.0
    %v6444 = vsel %vm1704, %v6388, 0.0
    %v6445 = vsel %vm1705, %v6392, 0.0
    %v6446 = vsel %vm1704, %v6396, 0.0
    %v6447 = vsel %vm1705, %v6400, 0.0
    %v6448 = vsel %vm1704, %v6404, 0.0
    %v6449 = vsel %vm1705, %v6408, 0.0
    %v6450 = vsel %vm1706, %v6412, 0.0
    %v6451 = vsel %vm1707, %v6416, 0.0
    %v6452 = vsel %vm1706, %v6420, 0.0
    %v6453 = vsel %vm1707, %v6424, 0.0
    %v6454 = vsel %vm1706, %v6428, 0.0
    %v6455 = vsel %vm1707, %v6432, 0.0
    %v6456 = vsel %vm1706, %v6436, 0.0
    %v6457 = vsel %vm1707, %v6440, 0.0
    %v6458 = vadd.f32 %v6362, %v6442
    %v6459 = vadd.f32 %v6363, %v6443
    %v6460 = vadd.f32 %v6364, %v6444
    %v6461 = vadd.f32 %v6365, %v6445
    %v6462 = vadd.f32 %v6366, %v6446
    %v6463 = vadd.f32 %v6367, %v6447
    %v6464 = vadd.f32 %v6368, %v6448
    %v6465 = vadd.f32 %v6369, %v6449
    %v6466 = vadd.f32 %v6370, %v6450
    %v6467 = vadd.f32 %v6371, %v6451
    %v6468 = vadd.f32 %v6372, %v6452
    %v6469 = vadd.f32 %v6373, %v6453
    %v6470 = vadd.f32 %v6374, %v6454
    %v6471 = vadd.f32 %v6375, %v6455
    %v6472 = vadd.f32 %v6376, %v6456
    %v6473 = vadd.f32 %v6377, %v6457
    %6474 = vset.pattern.permute.xlu0 2
    %6475 = vperm.xlu0 %6474, %v6227
    %v6476 = vpop.permute.xlu0 %6475
    %6478 = vset.pattern.permute.xlu0 2
    %6479 = vperm.xlu0 %6478, %v6229
    %v6480 = vpop.permute.xlu0 %6479
    %6482 = vset.pattern.permute.xlu0 2
    %6483 = vperm.xlu0 %6482, %v6232
    %v6484 = vpop.permute.xlu0 %6483
    %6486 = vset.pattern.permute.xlu0 2
    %6487 = vperm.xlu0 %6486, %v6234
    %v6488 = vpop.permute.xlu0 %6487
    %6490 = vset.pattern.permute.xlu0 2
    %6491 = vperm.xlu0 %6490, %v6237
    %v6492 = vpop.permute.xlu0 %6491
    %6494 = vset.pattern.permute.xlu0 2
    %6495 = vperm.xlu0 %6494, %v6239
    %v6496 = vpop.permute.xlu0 %6495
    %6498 = vset.pattern.permute.xlu0 2
    %6499 = vperm.xlu0 %6498, %v6242
    %v6500 = vpop.permute.xlu0 %6499
    %6502 = vset.pattern.permute.xlu0 2
    %6503 = vperm.xlu0 %6502, %v6244
    %v6504 = vpop.permute.xlu0 %6503
    %6506 = vset.pattern.permute.xlu0 2
    %6507 = vperm.xlu0 %6506, %v6247
    %v6508 = vpop.permute.xlu0 %6507
    %6510 = vset.pattern.permute.xlu0 2
    %6511 = vperm.xlu0 %6510, %v6249
    %v6512 = vpop.permute.xlu0 %6511
    %6514 = vset.pattern.permute.xlu0 2
    %6515 = vperm.xlu0 %6514, %v6252
    %v6516 = vpop.permute.xlu0 %6515
    %6518 = vset.pattern.permute.xlu0 2
    %6519 = vperm.xlu0 %6518, %v6254
    %v6520 = vpop.permute.xlu0 %6519
    %6522 = vset.pattern.permute.xlu0 2
    %6523 = vperm.xlu0 %6522, %v6257
    %v6524 = vpop.permute.xlu0 %6523
    %6526 = vset.pattern.permute.xlu0 2
    %6527 = vperm.xlu0 %6526, %v6259
    %v6528 = vpop.permute.xlu0 %6527
    %6530 = vset.pattern.permute.xlu0 2
    %6531 = vperm.xlu0 %6530, %v6262
    %v6532 = vpop.permute.xlu0 %6531
    %6534 = vset.pattern.permute.xlu0 2
    %6535 = vperm.xlu0 %6534, %v6264
    %v6536 = vpop.permute.xlu0 %6535
    %v6538 = vsel %vm1808, %v6476, 0.0
    %v6539 = vsel %vm1809, %v6480, 0.0
    %v6540 = vsel %vm1808, %v6484, 0.0
    %v6541 = vsel %vm1809, %v6488, 0.0
    %v6542 = vsel %vm1808, %v6492, 0.0
    %v6543 = vsel %vm1809, %v6496, 0.0
    %v6544 = vsel %vm1808, %v6500, 0.0
    %v6545 = vsel %vm1809, %v6504, 0.0
    %v6546 = vsel %vm1810, %v6508, 0.0
    %v6547 = vsel %vm1811, %v6512, 0.0
    %v6548 = vsel %vm1810, %v6516, 0.0
    %v6549 = vsel %vm1811, %v6520, 0.0
    %v6550 = vsel %vm1810, %v6524, 0.0
    %v6551 = vsel %vm1811, %v6528, 0.0
    %v6552 = vsel %vm1810, %v6532, 0.0
    %v6553 = vsel %vm1811, %v6536, 0.0
    %v6554 = vadd.f32 %v6458, %v6538
    %v6555 = vadd.f32 %v6459, %v6539
    %v6556 = vadd.f32 %v6460, %v6540
    %v6557 = vadd.f32 %v6461, %v6541
    %v6558 = vadd.f32 %v6462, %v6542
    %v6559 = vadd.f32 %v6463, %v6543
    %v6560 = vadd.f32 %v6464, %v6544
    %v6561 = vadd.f32 %v6465, %v6545
    %v6562 = vadd.f32 %v6466, %v6546
    %v6563 = vadd.f32 %v6467, %v6547
    %v6564 = vadd.f32 %v6468, %v6548
    %v6565 = vadd.f32 %v6469, %v6549
    %v6566 = vadd.f32 %v6470, %v6550
    %v6567 = vadd.f32 %v6471, %v6551
    %v6568 = vadd.f32 %v6472, %v6552
    %v6569 = vadd.f32 %v6473, %v6553
    %6570 = vset.pattern.permute.xlu0 3
    %6571 = vperm.xlu0 %6570, %v6227
    %v6572 = vpop.permute.xlu0 %6571
    %6574 = vset.pattern.permute.xlu0 3
    %6575 = vperm.xlu0 %6574, %v6229
    %v6576 = vpop.permute.xlu0 %6575
    %6578 = vset.pattern.permute.xlu0 3
    %6579 = vperm.xlu0 %6578, %v6232
    %v6580 = vpop.permute.xlu0 %6579
    %6582 = vset.pattern.permute.xlu0 3
    %6583 = vperm.xlu0 %6582, %v6234
    %v6584 = vpop.permute.xlu0 %6583
    %6586 = vset.pattern.permute.xlu0 3
    %6587 = vperm.xlu0 %6586, %v6237
    %v6588 = vpop.permute.xlu0 %6587
    %6590 = vset.pattern.permute.xlu0 3
    %6591 = vperm.xlu0 %6590, %v6239
    %v6592 = vpop.permute.xlu0 %6591
    %6594 = vset.pattern.permute.xlu0 3
    %6595 = vperm.xlu0 %6594, %v6242
    %v6596 = vpop.permute.xlu0 %6595
    %6598 = vset.pattern.permute.xlu0 3
    %6599 = vperm.xlu0 %6598, %v6244
    %v6600 = vpop.permute.xlu0 %6599
    %6602 = vset.pattern.permute.xlu0 3
    %6603 = vperm.xlu0 %6602, %v6247
    %v6604 = vpop.permute.xlu0 %6603
    %6606 = vset.pattern.permute.xlu0 3
    %6607 = vperm.xlu0 %6606, %v6249
    %v6608 = vpop.permute.xlu0 %6607
    %6610 = vset.pattern.permute.xlu0 3
    %6611 = vperm.xlu0 %6610, %v6252
    %v6612 = vpop.permute.xlu0 %6611
    %6614 = vset.pattern.permute.xlu0 3
    %6615 = vperm.xlu0 %6614, %v6254
    %v6616 = vpop.permute.xlu0 %6615
    %6618 = vset.pattern.permute.xlu0 3
    %6619 = vperm.xlu0 %6618, %v6257
    %v6620 = vpop.permute.xlu0 %6619
    %6622 = vset.pattern.permute.xlu0 3
    %6623 = vperm.xlu0 %6622, %v6259
    %v6624 = vpop.permute.xlu0 %6623
    %6626 = vset.pattern.permute.xlu0 3
    %6627 = vperm.xlu0 %6626, %v6262
    %v6628 = vpop.permute.xlu0 %6627
    %6630 = vset.pattern.permute.xlu0 3
    %6631 = vperm.xlu0 %6630, %v6264
    %v6632 = vpop.permute.xlu0 %6631
    %v6634 = vsel %vm1912, %v6572, 0.0
    %v6635 = vsel %vm1913, %v6576, 0.0
    %v6636 = vsel %vm1912, %v6580, 0.0
    %v6637 = vsel %vm1913, %v6584, 0.0
    %v6638 = vsel %vm1912, %v6588, 0.0
    %v6639 = vsel %vm1913, %v6592, 0.0
    %v6640 = vsel %vm1912, %v6596, 0.0
    %v6641 = vsel %vm1913, %v6600, 0.0
    %v6642 = vsel %vm1914, %v6604, 0.0
    %v6643 = vsel %vm1915, %v6608, 0.0
    %v6644 = vsel %vm1914, %v6612, 0.0
    %v6645 = vsel %vm1915, %v6616, 0.0
    %v6646 = vsel %vm1914, %v6620, 0.0
    %v6647 = vsel %vm1915, %v6624, 0.0
    %v6648 = vsel %vm1914, %v6628, 0.0
    %v6649 = vsel %vm1915, %v6632, 0.0
    %v6650 = vadd.f32 %v6554, %v6634
    %v6651 = vadd.f32 %v6555, %v6635
    %v6652 = vadd.f32 %v6556, %v6636
    %v6653 = vadd.f32 %v6557, %v6637
    %v6654 = vadd.f32 %v6558, %v6638
    %v6655 = vadd.f32 %v6559, %v6639
    %v6656 = vadd.f32 %v6560, %v6640
    %v6657 = vadd.f32 %v6561, %v6641
    %v6658 = vadd.f32 %v6562, %v6642
    %v6659 = vadd.f32 %v6563, %v6643
    %v6660 = vadd.f32 %v6564, %v6644
    %v6661 = vadd.f32 %v6565, %v6645
    %v6662 = vadd.f32 %v6566, %v6646
    %v6663 = vadd.f32 %v6567, %v6647
    %v6664 = vadd.f32 %v6568, %v6648
    %v6665 = vadd.f32 %v6569, %v6649
    %6666 = vset.pattern.permute.xlu0 4
    %6667 = vperm.xlu0 %6666, %v6227
    %v6668 = vpop.permute.xlu0 %6667
    %6670 = vset.pattern.permute.xlu0 4
    %6671 = vperm.xlu0 %6670, %v6229
    %v6672 = vpop.permute.xlu0 %6671
    %6674 = vset.pattern.permute.xlu0 4
    %6675 = vperm.xlu0 %6674, %v6232
    %v6676 = vpop.permute.xlu0 %6675
    %6678 = vset.pattern.permute.xlu0 4
    %6679 = vperm.xlu0 %6678, %v6234
    %v6680 = vpop.permute.xlu0 %6679
    %6682 = vset.pattern.permute.xlu0 4
    %6683 = vperm.xlu0 %6682, %v6237
    %v6684 = vpop.permute.xlu0 %6683
    %6686 = vset.pattern.permute.xlu0 4
    %6687 = vperm.xlu0 %6686, %v6239
    %v6688 = vpop.permute.xlu0 %6687
    %6690 = vset.pattern.permute.xlu0 4
    %6691 = vperm.xlu0 %6690, %v6242
    %v6692 = vpop.permute.xlu0 %6691
    %6694 = vset.pattern.permute.xlu0 4
    %6695 = vperm.xlu0 %6694, %v6244
    %v6696 = vpop.permute.xlu0 %6695
    %6698 = vset.pattern.permute.xlu0 4
    %6699 = vperm.xlu0 %6698, %v6247
    %v6700 = vpop.permute.xlu0 %6699
    %6702 = vset.pattern.permute.xlu0 4
    %6703 = vperm.xlu0 %6702, %v6249
    %v6704 = vpop.permute.xlu0 %6703
    %6706 = vset.pattern.permute.xlu0 4
    %6707 = vperm.xlu0 %6706, %v6252
    %v6708 = vpop.permute.xlu0 %6707
    %6710 = vset.pattern.permute.xlu0 4
    %6711 = vperm.xlu0 %6710, %v6254
    %v6712 = vpop.permute.xlu0 %6711
    %6714 = vset.pattern.permute.xlu0 4
    %6715 = vperm.xlu0 %6714, %v6257
    %v6716 = vpop.permute.xlu0 %6715
    %6718 = vset.pattern.permute.xlu0 4
    %6719 = vperm.xlu0 %6718, %v6259
    %v6720 = vpop.permute.xlu0 %6719
    %6722 = vset.pattern.permute.xlu0 4
    %6723 = vperm.xlu0 %6722, %v6262
    %v6724 = vpop.permute.xlu0 %6723
    %6726 = vset.pattern.permute.xlu0 4
    %6727 = vperm.xlu0 %6726, %v6264
    %v6728 = vpop.permute.xlu0 %6727
    %v6730 = vsel %vm2016, %v6668, 0.0
    %v6731 = vsel %vm2017, %v6672, 0.0
    %v6732 = vsel %vm2016, %v6676, 0.0
    %v6733 = vsel %vm2017, %v6680, 0.0
    %v6734 = vsel %vm2016, %v6684, 0.0
    %v6735 = vsel %vm2017, %v6688, 0.0
    %v6736 = vsel %vm2016, %v6692, 0.0
    %v6737 = vsel %vm2017, %v6696, 0.0
    %v6738 = vsel %vm2018, %v6700, 0.0
    %v6739 = vsel %vm2019, %v6704, 0.0
    %v6740 = vsel %vm2018, %v6708, 0.0
    %v6741 = vsel %vm2019, %v6712, 0.0
    %v6742 = vsel %vm2018, %v6716, 0.0
    %v6743 = vsel %vm2019, %v6720, 0.0
    %v6744 = vsel %vm2018, %v6724, 0.0
    %v6745 = vsel %vm2019, %v6728, 0.0
    %v6746 = vadd.f32 %v6650, %v6730
    %v6747 = vadd.f32 %v6651, %v6731
    %v6748 = vadd.f32 %v6652, %v6732
    %v6749 = vadd.f32 %v6653, %v6733
    %v6750 = vadd.f32 %v6654, %v6734
    %v6751 = vadd.f32 %v6655, %v6735
    %v6752 = vadd.f32 %v6656, %v6736
    %v6753 = vadd.f32 %v6657, %v6737
    %v6754 = vadd.f32 %v6658, %v6738
    %v6755 = vadd.f32 %v6659, %v6739
    %v6756 = vadd.f32 %v6660, %v6740
    %v6757 = vadd.f32 %v6661, %v6741
    %v6758 = vadd.f32 %v6662, %v6742
    %v6759 = vadd.f32 %v6663, %v6743
    %v6760 = vadd.f32 %v6664, %v6744
    %v6761 = vadd.f32 %v6665, %v6745
    %6762 = vset.pattern.permute.xlu0 5
    %6763 = vperm.xlu0 %6762, %v6227
    %v6764 = vpop.permute.xlu0 %6763
    %6766 = vset.pattern.permute.xlu0 5
    %6767 = vperm.xlu0 %6766, %v6229
    %v6768 = vpop.permute.xlu0 %6767
    %6770 = vset.pattern.permute.xlu0 5
    %6771 = vperm.xlu0 %6770, %v6232
    %v6772 = vpop.permute.xlu0 %6771
    %6774 = vset.pattern.permute.xlu0 5
    %6775 = vperm.xlu0 %6774, %v6234
    %v6776 = vpop.permute.xlu0 %6775
    %6778 = vset.pattern.permute.xlu0 5
    %6779 = vperm.xlu0 %6778, %v6237
    %v6780 = vpop.permute.xlu0 %6779
    %6782 = vset.pattern.permute.xlu0 5
    %6783 = vperm.xlu0 %6782, %v6239
    %v6784 = vpop.permute.xlu0 %6783
    %6786 = vset.pattern.permute.xlu0 5
    %6787 = vperm.xlu0 %6786, %v6242
    %v6788 = vpop.permute.xlu0 %6787
    %6790 = vset.pattern.permute.xlu0 5
    %6791 = vperm.xlu0 %6790, %v6244
    %v6792 = vpop.permute.xlu0 %6791
    %6794 = vset.pattern.permute.xlu0 5
    %6795 = vperm.xlu0 %6794, %v6247
    %v6796 = vpop.permute.xlu0 %6795
    %6798 = vset.pattern.permute.xlu0 5
    %6799 = vperm.xlu0 %6798, %v6249
    %v6800 = vpop.permute.xlu0 %6799
    %6802 = vset.pattern.permute.xlu0 5
    %6803 = vperm.xlu0 %6802, %v6252
    %v6804 = vpop.permute.xlu0 %6803
    %6806 = vset.pattern.permute.xlu0 5
    %6807 = vperm.xlu0 %6806, %v6254
    %v6808 = vpop.permute.xlu0 %6807
    %6810 = vset.pattern.permute.xlu0 5
    %6811 = vperm.xlu0 %6810, %v6257
    %v6812 = vpop.permute.xlu0 %6811
    %6814 = vset.pattern.permute.xlu0 5
    %6815 = vperm.xlu0 %6814, %v6259
    %v6816 = vpop.permute.xlu0 %6815
    %6818 = vset.pattern.permute.xlu0 5
    %6819 = vperm.xlu0 %6818, %v6262
    %v6820 = vpop.permute.xlu0 %6819
    %6822 = vset.pattern.permute.xlu0 5
    %6823 = vperm.xlu0 %6822, %v6264
    %v6824 = vpop.permute.xlu0 %6823
    %v6826 = vsel %vm2120, %v6764, 0.0
    %v6827 = vsel %vm2121, %v6768, 0.0
    %v6828 = vsel %vm2120, %v6772, 0.0
    %v6829 = vsel %vm2121, %v6776, 0.0
    %v6830 = vsel %vm2120, %v6780, 0.0
    %v6831 = vsel %vm2121, %v6784, 0.0
    %v6832 = vsel %vm2120, %v6788, 0.0
    %v6833 = vsel %vm2121, %v6792, 0.0
    %v6834 = vsel %vm2122, %v6796, 0.0
    %v6835 = vsel %vm2123, %v6800, 0.0
    %v6836 = vsel %vm2122, %v6804, 0.0
    %v6837 = vsel %vm2123, %v6808, 0.0
    %v6838 = vsel %vm2122, %v6812, 0.0
    %v6839 = vsel %vm2123, %v6816, 0.0
    %v6840 = vsel %vm2122, %v6820, 0.0
    %v6841 = vsel %vm2123, %v6824, 0.0
    %v6842 = vadd.f32 %v6746, %v6826
    %v6843 = vadd.f32 %v6747, %v6827
    %v6844 = vadd.f32 %v6748, %v6828
    %v6845 = vadd.f32 %v6749, %v6829
    %v6846 = vadd.f32 %v6750, %v6830
    %v6847 = vadd.f32 %v6751, %v6831
    %v6848 = vadd.f32 %v6752, %v6832
    %v6849 = vadd.f32 %v6753, %v6833
    %v6850 = vadd.f32 %v6754, %v6834
    %v6851 = vadd.f32 %v6755, %v6835
    %v6852 = vadd.f32 %v6756, %v6836
    %v6853 = vadd.f32 %v6757, %v6837
    %v6854 = vadd.f32 %v6758, %v6838
    %v6855 = vadd.f32 %v6759, %v6839
    %v6856 = vadd.f32 %v6760, %v6840
    %v6857 = vadd.f32 %v6761, %v6841
    %6858 = vset.pattern.permute.xlu0 6
    %6859 = vperm.xlu0 %6858, %v6227
    %v6860 = vpop.permute.xlu0 %6859
    %6862 = vset.pattern.permute.xlu0 6
    %6863 = vperm.xlu0 %6862, %v6229
    %v6864 = vpop.permute.xlu0 %6863
    %6866 = vset.pattern.permute.xlu0 6
    %6867 = vperm.xlu0 %6866, %v6232
    %v6868 = vpop.permute.xlu0 %6867
    %6870 = vset.pattern.permute.xlu0 6
    %6871 = vperm.xlu0 %6870, %v6234
    %v6872 = vpop.permute.xlu0 %6871
    %6874 = vset.pattern.permute.xlu0 6
    %6875 = vperm.xlu0 %6874, %v6237
    %v6876 = vpop.permute.xlu0 %6875
    %6878 = vset.pattern.permute.xlu0 6
    %6879 = vperm.xlu0 %6878, %v6239
    %v6880 = vpop.permute.xlu0 %6879
    %6882 = vset.pattern.permute.xlu0 6
    %6883 = vperm.xlu0 %6882, %v6242
    %v6884 = vpop.permute.xlu0 %6883
    %6886 = vset.pattern.permute.xlu0 6
    %6887 = vperm.xlu0 %6886, %v6244
    %v6888 = vpop.permute.xlu0 %6887
    %6890 = vset.pattern.permute.xlu0 6
    %6891 = vperm.xlu0 %6890, %v6247
    %v6892 = vpop.permute.xlu0 %6891
    %6894 = vset.pattern.permute.xlu0 6
    %6895 = vperm.xlu0 %6894, %v6249
    %v6896 = vpop.permute.xlu0 %6895
    %6898 = vset.pattern.permute.xlu0 6
    %6899 = vperm.xlu0 %6898, %v6252
    %v6900 = vpop.permute.xlu0 %6899
    %6902 = vset.pattern.permute.xlu0 6
    %6903 = vperm.xlu0 %6902, %v6254
    %v6904 = vpop.permute.xlu0 %6903
    %6906 = vset.pattern.permute.xlu0 6
    %6907 = vperm.xlu0 %6906, %v6257
    %v6908 = vpop.permute.xlu0 %6907
    %6910 = vset.pattern.permute.xlu0 6
    %6911 = vperm.xlu0 %6910, %v6259
    %v6912 = vpop.permute.xlu0 %6911
    %6914 = vset.pattern.permute.xlu0 6
    %6915 = vperm.xlu0 %6914, %v6262
    %v6916 = vpop.permute.xlu0 %6915
    %6918 = vset.pattern.permute.xlu0 6
    %6919 = vperm.xlu0 %6918, %v6264
    %v6920 = vpop.permute.xlu0 %6919
    %v6922 = vsel %vm2224, %v6860, 0.0
    %v6923 = vsel %vm2225, %v6864, 0.0
    %v6924 = vsel %vm2224, %v6868, 0.0
    %v6925 = vsel %vm2225, %v6872, 0.0
    %v6926 = vsel %vm2224, %v6876, 0.0
    %v6927 = vsel %vm2225, %v6880, 0.0
    %v6928 = vsel %vm2224, %v6884, 0.0
    %v6929 = vsel %vm2225, %v6888, 0.0
    %v6930 = vsel %vm2226, %v6892, 0.0
    %v6931 = vsel %vm2227, %v6896, 0.0
    %v6932 = vsel %vm2226, %v6900, 0.0
    %v6933 = vsel %vm2227, %v6904, 0.0
    %v6934 = vsel %vm2226, %v6908, 0.0
    %v6935 = vsel %vm2227, %v6912, 0.0
    %v6936 = vsel %vm2226, %v6916, 0.0
    %v6937 = vsel %vm2227, %v6920, 0.0
    %v6938 = vadd.f32 %v6842, %v6922
    %v6939 = vadd.f32 %v6843, %v6923
    %v6940 = vadd.f32 %v6844, %v6924
    %v6941 = vadd.f32 %v6845, %v6925
    %v6942 = vadd.f32 %v6846, %v6926
    %v6943 = vadd.f32 %v6847, %v6927
    %v6944 = vadd.f32 %v6848, %v6928
    %v6945 = vadd.f32 %v6849, %v6929
    %v6946 = vadd.f32 %v6850, %v6930
    %v6947 = vadd.f32 %v6851, %v6931
    %v6948 = vadd.f32 %v6852, %v6932
    %v6949 = vadd.f32 %v6853, %v6933
    %v6950 = vadd.f32 %v6854, %v6934
    %v6951 = vadd.f32 %v6855, %v6935
    %v6952 = vadd.f32 %v6856, %v6936
    %v6953 = vadd.f32 %v6857, %v6937
    %6954 = vset.pattern.permute.xlu0 7
    %6955 = vperm.xlu0 %6954, %v6227
    %v6956 = vpop.permute.xlu0 %6955
    %6958 = vset.pattern.permute.xlu0 7
    %6959 = vperm.xlu0 %6958, %v6229
    %v6960 = vpop.permute.xlu0 %6959
    %6962 = vset.pattern.permute.xlu0 7
    %6963 = vperm.xlu0 %6962, %v6232
    %v6964 = vpop.permute.xlu0 %6963
    %6966 = vset.pattern.permute.xlu0 7
    %6967 = vperm.xlu0 %6966, %v6234
    %v6968 = vpop.permute.xlu0 %6967
    %6970 = vset.pattern.permute.xlu0 7
    %6971 = vperm.xlu0 %6970, %v6237
    %v6972 = vpop.permute.xlu0 %6971
    %6974 = vset.pattern.permute.xlu0 7
    %6975 = vperm.xlu0 %6974, %v6239
    %v6976 = vpop.permute.xlu0 %6975
    %6978 = vset.pattern.permute.xlu0 7
    %6979 = vperm.xlu0 %6978, %v6242
    %v6980 = vpop.permute.xlu0 %6979
    %6982 = vset.pattern.permute.xlu0 7
    %6983 = vperm.xlu0 %6982, %v6244
    %v6984 = vpop.permute.xlu0 %6983
    %6986 = vset.pattern.permute.xlu0 7
    %6987 = vperm.xlu0 %6986, %v6247
    %v6988 = vpop.permute.xlu0 %6987
    %6990 = vset.pattern.permute.xlu0 7
    %6991 = vperm.xlu0 %6990, %v6249
    %v6992 = vpop.permute.xlu0 %6991
    %6994 = vset.pattern.permute.xlu0 7
    %6995 = vperm.xlu0 %6994, %v6252
    %v6996 = vpop.permute.xlu0 %6995
    %6998 = vset.pattern.permute.xlu0 7
    %6999 = vperm.xlu0 %6998, %v6254
    %v7000 = vpop.permute.xlu0 %6999
    %7002 = vset.pattern.permute.xlu0 7
    %7003 = vperm.xlu0 %7002, %v6257
    %v7004 = vpop.permute.xlu0 %7003
    %7006 = vset.pattern.permute.xlu0 7
    %7007 = vperm.xlu0 %7006, %v6259
    %v7008 = vpop.permute.xlu0 %7007
    %7010 = vset.pattern.permute.xlu0 7
    %7011 = vperm.xlu0 %7010, %v6262
    %v7012 = vpop.permute.xlu0 %7011
    %7014 = vset.pattern.permute.xlu0 7
    %7015 = vperm.xlu0 %7014, %v6264
    %v7016 = vpop.permute.xlu0 %7015
    %v7018 = vsel %vm2328, %v6956, 0.0
    %v7019 = vsel %vm2329, %v6960, 0.0
    %v7020 = vsel %vm2328, %v6964, 0.0
    %v7021 = vsel %vm2329, %v6968, 0.0
    %v7022 = vsel %vm2328, %v6972, 0.0
    %v7023 = vsel %vm2329, %v6976, 0.0
    %v7024 = vsel %vm2328, %v6980, 0.0
    %v7025 = vsel %vm2329, %v6984, 0.0
    %v7026 = vsel %vm2330, %v6988, 0.0
    %v7027 = vsel %vm2331, %v6992, 0.0
    %v7028 = vsel %vm2330, %v6996, 0.0
    %v7029 = vsel %vm2331, %v7000, 0.0
    %v7030 = vsel %vm2330, %v7004, 0.0
    %v7031 = vsel %vm2331, %v7008, 0.0
    %v7032 = vsel %vm2330, %v7012, 0.0
    %v7033 = vsel %vm2331, %v7016, 0.0
    %v7034 = vadd.f32 %v6938, %v7018
    %v7035 = vadd.f32 %v6939, %v7019
    %v7036 = vadd.f32 %v6940, %v7020
    %v7037 = vadd.f32 %v6941, %v7021
    %v7038 = vadd.f32 %v6942, %v7022
    %v7039 = vadd.f32 %v6943, %v7023
    %v7040 = vadd.f32 %v6944, %v7024
    %v7041 = vadd.f32 %v6945, %v7025
    %v7042 = vadd.f32 %v6946, %v7026
    %v7043 = vadd.f32 %v6947, %v7027
    %v7044 = vadd.f32 %v6948, %v7028
    %v7045 = vadd.f32 %v6949, %v7029
    %v7046 = vadd.f32 %v6950, %v7030
    %v7047 = vadd.f32 %v6951, %v7031
    %v7048 = vadd.f32 %v6952, %v7032
    %v7049 = vadd.f32 %v6953, %v7033
    %7050 = vset.pattern.permute.xlu0 8
    %7051 = vperm.xlu0 %7050, %v6227
    %v7052 = vpop.permute.xlu0 %7051
    %7054 = vset.pattern.permute.xlu0 8
    %7055 = vperm.xlu0 %7054, %v6229
    %v7056 = vpop.permute.xlu0 %7055
    %7058 = vset.pattern.permute.xlu0 8
    %7059 = vperm.xlu0 %7058, %v6232
    %v7060 = vpop.permute.xlu0 %7059
    %7062 = vset.pattern.permute.xlu0 8
    %7063 = vperm.xlu0 %7062, %v6234
    %v7064 = vpop.permute.xlu0 %7063
    %7066 = vset.pattern.permute.xlu0 8
    %7067 = vperm.xlu0 %7066, %v6237
    %v7068 = vpop.permute.xlu0 %7067
    %7070 = vset.pattern.permute.xlu0 8
    %7071 = vperm.xlu0 %7070, %v6239
    %v7072 = vpop.permute.xlu0 %7071
    %7074 = vset.pattern.permute.xlu0 8
    %7075 = vperm.xlu0 %7074, %v6242
    %v7076 = vpop.permute.xlu0 %7075
    %7078 = vset.pattern.permute.xlu0 8
    %7079 = vperm.xlu0 %7078, %v6244
    %v7080 = vpop.permute.xlu0 %7079
    %7082 = vset.pattern.permute.xlu0 8
    %7083 = vperm.xlu0 %7082, %v6247
    %v7084 = vpop.permute.xlu0 %7083
    %7086 = vset.pattern.permute.xlu0 8
    %7087 = vperm.xlu0 %7086, %v6249
    %v7088 = vpop.permute.xlu0 %7087
    %7090 = vset.pattern.permute.xlu0 8
    %7091 = vperm.xlu0 %7090, %v6252
    %v7092 = vpop.permute.xlu0 %7091
    %7094 = vset.pattern.permute.xlu0 8
    %7095 = vperm.xlu0 %7094, %v6254
    %v7096 = vpop.permute.xlu0 %7095
    %7098 = vset.pattern.permute.xlu0 8
    %7099 = vperm.xlu0 %7098, %v6257
    %v7100 = vpop.permute.xlu0 %7099
    %7102 = vset.pattern.permute.xlu0 8
    %7103 = vperm.xlu0 %7102, %v6259
    %v7104 = vpop.permute.xlu0 %7103
    %7106 = vset.pattern.permute.xlu0 8
    %7107 = vperm.xlu0 %7106, %v6262
    %v7108 = vpop.permute.xlu0 %7107
    %7110 = vset.pattern.permute.xlu0 8
    %7111 = vperm.xlu0 %7110, %v6264
    %v7112 = vpop.permute.xlu0 %7111
    %v7114 = vsel %vm2432, %v7052, 0.0
    %v7115 = vsel %vm2433, %v7056, 0.0
    %v7116 = vsel %vm2432, %v7060, 0.0
    %v7117 = vsel %vm2433, %v7064, 0.0
    %v7118 = vsel %vm2432, %v7068, 0.0
    %v7119 = vsel %vm2433, %v7072, 0.0
    %v7120 = vsel %vm2432, %v7076, 0.0
    %v7121 = vsel %vm2433, %v7080, 0.0
    %v7122 = vsel %vm2434, %v7084, 0.0
    %v7123 = vsel %vm2435, %v7088, 0.0
    %v7124 = vsel %vm2434, %v7092, 0.0
    %v7125 = vsel %vm2435, %v7096, 0.0
    %v7126 = vsel %vm2434, %v7100, 0.0
    %v7127 = vsel %vm2435, %v7104, 0.0
    %v7128 = vsel %vm2434, %v7108, 0.0
    %v7129 = vsel %vm2435, %v7112, 0.0
    %v7130 = vadd.f32 %v7034, %v7114
    %v7131 = vadd.f32 %v7035, %v7115
    %v7132 = vadd.f32 %v7036, %v7116
    %v7133 = vadd.f32 %v7037, %v7117
    %v7134 = vadd.f32 %v7038, %v7118
    %v7135 = vadd.f32 %v7039, %v7119
    %v7136 = vadd.f32 %v7040, %v7120
    %v7137 = vadd.f32 %v7041, %v7121
    %v7138 = vadd.f32 %v7042, %v7122
    %v7139 = vadd.f32 %v7043, %v7123
    %v7140 = vadd.f32 %v7044, %v7124
    %v7141 = vadd.f32 %v7045, %v7125
    %v7142 = vadd.f32 %v7046, %v7126
    %v7143 = vadd.f32 %v7047, %v7127
    %v7144 = vadd.f32 %v7048, %v7128
    %v7145 = vadd.f32 %v7049, %v7129
    %7146 = vset.pattern.permute.xlu0 9
    %7147 = vperm.xlu0 %7146, %v6227
    %v7148 = vpop.permute.xlu0 %7147
    %7150 = vset.pattern.permute.xlu0 9
    %7151 = vperm.xlu0 %7150, %v6229
    %v7152 = vpop.permute.xlu0 %7151
    %7154 = vset.pattern.permute.xlu0 9
    %7155 = vperm.xlu0 %7154, %v6232
    %v7156 = vpop.permute.xlu0 %7155
    %7158 = vset.pattern.permute.xlu0 9
    %7159 = vperm.xlu0 %7158, %v6234
    %v7160 = vpop.permute.xlu0 %7159
    %7162 = vset.pattern.permute.xlu0 9
    %7163 = vperm.xlu0 %7162, %v6237
    %v7164 = vpop.permute.xlu0 %7163
    %7166 = vset.pattern.permute.xlu0 9
    %7167 = vperm.xlu0 %7166, %v6239
    %v7168 = vpop.permute.xlu0 %7167
    %7170 = vset.pattern.permute.xlu0 9
    %7171 = vperm.xlu0 %7170, %v6242
    %v7172 = vpop.permute.xlu0 %7171
    %7174 = vset.pattern.permute.xlu0 9
    %7175 = vperm.xlu0 %7174, %v6244
    %v7176 = vpop.permute.xlu0 %7175
    %7178 = vset.pattern.permute.xlu0 9
    %7179 = vperm.xlu0 %7178, %v6247
    %v7180 = vpop.permute.xlu0 %7179
    %7182 = vset.pattern.permute.xlu0 9
    %7183 = vperm.xlu0 %7182, %v6249
    %v7184 = vpop.permute.xlu0 %7183
    %7186 = vset.pattern.permute.xlu0 9
    %7187 = vperm.xlu0 %7186, %v6252
    %v7188 = vpop.permute.xlu0 %7187
    %7190 = vset.pattern.permute.xlu0 9
    %7191 = vperm.xlu0 %7190, %v6254
    %v7192 = vpop.permute.xlu0 %7191
    %7194 = vset.pattern.permute.xlu0 9
    %7195 = vperm.xlu0 %7194, %v6257
    %v7196 = vpop.permute.xlu0 %7195
    %7198 = vset.pattern.permute.xlu0 9
    %7199 = vperm.xlu0 %7198, %v6259
    %v7200 = vpop.permute.xlu0 %7199
    %7202 = vset.pattern.permute.xlu0 9
    %7203 = vperm.xlu0 %7202, %v6262
    %v7204 = vpop.permute.xlu0 %7203
    %7206 = vset.pattern.permute.xlu0 9
    %7207 = vperm.xlu0 %7206, %v6264
    %v7208 = vpop.permute.xlu0 %7207
    %v7210 = vsel %vm2536, %v7148, 0.0
    %v7211 = vsel %vm2537, %v7152, 0.0
    %v7212 = vsel %vm2536, %v7156, 0.0
    %v7213 = vsel %vm2537, %v7160, 0.0
    %v7214 = vsel %vm2536, %v7164, 0.0
    %v7215 = vsel %vm2537, %v7168, 0.0
    %v7216 = vsel %vm2536, %v7172, 0.0
    %v7217 = vsel %vm2537, %v7176, 0.0
    %v7218 = vsel %vm2538, %v7180, 0.0
    %v7219 = vsel %vm2539, %v7184, 0.0
    %v7220 = vsel %vm2538, %v7188, 0.0
    %v7221 = vsel %vm2539, %v7192, 0.0
    %v7222 = vsel %vm2538, %v7196, 0.0
    %v7223 = vsel %vm2539, %v7200, 0.0
    %v7224 = vsel %vm2538, %v7204, 0.0
    %v7225 = vsel %vm2539, %v7208, 0.0
    %v7226 = vadd.f32 %v7130, %v7210
    %v7227 = vadd.f32 %v7131, %v7211
    %v7228 = vadd.f32 %v7132, %v7212
    %v7229 = vadd.f32 %v7133, %v7213
    %v7230 = vadd.f32 %v7134, %v7214
    %v7231 = vadd.f32 %v7135, %v7215
    %v7232 = vadd.f32 %v7136, %v7216
    %v7233 = vadd.f32 %v7137, %v7217
    %v7234 = vadd.f32 %v7138, %v7218
    %v7235 = vadd.f32 %v7139, %v7219
    %v7236 = vadd.f32 %v7140, %v7220
    %v7237 = vadd.f32 %v7141, %v7221
    %v7238 = vadd.f32 %v7142, %v7222
    %v7239 = vadd.f32 %v7143, %v7223
    %v7240 = vadd.f32 %v7144, %v7224
    %v7241 = vadd.f32 %v7145, %v7225
    %7242 = vset.pattern.permute.xlu0 10
    %7243 = vperm.xlu0 %7242, %v6227
    %v7244 = vpop.permute.xlu0 %7243
    %7246 = vset.pattern.permute.xlu0 10
    %7247 = vperm.xlu0 %7246, %v6229
    %v7248 = vpop.permute.xlu0 %7247
    %7250 = vset.pattern.permute.xlu0 10
    %7251 = vperm.xlu0 %7250, %v6232
    %v7252 = vpop.permute.xlu0 %7251
    %7254 = vset.pattern.permute.xlu0 10
    %7255 = vperm.xlu0 %7254, %v6234
    %v7256 = vpop.permute.xlu0 %7255
    %7258 = vset.pattern.permute.xlu0 10
    %7259 = vperm.xlu0 %7258, %v6237
    %v7260 = vpop.permute.xlu0 %7259
    %7262 = vset.pattern.permute.xlu0 10
    %7263 = vperm.xlu0 %7262, %v6239
    %v7264 = vpop.permute.xlu0 %7263
    %7266 = vset.pattern.permute.xlu0 10
    %7267 = vperm.xlu0 %7266, %v6242
    %v7268 = vpop.permute.xlu0 %7267
    %7270 = vset.pattern.permute.xlu0 10
    %7271 = vperm.xlu0 %7270, %v6244
    %v7272 = vpop.permute.xlu0 %7271
    %7274 = vset.pattern.permute.xlu0 10
    %7275 = vperm.xlu0 %7274, %v6247
    %v7276 = vpop.permute.xlu0 %7275
    %7278 = vset.pattern.permute.xlu0 10
    %7279 = vperm.xlu0 %7278, %v6249
    %v7280 = vpop.permute.xlu0 %7279
    %7282 = vset.pattern.permute.xlu0 10
    %7283 = vperm.xlu0 %7282, %v6252
    %v7284 = vpop.permute.xlu0 %7283
    %7286 = vset.pattern.permute.xlu0 10
    %7287 = vperm.xlu0 %7286, %v6254
    %v7288 = vpop.permute.xlu0 %7287
    %7290 = vset.pattern.permute.xlu0 10
    %7291 = vperm.xlu0 %7290, %v6257
    %v7292 = vpop.permute.xlu0 %7291
    %7294 = vset.pattern.permute.xlu0 10
    %7295 = vperm.xlu0 %7294, %v6259
    %v7296 = vpop.permute.xlu0 %7295
    %7298 = vset.pattern.permute.xlu0 10
    %7299 = vperm.xlu0 %7298, %v6262
    %v7300 = vpop.permute.xlu0 %7299
    %7302 = vset.pattern.permute.xlu0 10
    %7303 = vperm.xlu0 %7302, %v6264
    %v7304 = vpop.permute.xlu0 %7303
    %v7306 = vsel %vm2640, %v7244, 0.0
    %v7307 = vsel %vm2641, %v7248, 0.0
    %v7308 = vsel %vm2640, %v7252, 0.0
    %v7309 = vsel %vm2641, %v7256, 0.0
    %v7310 = vsel %vm2640, %v7260, 0.0
    %v7311 = vsel %vm2641, %v7264, 0.0
    %v7312 = vsel %vm2640, %v7268, 0.0
    %v7313 = vsel %vm2641, %v7272, 0.0
    %v7314 = vsel %vm2642, %v7276, 0.0
    %v7315 = vsel %vm2643, %v7280, 0.0
    %v7316 = vsel %vm2642, %v7284, 0.0
    %v7317 = vsel %vm2643, %v7288, 0.0
    %v7318 = vsel %vm2642, %v7292, 0.0
    %v7319 = vsel %vm2643, %v7296, 0.0
    %v7320 = vsel %vm2642, %v7300, 0.0
    %v7321 = vsel %vm2643, %v7304, 0.0
    %v7322 = vadd.f32 %v7226, %v7306
    %v7323 = vadd.f32 %v7227, %v7307
    %v7324 = vadd.f32 %v7228, %v7308
    %v7325 = vadd.f32 %v7229, %v7309
    %v7326 = vadd.f32 %v7230, %v7310
    %v7327 = vadd.f32 %v7231, %v7311
    %v7328 = vadd.f32 %v7232, %v7312
    %v7329 = vadd.f32 %v7233, %v7313
    %v7330 = vadd.f32 %v7234, %v7314
    %v7331 = vadd.f32 %v7235, %v7315
    %v7332 = vadd.f32 %v7236, %v7316
    %v7333 = vadd.f32 %v7237, %v7317
    %v7334 = vadd.f32 %v7238, %v7318
    %v7335 = vadd.f32 %v7239, %v7319
    %v7336 = vadd.f32 %v7240, %v7320
    %v7337 = vadd.f32 %v7241, %v7321
    %v7338 = vadd.f32 %v5964, %v7322
    %v7339 = vadd.f32 %v5966, %v7323
    %v7340 = vadd.f32 %v5994, %v7324
    %v7341 = vadd.f32 %v5996, %v7325
    %v7342 = vadd.f32 %v6024, %v7326
    %v7343 = vadd.f32 %v6026, %v7327
    %v7344 = vadd.f32 %v6054, %v7328
    %v7345 = vadd.f32 %v6056, %v7329
    %v7346 = vadd.f32 %v6084, %v7330
    %v7347 = vadd.f32 %v6086, %v7331
    %v7348 = vadd.f32 %v6114, %v7332
    %v7349 = vadd.f32 %v6116, %v7333
    %v7350 = vadd.f32 %v6144, %v7334
    %v7351 = vadd.f32 %v6146, %v7335
    %v7352 = vadd.f32 %v6174, %v7336
    %v7353 = vadd.f32 %v6176, %v7337
    %v7354 = vmul.f32 %v7338, 0.35355338
    %v7355 = vmul.f32 %v7339, 0.35355338
    %v7356 = vmul.f32 %v7340, 0.35355338
    %v7357 = vmul.f32 %v7341, 0.35355338
    %v7358 = vmul.f32 %v7342, 0.35355338
    %v7359 = vmul.f32 %v7343, 0.35355338
    %v7360 = vmul.f32 %v7344, 0.35355338
    %v7361 = vmul.f32 %v7345, 0.35355338
    %v7362 = vmul.f32 %v7346, 0.35355338
    %v7363 = vmul.f32 %v7347, 0.35355338
    %v7364 = vmul.f32 %v7348, 0.35355338
    %v7365 = vmul.f32 %v7349, 0.35355338
    %v7366 = vmul.f32 %v7350, 0.35355338
    %v7367 = vmul.f32 %v7351, 0.35355338
    %v7368 = vmul.f32 %v7352, 0.35355338
    %v7369 = vmul.f32 %v7353, 0.35355338
    %v7370 = vadd.f32 %v7354, %v2772
    %v7371 = vadd.f32 %v7355, %v2772
    %v7372 = vadd.f32 %v7356, %v2772
    %v7373 = vadd.f32 %v7357, %v2772
    %v7374 = vadd.f32 %v7358, %v2772
    %v7375 = vadd.f32 %v7359, %v2772
    %v7376 = vadd.f32 %v7360, %v2772
    %v7377 = vadd.f32 %v7361, %v2772
    %v7378 = vadd.f32 %v7362, %v2773
    %v7379 = vadd.f32 %v7363, %v2773
    %v7380 = vadd.f32 %v7364, %v2773
    %v7381 = vadd.f32 %v7365, %v2773
    %v7382 = vadd.f32 %v7366, %v2773
    %v7383 = vadd.f32 %v7367, %v2773
    %v7384 = vadd.f32 %v7368, %v2773
    %v7385 = vadd.f32 %v7369, %v2773
    %v7386 = vsel %vm2792, %v7370, -inf
    %7387 = vmax.xlane.f32.xlu0 %v7386
    %v7388 = vpop.xlane.xlu0 %7387
    %v7389 = vsel %vm2792, %v7371, -inf
    %7390 = vmax.xlane.f32.xlu0 %v7389
    %v7391 = vpop.xlane.xlu0 %7390
    %v7392 = vsel %vm2792, %v7372, -inf
    %7393 = vmax.xlane.f32.xlu0 %v7392
    %v7394 = vpop.xlane.xlu0 %7393
    %v7395 = vsel %vm2792, %v7373, -inf
    %7396 = vmax.xlane.f32.xlu0 %v7395
    %v7397 = vpop.xlane.xlu0 %7396
    %v7398 = vsel %vm2792, %v7374, -inf
    %7399 = vmax.xlane.f32.xlu0 %v7398
    %v7400 = vpop.xlane.xlu0 %7399
    %v7401 = vsel %vm2792, %v7375, -inf
    %7402 = vmax.xlane.f32.xlu0 %v7401
    %v7403 = vpop.xlane.xlu0 %7402
    %v7404 = vsel %vm2792, %v7376, -inf
    %7405 = vmax.xlane.f32.xlu0 %v7404
    %v7406 = vpop.xlane.xlu0 %7405
    %v7407 = vsel %vm2792, %v7377, -inf
    %7408 = vmax.xlane.f32.xlu0 %v7407
    %v7409 = vpop.xlane.xlu0 %7408
    %v7410 = vsel %vm2792, %v7378, -inf
    %7411 = vmax.xlane.f32.xlu0 %v7410
    %v7412 = vpop.xlane.xlu0 %7411
    %v7413 = vsel %vm2792, %v7379, -inf
    %7414 = vmax.xlane.f32.xlu0 %v7413
    %v7415 = vpop.xlane.xlu0 %7414
    %v7416 = vsel %vm2792, %v7380, -inf
    %7417 = vmax.xlane.f32.xlu0 %v7416
    %v7418 = vpop.xlane.xlu0 %7417
    %v7419 = vsel %vm2792, %v7381, -inf
    %7420 = vmax.xlane.f32.xlu0 %v7419
    %v7421 = vpop.xlane.xlu0 %7420
    %v7422 = vsel %vm2792, %v7382, -inf
    %7423 = vmax.xlane.f32.xlu0 %v7422
    %v7424 = vpop.xlane.xlu0 %7423
    %v7425 = vsel %vm2792, %v7383, -inf
    %7426 = vmax.xlane.f32.xlu0 %v7425
    %v7427 = vpop.xlane.xlu0 %7426
    %v7428 = vsel %vm2792, %v7384, -inf
    %7429 = vmax.xlane.f32.xlu0 %v7428
    %v7430 = vpop.xlane.xlu0 %7429
    %v7431 = vsel %vm2792, %v7385, -inf
    %7432 = vmax.xlane.f32.xlu0 %v7431
    %v7433 = vpop.xlane.xlu0 %7432
    %v7434 = vsub.f32 %v7370, %v7388
    %v7435 = vsub.f32 %v7371, %v7391
    %v7436 = vsub.f32 %v7372, %v7394
    %v7437 = vsub.f32 %v7373, %v7397
    %v7438 = vsub.f32 %v7374, %v7400
    %v7439 = vsub.f32 %v7375, %v7403
    %v7440 = vsub.f32 %v7376, %v7406
    %v7441 = vsub.f32 %v7377, %v7409
    %v7442 = vsub.f32 %v7378, %v7412
    %v7443 = vsub.f32 %v7379, %v7415
    %v7444 = vsub.f32 %v7380, %v7418
    %v7445 = vsub.f32 %v7381, %v7421
    %v7446 = vsub.f32 %v7382, %v7424
    %v7447 = vsub.f32 %v7383, %v7427
    %v7448 = vsub.f32 %v7384, %v7430
    %v7449 = vsub.f32 %v7385, %v7433
    %v7450 = vmul.f32 %v7434, 1.442695
    %v7451 = vpow.pop %v7450
    %v7452 = vmul.f32 %v7435, 1.442695
    %v7453 = vpow.pop %v7452
    %v7454 = vmul.f32 %v7436, 1.442695
    %v7455 = vpow.pop %v7454
    %v7456 = vmul.f32 %v7437, 1.442695
    %v7457 = vpow.pop %v7456
    %v7458 = vmul.f32 %v7438, 1.442695
    %v7459 = vpow.pop %v7458
    %v7460 = vmul.f32 %v7439, 1.442695
    %v7461 = vpow.pop %v7460
    %v7462 = vmul.f32 %v7440, 1.442695
    %v7463 = vpow.pop %v7462
    %v7464 = vmul.f32 %v7441, 1.442695
    %v7465 = vpow.pop %v7464
    %v7466 = vmul.f32 %v7442, 1.442695
    %v7467 = vpow.pop %v7466
    %v7468 = vmul.f32 %v7443, 1.442695
    %v7469 = vpow.pop %v7468
    %v7470 = vmul.f32 %v7444, 1.442695
    %v7471 = vpow.pop %v7470
    %v7472 = vmul.f32 %v7445, 1.442695
    %v7473 = vpow.pop %v7472
    %v7474 = vmul.f32 %v7446, 1.442695
    %v7475 = vpow.pop %v7474
    %v7476 = vmul.f32 %v7447, 1.442695
    %v7477 = vpow.pop %v7476
    %v7478 = vmul.f32 %v7448, 1.442695
    %v7479 = vpow.pop %v7478
    %v7480 = vmul.f32 %v7449, 1.442695
    %v7481 = vpow.pop %v7480
    %v7482 = vsel %vm2792, %v7451, 0.0
    %7483 = vadd.xlane.f32.xlu0 %v7482
    %v7484 = vpop.xlane.xlu0 %7483
    %v7485 = vsel %vm2792, %v7453, 0.0
    %7486 = vadd.xlane.f32.xlu0 %v7485
    %v7487 = vpop.xlane.xlu0 %7486
    %v7488 = vsel %vm2792, %v7455, 0.0
    %7489 = vadd.xlane.f32.xlu0 %v7488
    %v7490 = vpop.xlane.xlu0 %7489
    %v7491 = vsel %vm2792, %v7457, 0.0
    %7492 = vadd.xlane.f32.xlu0 %v7491
    %v7493 = vpop.xlane.xlu0 %7492
    %v7494 = vsel %vm2792, %v7459, 0.0
    %7495 = vadd.xlane.f32.xlu0 %v7494
    %v7496 = vpop.xlane.xlu0 %7495
    %v7497 = vsel %vm2792, %v7461, 0.0
    %7498 = vadd.xlane.f32.xlu0 %v7497
    %v7499 = vpop.xlane.xlu0 %7498
    %v7500 = vsel %vm2792, %v7463, 0.0
    %7501 = vadd.xlane.f32.xlu0 %v7500
    %v7502 = vpop.xlane.xlu0 %7501
    %v7503 = vsel %vm2792, %v7465, 0.0
    %7504 = vadd.xlane.f32.xlu0 %v7503
    %v7505 = vpop.xlane.xlu0 %7504
    %v7506 = vsel %vm2792, %v7467, 0.0
    %7507 = vadd.xlane.f32.xlu0 %v7506
    %v7508 = vpop.xlane.xlu0 %7507
    %v7509 = vsel %vm2792, %v7469, 0.0
    %7510 = vadd.xlane.f32.xlu0 %v7509
    %v7511 = vpop.xlane.xlu0 %7510
    %v7512 = vsel %vm2792, %v7471, 0.0
    %7513 = vadd.xlane.f32.xlu0 %v7512
    %v7514 = vpop.xlane.xlu0 %7513
    %v7515 = vsel %vm2792, %v7473, 0.0
    %7516 = vadd.xlane.f32.xlu0 %v7515
    %v7517 = vpop.xlane.xlu0 %7516
    %v7518 = vsel %vm2792, %v7475, 0.0
    %7519 = vadd.xlane.f32.xlu0 %v7518
    %v7520 = vpop.xlane.xlu0 %7519
    %v7521 = vsel %vm2792, %v7477, 0.0
    %7522 = vadd.xlane.f32.xlu0 %v7521
    %v7523 = vpop.xlane.xlu0 %7522
    %v7524 = vsel %vm2792, %v7479, 0.0
    %7525 = vadd.xlane.f32.xlu0 %v7524
    %v7526 = vpop.xlane.xlu0 %7525
    %v7527 = vsel %vm2792, %v7481, 0.0
    %7528 = vadd.xlane.f32.xlu0 %v7527
    %v7529 = vpop.xlane.xlu0 %7528
    %v7530 = vrcp.pop %v7484
    %v7531 = vrcp.pop %v7487
    %v7532 = vrcp.pop %v7490
    %v7533 = vrcp.pop %v7493
    %v7534 = vrcp.pop %v7496
    %v7535 = vrcp.pop %v7499
    %v7536 = vrcp.pop %v7502
    %v7537 = vrcp.pop %v7505
    %v7538 = vrcp.pop %v7508
    %v7539 = vrcp.pop %v7511
    %v7540 = vrcp.pop %v7514
    %v7541 = vrcp.pop %v7517
    %v7542 = vrcp.pop %v7520
    %v7543 = vrcp.pop %v7523
    %v7544 = vrcp.pop %v7526
    %v7545 = vrcp.pop %v7529
    %v7546 = vmul.f32 %v7451, %v7530
    %v7547 = vmul.f32 %v7453, %v7531
    %v7548 = vmul.f32 %v7455, %v7532
    %v7549 = vmul.f32 %v7457, %v7533
    %v7550 = vmul.f32 %v7459, %v7534
    %v7551 = vmul.f32 %v7461, %v7535
    %v7552 = vmul.f32 %v7463, %v7536
    %v7553 = vmul.f32 %v7465, %v7537
    %v7554 = vmul.f32 %v7467, %v7538
    %v7555 = vmul.f32 %v7469, %v7539
    %v7556 = vmul.f32 %v7471, %v7540
    %v7557 = vmul.f32 %v7473, %v7541
    %v7558 = vmul.f32 %v7475, %v7542
    %v7559 = vmul.f32 %v7477, %v7543
    %v7560 = vmul.f32 %v7479, %v7544
    %v7561 = vmul.f32 %v7481, %v7545
    %v7562 = vpack.c.bf16 %v7546, %v7546
    %v7563 = vpack.c.bf16 %v7547, %v7547
    %v7564 = vpack.c.bf16 %v7548, %v7548
    %v7565 = vpack.c.bf16 %v7549, %v7549
    %v7566 = vpack.c.bf16 %v7550, %v7550
    %v7567 = vpack.c.bf16 %v7551, %v7551
    %v7568 = vpack.c.bf16 %v7552, %v7552
    %v7569 = vpack.c.bf16 %v7553, %v7553
    %v7570 = vpack.c.bf16 %v7554, %v7554
    %v7571 = vpack.c.bf16 %v7555, %v7555
    %v7572 = vpack.c.bf16 %v7556, %v7556
    %v7573 = vpack.c.bf16 %v7557, %v7557
    %v7574 = vpack.c.bf16 %v7558, %v7558
    %v7575 = vpack.c.bf16 %v7559, %v7559
    %v7576 = vpack.c.bf16 %v7560, %v7560
    %v7577 = vpack.c.bf16 %v7561, %v7561
    %v7578 = vpack.c.bf16 %v5666, %v5666
    %v7579 = vpack.c.bf16 %v5667, %v5667
    %v7580 = vpack.c.bf16 %v5698, %v5698
    %v7581 = vpack.c.bf16 %v5699, %v5699
    %v7582 = vpack.c.bf16 %v5730, %v5730
    %v7583 = vpack.c.bf16 %v5731, %v5731
    %v7584 = vpack.c.bf16 %v5762, %v5762
    %v7585 = vpack.c.bf16 %v5763, %v5763
    %v7586 = vpack.c.bf16 %v5794, %v5794
    %v7587 = vpack.c.bf16 %v5795, %v5795
    %v7588 = vpack.c.bf16 %v5826, %v5826
    %v7589 = vpack.c.bf16 %v5827, %v5827
    %v7590 = vpack.c.bf16 %v5858, %v5858
    %v7591 = vpack.c.bf16 %v5859, %v5859
    %v7592 = vpack.c.bf16 %v5890, %v5890
    %v7593 = vpack.c.bf16 %v5891, %v5891
    %v7594 = vsel %vm1584, %v7546, 0.0
    %v7595 = vsel %vm1585, %v7547, 0.0
    %v7596 = vsel %vm1584, %v7548, 0.0
    %v7597 = vsel %vm1585, %v7549, 0.0
    %v7598 = vsel %vm1584, %v7550, 0.0
    %v7599 = vsel %vm1585, %v7551, 0.0
    %v7600 = vsel %vm1584, %v7552, 0.0
    %v7601 = vsel %vm1585, %v7553, 0.0
    %v7602 = vsel %vm1586, %v7554, 0.0
    %v7603 = vsel %vm1587, %v7555, 0.0
    %v7604 = vsel %vm1586, %v7556, 0.0
    %v7605 = vsel %vm1587, %v7557, 0.0
    %v7606 = vsel %vm1586, %v7558, 0.0
    %v7607 = vsel %vm1587, %v7559, 0.0
    %v7608 = vsel %vm1586, %v7560, 0.0
    %v7609 = vsel %vm1587, %v7561, 0.0
    %v7610 = vsel %vm2792, %v7594, 0.0
    %7611 = vadd.xlane.f32.xlu0 %v7610
    %v7612 = vpop.xlane.xlu0 %7611
    %v7613 = vsel %vm2792, %v7595, 0.0
    %7614 = vadd.xlane.f32.xlu0 %v7613
    %v7615 = vpop.xlane.xlu0 %7614
    %v7616 = vsel %vm2792, %v7596, 0.0
    %7617 = vadd.xlane.f32.xlu0 %v7616
    %v7618 = vpop.xlane.xlu0 %7617
    %v7619 = vsel %vm2792, %v7597, 0.0
    %7620 = vadd.xlane.f32.xlu0 %v7619
    %v7621 = vpop.xlane.xlu0 %7620
    %v7622 = vsel %vm2792, %v7598, 0.0
    %7623 = vadd.xlane.f32.xlu0 %v7622
    %v7624 = vpop.xlane.xlu0 %7623
    %v7625 = vsel %vm2792, %v7599, 0.0
    %7626 = vadd.xlane.f32.xlu0 %v7625
    %v7627 = vpop.xlane.xlu0 %7626
    %v7628 = vsel %vm2792, %v7600, 0.0
    %7629 = vadd.xlane.f32.xlu0 %v7628
    %v7630 = vpop.xlane.xlu0 %7629
    %v7631 = vsel %vm2792, %v7601, 0.0
    %7632 = vadd.xlane.f32.xlu0 %v7631
    %v7633 = vpop.xlane.xlu0 %7632
    %v7634 = vsel %vm2792, %v7602, 0.0
    %7635 = vadd.xlane.f32.xlu0 %v7634
    %v7636 = vpop.xlane.xlu0 %7635
    %v7637 = vsel %vm2792, %v7603, 0.0
    %7638 = vadd.xlane.f32.xlu0 %v7637
    %v7639 = vpop.xlane.xlu0 %7638
    %v7640 = vsel %vm2792, %v7604, 0.0
    %7641 = vadd.xlane.f32.xlu0 %v7640
    %v7642 = vpop.xlane.xlu0 %7641
    %v7643 = vsel %vm2792, %v7605, 0.0
    %7644 = vadd.xlane.f32.xlu0 %v7643
    %v7645 = vpop.xlane.xlu0 %7644
    %v7646 = vsel %vm2792, %v7606, 0.0
    %7647 = vadd.xlane.f32.xlu0 %v7646
    %v7648 = vpop.xlane.xlu0 %7647
    %v7649 = vsel %vm2792, %v7607, 0.0
    %7650 = vadd.xlane.f32.xlu0 %v7649
    %v7651 = vpop.xlane.xlu0 %7650
    %v7652 = vsel %vm2792, %v7608, 0.0
    %7653 = vadd.xlane.f32.xlu0 %v7652
    %v7654 = vpop.xlane.xlu0 %7653
    %v7655 = vsel %vm2792, %v7609, 0.0
    %7656 = vadd.xlane.f32.xlu0 %v7655
    %v7657 = vpop.xlane.xlu0 %7656
    %v7658 = vsel %vm1704, %v7546, 0.0
    %v7659 = vsel %vm1705, %v7547, 0.0
    %v7660 = vsel %vm1704, %v7548, 0.0
    %v7661 = vsel %vm1705, %v7549, 0.0
    %v7662 = vsel %vm1704, %v7550, 0.0
    %v7663 = vsel %vm1705, %v7551, 0.0
    %v7664 = vsel %vm1704, %v7552, 0.0
    %v7665 = vsel %vm1705, %v7553, 0.0
    %v7666 = vsel %vm1706, %v7554, 0.0
    %v7667 = vsel %vm1707, %v7555, 0.0
    %v7668 = vsel %vm1706, %v7556, 0.0
    %v7669 = vsel %vm1707, %v7557, 0.0
    %v7670 = vsel %vm1706, %v7558, 0.0
    %v7671 = vsel %vm1707, %v7559, 0.0
    %v7672 = vsel %vm1706, %v7560, 0.0
    %v7673 = vsel %vm1707, %v7561, 0.0
    %v7674 = vsel %vm2792, %v7658, 0.0
    %7675 = vadd.xlane.f32.xlu0 %v7674
    %v7676 = vpop.xlane.xlu0 %7675
    %v7677 = vsel %vm2792, %v7659, 0.0
    %7678 = vadd.xlane.f32.xlu0 %v7677
    %v7679 = vpop.xlane.xlu0 %7678
    %v7680 = vsel %vm2792, %v7660, 0.0
    %7681 = vadd.xlane.f32.xlu0 %v7680
    %v7682 = vpop.xlane.xlu0 %7681
    %v7683 = vsel %vm2792, %v7661, 0.0
    %7684 = vadd.xlane.f32.xlu0 %v7683
    %v7685 = vpop.xlane.xlu0 %7684
    %v7686 = vsel %vm2792, %v7662, 0.0
    %7687 = vadd.xlane.f32.xlu0 %v7686
    %v7688 = vpop.xlane.xlu0 %7687
    %v7689 = vsel %vm2792, %v7663, 0.0
    %7690 = vadd.xlane.f32.xlu0 %v7689
    %v7691 = vpop.xlane.xlu0 %7690
    %v7692 = vsel %vm2792, %v7664, 0.0
    %7693 = vadd.xlane.f32.xlu0 %v7692
    %v7694 = vpop.xlane.xlu0 %7693
    %v7695 = vsel %vm2792, %v7665, 0.0
    %7696 = vadd.xlane.f32.xlu0 %v7695
    %v7697 = vpop.xlane.xlu0 %7696
    %v7698 = vsel %vm2792, %v7666, 0.0
    %7699 = vadd.xlane.f32.xlu0 %v7698
    %v7700 = vpop.xlane.xlu0 %7699
    %v7701 = vsel %vm2792, %v7667, 0.0
    %7702 = vadd.xlane.f32.xlu0 %v7701
    %v7703 = vpop.xlane.xlu0 %7702
    %v7704 = vsel %vm2792, %v7668, 0.0
    %7705 = vadd.xlane.f32.xlu0 %v7704
    %v7706 = vpop.xlane.xlu0 %7705
    %v7707 = vsel %vm2792, %v7669, 0.0
    %7708 = vadd.xlane.f32.xlu0 %v7707
    %v7709 = vpop.xlane.xlu0 %7708
    %v7710 = vsel %vm2792, %v7670, 0.0
    %7711 = vadd.xlane.f32.xlu0 %v7710
    %v7712 = vpop.xlane.xlu0 %7711
    %v7713 = vsel %vm2792, %v7671, 0.0
    %7714 = vadd.xlane.f32.xlu0 %v7713
    %v7715 = vpop.xlane.xlu0 %7714
    %v7716 = vsel %vm2792, %v7672, 0.0
    %7717 = vadd.xlane.f32.xlu0 %v7716
    %v7718 = vpop.xlane.xlu0 %7717
    %v7719 = vsel %vm2792, %v7673, 0.0
    %7720 = vadd.xlane.f32.xlu0 %v7719
    %v7721 = vpop.xlane.xlu0 %7720
    %v7722 = vsel %vm1808, %v7546, 0.0
    %v7723 = vsel %vm1809, %v7547, 0.0
    %v7724 = vsel %vm1808, %v7548, 0.0
    %v7725 = vsel %vm1809, %v7549, 0.0
    %v7726 = vsel %vm1808, %v7550, 0.0
    %v7727 = vsel %vm1809, %v7551, 0.0
    %v7728 = vsel %vm1808, %v7552, 0.0
    %v7729 = vsel %vm1809, %v7553, 0.0
    %v7730 = vsel %vm1810, %v7554, 0.0
    %v7731 = vsel %vm1811, %v7555, 0.0
    %v7732 = vsel %vm1810, %v7556, 0.0
    %v7733 = vsel %vm1811, %v7557, 0.0
    %v7734 = vsel %vm1810, %v7558, 0.0
    %v7735 = vsel %vm1811, %v7559, 0.0
    %v7736 = vsel %vm1810, %v7560, 0.0
    %v7737 = vsel %vm1811, %v7561, 0.0
    %v7738 = vsel %vm2792, %v7722, 0.0
    %7739 = vadd.xlane.f32.xlu0 %v7738
    %v7740 = vpop.xlane.xlu0 %7739
    %v7741 = vsel %vm2792, %v7723, 0.0
    %7742 = vadd.xlane.f32.xlu0 %v7741
    %v7743 = vpop.xlane.xlu0 %7742
    %v7744 = vsel %vm2792, %v7724, 0.0
    %7745 = vadd.xlane.f32.xlu0 %v7744
    %v7746 = vpop.xlane.xlu0 %7745
    %v7747 = vsel %vm2792, %v7725, 0.0
    %7748 = vadd.xlane.f32.xlu0 %v7747
    %v7749 = vpop.xlane.xlu0 %7748
    %v7750 = vsel %vm2792, %v7726, 0.0
    %7751 = vadd.xlane.f32.xlu0 %v7750
    %v7752 = vpop.xlane.xlu0 %7751
    %v7753 = vsel %vm2792, %v7727, 0.0
    %7754 = vadd.xlane.f32.xlu0 %v7753
    %v7755 = vpop.xlane.xlu0 %7754
    %v7756 = vsel %vm2792, %v7728, 0.0
    %7757 = vadd.xlane.f32.xlu0 %v7756
    %v7758 = vpop.xlane.xlu0 %7757
    %v7759 = vsel %vm2792, %v7729, 0.0
    %7760 = vadd.xlane.f32.xlu0 %v7759
    %v7761 = vpop.xlane.xlu0 %7760
    %v7762 = vsel %vm2792, %v7730, 0.0
    %7763 = vadd.xlane.f32.xlu0 %v7762
    %v7764 = vpop.xlane.xlu0 %7763
    %v7765 = vsel %vm2792, %v7731, 0.0
    %7766 = vadd.xlane.f32.xlu0 %v7765
    %v7767 = vpop.xlane.xlu0 %7766
    %v7768 = vsel %vm2792, %v7732, 0.0
    %7769 = vadd.xlane.f32.xlu0 %v7768
    %v7770 = vpop.xlane.xlu0 %7769
    %v7771 = vsel %vm2792, %v7733, 0.0
    %7772 = vadd.xlane.f32.xlu0 %v7771
    %v7773 = vpop.xlane.xlu0 %7772
    %v7774 = vsel %vm2792, %v7734, 0.0
    %7775 = vadd.xlane.f32.xlu0 %v7774
    %v7776 = vpop.xlane.xlu0 %7775
    %v7777 = vsel %vm2792, %v7735, 0.0
    %7778 = vadd.xlane.f32.xlu0 %v7777
    %v7779 = vpop.xlane.xlu0 %7778
    %v7780 = vsel %vm2792, %v7736, 0.0
    %7781 = vadd.xlane.f32.xlu0 %v7780
    %v7782 = vpop.xlane.xlu0 %7781
    %v7783 = vsel %vm2792, %v7737, 0.0
    %7784 = vadd.xlane.f32.xlu0 %v7783
    %v7785 = vpop.xlane.xlu0 %7784
    %v7786 = vsel %vm1912, %v7546, 0.0
    %v7787 = vsel %vm1913, %v7547, 0.0
    %v7788 = vsel %vm1912, %v7548, 0.0
    %v7789 = vsel %vm1913, %v7549, 0.0
    %v7790 = vsel %vm1912, %v7550, 0.0
    %v7791 = vsel %vm1913, %v7551, 0.0
    %v7792 = vsel %vm1912, %v7552, 0.0
    %v7793 = vsel %vm1913, %v7553, 0.0
    %v7794 = vsel %vm1914, %v7554, 0.0
    %v7795 = vsel %vm1915, %v7555, 0.0
    %v7796 = vsel %vm1914, %v7556, 0.0
    %v7797 = vsel %vm1915, %v7557, 0.0
    %v7798 = vsel %vm1914, %v7558, 0.0
    %v7799 = vsel %vm1915, %v7559, 0.0
    %v7800 = vsel %vm1914, %v7560, 0.0
    %v7801 = vsel %vm1915, %v7561, 0.0
    %v7802 = vsel %vm2792, %v7786, 0.0
    %7803 = vadd.xlane.f32.xlu0 %v7802
    %v7804 = vpop.xlane.xlu0 %7803
    %v7805 = vsel %vm2792, %v7787, 0.0
    %7806 = vadd.xlane.f32.xlu0 %v7805
    %v7807 = vpop.xlane.xlu0 %7806
    %v7808 = vsel %vm2792, %v7788, 0.0
    %7809 = vadd.xlane.f32.xlu0 %v7808
    %v7810 = vpop.xlane.xlu0 %7809
    %v7811 = vsel %vm2792, %v7789, 0.0
    %7812 = vadd.xlane.f32.xlu0 %v7811
    %v7813 = vpop.xlane.xlu0 %7812
    %v7814 = vsel %vm2792, %v7790, 0.0
    %7815 = vadd.xlane.f32.xlu0 %v7814
    %v7816 = vpop.xlane.xlu0 %7815
    %v7817 = vsel %vm2792, %v7791, 0.0
    %7818 = vadd.xlane.f32.xlu0 %v7817
    %v7819 = vpop.xlane.xlu0 %7818
    %v7820 = vsel %vm2792, %v7792, 0.0
    %7821 = vadd.xlane.f32.xlu0 %v7820
    %v7822 = vpop.xlane.xlu0 %7821
    %v7823 = vsel %vm2792, %v7793, 0.0
    %7824 = vadd.xlane.f32.xlu0 %v7823
    %v7825 = vpop.xlane.xlu0 %7824
    %v7826 = vsel %vm2792, %v7794, 0.0
    %7827 = vadd.xlane.f32.xlu0 %v7826
    %v7828 = vpop.xlane.xlu0 %7827
    %v7829 = vsel %vm2792, %v7795, 0.0
    %7830 = vadd.xlane.f32.xlu0 %v7829
    %v7831 = vpop.xlane.xlu0 %7830
    %v7832 = vsel %vm2792, %v7796, 0.0
    %7833 = vadd.xlane.f32.xlu0 %v7832
    %v7834 = vpop.xlane.xlu0 %7833
    %v7835 = vsel %vm2792, %v7797, 0.0
    %7836 = vadd.xlane.f32.xlu0 %v7835
    %v7837 = vpop.xlane.xlu0 %7836
    %v7838 = vsel %vm2792, %v7798, 0.0
    %7839 = vadd.xlane.f32.xlu0 %v7838
    %v7840 = vpop.xlane.xlu0 %7839
    %v7841 = vsel %vm2792, %v7799, 0.0
    %7842 = vadd.xlane.f32.xlu0 %v7841
    %v7843 = vpop.xlane.xlu0 %7842
    %v7844 = vsel %vm2792, %v7800, 0.0
    %7845 = vadd.xlane.f32.xlu0 %v7844
    %v7846 = vpop.xlane.xlu0 %7845
    %v7847 = vsel %vm2792, %v7801, 0.0
    %7848 = vadd.xlane.f32.xlu0 %v7847
    %v7849 = vpop.xlane.xlu0 %7848
    %v7850 = vsel %vm2016, %v7546, 0.0
    %v7851 = vsel %vm2017, %v7547, 0.0
    %v7852 = vsel %vm2016, %v7548, 0.0
    %v7853 = vsel %vm2017, %v7549, 0.0
    %v7854 = vsel %vm2016, %v7550, 0.0
    %v7855 = vsel %vm2017, %v7551, 0.0
    %v7856 = vsel %vm2016, %v7552, 0.0
    %v7857 = vsel %vm2017, %v7553, 0.0
    %v7858 = vsel %vm2018, %v7554, 0.0
    %v7859 = vsel %vm2019, %v7555, 0.0
    %v7860 = vsel %vm2018, %v7556, 0.0
    %v7861 = vsel %vm2019, %v7557, 0.0
    %v7862 = vsel %vm2018, %v7558, 0.0
    %v7863 = vsel %vm2019, %v7559, 0.0
    %v7864 = vsel %vm2018, %v7560, 0.0
    %v7865 = vsel %vm2019, %v7561, 0.0
    %v7866 = vsel %vm2792, %v7850, 0.0
    %7867 = vadd.xlane.f32.xlu0 %v7866
    %v7868 = vpop.xlane.xlu0 %7867
    %v7869 = vsel %vm2792, %v7851, 0.0
    %7870 = vadd.xlane.f32.xlu0 %v7869
    %v7871 = vpop.xlane.xlu0 %7870
    %v7872 = vsel %vm2792, %v7852, 0.0
    %7873 = vadd.xlane.f32.xlu0 %v7872
    %v7874 = vpop.xlane.xlu0 %7873
    %v7875 = vsel %vm2792, %v7853, 0.0
    %7876 = vadd.xlane.f32.xlu0 %v7875
    %v7877 = vpop.xlane.xlu0 %7876
    %v7878 = vsel %vm2792, %v7854, 0.0
    %7879 = vadd.xlane.f32.xlu0 %v7878
    %v7880 = vpop.xlane.xlu0 %7879
    %v7881 = vsel %vm2792, %v7855, 0.0
    %7882 = vadd.xlane.f32.xlu0 %v7881
    %v7883 = vpop.xlane.xlu0 %7882
    %v7884 = vsel %vm2792, %v7856, 0.0
    %7885 = vadd.xlane.f32.xlu0 %v7884
    %v7886 = vpop.xlane.xlu0 %7885
    %v7887 = vsel %vm2792, %v7857, 0.0
    %7888 = vadd.xlane.f32.xlu0 %v7887
    %v7889 = vpop.xlane.xlu0 %7888
    %v7890 = vsel %vm2792, %v7858, 0.0
    %7891 = vadd.xlane.f32.xlu0 %v7890
    %v7892 = vpop.xlane.xlu0 %7891
    %v7893 = vsel %vm2792, %v7859, 0.0
    %7894 = vadd.xlane.f32.xlu0 %v7893
    %v7895 = vpop.xlane.xlu0 %7894
    %v7896 = vsel %vm2792, %v7860, 0.0
    %7897 = vadd.xlane.f32.xlu0 %v7896
    %v7898 = vpop.xlane.xlu0 %7897
    %v7899 = vsel %vm2792, %v7861, 0.0
    %7900 = vadd.xlane.f32.xlu0 %v7899
    %v7901 = vpop.xlane.xlu0 %7900
    %v7902 = vsel %vm2792, %v7862, 0.0
    %7903 = vadd.xlane.f32.xlu0 %v7902
    %v7904 = vpop.xlane.xlu0 %7903
    %v7905 = vsel %vm2792, %v7863, 0.0
    %7906 = vadd.xlane.f32.xlu0 %v7905
    %v7907 = vpop.xlane.xlu0 %7906
    %v7908 = vsel %vm2792, %v7864, 0.0
    %7909 = vadd.xlane.f32.xlu0 %v7908
    %v7910 = vpop.xlane.xlu0 %7909
    %v7911 = vsel %vm2792, %v7865, 0.0
    %7912 = vadd.xlane.f32.xlu0 %v7911
    %v7913 = vpop.xlane.xlu0 %7912
    %v7914 = vsel %vm2120, %v7546, 0.0
    %v7915 = vsel %vm2121, %v7547, 0.0
    %v7916 = vsel %vm2120, %v7548, 0.0
    %v7917 = vsel %vm2121, %v7549, 0.0
    %v7918 = vsel %vm2120, %v7550, 0.0
    %v7919 = vsel %vm2121, %v7551, 0.0
    %v7920 = vsel %vm2120, %v7552, 0.0
    %v7921 = vsel %vm2121, %v7553, 0.0
    %v7922 = vsel %vm2122, %v7554, 0.0
    %v7923 = vsel %vm2123, %v7555, 0.0
    %v7924 = vsel %vm2122, %v7556, 0.0
    %v7925 = vsel %vm2123, %v7557, 0.0
    %v7926 = vsel %vm2122, %v7558, 0.0
    %v7927 = vsel %vm2123, %v7559, 0.0
    %v7928 = vsel %vm2122, %v7560, 0.0
    %v7929 = vsel %vm2123, %v7561, 0.0
    %v7930 = vsel %vm2792, %v7914, 0.0
    %7931 = vadd.xlane.f32.xlu0 %v7930
    %v7932 = vpop.xlane.xlu0 %7931
    %v7933 = vsel %vm2792, %v7915, 0.0
    %7934 = vadd.xlane.f32.xlu0 %v7933
    %v7935 = vpop.xlane.xlu0 %7934
    %v7936 = vsel %vm2792, %v7916, 0.0
    %7937 = vadd.xlane.f32.xlu0 %v7936
    %v7938 = vpop.xlane.xlu0 %7937
    %v7939 = vsel %vm2792, %v7917, 0.0
    %7940 = vadd.xlane.f32.xlu0 %v7939
    %v7941 = vpop.xlane.xlu0 %7940
    %v7942 = vsel %vm2792, %v7918, 0.0
    %7943 = vadd.xlane.f32.xlu0 %v7942
    %v7944 = vpop.xlane.xlu0 %7943
    %v7945 = vsel %vm2792, %v7919, 0.0
    %7946 = vadd.xlane.f32.xlu0 %v7945
    %v7947 = vpop.xlane.xlu0 %7946
    %v7948 = vsel %vm2792, %v7920, 0.0
    %7949 = vadd.xlane.f32.xlu0 %v7948
    %v7950 = vpop.xlane.xlu0 %7949
    %v7951 = vsel %vm2792, %v7921, 0.0
    %7952 = vadd.xlane.f32.xlu0 %v7951
    %v7953 = vpop.xlane.xlu0 %7952
    %v7954 = vsel %vm2792, %v7922, 0.0
    %7955 = vadd.xlane.f32.xlu0 %v7954
    %v7956 = vpop.xlane.xlu0 %7955
    %v7957 = vsel %vm2792, %v7923, 0.0
    %7958 = vadd.xlane.f32.xlu0 %v7957
    %v7959 = vpop.xlane.xlu0 %7958
    %v7960 = vsel %vm2792, %v7924, 0.0
    %7961 = vadd.xlane.f32.xlu0 %v7960
    %v7962 = vpop.xlane.xlu0 %7961
    %v7963 = vsel %vm2792, %v7925, 0.0
    %7964 = vadd.xlane.f32.xlu0 %v7963
    %v7965 = vpop.xlane.xlu0 %7964
    %v7966 = vsel %vm2792, %v7926, 0.0
    %7967 = vadd.xlane.f32.xlu0 %v7966
    %v7968 = vpop.xlane.xlu0 %7967
    %v7969 = vsel %vm2792, %v7927, 0.0
    %7970 = vadd.xlane.f32.xlu0 %v7969
    %v7971 = vpop.xlane.xlu0 %7970
    %v7972 = vsel %vm2792, %v7928, 0.0
    %7973 = vadd.xlane.f32.xlu0 %v7972
    %v7974 = vpop.xlane.xlu0 %7973
    %v7975 = vsel %vm2792, %v7929, 0.0
    %7976 = vadd.xlane.f32.xlu0 %v7975
    %v7977 = vpop.xlane.xlu0 %7976
    %v7978 = vsel %vm2224, %v7546, 0.0
    %v7979 = vsel %vm2225, %v7547, 0.0
    %v7980 = vsel %vm2224, %v7548, 0.0
    %v7981 = vsel %vm2225, %v7549, 0.0
    %v7982 = vsel %vm2224, %v7550, 0.0
    %v7983 = vsel %vm2225, %v7551, 0.0
    %v7984 = vsel %vm2224, %v7552, 0.0
    %v7985 = vsel %vm2225, %v7553, 0.0
    %v7986 = vsel %vm2226, %v7554, 0.0
    %v7987 = vsel %vm2227, %v7555, 0.0
    %v7988 = vsel %vm2226, %v7556, 0.0
    %v7989 = vsel %vm2227, %v7557, 0.0
    %v7990 = vsel %vm2226, %v7558, 0.0
    %v7991 = vsel %vm2227, %v7559, 0.0
    %v7992 = vsel %vm2226, %v7560, 0.0
    %v7993 = vsel %vm2227, %v7561, 0.0
    %v7994 = vsel %vm2792, %v7978, 0.0
    %7995 = vadd.xlane.f32.xlu0 %v7994
    %v7996 = vpop.xlane.xlu0 %7995
    %v7997 = vsel %vm2792, %v7979, 0.0
    %7998 = vadd.xlane.f32.xlu0 %v7997
    %v7999 = vpop.xlane.xlu0 %7998
    %v8000 = vsel %vm2792, %v7980, 0.0
    %8001 = vadd.xlane.f32.xlu0 %v8000
    %v8002 = vpop.xlane.xlu0 %8001
    %v8003 = vsel %vm2792, %v7981, 0.0
    %8004 = vadd.xlane.f32.xlu0 %v8003
    %v8005 = vpop.xlane.xlu0 %8004
    %v8006 = vsel %vm2792, %v7982, 0.0
    %8007 = vadd.xlane.f32.xlu0 %v8006
    %v8008 = vpop.xlane.xlu0 %8007
    %v8009 = vsel %vm2792, %v7983, 0.0
    %8010 = vadd.xlane.f32.xlu0 %v8009
    %v8011 = vpop.xlane.xlu0 %8010
    %v8012 = vsel %vm2792, %v7984, 0.0
    %8013 = vadd.xlane.f32.xlu0 %v8012
    %v8014 = vpop.xlane.xlu0 %8013
    %v8015 = vsel %vm2792, %v7985, 0.0
    %8016 = vadd.xlane.f32.xlu0 %v8015
    %v8017 = vpop.xlane.xlu0 %8016
    %v8018 = vsel %vm2792, %v7986, 0.0
    %8019 = vadd.xlane.f32.xlu0 %v8018
    %v8020 = vpop.xlane.xlu0 %8019
    %v8021 = vsel %vm2792, %v7987, 0.0
    %8022 = vadd.xlane.f32.xlu0 %v8021
    %v8023 = vpop.xlane.xlu0 %8022
    %v8024 = vsel %vm2792, %v7988, 0.0
    %8025 = vadd.xlane.f32.xlu0 %v8024
    %v8026 = vpop.xlane.xlu0 %8025
    %v8027 = vsel %vm2792, %v7989, 0.0
    %8028 = vadd.xlane.f32.xlu0 %v8027
    %v8029 = vpop.xlane.xlu0 %8028
    %v8030 = vsel %vm2792, %v7990, 0.0
    %8031 = vadd.xlane.f32.xlu0 %v8030
    %v8032 = vpop.xlane.xlu0 %8031
    %v8033 = vsel %vm2792, %v7991, 0.0
    %8034 = vadd.xlane.f32.xlu0 %v8033
    %v8035 = vpop.xlane.xlu0 %8034
    %v8036 = vsel %vm2792, %v7992, 0.0
    %8037 = vadd.xlane.f32.xlu0 %v8036
    %v8038 = vpop.xlane.xlu0 %8037
    %v8039 = vsel %vm2792, %v7993, 0.0
    %8040 = vadd.xlane.f32.xlu0 %v8039
    %v8041 = vpop.xlane.xlu0 %8040
    %v8042 = vsel %vm2328, %v7546, 0.0
    %v8043 = vsel %vm2329, %v7547, 0.0
    %v8044 = vsel %vm2328, %v7548, 0.0
    %v8045 = vsel %vm2329, %v7549, 0.0
    %v8046 = vsel %vm2328, %v7550, 0.0
    %v8047 = vsel %vm2329, %v7551, 0.0
    %v8048 = vsel %vm2328, %v7552, 0.0
    %v8049 = vsel %vm2329, %v7553, 0.0
    %v8050 = vsel %vm2330, %v7554, 0.0
    %v8051 = vsel %vm2331, %v7555, 0.0
    %v8052 = vsel %vm2330, %v7556, 0.0
    %v8053 = vsel %vm2331, %v7557, 0.0
    %v8054 = vsel %vm2330, %v7558, 0.0
    %v8055 = vsel %vm2331, %v7559, 0.0
    %v8056 = vsel %vm2330, %v7560, 0.0
    %v8057 = vsel %vm2331, %v7561, 0.0
    %v8058 = vsel %vm2792, %v8042, 0.0
    %8059 = vadd.xlane.f32.xlu0 %v8058
    %v8060 = vpop.xlane.xlu0 %8059
    %v8061 = vsel %vm2792, %v8043, 0.0
    %8062 = vadd.xlane.f32.xlu0 %v8061
    %v8063 = vpop.xlane.xlu0 %8062
    %v8064 = vsel %vm2792, %v8044, 0.0
    %8065 = vadd.xlane.f32.xlu0 %v8064
    %v8066 = vpop.xlane.xlu0 %8065
    %v8067 = vsel %vm2792, %v8045, 0.0
    %8068 = vadd.xlane.f32.xlu0 %v8067
    %v8069 = vpop.xlane.xlu0 %8068
    %v8070 = vsel %vm2792, %v8046, 0.0
    %8071 = vadd.xlane.f32.xlu0 %v8070
    %v8072 = vpop.xlane.xlu0 %8071
    %v8073 = vsel %vm2792, %v8047, 0.0
    %8074 = vadd.xlane.f32.xlu0 %v8073
    %v8075 = vpop.xlane.xlu0 %8074
    %v8076 = vsel %vm2792, %v8048, 0.0
    %8077 = vadd.xlane.f32.xlu0 %v8076
    %v8078 = vpop.xlane.xlu0 %8077
    %v8079 = vsel %vm2792, %v8049, 0.0
    %8080 = vadd.xlane.f32.xlu0 %v8079
    %v8081 = vpop.xlane.xlu0 %8080
    %v8082 = vsel %vm2792, %v8050, 0.0
    %8083 = vadd.xlane.f32.xlu0 %v8082
    %v8084 = vpop.xlane.xlu0 %8083
    %v8085 = vsel %vm2792, %v8051, 0.0
    %8086 = vadd.xlane.f32.xlu0 %v8085
    %v8087 = vpop.xlane.xlu0 %8086
    %v8088 = vsel %vm2792, %v8052, 0.0
    %8089 = vadd.xlane.f32.xlu0 %v8088
    %v8090 = vpop.xlane.xlu0 %8089
    %v8091 = vsel %vm2792, %v8053, 0.0
    %8092 = vadd.xlane.f32.xlu0 %v8091
    %v8093 = vpop.xlane.xlu0 %8092
    %v8094 = vsel %vm2792, %v8054, 0.0
    %8095 = vadd.xlane.f32.xlu0 %v8094
    %v8096 = vpop.xlane.xlu0 %8095
    %v8097 = vsel %vm2792, %v8055, 0.0
    %8098 = vadd.xlane.f32.xlu0 %v8097
    %v8099 = vpop.xlane.xlu0 %8098
    %v8100 = vsel %vm2792, %v8056, 0.0
    %8101 = vadd.xlane.f32.xlu0 %v8100
    %v8102 = vpop.xlane.xlu0 %8101
    %v8103 = vsel %vm2792, %v8057, 0.0
    %8104 = vadd.xlane.f32.xlu0 %v8103
    %v8105 = vpop.xlane.xlu0 %8104
    %v8106 = vsel %vm2432, %v7546, 0.0
    %v8107 = vsel %vm2433, %v7547, 0.0
    %v8108 = vsel %vm2432, %v7548, 0.0
    %v8109 = vsel %vm2433, %v7549, 0.0
    %v8110 = vsel %vm2432, %v7550, 0.0
    %v8111 = vsel %vm2433, %v7551, 0.0
    %v8112 = vsel %vm2432, %v7552, 0.0
    %v8113 = vsel %vm2433, %v7553, 0.0
    %v8114 = vsel %vm2434, %v7554, 0.0
    %v8115 = vsel %vm2435, %v7555, 0.0
    %v8116 = vsel %vm2434, %v7556, 0.0
    %v8117 = vsel %vm2435, %v7557, 0.0
    %v8118 = vsel %vm2434, %v7558, 0.0
    %v8119 = vsel %vm2435, %v7559, 0.0
    %v8120 = vsel %vm2434, %v7560, 0.0
    %v8121 = vsel %vm2435, %v7561, 0.0
    %v8122 = vsel %vm2792, %v8106, 0.0
    %8123 = vadd.xlane.f32.xlu0 %v8122
    %v8124 = vpop.xlane.xlu0 %8123
    %v8125 = vsel %vm2792, %v8107, 0.0
    %8126 = vadd.xlane.f32.xlu0 %v8125
    %v8127 = vpop.xlane.xlu0 %8126
    %v8128 = vsel %vm2792, %v8108, 0.0
    %8129 = vadd.xlane.f32.xlu0 %v8128
    %v8130 = vpop.xlane.xlu0 %8129
    %v8131 = vsel %vm2792, %v8109, 0.0
    %8132 = vadd.xlane.f32.xlu0 %v8131
    %v8133 = vpop.xlane.xlu0 %8132
    %v8134 = vsel %vm2792, %v8110, 0.0
    %8135 = vadd.xlane.f32.xlu0 %v8134
    %v8136 = vpop.xlane.xlu0 %8135
    %v8137 = vsel %vm2792, %v8111, 0.0
    %8138 = vadd.xlane.f32.xlu0 %v8137
    %v8139 = vpop.xlane.xlu0 %8138
    %v8140 = vsel %vm2792, %v8112, 0.0
    %8141 = vadd.xlane.f32.xlu0 %v8140
    %v8142 = vpop.xlane.xlu0 %8141
    %v8143 = vsel %vm2792, %v8113, 0.0
    %8144 = vadd.xlane.f32.xlu0 %v8143
    %v8145 = vpop.xlane.xlu0 %8144
    %v8146 = vsel %vm2792, %v8114, 0.0
    %8147 = vadd.xlane.f32.xlu0 %v8146
    %v8148 = vpop.xlane.xlu0 %8147
    %v8149 = vsel %vm2792, %v8115, 0.0
    %8150 = vadd.xlane.f32.xlu0 %v8149
    %v8151 = vpop.xlane.xlu0 %8150
    %v8152 = vsel %vm2792, %v8116, 0.0
    %8153 = vadd.xlane.f32.xlu0 %v8152
    %v8154 = vpop.xlane.xlu0 %8153
    %v8155 = vsel %vm2792, %v8117, 0.0
    %8156 = vadd.xlane.f32.xlu0 %v8155
    %v8157 = vpop.xlane.xlu0 %8156
    %v8158 = vsel %vm2792, %v8118, 0.0
    %8159 = vadd.xlane.f32.xlu0 %v8158
    %v8160 = vpop.xlane.xlu0 %8159
    %v8161 = vsel %vm2792, %v8119, 0.0
    %8162 = vadd.xlane.f32.xlu0 %v8161
    %v8163 = vpop.xlane.xlu0 %8162
    %v8164 = vsel %vm2792, %v8120, 0.0
    %8165 = vadd.xlane.f32.xlu0 %v8164
    %v8166 = vpop.xlane.xlu0 %8165
    %v8167 = vsel %vm2792, %v8121, 0.0
    %8168 = vadd.xlane.f32.xlu0 %v8167
    %v8169 = vpop.xlane.xlu0 %8168
    %v8170 = vsel %vm2536, %v7546, 0.0
    %v8171 = vsel %vm2537, %v7547, 0.0
    %v8172 = vsel %vm2536, %v7548, 0.0
    %v8173 = vsel %vm2537, %v7549, 0.0
    %v8174 = vsel %vm2536, %v7550, 0.0
    %v8175 = vsel %vm2537, %v7551, 0.0
    %v8176 = vsel %vm2536, %v7552, 0.0
    %v8177 = vsel %vm2537, %v7553, 0.0
    %v8178 = vsel %vm2538, %v7554, 0.0
    %v8179 = vsel %vm2539, %v7555, 0.0
    %v8180 = vsel %vm2538, %v7556, 0.0
    %v8181 = vsel %vm2539, %v7557, 0.0
    %v8182 = vsel %vm2538, %v7558, 0.0
    %v8183 = vsel %vm2539, %v7559, 0.0
    %v8184 = vsel %vm2538, %v7560, 0.0
    %v8185 = vsel %vm2539, %v7561, 0.0
    %v8186 = vsel %vm2792, %v8170, 0.0
    %8187 = vadd.xlane.f32.xlu0 %v8186
    %v8188 = vpop.xlane.xlu0 %8187
    %v8189 = vsel %vm2792, %v8171, 0.0
    %8190 = vadd.xlane.f32.xlu0 %v8189
    %v8191 = vpop.xlane.xlu0 %8190
    %v8192 = vsel %vm2792, %v8172, 0.0
    %8193 = vadd.xlane.f32.xlu0 %v8192
    %v8194 = vpop.xlane.xlu0 %8193
    %v8195 = vsel %vm2792, %v8173, 0.0
    %8196 = vadd.xlane.f32.xlu0 %v8195
    %v8197 = vpop.xlane.xlu0 %8196
    %v8198 = vsel %vm2792, %v8174, 0.0
    %8199 = vadd.xlane.f32.xlu0 %v8198
    %v8200 = vpop.xlane.xlu0 %8199
    %v8201 = vsel %vm2792, %v8175, 0.0
    %8202 = vadd.xlane.f32.xlu0 %v8201
    %v8203 = vpop.xlane.xlu0 %8202
    %v8204 = vsel %vm2792, %v8176, 0.0
    %8205 = vadd.xlane.f32.xlu0 %v8204
    %v8206 = vpop.xlane.xlu0 %8205
    %v8207 = vsel %vm2792, %v8177, 0.0
    %8208 = vadd.xlane.f32.xlu0 %v8207
    %v8209 = vpop.xlane.xlu0 %8208
    %v8210 = vsel %vm2792, %v8178, 0.0
    %8211 = vadd.xlane.f32.xlu0 %v8210
    %v8212 = vpop.xlane.xlu0 %8211
    %v8213 = vsel %vm2792, %v8179, 0.0
    %8214 = vadd.xlane.f32.xlu0 %v8213
    %v8215 = vpop.xlane.xlu0 %8214
    %v8216 = vsel %vm2792, %v8180, 0.0
    %8217 = vadd.xlane.f32.xlu0 %v8216
    %v8218 = vpop.xlane.xlu0 %8217
    %v8219 = vsel %vm2792, %v8181, 0.0
    %8220 = vadd.xlane.f32.xlu0 %v8219
    %v8221 = vpop.xlane.xlu0 %8220
    %v8222 = vsel %vm2792, %v8182, 0.0
    %8223 = vadd.xlane.f32.xlu0 %v8222
    %v8224 = vpop.xlane.xlu0 %8223
    %v8225 = vsel %vm2792, %v8183, 0.0
    %8226 = vadd.xlane.f32.xlu0 %v8225
    %v8227 = vpop.xlane.xlu0 %8226
    %v8228 = vsel %vm2792, %v8184, 0.0
    %8229 = vadd.xlane.f32.xlu0 %v8228
    %v8230 = vpop.xlane.xlu0 %8229
    %v8231 = vsel %vm2792, %v8185, 0.0
    %8232 = vadd.xlane.f32.xlu0 %v8231
    %v8233 = vpop.xlane.xlu0 %8232
    %v8234 = vsel %vm2640, %v7546, 0.0
    %v8235 = vsel %vm2641, %v7547, 0.0
    %v8236 = vsel %vm2640, %v7548, 0.0
    %v8237 = vsel %vm2641, %v7549, 0.0
    %v8238 = vsel %vm2640, %v7550, 0.0
    %v8239 = vsel %vm2641, %v7551, 0.0
    %v8240 = vsel %vm2640, %v7552, 0.0
    %v8241 = vsel %vm2641, %v7553, 0.0
    %v8242 = vsel %vm2642, %v7554, 0.0
    %v8243 = vsel %vm2643, %v7555, 0.0
    %v8244 = vsel %vm2642, %v7556, 0.0
    %v8245 = vsel %vm2643, %v7557, 0.0
    %v8246 = vsel %vm2642, %v7558, 0.0
    %v8247 = vsel %vm2643, %v7559, 0.0
    %v8248 = vsel %vm2642, %v7560, 0.0
    %v8249 = vsel %vm2643, %v7561, 0.0
    %v8250 = vsel %vm2792, %v8234, 0.0
    %8251 = vadd.xlane.f32.xlu0 %v8250
    %v8252 = vpop.xlane.xlu0 %8251
    %v8253 = vsel %vm2792, %v8235, 0.0
    %8254 = vadd.xlane.f32.xlu0 %v8253
    %v8255 = vpop.xlane.xlu0 %8254
    %v8256 = vsel %vm2792, %v8236, 0.0
    %8257 = vadd.xlane.f32.xlu0 %v8256
    %v8258 = vpop.xlane.xlu0 %8257
    %v8259 = vsel %vm2792, %v8237, 0.0
    %8260 = vadd.xlane.f32.xlu0 %v8259
    %v8261 = vpop.xlane.xlu0 %8260
    %v8262 = vsel %vm2792, %v8238, 0.0
    %8263 = vadd.xlane.f32.xlu0 %v8262
    %v8264 = vpop.xlane.xlu0 %8263
    %v8265 = vsel %vm2792, %v8239, 0.0
    %8266 = vadd.xlane.f32.xlu0 %v8265
    %v8267 = vpop.xlane.xlu0 %8266
    %v8268 = vsel %vm2792, %v8240, 0.0
    %8269 = vadd.xlane.f32.xlu0 %v8268
    %v8270 = vpop.xlane.xlu0 %8269
    %v8271 = vsel %vm2792, %v8241, 0.0
    %8272 = vadd.xlane.f32.xlu0 %v8271
    %v8273 = vpop.xlane.xlu0 %8272
    %v8274 = vsel %vm2792, %v8242, 0.0
    %8275 = vadd.xlane.f32.xlu0 %v8274
    %v8276 = vpop.xlane.xlu0 %8275
    %v8277 = vsel %vm2792, %v8243, 0.0
    %8278 = vadd.xlane.f32.xlu0 %v8277
    %v8279 = vpop.xlane.xlu0 %8278
    %v8280 = vsel %vm2792, %v8244, 0.0
    %8281 = vadd.xlane.f32.xlu0 %v8280
    %v8282 = vpop.xlane.xlu0 %8281
    %v8283 = vsel %vm2792, %v8245, 0.0
    %8284 = vadd.xlane.f32.xlu0 %v8283
    %v8285 = vpop.xlane.xlu0 %8284
    %v8286 = vsel %vm2792, %v8246, 0.0
    %8287 = vadd.xlane.f32.xlu0 %v8286
    %v8288 = vpop.xlane.xlu0 %8287
    %v8289 = vsel %vm2792, %v8247, 0.0
    %8290 = vadd.xlane.f32.xlu0 %v8289
    %v8291 = vpop.xlane.xlu0 %8290
    %v8292 = vsel %vm2792, %v8248, 0.0
    %8293 = vadd.xlane.f32.xlu0 %v8292
    %v8294 = vpop.xlane.xlu0 %8293
    %v8295 = vsel %vm2792, %v8249, 0.0
    %8296 = vadd.xlane.f32.xlu0 %v8295
    %v8297 = vpop.xlane.xlu0 %8296
    %v8298 = vsel %vm3705, %v7612, %v7676
    %v8299 = vsel %vm3705, %v7615, %v7679
    %v8300 = vsel %vm3705, %v7618, %v7682
    %v8301 = vsel %vm3705, %v7621, %v7685
    %v8302 = vsel %vm3705, %v7624, %v7688
    %v8303 = vsel %vm3705, %v7627, %v7691
    %v8304 = vsel %vm3705, %v7630, %v7694
    %v8305 = vsel %vm3705, %v7633, %v7697
    %v8306 = vsel %vm3705, %v7636, %v7700
    %v8307 = vsel %vm3705, %v7639, %v7703
    %v8308 = vsel %vm3705, %v7642, %v7706
    %v8309 = vsel %vm3705, %v7645, %v7709
    %v8310 = vsel %vm3705, %v7648, %v7712
    %v8311 = vsel %vm3705, %v7651, %v7715
    %v8312 = vsel %vm3705, %v7654, %v7718
    %v8313 = vsel %vm3705, %v7657, %v7721
    %v8314 = vsel %vm3722, %v8298, %v7740
    %v8315 = vsel %vm3722, %v8299, %v7743
    %v8316 = vsel %vm3722, %v8300, %v7746
    %v8317 = vsel %vm3722, %v8301, %v7749
    %v8318 = vsel %vm3722, %v8302, %v7752
    %v8319 = vsel %vm3722, %v8303, %v7755
    %v8320 = vsel %vm3722, %v8304, %v7758
    %v8321 = vsel %vm3722, %v8305, %v7761
    %v8322 = vsel %vm3722, %v8306, %v7764
    %v8323 = vsel %vm3722, %v8307, %v7767
    %v8324 = vsel %vm3722, %v8308, %v7770
    %v8325 = vsel %vm3722, %v8309, %v7773
    %v8326 = vsel %vm3722, %v8310, %v7776
    %v8327 = vsel %vm3722, %v8311, %v7779
    %v8328 = vsel %vm3722, %v8312, %v7782
    %v8329 = vsel %vm3722, %v8313, %v7785
    %v8330 = vsel %vm3739, %v8314, %v7804
    %v8331 = vsel %vm3739, %v8315, %v7807
    %v8332 = vsel %vm3739, %v8316, %v7810
    %v8333 = vsel %vm3739, %v8317, %v7813
    %v8334 = vsel %vm3739, %v8318, %v7816
    %v8335 = vsel %vm3739, %v8319, %v7819
    %v8336 = vsel %vm3739, %v8320, %v7822
    %v8337 = vsel %vm3739, %v8321, %v7825
    %v8338 = vsel %vm3739, %v8322, %v7828
    %v8339 = vsel %vm3739, %v8323, %v7831
    %v8340 = vsel %vm3739, %v8324, %v7834
    %v8341 = vsel %vm3739, %v8325, %v7837
    %v8342 = vsel %vm3739, %v8326, %v7840
    %v8343 = vsel %vm3739, %v8327, %v7843
    %v8344 = vsel %vm3739, %v8328, %v7846
    %v8345 = vsel %vm3739, %v8329, %v7849
    %v8346 = vsel %vm3756, %v8330, %v7868
    %v8347 = vsel %vm3756, %v8331, %v7871
    %v8348 = vsel %vm3756, %v8332, %v7874
    %v8349 = vsel %vm3756, %v8333, %v7877
    %v8350 = vsel %vm3756, %v8334, %v7880
    %v8351 = vsel %vm3756, %v8335, %v7883
    %v8352 = vsel %vm3756, %v8336, %v7886
    %v8353 = vsel %vm3756, %v8337, %v7889
    %v8354 = vsel %vm3756, %v8338, %v7892
    %v8355 = vsel %vm3756, %v8339, %v7895
    %v8356 = vsel %vm3756, %v8340, %v7898
    %v8357 = vsel %vm3756, %v8341, %v7901
    %v8358 = vsel %vm3756, %v8342, %v7904
    %v8359 = vsel %vm3756, %v8343, %v7907
    %v8360 = vsel %vm3756, %v8344, %v7910
    %v8361 = vsel %vm3756, %v8345, %v7913
    %v8362 = vsel %vm3773, %v8346, %v7932
    %v8363 = vsel %vm3773, %v8347, %v7935
    %v8364 = vsel %vm3773, %v8348, %v7938
    %v8365 = vsel %vm3773, %v8349, %v7941
    %v8366 = vsel %vm3773, %v8350, %v7944
    %v8367 = vsel %vm3773, %v8351, %v7947
    %v8368 = vsel %vm3773, %v8352, %v7950
    %v8369 = vsel %vm3773, %v8353, %v7953
    %v8370 = vsel %vm3773, %v8354, %v7956
    %v8371 = vsel %vm3773, %v8355, %v7959
    %v8372 = vsel %vm3773, %v8356, %v7962
    %v8373 = vsel %vm3773, %v8357, %v7965
    %v8374 = vsel %vm3773, %v8358, %v7968
    %v8375 = vsel %vm3773, %v8359, %v7971
    %v8376 = vsel %vm3773, %v8360, %v7974
    %v8377 = vsel %vm3773, %v8361, %v7977
    %v8378 = vsel %vm3790, %v8362, %v7996
    %v8379 = vsel %vm3790, %v8363, %v7999
    %v8380 = vsel %vm3790, %v8364, %v8002
    %v8381 = vsel %vm3790, %v8365, %v8005
    %v8382 = vsel %vm3790, %v8366, %v8008
    %v8383 = vsel %vm3790, %v8367, %v8011
    %v8384 = vsel %vm3790, %v8368, %v8014
    %v8385 = vsel %vm3790, %v8369, %v8017
    %v8386 = vsel %vm3790, %v8370, %v8020
    %v8387 = vsel %vm3790, %v8371, %v8023
    %v8388 = vsel %vm3790, %v8372, %v8026
    %v8389 = vsel %vm3790, %v8373, %v8029
    %v8390 = vsel %vm3790, %v8374, %v8032
    %v8391 = vsel %vm3790, %v8375, %v8035
    %v8392 = vsel %vm3790, %v8376, %v8038
    %v8393 = vsel %vm3790, %v8377, %v8041
    %v8394 = vsel %vm3807, %v8378, %v8060
    %v8395 = vsel %vm3807, %v8379, %v8063
    %v8396 = vsel %vm3807, %v8380, %v8066
    %v8397 = vsel %vm3807, %v8381, %v8069
    %v8398 = vsel %vm3807, %v8382, %v8072
    %v8399 = vsel %vm3807, %v8383, %v8075
    %v8400 = vsel %vm3807, %v8384, %v8078
    %v8401 = vsel %vm3807, %v8385, %v8081
    %v8402 = vsel %vm3807, %v8386, %v8084
    %v8403 = vsel %vm3807, %v8387, %v8087
    %v8404 = vsel %vm3807, %v8388, %v8090
    %v8405 = vsel %vm3807, %v8389, %v8093
    %v8406 = vsel %vm3807, %v8390, %v8096
    %v8407 = vsel %vm3807, %v8391, %v8099
    %v8408 = vsel %vm3807, %v8392, %v8102
    %v8409 = vsel %vm3807, %v8393, %v8105
    %v8410 = vsel %vm1262, %v8394, %v8124
    %v8411 = vsel %vm1262, %v8395, %v8127
    %v8412 = vsel %vm1262, %v8396, %v8130
    %v8413 = vsel %vm1262, %v8397, %v8133
    %v8414 = vsel %vm1262, %v8398, %v8136
    %v8415 = vsel %vm1262, %v8399, %v8139
    %v8416 = vsel %vm1262, %v8400, %v8142
    %v8417 = vsel %vm1262, %v8401, %v8145
    %v8418 = vsel %vm1262, %v8402, %v8148
    %v8419 = vsel %vm1262, %v8403, %v8151
    %v8420 = vsel %vm1262, %v8404, %v8154
    %v8421 = vsel %vm1262, %v8405, %v8157
    %v8422 = vsel %vm1262, %v8406, %v8160
    %v8423 = vsel %vm1262, %v8407, %v8163
    %v8424 = vsel %vm1262, %v8408, %v8166
    %v8425 = vsel %vm1262, %v8409, %v8169
    %v8426 = vsel %vm3840, %v8410, %v8188
    %v8427 = vsel %vm3840, %v8411, %v8191
    %v8428 = vsel %vm3840, %v8412, %v8194
    %v8429 = vsel %vm3840, %v8413, %v8197
    %v8430 = vsel %vm3840, %v8414, %v8200
    %v8431 = vsel %vm3840, %v8415, %v8203
    %v8432 = vsel %vm3840, %v8416, %v8206
    %v8433 = vsel %vm3840, %v8417, %v8209
    %v8434 = vsel %vm3840, %v8418, %v8212
    %v8435 = vsel %vm3840, %v8419, %v8215
    %v8436 = vsel %vm3840, %v8420, %v8218
    %v8437 = vsel %vm3840, %v8421, %v8221
    %v8438 = vsel %vm3840, %v8422, %v8224
    %v8439 = vsel %vm3840, %v8423, %v8227
    %v8440 = vsel %vm3840, %v8424, %v8230
    %v8441 = vsel %vm3840, %v8425, %v8233
    %v8442 = vsel %vm3857, %v8426, %v8252
    %v8443 = vsel %vm3857, %v8427, %v8255
    %v8444 = vsel %vm3857, %v8428, %v8258
    %v8445 = vsel %vm3857, %v8429, %v8261
    %v8446 = vsel %vm3857, %v8430, %v8264
    %v8447 = vsel %vm3857, %v8431, %v8267
    %v8448 = vsel %vm3857, %v8432, %v8270
    %v8449 = vsel %vm3857, %v8433, %v8273
    %v8450 = vsel %vm3857, %v8434, %v8276
    %v8451 = vsel %vm3857, %v8435, %v8279
    %v8452 = vsel %vm3857, %v8436, %v8282
    %v8453 = vsel %vm3857, %v8437, %v8285
    %v8454 = vsel %vm3857, %v8438, %v8288
    %v8455 = vsel %vm3857, %v8439, %v8291
    %v8456 = vsel %vm3857, %v8440, %v8294
    %v8457 = vsel %vm3857, %v8441, %v8297
    %s8458 = scalar_lea.vmem %s17, 16
    %v8459 = vld [vmem:[%s8458] sm:$0xff]
    %v8460 = vld [vmem:[%s8458 + $0x8] sm:$0x7]
    %v8461 = vpack.c.bf16 %v8443, %v8442
    %v8462 = vpack.c.bf16 %v8445, %v8444
    %v8463 = vpack.c.bf16 %v8447, %v8446
    %v8464 = vpack.c.bf16 %v8449, %v8448
    %v8465 = vpack.c.bf16 %v8451, %v8450
    %v8466 = vpack.c.bf16 %v8453, %v8452
    %v8467 = vpack.c.bf16 %v8455, %v8454
    %v8468 = vpack.c.bf16 %v8457, %v8456
    %v8469 = vpack.c.bf16 %v8460, %v8459
    %v8471 = vsel %vm3885, %v8461, 0
    %v8474 = vsel %vm3885, %v8462, 0
    %v8477 = vsel %vm3885, %v8463, 0
    %v8480 = vsel %vm3885, %v8464, 0
    %v8483 = vsel %vm3885, %v8465, 0
    %v8486 = vsel %vm3885, %v8466, 0
    %v8489 = vsel %vm3885, %v8467, 0
    %v8492 = vsel %vm3885, %v8468, 0
    %v8495 = vand.u32 %v8469, %v3913
    %8497 = vmatpush.bf16.msra.mxu0 0
    %8498 = vmatpush.bf16.msra.mxu0 0
    %8499 = vmatpush.bf16.msra.mxu0 0
    %8500 = vmatpush.bf16.msra.mxu0 0
    %8501 = vmatpush.bf16.msra.mxu0 0
    %8502 = vmatpush.bf16.msra.mxu0 0
    %8503 = vmatpush.bf16.msra.mxu0 0
    %8504 = vmatpush.bf16.msra.mxu0 %v8495
    %8505 = vmatmul.bf16.gmra.mxu0 %v8471
    %v8506 = vpop.f32.mrf.mxu0
    %v8507 = vadd.f32 0.0, %v8506
    %v8508 = vpop.f32.mrf.mxu0
    %v8509 = vadd.f32 0.0, %v8508
    %8510 = vmatmul.bf16.gmra.mxu0 %v8474
    %v8511 = vpop.f32.mrf.mxu0
    %v8512 = vadd.f32 0.0, %v8511
    %v8513 = vpop.f32.mrf.mxu0
    %v8514 = vadd.f32 0.0, %v8513
    %8515 = vmatmul.bf16.gmra.mxu0 %v8477
    %v8516 = vpop.f32.mrf.mxu0
    %v8517 = vadd.f32 0.0, %v8516
    %v8518 = vpop.f32.mrf.mxu0
    %v8519 = vadd.f32 0.0, %v8518
    %8520 = vmatmul.bf16.gmra.mxu0 %v8480
    %v8521 = vpop.f32.mrf.mxu0
    %v8522 = vadd.f32 0.0, %v8521
    %v8523 = vpop.f32.mrf.mxu0
    %v8524 = vadd.f32 0.0, %v8523
    %8525 = vmatmul.bf16.gmra.mxu0 %v8483
    %v8526 = vpop.f32.mrf.mxu0
    %v8527 = vadd.f32 0.0, %v8526
    %v8528 = vpop.f32.mrf.mxu0
    %v8529 = vadd.f32 0.0, %v8528
    %8530 = vmatmul.bf16.gmra.mxu0 %v8486
    %v8531 = vpop.f32.mrf.mxu0
    %v8532 = vadd.f32 0.0, %v8531
    %v8533 = vpop.f32.mrf.mxu0
    %v8534 = vadd.f32 0.0, %v8533
    %8535 = vmatmul.bf16.gmra.mxu0 %v8489
    %v8536 = vpop.f32.mrf.mxu0
    %v8537 = vadd.f32 0.0, %v8536
    %v8538 = vpop.f32.mrf.mxu0
    %v8539 = vadd.f32 0.0, %v8538
    %8540 = vmatmul.bf16.gmra.mxu0 %v8492
    %v8541 = vpop.f32.mrf.mxu0
    %v8542 = vadd.f32 0.0, %v8541
    %v8543 = vpop.f32.mrf.mxu0
    %v8544 = vadd.f32 0.0, %v8543
    %8545 = vdwg.mxu0
    %v8548 = vunpack.c.l.b16 %v7562
    %v8549 = vunpack.c.l.b16 %v7563
    %v8550 = vpack.c.b16 %v8549, %v8548
    %v8553 = vunpack.c.l.b16 %v7578
    %v8554 = vunpack.c.l.b16 %v7579
    %v8555 = vpack.c.b16 %v8554, %v8553
    %v8558 = vsel %vm2792, %v8550, 0
    %8560 = vmatpush.bf16.msra.mxu0 0
    %8561 = vmatpush.bf16.msra.mxu0 0
    %8562 = vmatpush.bf16.msra.mxu0 0
    %8563 = vmatpush.bf16.msra.mxu0 0
    %8564 = vmatpush.bf16.msra.mxu0 0
    %8565 = vmatpush.bf16.msra.mxu0 0
    %8566 = vmatpush.bf16.msra.mxu0 0
    %8567 = vmatpush.bf16.msra.mxu0 %v8555
    %8568 = vmatmul.bf16.gmra.mxu0 %v8558
    %v8569 = vpop.f32.mrf.mxu0
    %v8570 = vadd.f32 %v8507, %v8569
    %v8571 = vpop.f32.mrf.mxu0
    %v8572 = vadd.f32 %v8509, %v8571
    %8573 = vdwg.mxu0
    %v8576 = vunpack.c.l.b16 %v7564
    %v8577 = vunpack.c.l.b16 %v7565
    %v8578 = vpack.c.b16 %v8577, %v8576
    %v8581 = vunpack.c.l.b16 %v7580
    %v8582 = vunpack.c.l.b16 %v7581
    %v8583 = vpack.c.b16 %v8582, %v8581
    %v8586 = vsel %vm2792, %v8578, 0
    %8588 = vmatpush.bf16.msra.mxu0 0
    %8589 = vmatpush.bf16.msra.mxu0 0
    %8590 = vmatpush.bf16.msra.mxu0 0
    %8591 = vmatpush.bf16.msra.mxu0 0
    %8592 = vmatpush.bf16.msra.mxu0 0
    %8593 = vmatpush.bf16.msra.mxu0 0
    %8594 = vmatpush.bf16.msra.mxu0 0
    %8595 = vmatpush.bf16.msra.mxu0 %v8583
    %8596 = vmatmul.bf16.gmra.mxu0 %v8586
    %v8597 = vpop.f32.mrf.mxu0
    %v8598 = vadd.f32 %v8512, %v8597
    %v8599 = vpop.f32.mrf.mxu0
    %v8600 = vadd.f32 %v8514, %v8599
    %8601 = vdwg.mxu0
    %v8604 = vunpack.c.l.b16 %v7566
    %v8605 = vunpack.c.l.b16 %v7567
    %v8606 = vpack.c.b16 %v8605, %v8604
    %v8609 = vunpack.c.l.b16 %v7582
    %v8610 = vunpack.c.l.b16 %v7583
    %v8611 = vpack.c.b16 %v8610, %v8609
    %v8614 = vsel %vm2792, %v8606, 0
    %8616 = vmatpush.bf16.msra.mxu0 0
    %8617 = vmatpush.bf16.msra.mxu0 0
    %8618 = vmatpush.bf16.msra.mxu0 0
    %8619 = vmatpush.bf16.msra.mxu0 0
    %8620 = vmatpush.bf16.msra.mxu0 0
    %8621 = vmatpush.bf16.msra.mxu0 0
    %8622 = vmatpush.bf16.msra.mxu0 0
    %8623 = vmatpush.bf16.msra.mxu0 %v8611
    %8624 = vmatmul.bf16.gmra.mxu0 %v8614
    %v8625 = vpop.f32.mrf.mxu0
    %v8626 = vadd.f32 %v8517, %v8625
    %v8627 = vpop.f32.mrf.mxu0
    %v8628 = vadd.f32 %v8519, %v8627
    %8629 = vdwg.mxu0
    %v8632 = vunpack.c.l.b16 %v7568
    %v8633 = vunpack.c.l.b16 %v7569
    %v8634 = vpack.c.b16 %v8633, %v8632
    %v8637 = vunpack.c.l.b16 %v7584
    %v8638 = vunpack.c.l.b16 %v7585
    %v8639 = vpack.c.b16 %v8638, %v8637
    %v8642 = vsel %vm2792, %v8634, 0
    %8644 = vmatpush.bf16.msra.mxu0 0
    %8645 = vmatpush.bf16.msra.mxu0 0
    %8646 = vmatpush.bf16.msra.mxu0 0
    %8647 = vmatpush.bf16.msra.mxu0 0
    %8648 = vmatpush.bf16.msra.mxu0 0
    %8649 = vmatpush.bf16.msra.mxu0 0
    %8650 = vmatpush.bf16.msra.mxu0 0
    %8651 = vmatpush.bf16.msra.mxu0 %v8639
    %8652 = vmatmul.bf16.gmra.mxu0 %v8642
    %v8653 = vpop.f32.mrf.mxu0
    %v8654 = vadd.f32 %v8522, %v8653
    %v8655 = vpop.f32.mrf.mxu0
    %v8656 = vadd.f32 %v8524, %v8655
    %8657 = vdwg.mxu0
    %v8660 = vunpack.c.l.b16 %v7570
    %v8661 = vunpack.c.l.b16 %v7571
    %v8662 = vpack.c.b16 %v8661, %v8660
    %v8665 = vunpack.c.l.b16 %v7586
    %v8666 = vunpack.c.l.b16 %v7587
    %v8667 = vpack.c.b16 %v8666, %v8665
    %v8670 = vsel %vm2792, %v8662, 0
    %8672 = vmatpush.bf16.msra.mxu0 0
    %8673 = vmatpush.bf16.msra.mxu0 0
    %8674 = vmatpush.bf16.msra.mxu0 0
    %8675 = vmatpush.bf16.msra.mxu0 0
    %8676 = vmatpush.bf16.msra.mxu0 0
    %8677 = vmatpush.bf16.msra.mxu0 0
    %8678 = vmatpush.bf16.msra.mxu0 0
    %8679 = vmatpush.bf16.msra.mxu0 %v8667
    %8680 = vmatmul.bf16.gmra.mxu0 %v8670
    %v8681 = vpop.f32.mrf.mxu0
    %v8682 = vadd.f32 %v8527, %v8681
    %v8683 = vpop.f32.mrf.mxu0
    %v8684 = vadd.f32 %v8529, %v8683
    %8685 = vdwg.mxu0
    %v8688 = vunpack.c.l.b16 %v7572
    %v8689 = vunpack.c.l.b16 %v7573
    %v8690 = vpack.c.b16 %v8689, %v8688
    %v8693 = vunpack.c.l.b16 %v7588
    %v8694 = vunpack.c.l.b16 %v7589
    %v8695 = vpack.c.b16 %v8694, %v8693
    %v8698 = vsel %vm2792, %v8690, 0
    %8700 = vmatpush.bf16.msra.mxu0 0
    %8701 = vmatpush.bf16.msra.mxu0 0
    %8702 = vmatpush.bf16.msra.mxu0 0
    %8703 = vmatpush.bf16.msra.mxu0 0
    %8704 = vmatpush.bf16.msra.mxu0 0
    %8705 = vmatpush.bf16.msra.mxu0 0
    %8706 = vmatpush.bf16.msra.mxu0 0
    %8707 = vmatpush.bf16.msra.mxu0 %v8695
    %8708 = vmatmul.bf16.gmra.mxu0 %v8698
    %v8709 = vpop.f32.mrf.mxu0
    %v8710 = vadd.f32 %v8532, %v8709
    %v8711 = vpop.f32.mrf.mxu0
    %v8712 = vadd.f32 %v8534, %v8711
    %8713 = vdwg.mxu0
    %v8716 = vunpack.c.l.b16 %v7574
    %v8717 = vunpack.c.l.b16 %v7575
    %v8718 = vpack.c.b16 %v8717, %v8716
    %v8721 = vunpack.c.l.b16 %v7590
    %v8722 = vunpack.c.l.b16 %v7591
    %v8723 = vpack.c.b16 %v8722, %v8721
    %v8726 = vsel %vm2792, %v8718, 0
    %8728 = vmatpush.bf16.msra.mxu0 0
    %8729 = vmatpush.bf16.msra.mxu0 0
    %8730 = vmatpush.bf16.msra.mxu0 0
    %8731 = vmatpush.bf16.msra.mxu0 0
    %8732 = vmatpush.bf16.msra.mxu0 0
    %8733 = vmatpush.bf16.msra.mxu0 0
    %8734 = vmatpush.bf16.msra.mxu0 0
    %8735 = vmatpush.bf16.msra.mxu0 %v8723
    %8736 = vmatmul.bf16.gmra.mxu0 %v8726
    %v8737 = vpop.f32.mrf.mxu0
    %v8738 = vadd.f32 %v8537, %v8737
    %v8739 = vpop.f32.mrf.mxu0
    %v8740 = vadd.f32 %v8539, %v8739
    %8741 = vdwg.mxu0
    %v8744 = vunpack.c.l.b16 %v7576
    %v8745 = vunpack.c.l.b16 %v7577
    %v8746 = vpack.c.b16 %v8745, %v8744
    %v8749 = vunpack.c.l.b16 %v7592
    %v8750 = vunpack.c.l.b16 %v7593
    %v8751 = vpack.c.b16 %v8750, %v8749
    %v8754 = vsel %vm2792, %v8746, 0
    %8756 = vmatpush.bf16.msra.mxu0 0
    %8757 = vmatpush.bf16.msra.mxu0 0
    %8758 = vmatpush.bf16.msra.mxu0 0
    %8759 = vmatpush.bf16.msra.mxu0 0
    %8760 = vmatpush.bf16.msra.mxu0 0
    %8761 = vmatpush.bf16.msra.mxu0 0
    %8762 = vmatpush.bf16.msra.mxu0 0
    %8763 = vmatpush.bf16.msra.mxu0 %v8751
    %8764 = vmatmul.bf16.gmra.mxu0 %v8754
    %v8765 = vpop.f32.mrf.mxu0
    %v8766 = vadd.f32 %v8542, %v8765
    %v8767 = vpop.f32.mrf.mxu0
    %v8768 = vadd.f32 %v8544, %v8767
    %8769 = vdwg.mxu0
    %8770 = vxpose.xlu0.b32.start [1/16] %v8570, 128
    %8771 = vxpose.xlu0.b32.cont [2/16] %v8572, 128
    %8772 = vxpose.xlu0.b32.cont [3/16] 0.0, 128
    %8773 = vxpose.xlu0.b32.cont [4/16] 0.0, 128
    %8774 = vxpose.xlu0.b32.cont [5/16] 0.0, 128
    %8775 = vxpose.xlu0.b32.cont [6/16] 0.0, 128
    %8776 = vxpose.xlu0.b32.cont [7/16] 0.0, 128
    %8777 = vxpose.xlu0.b32.cont [8/16] 0.0, 128
    %8778 = vxpose.xlu0.b32.cont [9/16] 0.0, 128
    %8779 = vxpose.xlu0.b32.cont [10/16] 0.0, 128
    %8780 = vxpose.xlu0.b32.cont [11/16] 0.0, 128
    %8781 = vxpose.xlu0.b32.cont [12/16] 0.0, 128
    %8782 = vxpose.xlu0.b32.cont [13/16] 0.0, 128
    %8783 = vxpose.xlu0.b32.cont [14/16] 0.0, 128
    %8784 = vxpose.xlu0.b32.cont [15/16] 0.0, 128
    %8785 = vxpose.xlu0.b32.end [16/16] 0.0, 128
    %v8786 = vpop.trf.xlu0
    %v8787 = vpop.trf.xlu0
    %v8788 = vpop.trf.xlu0
    %v8789 = vpop.trf.xlu0
    %v8790 = vpop.trf.xlu0
    %v8791 = vpop.trf.xlu0
    %v8792 = vpop.trf.xlu0
    %v8793 = vpop.trf.xlu0
    %v8794 = vpop.trf.xlu0
    %v8795 = vpop.trf.xlu0
    %v8796 = vpop.trf.xlu0
    %v8797 = vpop.trf.xlu0
    %v8798 = vpop.trf.xlu0
    %v8799 = vpop.trf.xlu0
    %v8800 = vpop.trf.xlu0
    %v8801 = vpop.trf.xlu0
    %8802 = vxpose.xlu0.b32.start [1/16] %v8598, 128
    %8803 = vxpose.xlu0.b32.cont [2/16] %v8600, 128
    %8804 = vxpose.xlu0.b32.cont [3/16] 0.0, 128
    %8805 = vxpose.xlu0.b32.cont [4/16] 0.0, 128
    %8806 = vxpose.xlu0.b32.cont [5/16] 0.0, 128
    %8807 = vxpose.xlu0.b32.cont [6/16] 0.0, 128
    %8808 = vxpose.xlu0.b32.cont [7/16] 0.0, 128
    %8809 = vxpose.xlu0.b32.cont [8/16] 0.0, 128
    %8810 = vxpose.xlu0.b32.cont [9/16] 0.0, 128
    %8811 = vxpose.xlu0.b32.cont [10/16] 0.0, 128
    %8812 = vxpose.xlu0.b32.cont [11/16] 0.0, 128
    %8813 = vxpose.xlu0.b32.cont [12/16] 0.0, 128
    %8814 = vxpose.xlu0.b32.cont [13/16] 0.0, 128
    %8815 = vxpose.xlu0.b32.cont [14/16] 0.0, 128
    %8816 = vxpose.xlu0.b32.cont [15/16] 0.0, 128
    %8817 = vxpose.xlu0.b32.end [16/16] 0.0, 128
    %v8818 = vpop.trf.xlu0
    %v8819 = vpop.trf.xlu0
    %v8820 = vpop.trf.xlu0
    %v8821 = vpop.trf.xlu0
    %v8822 = vpop.trf.xlu0
    %v8823 = vpop.trf.xlu0
    %v8824 = vpop.trf.xlu0
    %v8825 = vpop.trf.xlu0
    %v8826 = vpop.trf.xlu0
    %v8827 = vpop.trf.xlu0
    %v8828 = vpop.trf.xlu0
    %v8829 = vpop.trf.xlu0
    %v8830 = vpop.trf.xlu0
    %v8831 = vpop.trf.xlu0
    %v8832 = vpop.trf.xlu0
    %v8833 = vpop.trf.xlu0
    %8834 = vxpose.xlu0.b32.start [1/16] %v8626, 128
    %8835 = vxpose.xlu0.b32.cont [2/16] %v8628, 128
    %8836 = vxpose.xlu0.b32.cont [3/16] 0.0, 128
    %8837 = vxpose.xlu0.b32.cont [4/16] 0.0, 128
    %8838 = vxpose.xlu0.b32.cont [5/16] 0.0, 128
    %8839 = vxpose.xlu0.b32.cont [6/16] 0.0, 128
    %8840 = vxpose.xlu0.b32.cont [7/16] 0.0, 128
    %8841 = vxpose.xlu0.b32.cont [8/16] 0.0, 128
    %8842 = vxpose.xlu0.b32.cont [9/16] 0.0, 128
    %8843 = vxpose.xlu0.b32.cont [10/16] 0.0, 128
    %8844 = vxpose.xlu0.b32.cont [11/16] 0.0, 128
    %8845 = vxpose.xlu0.b32.cont [12/16] 0.0, 128
    %8846 = vxpose.xlu0.b32.cont [13/16] 0.0, 128
    %8847 = vxpose.xlu0.b32.cont [14/16] 0.0, 128
    %8848 = vxpose.xlu0.b32.cont [15/16] 0.0, 128
    %8849 = vxpose.xlu0.b32.end [16/16] 0.0, 128
    %v8850 = vpop.trf.xlu0
    %v8851 = vpop.trf.xlu0
    %v8852 = vpop.trf.xlu0
    %v8853 = vpop.trf.xlu0
    %v8854 = vpop.trf.xlu0
    %v8855 = vpop.trf.xlu0
    %v8856 = vpop.trf.xlu0
    %v8857 = vpop.trf.xlu0
    %v8858 = vpop.trf.xlu0
    %v8859 = vpop.trf.xlu0
    %v8860 = vpop.trf.xlu0
    %v8861 = vpop.trf.xlu0
    %v8862 = vpop.trf.xlu0
    %v8863 = vpop.trf.xlu0
    %v8864 = vpop.trf.xlu0
    %v8865 = vpop.trf.xlu0
    %8866 = vxpose.xlu0.b32.start [1/16] %v8654, 128
    %8867 = vxpose.xlu0.b32.cont [2/16] %v8656, 128
    %8868 = vxpose.xlu0.b32.cont [3/16] 0.0, 128
    %8869 = vxpose.xlu0.b32.cont [4/16] 0.0, 128
    %8870 = vxpose.xlu0.b32.cont [5/16] 0.0, 128
    %8871 = vxpose.xlu0.b32.cont [6/16] 0.0, 128
    %8872 = vxpose.xlu0.b32.cont [7/16] 0.0, 128
    %8873 = vxpose.xlu0.b32.cont [8/16] 0.0, 128
    %8874 = vxpose.xlu0.b32.cont [9/16] 0.0, 128
    %8875 = vxpose.xlu0.b32.cont [10/16] 0.0, 128
    %8876 = vxpose.xlu0.b32.cont [11/16] 0.0, 128
    %8877 = vxpose.xlu0.b32.cont [12/16] 0.0, 128
    %8878 = vxpose.xlu0.b32.cont [13/16] 0.0, 128
    %8879 = vxpose.xlu0.b32.cont [14/16] 0.0, 128
    %8880 = vxpose.xlu0.b32.cont [15/16] 0.0, 128
    %8881 = vxpose.xlu0.b32.end [16/16] 0.0, 128
    %v8882 = vpop.trf.xlu0
    %v8883 = vpop.trf.xlu0
    %v8884 = vpop.trf.xlu0
    %v8885 = vpop.trf.xlu0
    %v8886 = vpop.trf.xlu0
    %v8887 = vpop.trf.xlu0
    %v8888 = vpop.trf.xlu0
    %v8889 = vpop.trf.xlu0
    %v8890 = vpop.trf.xlu0
    %v8891 = vpop.trf.xlu0
    %v8892 = vpop.trf.xlu0
    %v8893 = vpop.trf.xlu0
    %v8894 = vpop.trf.xlu0
    %v8895 = vpop.trf.xlu0
    %v8896 = vpop.trf.xlu0
    %v8897 = vpop.trf.xlu0
    %8898 = vxpose.xlu0.b32.start [1/16] %v8682, 128
    %8899 = vxpose.xlu0.b32.cont [2/16] %v8684, 128
    %8900 = vxpose.xlu0.b32.cont [3/16] 0.0, 128
    %8901 = vxpose.xlu0.b32.cont [4/16] 0.0, 128
    %8902 = vxpose.xlu0.b32.cont [5/16] 0.0, 128
    %8903 = vxpose.xlu0.b32.cont [6/16] 0.0, 128
    %8904 = vxpose.xlu0.b32.cont [7/16] 0.0, 128
    %8905 = vxpose.xlu0.b32.cont [8/16] 0.0, 128
    %8906 = vxpose.xlu0.b32.cont [9/16] 0.0, 128
    %8907 = vxpose.xlu0.b32.cont [10/16] 0.0, 128
    %8908 = vxpose.xlu0.b32.cont [11/16] 0.0, 128
    %8909 = vxpose.xlu0.b32.cont [12/16] 0.0, 128
    %8910 = vxpose.xlu0.b32.cont [13/16] 0.0, 128
    %8911 = vxpose.xlu0.b32.cont [14/16] 0.0, 128
    %8912 = vxpose.xlu0.b32.cont [15/16] 0.0, 128
    %8913 = vxpose.xlu0.b32.end [16/16] 0.0, 128
    %v8914 = vpop.trf.xlu0
    %v8915 = vpop.trf.xlu0
    %v8916 = vpop.trf.xlu0
    %v8917 = vpop.trf.xlu0
    %v8918 = vpop.trf.xlu0
    %v8919 = vpop.trf.xlu0
    %v8920 = vpop.trf.xlu0
    %v8921 = vpop.trf.xlu0
    %v8922 = vpop.trf.xlu0
    %v8923 = vpop.trf.xlu0
    %v8924 = vpop.trf.xlu0
    %v8925 = vpop.trf.xlu0
    %v8926 = vpop.trf.xlu0
    %v8927 = vpop.trf.xlu0
    %v8928 = vpop.trf.xlu0
    %v8929 = vpop.trf.xlu0
    %8930 = vxpose.xlu0.b32.start [1/16] %v8710, 128
    %8931 = vxpose.xlu0.b32.cont [2/16] %v8712, 128
    %8932 = vxpose.xlu0.b32.cont [3/16] 0.0, 128
    %8933 = vxpose.xlu0.b32.cont [4/16] 0.0, 128
    %8934 = vxpose.xlu0.b32.cont [5/16] 0.0, 128
    %8935 = vxpose.xlu0.b32.cont [6/16] 0.0, 128
    %8936 = vxpose.xlu0.b32.cont [7/16] 0.0, 128
    %8937 = vxpose.xlu0.b32.cont [8/16] 0.0, 128
    %8938 = vxpose.xlu0.b32.cont [9/16] 0.0, 128
    %8939 = vxpose.xlu0.b32.cont [10/16] 0.0, 128
    %8940 = vxpose.xlu0.b32.cont [11/16] 0.0, 128
    %8941 = vxpose.xlu0.b32.cont [12/16] 0.0, 128
    %8942 = vxpose.xlu0.b32.cont [13/16] 0.0, 128
    %8943 = vxpose.xlu0.b32.cont [14/16] 0.0, 128
    %8944 = vxpose.xlu0.b32.cont [15/16] 0.0, 128
    %8945 = vxpose.xlu0.b32.end [16/16] 0.0, 128
    %v8946 = vpop.trf.xlu0
    %v8947 = vpop.trf.xlu0
    %v8948 = vpop.trf.xlu0
    %v8949 = vpop.trf.xlu0
    %v8950 = vpop.trf.xlu0
    %v8951 = vpop.trf.xlu0
    %v8952 = vpop.trf.xlu0
    %v8953 = vpop.trf.xlu0
    %v8954 = vpop.trf.xlu0
    %v8955 = vpop.trf.xlu0
    %v8956 = vpop.trf.xlu0
    %v8957 = vpop.trf.xlu0
    %v8958 = vpop.trf.xlu0
    %v8959 = vpop.trf.xlu0
    %v8960 = vpop.trf.xlu0
    %v8961 = vpop.trf.xlu0
    %8962 = vxpose.xlu0.b32.start [1/16] %v8738, 128
    %8963 = vxpose.xlu0.b32.cont [2/16] %v8740, 128
    %8964 = vxpose.xlu0.b32.cont [3/16] 0.0, 128
    %8965 = vxpose.xlu0.b32.cont [4/16] 0.0, 128
    %8966 = vxpose.xlu0.b32.cont [5/16] 0.0, 128
    %8967 = vxpose.xlu0.b32.cont [6/16] 0.0, 128
    %8968 = vxpose.xlu0.b32.cont [7/16] 0.0, 128
    %8969 = vxpose.xlu0.b32.cont [8/16] 0.0, 128
    %8970 = vxpose.xlu0.b32.cont [9/16] 0.0, 128
    %8971 = vxpose.xlu0.b32.cont [10/16] 0.0, 128
    %8972 = vxpose.xlu0.b32.cont [11/16] 0.0, 128
    %8973 = vxpose.xlu0.b32.cont [12/16] 0.0, 128
    %8974 = vxpose.xlu0.b32.cont [13/16] 0.0, 128
    %8975 = vxpose.xlu0.b32.cont [14/16] 0.0, 128
    %8976 = vxpose.xlu0.b32.cont [15/16] 0.0, 128
    %8977 = vxpose.xlu0.b32.end [16/16] 0.0, 128
    %v8978 = vpop.trf.xlu0
    %v8979 = vpop.trf.xlu0
    %v8980 = vpop.trf.xlu0
    %v8981 = vpop.trf.xlu0
    %v8982 = vpop.trf.xlu0
    %v8983 = vpop.trf.xlu0
    %v8984 = vpop.trf.xlu0
    %v8985 = vpop.trf.xlu0
    %v8986 = vpop.trf.xlu0
    %v8987 = vpop.trf.xlu0
    %v8988 = vpop.trf.xlu0
    %v8989 = vpop.trf.xlu0
    %v8990 = vpop.trf.xlu0
    %v8991 = vpop.trf.xlu0
    %v8992 = vpop.trf.xlu0
    %v8993 = vpop.trf.xlu0
    %8994 = vxpose.xlu0.b32.start [1/16] %v8766, 128
    %8995 = vxpose.xlu0.b32.cont [2/16] %v8768, 128
    %8996 = vxpose.xlu0.b32.cont [3/16] 0.0, 128
    %8997 = vxpose.xlu0.b32.cont [4/16] 0.0, 128
    %8998 = vxpose.xlu0.b32.cont [5/16] 0.0, 128
    %8999 = vxpose.xlu0.b32.cont [6/16] 0.0, 128
    %9000 = vxpose.xlu0.b32.cont [7/16] 0.0, 128
    %9001 = vxpose.xlu0.b32.cont [8/16] 0.0, 128
    %9002 = vxpose.xlu0.b32.cont [9/16] 0.0, 128
    %9003 = vxpose.xlu0.b32.cont [10/16] 0.0, 128
    %9004 = vxpose.xlu0.b32.cont [11/16] 0.0, 128
    %9005 = vxpose.xlu0.b32.cont [12/16] 0.0, 128
    %9006 = vxpose.xlu0.b32.cont [13/16] 0.0, 128
    %9007 = vxpose.xlu0.b32.cont [14/16] 0.0, 128
    %9008 = vxpose.xlu0.b32.cont [15/16] 0.0, 128
    %9009 = vxpose.xlu0.b32.end [16/16] 0.0, 128
    %v9010 = vpop.trf.xlu0
    %v9011 = vpop.trf.xlu0
    %v9012 = vpop.trf.xlu0
    %v9013 = vpop.trf.xlu0
    %v9014 = vpop.trf.xlu0
    %v9015 = vpop.trf.xlu0
    %v9016 = vpop.trf.xlu0
    %v9017 = vpop.trf.xlu0
    %v9018 = vpop.trf.xlu0
    %v9019 = vpop.trf.xlu0
    %v9020 = vpop.trf.xlu0
    %v9021 = vpop.trf.xlu0
    %v9022 = vpop.trf.xlu0
    %v9023 = vpop.trf.xlu0
    %v9024 = vpop.trf.xlu0
    %v9025 = vpop.trf.xlu0
    %9026 = vxpose.xlu0.b32.start [1/16] %v8786, 128
    %9027 = vxpose.xlu0.b32.cont [2/16] %v8818, 128
    %9028 = vxpose.xlu0.b32.cont [3/16] %v8850, 128
    %9029 = vxpose.xlu0.b32.cont [4/16] %v8882, 128
    %9030 = vxpose.xlu0.b32.cont [5/16] 0.0, 128
    %9031 = vxpose.xlu0.b32.cont [6/16] 0.0, 128
    %9032 = vxpose.xlu0.b32.cont [7/16] 0.0, 128
    %9033 = vxpose.xlu0.b32.cont [8/16] 0.0, 128
    %9034 = vxpose.xlu0.b32.cont [9/16] 0.0, 128
    %9035 = vxpose.xlu0.b32.cont [10/16] 0.0, 128
    %9036 = vxpose.xlu0.b32.cont [11/16] 0.0, 128
    %9037 = vxpose.xlu0.b32.cont [12/16] 0.0, 128
    %9038 = vxpose.xlu0.b32.cont [13/16] 0.0, 128
    %9039 = vxpose.xlu0.b32.cont [14/16] 0.0, 128
    %9040 = vxpose.xlu0.b32.cont [15/16] 0.0, 128
    %9041 = vxpose.xlu0.b32.end [16/16] 0.0, 128
    %v9042 = vpop.trf.xlu0
    %v9043 = vpop.trf.xlu0
    %v9044 = vpop.trf.xlu0
    %v9045 = vpop.trf.xlu0
    %v9046 = vpop.trf.xlu0
    %v9047 = vpop.trf.xlu0
    %v9048 = vpop.trf.xlu0
    %v9049 = vpop.trf.xlu0
    %v9050 = vpop.trf.xlu0
    %v9051 = vpop.trf.xlu0
    %v9052 = vpop.trf.xlu0
    %v9053 = vpop.trf.xlu0
    %v9054 = vpop.trf.xlu0
    %v9055 = vpop.trf.xlu0
    %v9056 = vpop.trf.xlu0
    %v9057 = vpop.trf.xlu0
    %9058 = vxpose.xlu0.b32.start [1/16] %v8914, 128
    %9059 = vxpose.xlu0.b32.cont [2/16] %v8946, 128
    %9060 = vxpose.xlu0.b32.cont [3/16] %v8978, 128
    %9061 = vxpose.xlu0.b32.cont [4/16] %v9010, 128
    %9062 = vxpose.xlu0.b32.cont [5/16] 0.0, 128
    %9063 = vxpose.xlu0.b32.cont [6/16] 0.0, 128
    %9064 = vxpose.xlu0.b32.cont [7/16] 0.0, 128
    %9065 = vxpose.xlu0.b32.cont [8/16] 0.0, 128
    %9066 = vxpose.xlu0.b32.cont [9/16] 0.0, 128
    %9067 = vxpose.xlu0.b32.cont [10/16] 0.0, 128
    %9068 = vxpose.xlu0.b32.cont [11/16] 0.0, 128
    %9069 = vxpose.xlu0.b32.cont [12/16] 0.0, 128
    %9070 = vxpose.xlu0.b32.cont [13/16] 0.0, 128
    %9071 = vxpose.xlu0.b32.cont [14/16] 0.0, 128
    %9072 = vxpose.xlu0.b32.cont [15/16] 0.0, 128
    %9073 = vxpose.xlu0.b32.end [16/16] 0.0, 128
    %v9074 = vpop.trf.xlu0
    %v9075 = vpop.trf.xlu0
    %v9076 = vpop.trf.xlu0
    %v9077 = vpop.trf.xlu0
    %v9078 = vpop.trf.xlu0
    %v9079 = vpop.trf.xlu0
    %v9080 = vpop.trf.xlu0
    %v9081 = vpop.trf.xlu0
    %v9082 = vpop.trf.xlu0
    %v9083 = vpop.trf.xlu0
    %v9084 = vpop.trf.xlu0
    %v9085 = vpop.trf.xlu0
    %v9086 = vpop.trf.xlu0
    %v9087 = vpop.trf.xlu0
    %v9088 = vpop.trf.xlu0
    %v9089 = vpop.trf.xlu0
    %s9090 = scalar_lea.vmem %s6, 32
    %v9091 = vld [vmem:[%s9090] sm:$0xff]
    %v9092 = vld [vmem:[%s9090 + $0x8] sm:$0xff]
    %v9093 = vld [vmem:[%s9090 + $0x10] sm:$0xff]
    %v9094 = vld [vmem:[%s9090 + $0x18] sm:$0xff]
    %v9095 = vpack.c.bf16 %v9043, %v9042
    %v9096 = vpack.c.bf16 %v9075, %v9074
    %v9097 = vpack.c.bf16 %v9092, %v9091
    %v9098 = vpack.c.bf16 %v9094, %v9093
    %s9099 = scalar_lea.vmem %s7, 1
    %v9100 = vld [vmem:[%s9099] sm:$0x1]
    %v9102 = vperm.slane %v9100, 0
    %v9105 = vsel %vm184, %v9095, 0
    %v9108 = vsel %vm184, %v9096, 0
    %9110 = vmatpush.bf16.msra.mxu0 0
    %9111 = vmatpush.bf16.msra.mxu0 0
    %9112 = vmatpush.bf16.msra.mxu0 0
    %9113 = vmatpush.bf16.msra.mxu0 0
    %9114 = vmatpush.bf16.msra.mxu0 0
    %9115 = vmatpush.bf16.msra.mxu0 0
    %9116 = vmatpush.bf16.msra.mxu0 %v9098
    %9117 = vmatpush.bf16.msra.mxu0 %v9097
    %9118 = vmatmul.bf16.gmra.mxu0 %v9105
    %v9119 = vpop.f32.mrf.mxu0
    %v9120 = vadd.f32 %v9102, %v9119
    %v9121 = vpop.f32.mrf.mxu0
    %v9122 = vadd.f32 %v9102, %v9121
    %9123 = vmatmul.bf16.gmra.mxu0 %v9108
    %v9124 = vpop.f32.mrf.mxu0
    %v9125 = vadd.f32 %v9102, %v9124
    %v9126 = vpop.f32.mrf.mxu0
    %v9127 = vadd.f32 %v9102, %v9126
    %9128 = vdwg.mxu0
    %v9129 = vadd.f32 %v4856, %v9120
    %v9130 = vadd.f32 %v4857, %v9122
    %v9131 = vadd.f32 %v4858, %v9125
    %v9132 = vadd.f32 %v4859, %v9127
    %s9133 = scalar_lea.vmem %s8, 1
    %v9134 = vld [vmem:[%s9133] sm:$0x1]
    %s9135 = scalar_lea.vmem %s9, 1
    %v9136 = vld [vmem:[%s9135] sm:$0x1]
    %v9137 = vsel %vm184, %v9129, 0.0
    %9138 = vadd.xlane.f32.xlu0 %v9137
    %v9139 = vpop.xlane.xlu0 %9138
    %v9140 = vsel %vm184, %v9130, 0.0
    %9141 = vadd.xlane.f32.xlu0 %v9140
    %v9142 = vpop.xlane.xlu0 %9141
    %v9143 = vsel %vm184, %v9131, 0.0
    %9144 = vadd.xlane.f32.xlu0 %v9143
    %v9145 = vpop.xlane.xlu0 %9144
    %v9146 = vsel %vm184, %v9132, 0.0
    %9147 = vadd.xlane.f32.xlu0 %v9146
    %v9148 = vpop.xlane.xlu0 %9147
    %v9149 = vmul.f32 %v9139, %v4571
    %v9150 = vmul.f32 %v9142, %v4571
    %v9151 = vmul.f32 %v9145, %v4571
    %v9152 = vmul.f32 %v9148, %v4571
    %v9153 = vsub.f32 %v9129, %v9149
    %v9154 = vsub.f32 %v9130, %v9150
    %v9155 = vsub.f32 %v9131, %v9151
    %v9156 = vsub.f32 %v9132, %v9152
    %v9157 = vmul.f32 %v9153, %v9153
    %v9158 = vmul.f32 %v9154, %v9154
    %v9159 = vmul.f32 %v9155, %v9155
    %v9160 = vmul.f32 %v9156, %v9156
    %v9161 = vsel %vm184, %v9157, 0.0
    %9162 = vadd.xlane.f32.xlu0 %v9161
    %v9163 = vpop.xlane.xlu0 %9162
    %v9164 = vsel %vm184, %v9158, 0.0
    %9165 = vadd.xlane.f32.xlu0 %v9164
    %v9166 = vpop.xlane.xlu0 %9165
    %v9167 = vsel %vm184, %v9159, 0.0
    %9168 = vadd.xlane.f32.xlu0 %v9167
    %v9169 = vpop.xlane.xlu0 %9168
    %v9170 = vsel %vm184, %v9160, 0.0
    %9171 = vadd.xlane.f32.xlu0 %v9170
    %v9172 = vpop.xlane.xlu0 %9171
    %v9173 = vmul.f32 %v9163, %v4571
    %v9174 = vmul.f32 %v9166, %v4571
    %v9175 = vmul.f32 %v9169, %v4571
    %v9176 = vmul.f32 %v9172, %v4571
    %v9177 = vadd.f32 %v9173, 1e-05
    %v9178 = vadd.f32 %v9174, 1e-05
    %v9179 = vadd.f32 %v9175, 1e-05
    %v9180 = vadd.f32 %v9176, 1e-05
    %v9181 = vrsqrt.pop %v9177
    %v9182 = vmul.f32 %v9181, %v9177
    %v9183 = vmul.f32 %v9182, %v9181
    %v9184 = vmul.f32 0.5, %v9183
    %v9185 = vsub.f32 1.5, %v9184
    %v9186 = vmul.f32 %v9181, %v9185
    %vm9187 = vweird.f32 %v9177
    %vm9188 = vweird.f32 %v9181
    %vm9189 = vmor %vm9187, %vm9188
    %v9190 = vsel %vm9189, %v9181, %v9186
    %v9191 = vrsqrt.pop %v9178
    %v9192 = vmul.f32 %v9191, %v9178
    %v9193 = vmul.f32 %v9192, %v9191
    %v9194 = vmul.f32 0.5, %v9193
    %v9195 = vsub.f32 1.5, %v9194
    %v9196 = vmul.f32 %v9191, %v9195
    %vm9197 = vweird.f32 %v9178
    %vm9198 = vweird.f32 %v9191
    %vm9199 = vmor %vm9197, %vm9198
    %v9200 = vsel %vm9199, %v9191, %v9196
    %v9201 = vrsqrt.pop %v9179
    %v9202 = vmul.f32 %v9201, %v9179
    %v9203 = vmul.f32 %v9202, %v9201
    %v9204 = vmul.f32 0.5, %v9203
    %v9205 = vsub.f32 1.5, %v9204
    %v9206 = vmul.f32 %v9201, %v9205
    %vm9207 = vweird.f32 %v9179
    %vm9208 = vweird.f32 %v9201
    %vm9209 = vmor %vm9207, %vm9208
    %v9210 = vsel %vm9209, %v9201, %v9206
    %v9211 = vrsqrt.pop %v9180
    %v9212 = vmul.f32 %v9211, %v9180
    %v9213 = vmul.f32 %v9212, %v9211
    %v9214 = vmul.f32 0.5, %v9213
    %v9215 = vsub.f32 1.5, %v9214
    %v9216 = vmul.f32 %v9211, %v9215
    %vm9217 = vweird.f32 %v9180
    %vm9218 = vweird.f32 %v9211
    %vm9219 = vmor %vm9217, %vm9218
    %v9220 = vsel %vm9219, %v9211, %v9216
    %v9221 = vmul.f32 %v9153, %v9190
    %v9222 = vmul.f32 %v9154, %v9200
    %v9223 = vmul.f32 %v9155, %v9210
    %v9224 = vmul.f32 %v9156, %v9220
    %v9226 = vperm.slane %v9134, 0
    %v9228 = vmul.f32 %v9221, %v9226
    %v9229 = vmul.f32 %v9222, %v9226
    %v9230 = vmul.f32 %v9223, %v9226
    %v9231 = vmul.f32 %v9224, %v9226
    %v9233 = vperm.slane %v9136, 0
    %v9235 = vadd.f32 %v9228, %v9233
    %v9236 = vadd.f32 %v9229, %v9233
    %v9237 = vadd.f32 %v9230, %v9233
    %v9238 = vadd.f32 %v9231, %v9233
    %s9239 = scalar_lea.vmem %s10, 32
    %v9240 = vld [vmem:[%s9239] sm:$0xff]
    %v9241 = vld [vmem:[%s9239 + $0x8] sm:$0xff]
    %v9242 = vld [vmem:[%s9239 + $0x10] sm:$0xff]
    %v9243 = vld [vmem:[%s9239 + $0x18] sm:$0xff]
    %v9244 = vpack.c.bf16 %v9236, %v9235
    %v9245 = vpack.c.bf16 %v9238, %v9237
    %v9246 = vpack.c.bf16 %v9241, %v9240
    %v9247 = vpack.c.bf16 %v9243, %v9242
    %s9248 = scalar_lea.vmem %s11, 1
    %v9249 = vld [vmem:[%s9248] sm:$0x1]
    %v9251 = vperm.slane %v9249, 0
    %v9254 = vsel %vm184, %v9244, 0
    %v9257 = vsel %vm184, %v9245, 0
    %9259 = vmatpush.bf16.msra.mxu0 0
    %9260 = vmatpush.bf16.msra.mxu0 0
    %9261 = vmatpush.bf16.msra.mxu0 0
    %9262 = vmatpush.bf16.msra.mxu0 0
    %9263 = vmatpush.bf16.msra.mxu0 0
    %9264 = vmatpush.bf16.msra.mxu0 0
    %9265 = vmatpush.bf16.msra.mxu0 %v9247
    %9266 = vmatpush.bf16.msra.mxu0 %v9246
    %9267 = vmatmul.bf16.gmra.mxu0 %v9254
    %v9268 = vpop.f32.mrf.mxu0
    %v9269 = vadd.f32 %v9251, %v9268
    %v9270 = vpop.f32.mrf.mxu0
    %v9271 = vadd.f32 %v9251, %v9270
    %9272 = vmatmul.bf16.gmra.mxu0 %v9257
    %v9273 = vpop.f32.mrf.mxu0
    %v9274 = vadd.f32 %v9251, %v9273
    %v9275 = vpop.f32.mrf.mxu0
    %v9276 = vadd.f32 %v9251, %v9275
    %9277 = vdwg.mxu0
    %v9278 = vmax.f32 %v9269, 0.0
    %v9279 = vmax.f32 %v9271, 0.0
    %v9280 = vmax.f32 %v9274, 0.0
    %v9281 = vmax.f32 %v9276, 0.0
    %s9282 = scalar_lea.vmem %s12, 128
    %v9283 = vld [vmem:[%s9282] sm:$0xff]
    %v9284 = vld [vmem:[%s9282 + $0x8] sm:$0xff]
    %v9285 = vld [vmem:[%s9282 + $0x10] sm:$0xff]
    %v9286 = vld [vmem:[%s9282 + $0x18] sm:$0xff]
    %v9287 = vld [vmem:[%s9282 + $0x20] sm:$0xff]
    %v9288 = vld [vmem:[%s9282 + $0x28] sm:$0xff]
    %v9289 = vld [vmem:[%s9282 + $0x30] sm:$0xff]
    %v9290 = vld [vmem:[%s9282 + $0x38] sm:$0xff]
    %v9291 = vld [vmem:[%s9282 + $0x40] sm:$0xff]
    %v9292 = vld [vmem:[%s9282 + $0x48] sm:$0xff]
    %v9293 = vld [vmem:[%s9282 + $0x50] sm:$0xff]
    %v9294 = vld [vmem:[%s9282 + $0x58] sm:$0xff]
    %v9295 = vld [vmem:[%s9282 + $0x60] sm:$0xff]
    %v9296 = vld [vmem:[%s9282 + $0x68] sm:$0xff]
    %v9297 = vld [vmem:[%s9282 + $0x70] sm:$0xff]
    %v9298 = vld [vmem:[%s9282 + $0x78] sm:$0xff]
    %v9299 = vpack.c.bf16 %v9279, %v9278
    %v9300 = vpack.c.bf16 %v9281, %v9280
    %v9301 = vpack.c.bf16 %v9284, %v9283
    %v9302 = vpack.c.bf16 %v9286, %v9285
    %v9303 = vpack.c.bf16 %v9288, %v9287
    %v9304 = vpack.c.bf16 %v9290, %v9289
    %v9305 = vpack.c.bf16 %v9292, %v9291
    %v9306 = vpack.c.bf16 %v9294, %v9293
    %v9307 = vpack.c.bf16 %v9296, %v9295
    %v9308 = vpack.c.bf16 %v9298, %v9297
    %s9309 = scalar_lea.vmem %s13, 1
    %v9310 = vld [vmem:[%s9309] sm:$0x1]
    %v9312 = vperm.slane %v9310, 0
    %9314 = vmatpush.bf16.msra.mxu0 %v9308
    %9315 = vmatpush.bf16.msra.mxu0 %v9307
    %9316 = vmatpush.bf16.msra.mxu0 %v9306
    %9317 = vmatpush.bf16.msra.mxu0 %v9305
    %9318 = vmatpush.bf16.msra.mxu0 %v9304
    %9319 = vmatpush.bf16.msra.mxu0 %v9303
    %9320 = vmatpush.bf16.msra.mxu0 %v9302
    %9321 = vmatpush.bf16.msra.mxu0 %v9301
    %9322 = vmatmul.bf16.gmra.mxu0 %v9299
    %v9323 = vpop.f32.mrf.mxu0
    %v9324 = vadd.f32 %v9312, %v9323
    %v9325 = vpop.f32.mrf.mxu0
    %v9326 = vadd.f32 %v9312, %v9325
    %9327 = vmatmul.bf16.gmra.mxu0 %v9300
    %v9328 = vpop.f32.mrf.mxu0
    %v9329 = vadd.f32 %v9312, %v9328
    %v9330 = vpop.f32.mrf.mxu0
    %v9331 = vadd.f32 %v9312, %v9330
    %9332 = vdwg.mxu0
    %v9333 = vadd.f32 %v9235, %v9324
    %v9334 = vadd.f32 %v9236, %v9326
    %v9335 = vadd.f32 %v9237, %v9329
    %v9336 = vadd.f32 %v9238, %v9331
    %s9337 = scalar_lea.vmem %s14, 1
    %v9338 = vld [vmem:[%s9337] sm:$0x1]
    %s9339 = scalar_lea.vmem %s15, 1
    %v9340 = vld [vmem:[%s9339] sm:$0x1]
    %v9341 = vsel %vm184, %v9333, 0.0
    %9342 = vadd.xlane.f32.xlu0 %v9341
    %v9343 = vpop.xlane.xlu0 %9342
    %v9344 = vsel %vm184, %v9334, 0.0
    %9345 = vadd.xlane.f32.xlu0 %v9344
    %v9346 = vpop.xlane.xlu0 %9345
    %v9347 = vsel %vm184, %v9335, 0.0
    %9348 = vadd.xlane.f32.xlu0 %v9347
    %v9349 = vpop.xlane.xlu0 %9348
    %v9350 = vsel %vm184, %v9336, 0.0
    %9351 = vadd.xlane.f32.xlu0 %v9350
    %v9352 = vpop.xlane.xlu0 %9351
    %v9353 = vmul.f32 %v9343, %v4571
    %v9354 = vmul.f32 %v9346, %v4571
    %v9355 = vmul.f32 %v9349, %v4571
    %v9356 = vmul.f32 %v9352, %v4571
    %v9357 = vsub.f32 %v9333, %v9353
    %v9358 = vsub.f32 %v9334, %v9354
    %v9359 = vsub.f32 %v9335, %v9355
    %v9360 = vsub.f32 %v9336, %v9356
    %v9361 = vmul.f32 %v9357, %v9357
    %v9362 = vmul.f32 %v9358, %v9358
    %v9363 = vmul.f32 %v9359, %v9359
    %v9364 = vmul.f32 %v9360, %v9360
    %v9365 = vsel %vm184, %v9361, 0.0
    %9366 = vadd.xlane.f32.xlu0 %v9365
    %v9367 = vpop.xlane.xlu0 %9366
    %v9368 = vsel %vm184, %v9362, 0.0
    %9369 = vadd.xlane.f32.xlu0 %v9368
    %v9370 = vpop.xlane.xlu0 %9369
    %v9371 = vsel %vm184, %v9363, 0.0
    %9372 = vadd.xlane.f32.xlu0 %v9371
    %v9373 = vpop.xlane.xlu0 %9372
    %v9374 = vsel %vm184, %v9364, 0.0
    %9375 = vadd.xlane.f32.xlu0 %v9374
    %v9376 = vpop.xlane.xlu0 %9375
    %v9377 = vmul.f32 %v9367, %v4571
    %v9378 = vmul.f32 %v9370, %v4571
    %v9379 = vmul.f32 %v9373, %v4571
    %v9380 = vmul.f32 %v9376, %v4571
    %v9381 = vadd.f32 %v9377, 1e-05
    %v9382 = vadd.f32 %v9378, 1e-05
    %v9383 = vadd.f32 %v9379, 1e-05
    %v9384 = vadd.f32 %v9380, 1e-05
    %v9385 = vrsqrt.pop %v9381
    %v9386 = vmul.f32 %v9385, %v9381
    %v9387 = vmul.f32 %v9386, %v9385
    %v9388 = vmul.f32 0.5, %v9387
    %v9389 = vsub.f32 1.5, %v9388
    %v9390 = vmul.f32 %v9385, %v9389
    %vm9391 = vweird.f32 %v9381
    %vm9392 = vweird.f32 %v9385
    %vm9393 = vmor %vm9391, %vm9392
    %v9394 = vsel %vm9393, %v9385, %v9390
    %v9395 = vrsqrt.pop %v9382
    %v9396 = vmul.f32 %v9395, %v9382
    %v9397 = vmul.f32 %v9396, %v9395
    %v9398 = vmul.f32 0.5, %v9397
    %v9399 = vsub.f32 1.5, %v9398
    %v9400 = vmul.f32 %v9395, %v9399
    %vm9401 = vweird.f32 %v9382
    %vm9402 = vweird.f32 %v9395
    %vm9403 = vmor %vm9401, %vm9402
    %v9404 = vsel %vm9403, %v9395, %v9400
    %v9405 = vrsqrt.pop %v9383
    %v9406 = vmul.f32 %v9405, %v9383
    %v9407 = vmul.f32 %v9406, %v9405
    %v9408 = vmul.f32 0.5, %v9407
    %v9409 = vsub.f32 1.5, %v9408
    %v9410 = vmul.f32 %v9405, %v9409
    %vm9411 = vweird.f32 %v9383
    %vm9412 = vweird.f32 %v9405
    %vm9413 = vmor %vm9411, %vm9412
    %v9414 = vsel %vm9413, %v9405, %v9410
    %v9415 = vrsqrt.pop %v9384
    %v9416 = vmul.f32 %v9415, %v9384
    %v9417 = vmul.f32 %v9416, %v9415
    %v9418 = vmul.f32 0.5, %v9417
    %v9419 = vsub.f32 1.5, %v9418
    %v9420 = vmul.f32 %v9415, %v9419
    %vm9421 = vweird.f32 %v9384
    %vm9422 = vweird.f32 %v9415
    %vm9423 = vmor %vm9421, %vm9422
    %v9424 = vsel %vm9423, %v9415, %v9420
    %v9425 = vmul.f32 %v9357, %v9394
    %v9426 = vmul.f32 %v9358, %v9404
    %v9427 = vmul.f32 %v9359, %v9414
    %v9428 = vmul.f32 %v9360, %v9424
    %v9430 = vperm.slane %v9338, 0
    %v9432 = vmul.f32 %v9425, %v9430
    %v9433 = vmul.f32 %v9426, %v9430
    %v9434 = vmul.f32 %v9427, %v9430
    %v9435 = vmul.f32 %v9428, %v9430
    %v9437 = vperm.slane %v9340, 0
    %v9439 = vadd.f32 %v9432, %v9437
    %v9440 = vadd.f32 %v9433, %v9437
    %v9441 = vadd.f32 %v9434, %v9437
    %v9442 = vadd.f32 %v9435, %v9437
    %v9443 = vld [vmem:[#allocation7] sm:$0xff]
    %v9444 = vld [vmem:[#allocation7 + $0x8] sm:$0xff]
    %v9445 = vld [vmem:[#allocation7 + $0x10] sm:$0xff]
    %v9446 = vld [vmem:[#allocation7 + $0x18] sm:$0xff]
    %v9447 = vpack.c.bf16 %v9440, %v9439
    %v9448 = vpack.c.bf16 %v9442, %v9441
    %v9449 = vpack.c.bf16 %v9444, %v9443
    %v9450 = vpack.c.bf16 %v9446, %v9445
    %v9451 = vld [vmem:[%s19] sm:$0x1]
    %v9453 = vperm.slane %v9451, 0
    %v9456 = vsel %vm184, %v9447, 0
    %v9459 = vsel %vm184, %v9448, 0
    %9461 = vmatpush.bf16.msra.mxu0 0
    %9462 = vmatpush.bf16.msra.mxu0 0
    %9463 = vmatpush.bf16.msra.mxu0 0
    %9464 = vmatpush.bf16.msra.mxu0 0
    %9465 = vmatpush.bf16.msra.mxu0 0
    %9466 = vmatpush.bf16.msra.mxu0 0
    %9467 = vmatpush.bf16.msra.mxu0 %v9450
    %9468 = vmatpush.bf16.msra.mxu0 %v9449
    %9469 = vmatmul.bf16.gmra.mxu0 %v9456
    %v9470 = vpop.f32.mrf.mxu0
    %v9471 = vadd.f32 %v9453, %v9470
    %v9472 = vpop.f32.mrf.mxu0
    %v9473 = vadd.f32 %v9453, %v9472
    %9474 = vmatmul.bf16.gmra.mxu0 %v9459
    %v9475 = vpop.f32.mrf.mxu0
    %v9476 = vadd.f32 %v9453, %v9475
    %v9477 = vpop.f32.mrf.mxu0
    %v9478 = vadd.f32 %v9453, %v9477
    %9479 = vdwg.mxu0
    %v9480 = vtanh.pop %v9471
    %v9481 = vtanh.pop %v9473
    %v9482 = vtanh.pop %v9476
    %v9483 = vtanh.pop %v9478
    %9484 = vst.msk [vmem:[#allocation8] sm:$0xff] %vm184, %v9480
    %9485 = vst.msk [vmem:[#allocation8 + $0x8] sm:$0xff] %vm184, %v9481
    %9486 = vst.msk [vmem:[#allocation8 + $0x10] sm:$0xff] %vm184, %v9482
    %9487 = vst.msk [vmem:[#allocation8 + $0x18] sm:$0xff] %vm184, %v9483
    // Predicated region
    $region94: #{tpu_custom_call.1} parent=1 // pred_check
      _
    $region95: #{tpu_custom_call.1} parent=1 // pred_check_branch
      %9489 = sbr.rel (0) target = $region97
    $region96: #{tpu_custom_call.1} parent=1 // pred_region
      %9491 = vsyncadd [#allocation4], 0
      %s9492 = sshll.u32 [#allocation8], 4
      %s9493 = int_to_ptr.vmem [resolvable:$true] %s9492
      %s9494 = sshll.u32 %s20, 4
      %s9495 = int_to_ptr.hbm [resolvable:$true] %s9494
      %9500 = dma.vmem_to_hbm [thread:$0]  %s9493, 512, %s9495, [#allocation4], 128, 128, 8
    $region97: #{tpu_custom_call.1} parent=1 // pred_fallthru
      _
    // Predicated region
    $region98: #{tpu_custom_call.1} parent=1 // pred_check
      _
    $region99: #{tpu_custom_call.1} parent=1 // pred_check_branch
      %9502 = sbr.rel (0) target = $region101
    $region100: #{tpu_custom_call.1} parent=1 // pred_region
      %9504 = dma.done [#allocation4], 512
    $region101: #{tpu_custom_call.1} parent=1 // pred_fallthru
      _
    %9505 = vsyncpa [#allocation3], 1
    %9506 = vsyncpa [#allocation6], 1
    %9507 = vsyncpa [#allocation4], 1

</llo_original>
